<compile_context>
chip_gen: v5e
topology: v5e:2x2
jax: 0.10.0
libtpu: 0.0.40
codegen_flags: <defaults>
</compile_context>

<pallas_src>
import functools
import numpy as np
import jax
import jax.numpy as jnp
from jax.experimental import pallas as pl
from jax.experimental.pallas import tpu as pltpu


SLAB = 128  # lane-dense output width (multiple of 128 -> unmasked output DMA)


# ----------------------------- kernel helpers -----------------------------

def _gelu(x):
    # exact (erf-based) GELU, matching torch.nn.GELU default
    return 0.5 * x * (1.0 + jax.lax.erf(x * 0.7071067811865476))


# ------------------------------ Pallas kernel ------------------------------

def gnn_kernel(x_ref, ablk_ref,
               w0_ref, b0_ref, l0w_ref, l0b_ref,
               w1_ref, b1_ref, w2_ref, b2_ref,
               node_ref, graph_ref,
               *, graphs_per_tile, nodes_per_graph, dim_target):
    f32, bf16 = jnp.float32, jnp.bfloat16
    T = dim_target
    gpt, npg = graphs_per_tile, nodes_per_graph
    mm = lambda a, b: jnp.dot(a, b, preferred_element_type=f32)

    x = x_ref[...]          # [bn, F]            bf16
    A = ablk_ref[...]       # [gpt, npg, npg]    bf16 per-graph adjacency blocks
    bn = x.shape[0]

    def neighbor_sum(h_bf):
        # block-diagonal A @ h done per graph: [bn, d] -> [bn, d] (f32)
        d = h_bf.shape[-1]
        hg = h_bf.reshape(gpt, npg, d)
        out = jnp.einsum('gij,gjd->gid', A, hg, preferred_element_type=f32)
        return out.reshape(bn, d)

    # ---- layer 0: first_h = Linear + BN(folded) + GELU ; linears[0] = Linear + GELU
    h0 = _gelu(mm(x, w0_ref[...]) + b0_ref[...])                   # [bn, d0] f32
    h0_bf = h0.astype(bf16)
    z0 = _gelu(mm(h0_bf, l0w_ref[...]) + l0b_ref[...])             # [bn, T]

    # ---- layer 1: GINConv(eps=0), nn = Linear + BN(folded); head fused in RHS slab
    agg1 = (h0 + neighbor_sum(h0_bf)).astype(bf16)                 # x_i + sum_j x_j
    y1 = mm(agg1, w1_ref[...]) + b1_ref[...]                       # [bn, d1 + T]
    d1 = w1_ref.shape[1] - T
    h1, z1 = y1[:, :d1], y1[:, d1:]

    # ---- layer 2: GINConv(eps=0)
    h1_bf = h1.astype(bf16)
    agg2 = (h1 + neighbor_sum(h1_bf)).astype(bf16)
    y2 = mm(agg2, w2_ref[...]) + b2_ref[...]                       # [bn, d2 + T]
    d2 = w2_ref.shape[1] - T
    h2, z2 = y2[:, :d2], y2[:, d2:]

    zsum = z0 + z1 + z2                                            # [bn, T]

    # single fused segment-max over [z0 | z1 | z2] (graphs contiguous & equal size)
    zcat = jnp.concatenate([z0, z1, z2], axis=1)                   # [bn, 3T]
    zmax = jnp.max(zcat.reshape(gpt, npg, 3 * T), axis=1)          # [gpt, 3T]
    pooled = zmax[:, :T] + zmax[:, T:2 * T] + zmax[:, 2 * T:]      # [gpt, T]
    # dropout(p=0.0) == identity

    # sub-slice stores into lane-dense bf16 slabs; pad lanes are don't-care
    node_ref[:, :T] = zsum.astype(node_ref.dtype)
    node_ref[:, T:T + d2] = h2.astype(node_ref.dtype)
    graph_ref[:, :T] = pooled.astype(graph_ref.dtype)


# ------------------------------ wrapper (glue) ------------------------------

def gnn_forward(x_bf, adj_blocks, params, *, nodes_per_graph, block_nodes,
                dim_target):
    """x_bf:[N,F] bf16, adj_blocks:[G,npg,npg] bf16 (per-graph adjacency blocks).

    Graphs must be contiguous, equal-sized, and never split across a node tile
    (block_nodes % nodes_per_graph == 0) -- that makes the per-tile pooled max
    exact and lets every tile fetch only its own gpt adjacency blocks.
    """
    N, F = x_bf.shape
    npg = nodes_per_graph
    G = N // npg
    T = dim_target
    assert adj_blocks.shape == (G, npg, npg)
    assert x_bf.dtype == jnp.bfloat16 and adj_blocks.dtype == jnp.bfloat16
    assert N % block_nodes == 0 and block_nodes % npg == 0
    num_tiles = N // block_nodes
    gpt = block_nodes // npg
    assert gpt % 8 == 0 or gpt == G       # (8,128) rule for the graph-slab block
    d0 = params["w0"].shape[1]
    d1 = params["w1c"].shape[1] - T
    d_last = params["w2c"].shape[1] - T
    assert T + d_last <= SLAB and 3 * T <= SLAB   # fits one lane-dense slab

    weights = (params["w0"], params["b0"], params["l0_w"], params["l0_b"],
               params["w1c"], params["b1c"], params["w2c"], params["b2c"])

    full = lambda a: pl.BlockSpec(a.shape, lambda i: (0,) * a.ndim)
    in_specs = [pl.BlockSpec((block_nodes, F), lambda i: (i, 0)),       # x tile
                pl.BlockSpec((gpt, npg, npg), lambda i: (i, 0, 0))]     # its adj blocks
    in_specs += [full(w) for w in weights]

    out_specs = (pl.BlockSpec((block_nodes, SLAB), lambda i: (i, 0)),
                 pl.BlockSpec((gpt, SLAB), lambda i: (i, 0)))
    out_shape = (jax.ShapeDtypeStruct((N, SLAB), jnp.bfloat16),
                 jax.ShapeDtypeStruct((G, SLAB), jnp.bfloat16))

    flops = 2 * N * (F * d0 + d0 * T + npg * d0 +
                     d0 * (d1 + T) + npg * d1 + d1 * (d_last + T))
    transcendentals = N * (d0 + T)        # erf calls
    bytes_accessed = int(
        N * F * 2 + G * npg * npg * 2 +
        sum(int(np.prod(w.shape)) * w.dtype.itemsize for w in weights) +
        N * SLAB * 2 + G * SLAB * 2)

    kernel = functools.partial(gnn_kernel,
                               graphs_per_tile=gpt,
                               nodes_per_graph=npg,
                               dim_target=T)

    node_slab, graph_slab = pl.pallas_call(
        kernel,
        out_shape=out_shape,
        grid_spec=pltpu.PrefetchScalarGridSpec(
            num_scalar_prefetch=0,
            grid=(num_tiles,),
            in_specs=in_specs,
            out_specs=out_specs),
        compiler_params=pltpu.CompilerParams(
            dimension_semantics=("parallel",),
            vmem_limit_bytes=32 * 1024 * 1024),
        cost_estimate=pl.CostEstimate(flops=flops,
                                      transcendentals=transcendentals,
                                      bytes_accessed=bytes_accessed),
    )(x_bf, adj_blocks, *weights)

    out = graph_slab[:, :T]                 # [G, T]         (bf16)
    Z = node_slab[:, :T]                    # [N, T]         (bf16)
    x_last = node_slab[:, T:T + d_last]     # [N, layers[-1]] (bf16)
    return out, Z, x_last


def pick_block_nodes(N, nodes_per_graph):
    """1 big tile on single-TC chips (v5e/v6e); >=4 parallel tiles on v7x (2 TCs)."""
    G = N // nodes_per_graph
    kind = ""
    try:
        kind = jax.devices()[0].device_kind.lower()
    except Exception:
        pass
    target_tiles = 4 if "v7" in kind else 1
    for nt in range(target_tiles, 0, -1):
        if N % nt:
            continue
        bn = N // nt
        if bn % nodes_per_graph:
            continue
        gpt = bn // nodes_per_graph
        if gpt % 8 == 0 or gpt == G:
            return bn
    return N


# -------------------------- parameter construction --------------------------

def _fold_bn(w, b, gamma, beta, mean, var, eps=1e-5):
    # eval-mode BatchNorm1d folded exactly into the preceding Linear
    scale = gamma / jnp.sqrt(var + eps)
    return w * scale[None, :], ((b - mean) * scale + beta)[None, :]


def make_raw_params(key, dim_features, layers, dim_target):
    ks = iter(jax.random.split(key, 32))
    n = lambda shape, s=0.1: (s * jax.random.normal(next(ks), shape)).astype(jnp.float32)
    u = lambda shape: jax.random.uniform(next(ks), shape, jnp.float32, 0.5, 1.5)
    return dict(
        w0=n((dim_features, layers[0])), b0=n((layers[0],)),
        g0=u((layers[0],)), be0=n((layers[0],)), m0=n((layers[0],)), v0=u((layers[0],)),
        l0_w=n((layers[0], dim_target)), l0_b=n((dim_target,)),
        wc1=n((layers[0], layers[1])), bc1=n((layers[1],)),
        g1=u((layers[1],)), be1=n((layers[1],)), m1=n((layers[1],)), v1=u((layers[1],)),
        l1_w=n((layers[1], dim_target)), l1_b=n((dim_target,)),
        wc2=n((layers[1], layers[2])), bc2=n((layers[2],)),
        g2=u((layers[2],)), be2=n((layers[2],)), m2=n((layers[2],)), v2=u((layers[2],)),
        l2_w=n((layers[2], dim_target)), l2_b=n((dim_target,)),
    )


def prepare_params(raw):
    """Fold BN, fuse the per-layer heads into wider RHS slabs, cast to bf16."""
    bf16 = jnp.bfloat16
    w0, b0 = _fold_bn(raw["w0"], raw["b0"], raw["g0"], raw["be0"], raw["m0"], raw["v0"])
    wc1, bc1 = _fold_bn(raw["wc1"], raw["bc1"], raw["g1"], raw["be1"], raw["m1"], raw["v1"])
    wc2, bc2 = _fold_bn(raw["wc2"], raw["bc2"], raw["g2"], raw["be2"], raw["m2"], raw["v2"])
    # z_l = (agg @ wc + bc) @ l_w + l_b  ==  agg @ (wc @ l_w) + (bc @ l_w + l_b)
    w1c = jnp.concatenate([wc1, wc1 @ raw["l1_w"]], axis=1)
    b1c = jnp.concatenate([bc1, bc1 @ raw["l1_w"] + raw["l1_b"][None, :]], axis=1)
    w2c = jnp.concatenate([wc2, wc2 @ raw["l2_w"]], axis=1)
    b2c = jnp.concatenate([bc2, bc2 @ raw["l2_w"] + raw["l2_b"][None, :]], axis=1)
    return dict(
        w0=w0.astype(bf16), b0=b0,                          # biases stay f32
        l0_w=raw["l0_w"].astype(bf16), l0_b=raw["l0_b"][None, :],
        w1c=w1c.astype(bf16), b1c=b1c,
        w2c=w2c.astype(bf16), b2c=b2c,
    )


# ------------------------- pure-JAX reference checks -------------------------

def reference_f32(x, adj, raw, *, num_graphs, nodes_per_graph):
    # torch-module semantics, all-f32
    gelu = lambda t: 0.5 * t * (1.0 + jax.lax.erf(t / jnp.sqrt(2.0)))
    bnorm = lambda h, g, b, m, v: (h - m) / jnp.sqrt(v + 1e-5) * g + b
    pool = lambda z: z.reshape(num_graphs, nodes_per_graph, -1).max(axis=1)

    h0 = gelu(bnorm(x @ raw["w0"] + raw["b0"], raw["g0"], raw["be0"], raw["m0"], raw["v0"]))
    z0 = gelu(h0 @ raw["l0_w"] + raw["l0_b"])
    Z, out = z0, pool(z0)

    agg1 = h0 + adj @ h0
    h1 = bnorm(agg1 @ raw["wc1"] + raw["bc1"], raw["g1"], raw["be1"], raw["m1"], raw["v1"])
    z1 = h1 @ raw["l1_w"] + raw["l1_b"]
    Z, out = Z + z1, out + pool(z1)

    agg2 = h1 + adj @ h1
    h2 = bnorm(agg2 @ raw["wc2"] + raw["bc2"], raw["g2"], raw["be2"], raw["m2"], raw["v2"])
    z2 = h2 @ raw["l2_w"] + raw["l2_b"]
    Z, out = Z + z2, out + pool(z2)
    return out, Z, h2


def reference_prepared(x, adj, p, *, num_graphs, nodes_per_graph, dim_target):
    # same bf16/f32 math as the kernel, in plain JAX (tight check)
    f32, bf16 = jnp.float32, jnp.bfloat16
    mm = lambda a, b: jnp.dot(a, b, preferred_element_type=f32)
    pool = lambda z: z.reshape(num_graphs, nodes_per_graph, -1).max(axis=1)
    x_bf, adj_bf = x.astype(bf16), adj.astype(bf16)

    h0 = _gelu(mm(x_bf, p["w0"]) + p["b0"])
    z0 = _gelu(mm(h0.astype(bf16), p["l0_w"]) + p["l0_b"])
    agg1 = (h0 + mm(adj_bf, h0.astype(bf16))).astype(bf16)
    y1 = mm(agg1, p["w1c"]) + p["b1c"]
    d1 = p["w1c"].shape[1] - dim_target
    h1, z1 = y1[:, :d1], y1[:, d1:]
    agg2 = (h1 + mm(adj_bf, h1.astype(bf16))).astype(bf16)
    y2 = mm(agg2, p["w2c"]) + p["b2c"]
    d2 = p["w2c"].shape[1] - dim_target
    h2, z2 = y2[:, :d2], y2[:, d2:]
    Z = z0 + z1 + z2
    out = pool(z0) + pool(z1) + pool(z2)
    return out, Z, h2


# ----------------------------------- main -----------------------------------

if __name__ == "__main__":
    key = jax.random.PRNGKey(0)
    dim_features, layers, dim_target = 32, [16, 16, 8], 4
    nodes_per_graph = 16
    num_graphs = 32                       # batched workload: 512 nodes
    N = num_graphs * nodes_per_graph

    kx, kp = jax.random.split(key)
    x = jax.random.normal(kx, (N, dim_features), jnp.float32)
    x_bf = x.astype(jnp.bfloat16)         # stored once in kernel dtype, outside fwd path

    # deterministic graphs: bidirectional ring inside each graph.
    # adjacency is stored compactly as per-graph diagonal blocks (kernel input);
    # the dense [N, N] matrix is only built for the reference implementations.
    blk = np.zeros((num_graphs, nodes_per_graph, nodes_per_graph), np.float32)
    for i in range(nodes_per_graph):
        j = (i + 1) % nodes_per_graph
        blk[:, i, j] = 1.0
        blk[:, j, i] = 1.0
    adj_blocks = jnp.asarray(blk, jnp.bfloat16)
    A_dense = np.zeros((N, N), np.float32)
    for g in range(num_graphs):
        o = g * nodes_per_graph
        A_dense[o:o + nodes_per_graph, o:o + nodes_per_graph] = blk[g]
    adj_dense = jnp.asarray(A_dense)

    raw = make_raw_params(kp, dim_features, layers, dim_target)
    params = prepare_params(raw)

    block_nodes = pick_block_nodes(N, nodes_per_graph)

    out, Z, x_last = jax.block_until_ready(
        gnn_forward(x_bf, adj_blocks, params,
                    nodes_per_graph=nodes_per_graph,
                    block_nodes=block_nodes,
                    dim_target=dim_target))

    f32c = lambda a: a.astype(jnp.float32)
    to_bf = lambda a: f32c(a.astype(jnp.bfloat16))

    # tight check: identical bf16/f32 math in plain JAX (reference rounded to the
    # kernel's bf16 output dtype)
    out_t, Z_t, x_t = reference_prepared(x, adj_dense, params,
                                         num_graphs=num_graphs,
                                         nodes_per_graph=nodes_per_graph,
                                         dim_target=dim_target)
    assert jnp.allclose(f32c(out), to_bf(out_t), rtol=1e-2, atol=1e-2)
    assert jnp.allclose(f32c(Z), to_bf(Z_t), rtol=1e-2, atol=1e-2)
    assert jnp.allclose(f32c(x_last), to_bf(x_t), rtol=1e-2, atol=1e-2)

    # loose semantic check vs. the all-f32 torch-style reference (bf16 quantization)
    out_r, Z_r, x_r = reference_f32(x, adj_dense, raw,
                                    num_graphs=num_graphs,
                                    nodes_per_graph=nodes_per_graph)
    nerr = lambda a, b: float(jnp.max(jnp.abs(f32c(a) - b)) / (jnp.max(jnp.abs(b)) + 1e-3))
    assert nerr(out, out_r) < 6e-2
    assert nerr(Z, Z_r) < 6e-2
    assert nerr(x_last, x_r) < 6e-2

    # TODO(synk): training-mode BatchNorm / nonzero dropout not implemented
    # (module defaults: eval-mode running stats, dropout p=0.0).
    # TODO(synk): ragged (unequal-size) graph batches would need a scalar-prefetched
    # per-graph offset table plus -inf masking in the pooled max.
    # TODO(synk): adjacency blocks could be stored as int8 (v5e/v6e) or fp8 (v7x)
    # for another 2x on adjacency bytes; immaterial after block-compaction here.
    print("KERNEL_OK")
</pallas_src>

<mosaic_0001>
module attributes {stable_mosaic.version = 11 : i64} {
  func.func @gnn_kernel(%arg0: i32, %arg1: memref<512x32xbf16, #tpu.memory_space<vmem>>, %arg2: memref<32x16x16xbf16, #tpu.memory_space<vmem>>, %arg3: memref<32x16xbf16, #tpu.memory_space<vmem>>, %arg4: memref<1x16xf32, #tpu.memory_space<vmem>>, %arg5: memref<16x4xbf16, #tpu.memory_space<vmem>>, %arg6: memref<1x4xf32, #tpu.memory_space<vmem>>, %arg7: memref<16x20xbf16, #tpu.memory_space<vmem>>, %arg8: memref<1x20xf32, #tpu.memory_space<vmem>>, %arg9: memref<16x12xbf16, #tpu.memory_space<vmem>>, %arg10: memref<1x12xf32, #tpu.memory_space<vmem>>, %arg11: memref<512x128xbf16, #tpu.memory_space<vmem>>, %arg12: memref<32x128xbf16, #tpu.memory_space<vmem>>) attributes {dimension_semantics = [#tpu.dimension_semantics<parallel>], iteration_bounds = array<i64: 1>, scalar_prefetch = 0 : i64, scratch_operands = 0 : i64, tpu.core_type = #tpu.core_type<tc>, window_params = [{transform_indices = @transform_0, window_bounds = array<i64: 512, 32>}, {transform_indices = @transform_1, window_bounds = array<i64: 32, 16, 16>}, {pipeline_mode = #tpu.pipeline_mode<synchronous>, transform_indices = @transform_2, window_bounds = array<i64: 32, 16>}, {pipeline_mode = #tpu.pipeline_mode<synchronous>, transform_indices = @transform_3, window_bounds = array<i64: 1, 16>}, {pipeline_mode = #tpu.pipeline_mode<synchronous>, transform_indices = @transform_4, window_bounds = array<i64: 16, 4>}, {pipeline_mode = #tpu.pipeline_mode<synchronous>, transform_indices = @transform_5, window_bounds = array<i64: 1, 4>}, {pipeline_mode = #tpu.pipeline_mode<synchronous>, transform_indices = @transform_6, window_bounds = array<i64: 16, 20>}, {pipeline_mode = #tpu.pipeline_mode<synchronous>, transform_indices = @transform_7, window_bounds = array<i64: 1, 20>}, {pipeline_mode = #tpu.pipeline_mode<synchronous>, transform_indices = @transform_8, window_bounds = array<i64: 16, 12>}, {pipeline_mode = #tpu.pipeline_mode<synchronous>, transform_indices = @transform_9, window_bounds = array<i64: 1, 12>}, {transform_indices = @transform_10, window_bounds = array<i64: 512, 128>}, {transform_indices = @transform_11, window_bounds = array<i64: 32, 128>}]} {
    %c0 = arith.constant 0 : index
    %c0_0 = arith.constant 0 : index
    %0 = vector.load %arg1[%c0, %c0_0] : memref<512x32xbf16, #tpu.memory_space<vmem>>, vector<512x32xbf16>
    %c0_1 = arith.constant 0 : index
    %c0_2 = arith.constant 0 : index
    %c0_3 = arith.constant 0 : index
    %1 = vector.load %arg2[%c0_1, %c0_2, %c0_3] : memref<32x16x16xbf16, #tpu.memory_space<vmem>>, vector<32x16x16xbf16>
    %c0_4 = arith.constant 0 : index
    %c0_5 = arith.constant 0 : index
    %2 = vector.load %arg3[%c0_4, %c0_5] : memref<32x16xbf16, #tpu.memory_space<vmem>>, vector<32x16xbf16>
    %cst = arith.constant dense<0.000000e+00> : vector<512x16xf32>
    %3 = tpu.matmul %0, %2, %cst {dimension_numbers = #tpu.dot_dimension_numbers<[1], [0], [0], [1], [0, 0, 1, 1], [], []>} : vector<512x32xbf16>, vector<32x16xbf16>, vector<512x16xf32> -> vector<512x16xf32>
    %c0_6 = arith.constant 0 : index
    %c0_7 = arith.constant 0 : index
    %4 = vector.load %arg4[%c0_6, %c0_7] : memref<1x16xf32, #tpu.memory_space<vmem>>, vector<1x16xf32>
    %5 = vector.broadcast %4 : vector<1x16xf32> to vector<512x16xf32>
    %6 = arith.addf %3, %5 : vector<512x16xf32>
    %cst_8 = arith.constant 5.000000e-01 : f32
    %7 = vector.broadcast %cst_8 : f32 to vector<512x16xf32>
    %8 = arith.mulf %7, %6 : vector<512x16xf32>
    %cst_9 = arith.constant 0.707106769 : f32
    %9 = vector.broadcast %cst_9 : f32 to vector<512x16xf32>
    %10 = arith.mulf %6, %9 : vector<512x16xf32>
    %11 = math.erf %10 : vector<512x16xf32>
    %cst_10 = arith.constant 1.000000e+00 : f32
    %12 = vector.broadcast %cst_10 : f32 to vector<512x16xf32>
    %13 = arith.addf %12, %11 : vector<512x16xf32>
    %14 = arith.mulf %8, %13 : vector<512x16xf32>
    %15 = arith.truncf %14 : vector<512x16xf32> to vector<512x16xbf16>
    %c0_11 = arith.constant 0 : index
    %c0_12 = arith.constant 0 : index
    %16 = vector.load %arg5[%c0_11, %c0_12] : memref<16x4xbf16, #tpu.memory_space<vmem>>, vector<16x4xbf16>
    %cst_13 = arith.constant dense<0.000000e+00> : vector<512x4xf32>
    %17 = tpu.matmul %15, %16, %cst_13 {dimension_numbers = #tpu.dot_dimension_numbers<[1], [0], [0], [1], [0, 0, 1, 1], [], []>} : vector<512x16xbf16>, vector<16x4xbf16>, vector<512x4xf32> -> vector<512x4xf32>
    %c0_14 = arith.constant 0 : index
    %c0_15 = arith.constant 0 : index
    %18 = vector.load %arg6[%c0_14, %c0_15] : memref<1x4xf32, #tpu.memory_space<vmem>>, vector<1x4xf32>
    %19 = vector.broadcast %18 : vector<1x4xf32> to vector<512x4xf32>
    %20 = arith.addf %17, %19 : vector<512x4xf32>
    %cst_16 = arith.constant 5.000000e-01 : f32
    %21 = vector.broadcast %cst_16 : f32 to vector<512x4xf32>
    %22 = arith.mulf %21, %20 : vector<512x4xf32>
    %cst_17 = arith.constant 0.707106769 : f32
    %23 = vector.broadcast %cst_17 : f32 to vector<512x4xf32>
    %24 = arith.mulf %20, %23 : vector<512x4xf32>
    %25 = math.erf %24 : vector<512x4xf32>
    %cst_18 = arith.constant 1.000000e+00 : f32
    %26 = vector.broadcast %cst_18 : f32 to vector<512x4xf32>
    %27 = arith.addf %26, %25 : vector<512x4xf32>
    %28 = arith.mulf %22, %27 : vector<512x4xf32>
    %29 = vector.shape_cast %15 : vector<512x16xbf16> to vector<32x16x16xbf16>
    "tpu.trace_start"() <{level = 10 : i32, message = "gij,gjd->gid"}> : () -> ()
    %cst_19 = arith.constant dense<0.000000e+00> : vector<32x16x16xf32>
    %30 = tpu.matmul %1, %29, %cst_19 {dimension_numbers = #tpu.dot_dimension_numbers<[2], [1], [1], [2], [0, 0, 0, 1, 1, 2], [0], [0]>} : vector<32x16x16xbf16>, vector<32x16x16xbf16>, vector<32x16x16xf32> -> vector<32x16x16xf32>
    "tpu.trace_stop"() : () -> ()
    %31 = vector.shape_cast %30 : vector<32x16x16xf32> to vector<512x16xf32>
    %32 = arith.addf %14, %31 : vector<512x16xf32>
    %33 = arith.truncf %32 : vector<512x16xf32> to vector<512x16xbf16>
    %c0_20 = arith.constant 0 : index
    %c0_21 = arith.constant 0 : index
    %34 = vector.load %arg7[%c0_20, %c0_21] : memref<16x20xbf16, #tpu.memory_space<vmem>>, vector<16x20xbf16>
    %cst_22 = arith.constant dense<0.000000e+00> : vector<512x20xf32>
    %35 = tpu.matmul %33, %34, %cst_22 {dimension_numbers = #tpu.dot_dimension_numbers<[1], [0], [0], [1], [0, 0, 1, 1], [], []>} : vector<512x16xbf16>, vector<16x20xbf16>, vector<512x20xf32> -> vector<512x20xf32>
    %c0_23 = arith.constant 0 : index
    %c0_24 = arith.constant 0 : index
    %36 = vector.load %arg8[%c0_23, %c0_24] : memref<1x20xf32, #tpu.memory_space<vmem>>, vector<1x20xf32>
    %37 = vector.broadcast %36 : vector<1x20xf32> to vector<512x20xf32>
    %38 = arith.addf %35, %37 : vector<512x20xf32>
    %39 = vector.extract_strided_slice %38 {offsets = [0, 0], sizes = [512, 16], strides = [1, 1]} : vector<512x20xf32> to vector<512x16xf32>
    %40 = vector.extract_strided_slice %38 {offsets = [0, 16], sizes = [512, 4], strides = [1, 1]} : vector<512x20xf32> to vector<512x4xf32>
    %41 = arith.truncf %39 : vector<512x16xf32> to vector<512x16xbf16>
    %42 = vector.shape_cast %41 : vector<512x16xbf16> to vector<32x16x16xbf16>
    "tpu.trace_start"() <{level = 10 : i32, message = "gij,gjd->gid"}> : () -> ()
    %cst_25 = arith.constant dense<0.000000e+00> : vector<32x16x16xf32>
    %43 = tpu.matmul %1, %42, %cst_25 {dimension_numbers = #tpu.dot_dimension_numbers<[2], [1], [1], [2], [0, 0, 0, 1, 1, 2], [0], [0]>} : vector<32x16x16xbf16>, vector<32x16x16xbf16>, vector<32x16x16xf32> -> vector<32x16x16xf32>
    "tpu.trace_stop"() : () -> ()
    %44 = vector.shape_cast %43 : vector<32x16x16xf32> to vector<512x16xf32>
    %45 = arith.addf %39, %44 : vector<512x16xf32>
    %46 = arith.truncf %45 : vector<512x16xf32> to vector<512x16xbf16>
    %c0_26 = arith.constant 0 : index
    %c0_27 = arith.constant 0 : index
    %47 = vector.load %arg9[%c0_26, %c0_27] : memref<16x12xbf16, #tpu.memory_space<vmem>>, vector<16x12xbf16>
    %cst_28 = arith.constant dense<0.000000e+00> : vector<512x12xf32>
    %48 = tpu.matmul %46, %47, %cst_28 {dimension_numbers = #tpu.dot_dimension_numbers<[1], [0], [0], [1], [0, 0, 1, 1], [], []>} : vector<512x16xbf16>, vector<16x12xbf16>, vector<512x12xf32> -> vector<512x12xf32>
    %c0_29 = arith.constant 0 : index
    %c0_30 = arith.constant 0 : index
    %49 = vector.load %arg10[%c0_29, %c0_30] : memref<1x12xf32, #tpu.memory_space<vmem>>, vector<1x12xf32>
    %50 = vector.broadcast %49 : vector<1x12xf32> to vector<512x12xf32>
    %51 = arith.addf %48, %50 : vector<512x12xf32>
    %52 = vector.extract_strided_slice %51 {offsets = [0, 0], sizes = [512, 8], strides = [1, 1]} : vector<512x12xf32> to vector<512x8xf32>
    %53 = vector.extract_strided_slice %51 {offsets = [0, 8], sizes = [512, 4], strides = [1, 1]} : vector<512x12xf32> to vector<512x4xf32>
    %54 = arith.addf %28, %40 : vector<512x4xf32>
    %55 = arith.addf %54, %53 : vector<512x4xf32>
    %56 = tpu.concatenate %28, %40, %53 in 1 : vector<512x4xf32>, vector<512x4xf32>, vector<512x4xf32> -> vector<512x12xf32>
    %57 = vector.shape_cast %56 : vector<512x12xf32> to vector<32x16x12xf32>
    %cst_31 = arith.constant dense<0xFF800000> : vector<32x12xf32>
    %58 = vector.multi_reduction <maximumf>, %57, %cst_31 [1] : vector<32x16x12xf32> to vector<32x12xf32>
    %59 = vector.extract_strided_slice %58 {offsets = [0, 0], sizes = [32, 4], strides = [1, 1]} : vector<32x12xf32> to vector<32x4xf32>
    %60 = vector.extract_strided_slice %58 {offsets = [0, 4], sizes = [32, 4], strides = [1, 1]} : vector<32x12xf32> to vector<32x4xf32>
    %61 = arith.addf %59, %60 : vector<32x4xf32>
    %62 = vector.extract_strided_slice %58 {offsets = [0, 8], sizes = [32, 4], strides = [1, 1]} : vector<32x12xf32> to vector<32x4xf32>
    %63 = arith.addf %61, %62 : vector<32x4xf32>
    %64 = arith.truncf %55 : vector<512x4xf32> to vector<512x4xbf16>
    %c0_32 = arith.constant 0 : index
    %c0_33 = arith.constant 0 : index
    %65 = vector.load %arg11[%c0_32, %c0_33] : memref<512x128xbf16, #tpu.memory_space<vmem>>, vector<512x4xbf16>
    tpu.vector_store %arg11[%c0_32, %c0_33], %64 {strides = array<i32>} : memref<512x128xbf16, #tpu.memory_space<vmem>>, vector<512x4xbf16>,
    %66 = arith.truncf %52 : vector<512x8xf32> to vector<512x8xbf16>
    %c0_34 = arith.constant 0 : index
    %c4 = arith.constant 4 : index
    %67 = vector.load %arg11[%c0_34, %c4] : memref<512x128xbf16, #tpu.memory_space<vmem>>, vector<512x8xbf16>
    tpu.vector_store %arg11[%c0_34, %c4], %66 {strides = array<i32>} : memref<512x128xbf16, #tpu.memory_space<vmem>>, vector<512x8xbf16>,
    %68 = arith.truncf %63 : vector<32x4xf32> to vector<32x4xbf16>
    %c0_35 = arith.constant 0 : index
    %c0_36 = arith.constant 0 : index
    %69 = vector.load %arg12[%c0_35, %c0_36] : memref<32x128xbf16, #tpu.memory_space<vmem>>, vector<32x4xbf16>
    tpu.vector_store %arg12[%c0_35, %c0_36], %68 {strides = array<i32>} : memref<32x128xbf16, #tpu.memory_space<vmem>>, vector<32x4xbf16>,
    return
  }
  func.func @transform_0(%arg0: i32) -> (i32, i32) {
    %c0_i32 = arith.constant 0 : i32
    %c0_i32_0 = arith.constant 0 : i32
    return %arg0, %c0_i32 : i32, i32
  }
  func.func @transform_1(%arg0: i32) -> (i32, i32, i32) {
    %c0_i32 = arith.constant 0 : i32
    %c0_i32_0 = arith.constant 0 : i32
    %c0_i32_1 = arith.constant 0 : i32
    return %arg0, %c0_i32, %c0_i32_0 : i32, i32, i32
  }
  func.func @transform_2(%arg0: i32) -> (i32, i32) {
    %c0_i32 = arith.constant 0 : i32
    %c0_i32_0 = arith.constant 0 : i32
    %c0_i32_1 = arith.constant 0 : i32
    return %c0_i32, %c0_i32_0 : i32, i32
  }
  func.func @transform_3(%arg0: i32) -> (i32, i32) {
    %c0_i32 = arith.constant 0 : i32
    %c0_i32_0 = arith.constant 0 : i32
    %c0_i32_1 = arith.constant 0 : i32
    return %c0_i32, %c0_i32_0 : i32, i32
  }
  func.func @transform_4(%arg0: i32) -> (i32, i32) {
    %c0_i32 = arith.constant 0 : i32
    %c0_i32_0 = arith.constant 0 : i32
    %c0_i32_1 = arith.constant 0 : i32
    return %c0_i32, %c0_i32_0 : i32, i32
  }
  func.func @transform_5(%arg0: i32) -> (i32, i32) {
    %c0_i32 = arith.constant 0 : i32
    %c0_i32_0 = arith.constant 0 : i32
    %c0_i32_1 = arith.constant 0 : i32
    return %c0_i32, %c0_i32_0 : i32, i32
  }
  func.func @transform_6(%arg0: i32) -> (i32, i32) {
    %c0_i32 = arith.constant 0 : i32
    %c0_i32_0 = arith.constant 0 : i32
    %c0_i32_1 = arith.constant 0 : i32
    return %c0_i32, %c0_i32_0 : i32, i32
  }
  func.func @transform_7(%arg0: i32) -> (i32, i32) {
    %c0_i32 = arith.constant 0 : i32
    %c0_i32_0 = arith.constant 0 : i32
    %c0_i32_1 = arith.constant 0 : i32
    return %c0_i32, %c0_i32_0 : i32, i32
  }
  func.func @transform_8(%arg0: i32) -> (i32, i32) {
    %c0_i32 = arith.constant 0 : i32
    %c0_i32_0 = arith.constant 0 : i32
    %c0_i32_1 = arith.constant 0 : i32
    return %c0_i32, %c0_i32_0 : i32, i32
  }
  func.func @transform_9(%arg0: i32) -> (i32, i32) {
    %c0_i32 = arith.constant 0 : i32
    %c0_i32_0 = arith.constant 0 : i32
    %c0_i32_1 = arith.constant 0 : i32
    return %c0_i32, %c0_i32_0 : i32, i32
  }
  func.func @transform_10(%arg0: i32) -> (i32, i32) {
    %c0_i32 = arith.constant 0 : i32
    %c0_i32_0 = arith.constant 0 : i32
    return %arg0, %c0_i32 : i32, i32
  }
  func.func @transform_11(%arg0: i32) -> (i32, i32) {
    %c0_i32 = arith.constant 0 : i32
    %c0_i32_0 = arith.constant 0 : i32
    return %arg0, %c0_i32 : i32, i32
  }
}

</mosaic_0001>

<llo_original>
// kernel: tpu_custom_call.1
$region0: #{tpu_custom_call.1}
  #allocation0 [shape = 'u32[]', space=smem, size = 0x4, offset = 0x4, fixed_abs, tag = 'smem constant byte address 0x4 - core index']
  #allocation1 [shape = 'u32[72,128]{1,0:T(1,128)}', space=vmem, size = 0x9000, scoped, tag = 'internal scratch']
  %s0 = inlined_call_operand.vmem [shape: bf16[512,32], index: 0, kind: input, shape index: {}]
  %s1 = inlined_call_operand.vmem [shape: bf16[32,16,16], index: 1, kind: input, shape index: {}]
  %s2 = inlined_call_operand.vmem [shape: bf16[32,16], index: 2, kind: input, shape index: {}]
  %s3 = inlined_call_operand.vmem [shape: f32[1,16], index: 3, kind: input, shape index: {}]
  %s4 = inlined_call_operand.vmem [shape: bf16[16,4], index: 4, kind: input, shape index: {}]
  %s5 = inlined_call_operand.vmem [shape: f32[1,4], index: 5, kind: input, shape index: {}]
  %s6 = inlined_call_operand.vmem [shape: bf16[16,20], index: 6, kind: input, shape index: {}]
  %s7 = inlined_call_operand.vmem [shape: f32[1,20], index: 7, kind: input, shape index: {}]
  %s8 = inlined_call_operand.vmem [shape: bf16[16,12], index: 8, kind: input, shape index: {}]
  %s9 = inlined_call_operand.vmem [shape: f32[1,12], index: 9, kind: input, shape index: {}]
  %s10 = inlined_call_operand.hbm [shape: bf16[512,128], index: 10, kind: output, shape index: {0}]
  %s11 = inlined_call_operand.hbm [shape: bf16[32,128], index: 11, kind: output, shape index: {1}]
  %12 = xla_tuple %s10, %s11
  %s13 = sld [smem:[#allocation0]]
  $region58: #{tpu_custom_call.1} parent=0
    _
  %s15 = ssub.s32 1, %s13
  %s16 = scalar_select 0, %s15, %s13
  $region1: #{tpu_custom_call.1} parent=0
    #allocation2 [shape = 'u8[131072]{0}', space=vmem, size = 0x20000, scoped, tag = 'output window, operand 0, single buffered']
    #allocation3 [shape = 's32[1]{0}', space=sflag, size = 0x4, scoped, tag = 'scoped memory for tpu_custom_call.1']
    #allocation4 [shape = 'u8[8192]{0}', space=vmem, size = 0x2000, scoped, tag = 'output window, operand 1, single buffered']
    #allocation5 [shape = 's32[1]{0}', space=sflag, size = 0x4, scoped, tag = 'scoped memory for tpu_custom_call.1']
    %17 = vsyncpa [#allocation3], 0
    %18 = vsyncpa [#allocation5], 0
    // Predicated region
    $region2: #{tpu_custom_call.1} parent=1 // pred_check
      _
    $region3: #{tpu_custom_call.1} parent=1 // pred_check_branch
      %20 = sbr.rel (0) target = $region5
    $region4: #{tpu_custom_call.1} parent=1 // pred_region
      _
    $region5: #{tpu_custom_call.1} parent=1 // pred_fallthru
      _
    // Predicated region
    $region6: #{tpu_custom_call.1} parent=1 // pred_check
      _
    $region7: #{tpu_custom_call.1} parent=1 // pred_check_branch
      %22 = sbr.rel (0) target = $region9
    $region8: #{tpu_custom_call.1} parent=1 // pred_region
      _
    $region9: #{tpu_custom_call.1} parent=1 // pred_fallthru
      _
    // Predicated region
    $region10: #{tpu_custom_call.1} parent=1 // pred_check
      _
    $region11: #{tpu_custom_call.1} parent=1 // pred_check_branch
      %24 = sbr.rel (0) target = $region13
    $region12: #{tpu_custom_call.1} parent=1 // pred_region
      _
    $region13: #{tpu_custom_call.1} parent=1 // pred_fallthru
      _
    // Predicated region
    $region14: #{tpu_custom_call.1} parent=1 // pred_check
      _
    $region15: #{tpu_custom_call.1} parent=1 // pred_check_branch
      %26 = sbr.rel (0) target = $region17
    $region16: #{tpu_custom_call.1} parent=1 // pred_region
      _
    $region17: #{tpu_custom_call.1} parent=1 // pred_fallthru
      _
    // Predicated region
    $region18: #{tpu_custom_call.1} parent=1 // pred_check
      _
    $region19: #{tpu_custom_call.1} parent=1 // pred_check_branch
      %28 = sbr.rel (0) target = $region21
    $region20: #{tpu_custom_call.1} parent=1 // pred_region
      _
    $region21: #{tpu_custom_call.1} parent=1 // pred_fallthru
      _
    // Predicated region
    $region22: #{tpu_custom_call.1} parent=1 // pred_check
      _
    $region23: #{tpu_custom_call.1} parent=1 // pred_check_branch
      %30 = sbr.rel (0) target = $region25
    $region24: #{tpu_custom_call.1} parent=1 // pred_region
      _
    $region25: #{tpu_custom_call.1} parent=1 // pred_fallthru
      _
    // Predicated region
    $region26: #{tpu_custom_call.1} parent=1 // pred_check
      _
    $region27: #{tpu_custom_call.1} parent=1 // pred_check_branch
      %32 = sbr.rel (0) target = $region29
    $region28: #{tpu_custom_call.1} parent=1 // pred_region
      _
    $region29: #{tpu_custom_call.1} parent=1 // pred_fallthru
      _
    // Predicated region
    $region30: #{tpu_custom_call.1} parent=1 // pred_check
      _
    $region31: #{tpu_custom_call.1} parent=1 // pred_check_branch
      %34 = sbr.rel (0) target = $region33
    $region32: #{tpu_custom_call.1} parent=1 // pred_region
      _
    $region33: #{tpu_custom_call.1} parent=1 // pred_fallthru
      _
    // Predicated region
    $region34: #{tpu_custom_call.1} parent=1 // pred_check
      _
    $region35: #{tpu_custom_call.1} parent=1 // pred_check_branch
      %36 = sbr.rel (0) target = $region37
    $region36: #{tpu_custom_call.1} parent=1 // pred_region
      _
    $region37: #{tpu_custom_call.1} parent=1 // pred_fallthru
      _
    // Predicated region
    $region38: #{tpu_custom_call.1} parent=1 // pred_check
      _
    $region39: #{tpu_custom_call.1} parent=1 // pred_check_branch
      %38 = sbr.rel (0) target = $region41
    $region40: #{tpu_custom_call.1} parent=1 // pred_region
      _
    $region41: #{tpu_custom_call.1} parent=1 // pred_fallthru
      _
    %v40 = vld [vmem:[%s0] sm:$0xf]
    %v41 = vld [vmem:[%s0 + $0x4] sm:$0xf]
    %v42 = vld [vmem:[%s0 + $0x8] sm:$0xf]
    %v43 = vld [vmem:[%s0 + $0xc] sm:$0xf]
    %v44 = vld [vmem:[%s0 + $0x10] sm:$0xf]
    %v45 = vld [vmem:[%s0 + $0x14] sm:$0xf]
    %v46 = vld [vmem:[%s0 + $0x18] sm:$0xf]
    %v47 = vld [vmem:[%s0 + $0x1c] sm:$0xf]
    %v48 = vld [vmem:[%s0 + $0x20] sm:$0xf]
    %v49 = vld [vmem:[%s0 + $0x24] sm:$0xf]
    %v50 = vld [vmem:[%s0 + $0x28] sm:$0xf]
    %v51 = vld [vmem:[%s0 + $0x2c] sm:$0xf]
    %v52 = vld [vmem:[%s0 + $0x30] sm:$0xf]
    %v53 = vld [vmem:[%s0 + $0x34] sm:$0xf]
    %v54 = vld [vmem:[%s0 + $0x38] sm:$0xf]
    %v55 = vld [vmem:[%s0 + $0x3c] sm:$0xf]
    %v56 = vld [vmem:[%s0 + $0x40] sm:$0xf]
    %v57 = vld [vmem:[%s0 + $0x44] sm:$0xf]
    %v58 = vld [vmem:[%s0 + $0x48] sm:$0xf]
    %v59 = vld [vmem:[%s0 + $0x4c] sm:$0xf]
    %v60 = vld [vmem:[%s0 + $0x50] sm:$0xf]
    %v61 = vld [vmem:[%s0 + $0x54] sm:$0xf]
    %v62 = vld [vmem:[%s0 + $0x58] sm:$0xf]
    %v63 = vld [vmem:[%s0 + $0x5c] sm:$0xf]
    %v64 = vld [vmem:[%s0 + $0x60] sm:$0xf]
    %v65 = vld [vmem:[%s0 + $0x64] sm:$0xf]
    %v66 = vld [vmem:[%s0 + $0x68] sm:$0xf]
    %v67 = vld [vmem:[%s0 + $0x6c] sm:$0xf]
    %v68 = vld [vmem:[%s0 + $0x70] sm:$0xf]
    %v69 = vld [vmem:[%s0 + $0x74] sm:$0xf]
    %v70 = vld [vmem:[%s0 + $0x78] sm:$0xf]
    %v71 = vld [vmem:[%s0 + $0x7c] sm:$0xf]
    %v72 = vld [vmem:[%s0 + $0x80] sm:$0xf]
    %v73 = vld [vmem:[%s0 + $0x84] sm:$0xf]
    %v74 = vld [vmem:[%s0 + $0x88] sm:$0xf]
    %v75 = vld [vmem:[%s0 + $0x8c] sm:$0xf]
    %v76 = vld [vmem:[%s0 + $0x90] sm:$0xf]
    %v77 = vld [vmem:[%s0 + $0x94] sm:$0xf]
    %v78 = vld [vmem:[%s0 + $0x98] sm:$0xf]
    %v79 = vld [vmem:[%s0 + $0x9c] sm:$0xf]
    %v80 = vld [vmem:[%s0 + $0xa0] sm:$0xf]
    %v81 = vld [vmem:[%s0 + $0xa4] sm:$0xf]
    %v82 = vld [vmem:[%s0 + $0xa8] sm:$0xf]
    %v83 = vld [vmem:[%s0 + $0xac] sm:$0xf]
    %v84 = vld [vmem:[%s0 + $0xb0] sm:$0xf]
    %v85 = vld [vmem:[%s0 + $0xb4] sm:$0xf]
    %v86 = vld [vmem:[%s0 + $0xb8] sm:$0xf]
    %v87 = vld [vmem:[%s0 + $0xbc] sm:$0xf]
    %v88 = vld [vmem:[%s0 + $0xc0] sm:$0xf]
    %v89 = vld [vmem:[%s0 + $0xc4] sm:$0xf]
    %v90 = vld [vmem:[%s0 + $0xc8] sm:$0xf]
    %v91 = vld [vmem:[%s0 + $0xcc] sm:$0xf]
    %v92 = vld [vmem:[%s0 + $0xd0] sm:$0xf]
    %v93 = vld [vmem:[%s0 + $0xd4] sm:$0xf]
    %v94 = vld [vmem:[%s0 + $0xd8] sm:$0xf]
    %v95 = vld [vmem:[%s0 + $0xdc] sm:$0xf]
    %v96 = vld [vmem:[%s0 + $0xe0] sm:$0xf]
    %v97 = vld [vmem:[%s0 + $0xe4] sm:$0xf]
    %v98 = vld [vmem:[%s0 + $0xe8] sm:$0xf]
    %v99 = vld [vmem:[%s0 + $0xec] sm:$0xf]
    %v100 = vld [vmem:[%s0 + $0xf0] sm:$0xf]
    %v101 = vld [vmem:[%s0 + $0xf4] sm:$0xf]
    %v102 = vld [vmem:[%s0 + $0xf8] sm:$0xf]
    %v103 = vld [vmem:[%s0 + $0xfc] sm:$0xf]
    %v104 = vld [vmem:[%s1] sm:$0xf]
    %v105 = vld [vmem:[%s1 + $0x4] sm:$0xf]
    %v106 = vld [vmem:[%s1 + $0x8] sm:$0xf]
    %v107 = vld [vmem:[%s1 + $0xc] sm:$0xf]
    %v108 = vld [vmem:[%s1 + $0x10] sm:$0xf]
    %v109 = vld [vmem:[%s1 + $0x14] sm:$0xf]
    %v110 = vld [vmem:[%s1 + $0x18] sm:$0xf]
    %v111 = vld [vmem:[%s1 + $0x1c] sm:$0xf]
    %v112 = vld [vmem:[%s1 + $0x20] sm:$0xf]
    %v113 = vld [vmem:[%s1 + $0x24] sm:$0xf]
    %v114 = vld [vmem:[%s1 + $0x28] sm:$0xf]
    %v115 = vld [vmem:[%s1 + $0x2c] sm:$0xf]
    %v116 = vld [vmem:[%s1 + $0x30] sm:$0xf]
    %v117 = vld [vmem:[%s1 + $0x34] sm:$0xf]
    %v118 = vld [vmem:[%s1 + $0x38] sm:$0xf]
    %v119 = vld [vmem:[%s1 + $0x3c] sm:$0xf]
    %v120 = vld [vmem:[%s1 + $0x40] sm:$0xf]
    %v121 = vld [vmem:[%s1 + $0x44] sm:$0xf]
    %v122 = vld [vmem:[%s1 + $0x48] sm:$0xf]
    %v123 = vld [vmem:[%s1 + $0x4c] sm:$0xf]
    %v124 = vld [vmem:[%s1 + $0x50] sm:$0xf]
    %v125 = vld [vmem:[%s1 + $0x54] sm:$0xf]
    %v126 = vld [vmem:[%s1 + $0x58] sm:$0xf]
    %v127 = vld [vmem:[%s1 + $0x5c] sm:$0xf]
    %v128 = vld [vmem:[%s1 + $0x60] sm:$0xf]
    %v129 = vld [vmem:[%s1 + $0x64] sm:$0xf]
    %v130 = vld [vmem:[%s1 + $0x68] sm:$0xf]
    %v131 = vld [vmem:[%s1 + $0x6c] sm:$0xf]
    %v132 = vld [vmem:[%s1 + $0x70] sm:$0xf]
    %v133 = vld [vmem:[%s1 + $0x74] sm:$0xf]
    %v134 = vld [vmem:[%s1 + $0x78] sm:$0xf]
    %v135 = vld [vmem:[%s1 + $0x7c] sm:$0xf]
    %v136 = vld [vmem:[%s1 + $0x80] sm:$0xf]
    %v137 = vld [vmem:[%s1 + $0x84] sm:$0xf]
    %v138 = vld [vmem:[%s1 + $0x88] sm:$0xf]
    %v139 = vld [vmem:[%s1 + $0x8c] sm:$0xf]
    %v140 = vld [vmem:[%s1 + $0x90] sm:$0xf]
    %v141 = vld [vmem:[%s1 + $0x94] sm:$0xf]
    %v142 = vld [vmem:[%s1 + $0x98] sm:$0xf]
    %v143 = vld [vmem:[%s1 + $0x9c] sm:$0xf]
    %v144 = vld [vmem:[%s1 + $0xa0] sm:$0xf]
    %v145 = vld [vmem:[%s1 + $0xa4] sm:$0xf]
    %v146 = vld [vmem:[%s1 + $0xa8] sm:$0xf]
    %v147 = vld [vmem:[%s1 + $0xac] sm:$0xf]
    %v148 = vld [vmem:[%s1 + $0xb0] sm:$0xf]
    %v149 = vld [vmem:[%s1 + $0xb4] sm:$0xf]
    %v150 = vld [vmem:[%s1 + $0xb8] sm:$0xf]
    %v151 = vld [vmem:[%s1 + $0xbc] sm:$0xf]
    %v152 = vld [vmem:[%s1 + $0xc0] sm:$0xf]
    %v153 = vld [vmem:[%s1 + $0xc4] sm:$0xf]
    %v154 = vld [vmem:[%s1 + $0xc8] sm:$0xf]
    %v155 = vld [vmem:[%s1 + $0xcc] sm:$0xf]
    %v156 = vld [vmem:[%s1 + $0xd0] sm:$0xf]
    %v157 = vld [vmem:[%s1 + $0xd4] sm:$0xf]
    %v158 = vld [vmem:[%s1 + $0xd8] sm:$0xf]
    %v159 = vld [vmem:[%s1 + $0xdc] sm:$0xf]
    %v160 = vld [vmem:[%s1 + $0xe0] sm:$0xf]
    %v161 = vld [vmem:[%s1 + $0xe4] sm:$0xf]
    %v162 = vld [vmem:[%s1 + $0xe8] sm:$0xf]
    %v163 = vld [vmem:[%s1 + $0xec] sm:$0xf]
    %v164 = vld [vmem:[%s1 + $0xf0] sm:$0xf]
    %v165 = vld [vmem:[%s1 + $0xf4] sm:$0xf]
    %v166 = vld [vmem:[%s1 + $0xf8] sm:$0xf]
    %v167 = vld [vmem:[%s1 + $0xfc] sm:$0xf]
    %v168 = vld [vmem:[%s2] sm:$0xf]
    %v169 = vld [vmem:[%s2 + $0x4] sm:$0xf]
    %v170 = vld [vmem:[%s2 + $0x8] sm:$0xf]
    %v171 = vld [vmem:[%s2 + $0xc] sm:$0xf]
    %v172 = vld [vmem:[%s3] sm:$0x1]
    %v174 = vperm.slane %v172, 0
    %v240 = vunpack.c.l.b16 %v40
    %v241 = vunpack.c.l.b16 %v41
    %v242 = vunpack.c.l.b16 %v42
    %v243 = vunpack.c.l.b16 %v43
    %v244 = vunpack.c.l.b16 %v44
    %v245 = vunpack.c.l.b16 %v45
    %v246 = vunpack.c.l.b16 %v46
    %v247 = vunpack.c.l.b16 %v47
    %v248 = vunpack.c.l.b16 %v48
    %v249 = vunpack.c.l.b16 %v49
    %v250 = vunpack.c.l.b16 %v50
    %v251 = vunpack.c.l.b16 %v51
    %v252 = vunpack.c.l.b16 %v52
    %v253 = vunpack.c.l.b16 %v53
    %v254 = vunpack.c.l.b16 %v54
    %v255 = vunpack.c.l.b16 %v55
    %v256 = vunpack.c.l.b16 %v56
    %v257 = vunpack.c.l.b16 %v57
    %v258 = vunpack.c.l.b16 %v58
    %v259 = vunpack.c.l.b16 %v59
    %v260 = vunpack.c.l.b16 %v60
    %v261 = vunpack.c.l.b16 %v61
    %v262 = vunpack.c.l.b16 %v62
    %v263 = vunpack.c.l.b16 %v63
    %v264 = vunpack.c.l.b16 %v64
    %v265 = vunpack.c.l.b16 %v65
    %v266 = vunpack.c.l.b16 %v66
    %v267 = vunpack.c.l.b16 %v67
    %v268 = vunpack.c.l.b16 %v68
    %v269 = vunpack.c.l.b16 %v69
    %v270 = vunpack.c.l.b16 %v70
    %v271 = vunpack.c.l.b16 %v71
    %v272 = vunpack.c.l.b16 %v72
    %v273 = vunpack.c.l.b16 %v73
    %v274 = vunpack.c.l.b16 %v74
    %v275 = vunpack.c.l.b16 %v75
    %v276 = vunpack.c.l.b16 %v76
    %v277 = vunpack.c.l.b16 %v77
    %v278 = vunpack.c.l.b16 %v78
    %v279 = vunpack.c.l.b16 %v79
    %v280 = vunpack.c.l.b16 %v80
    %v281 = vunpack.c.l.b16 %v81
    %v282 = vunpack.c.l.b16 %v82
    %v283 = vunpack.c.l.b16 %v83
    %v284 = vunpack.c.l.b16 %v84
    %v285 = vunpack.c.l.b16 %v85
    %v286 = vunpack.c.l.b16 %v86
    %v287 = vunpack.c.l.b16 %v87
    %v288 = vunpack.c.l.b16 %v88
    %v289 = vunpack.c.l.b16 %v89
    %v290 = vunpack.c.l.b16 %v90
    %v291 = vunpack.c.l.b16 %v91
    %v292 = vunpack.c.l.b16 %v92
    %v293 = vunpack.c.l.b16 %v93
    %v294 = vunpack.c.l.b16 %v94
    %v295 = vunpack.c.l.b16 %v95
    %v296 = vunpack.c.l.b16 %v96
    %v297 = vunpack.c.l.b16 %v97
    %v298 = vunpack.c.l.b16 %v98
    %v299 = vunpack.c.l.b16 %v99
    %v300 = vunpack.c.l.b16 %v100
    %v301 = vunpack.c.l.b16 %v101
    %v302 = vunpack.c.l.b16 %v102
    %v303 = vunpack.c.l.b16 %v103
    %v304 = vpack.c.b16 %v241, %v240
    %v305 = vpack.c.b16 %v243, %v242
    %v306 = vpack.c.b16 %v245, %v244
    %v307 = vpack.c.b16 %v247, %v246
    %v308 = vpack.c.b16 %v249, %v248
    %v309 = vpack.c.b16 %v251, %v250
    %v310 = vpack.c.b16 %v253, %v252
    %v311 = vpack.c.b16 %v255, %v254
    %v312 = vpack.c.b16 %v257, %v256
    %v313 = vpack.c.b16 %v259, %v258
    %v314 = vpack.c.b16 %v261, %v260
    %v315 = vpack.c.b16 %v263, %v262
    %v316 = vpack.c.b16 %v265, %v264
    %v317 = vpack.c.b16 %v267, %v266
    %v318 = vpack.c.b16 %v269, %v268
    %v319 = vpack.c.b16 %v271, %v270
    %v320 = vpack.c.b16 %v273, %v272
    %v321 = vpack.c.b16 %v275, %v274
    %v322 = vpack.c.b16 %v277, %v276
    %v323 = vpack.c.b16 %v279, %v278
    %v324 = vpack.c.b16 %v281, %v280
    %v325 = vpack.c.b16 %v283, %v282
    %v326 = vpack.c.b16 %v285, %v284
    %v327 = vpack.c.b16 %v287, %v286
    %v328 = vpack.c.b16 %v289, %v288
    %v329 = vpack.c.b16 %v291, %v290
    %v330 = vpack.c.b16 %v293, %v292
    %v331 = vpack.c.b16 %v295, %v294
    %v332 = vpack.c.b16 %v297, %v296
    %v333 = vpack.c.b16 %v299, %v298
    %v334 = vpack.c.b16 %v301, %v300
    %v335 = vpack.c.b16 %v303, %v302
    %v340 = vunpack.c.l.b16 %v168
    %v341 = vunpack.c.l.b16 %v169
    %v342 = vunpack.c.l.b16 %v170
    %v343 = vunpack.c.l.b16 %v171
    %v344 = vpack.c.b16 %v341, %v340
    %v345 = vpack.c.b16 %v343, %v342
    %vm348 = vcmask 261120
    %v350 = vsel %vm348, %v304, 0
    %v353 = vsel %vm348, %v305, 0
    %v356 = vsel %vm348, %v306, 0
    %v359 = vsel %vm348, %v307, 0
    %v362 = vsel %vm348, %v308, 0
    %v365 = vsel %vm348, %v309, 0
    %v368 = vsel %vm348, %v310, 0
    %v371 = vsel %vm348, %v311, 0
    %v374 = vsel %vm348, %v312, 0
    %v377 = vsel %vm348, %v313, 0
    %v380 = vsel %vm348, %v314, 0
    %v383 = vsel %vm348, %v315, 0
    %v386 = vsel %vm348, %v316, 0
    %v389 = vsel %vm348, %v317, 0
    %v392 = vsel %vm348, %v318, 0
    %v395 = vsel %vm348, %v319, 0
    %v398 = vsel %vm348, %v320, 0
    %v401 = vsel %vm348, %v321, 0
    %v404 = vsel %vm348, %v322, 0
    %v407 = vsel %vm348, %v323, 0
    %v410 = vsel %vm348, %v324, 0
    %v413 = vsel %vm348, %v325, 0
    %v416 = vsel %vm348, %v326, 0
    %v419 = vsel %vm348, %v327, 0
    %v422 = vsel %vm348, %v328, 0
    %v425 = vsel %vm348, %v329, 0
    %v428 = vsel %vm348, %v330, 0
    %v431 = vsel %vm348, %v331, 0
    %v434 = vsel %vm348, %v332, 0
    %v437 = vsel %vm348, %v333, 0
    %v440 = vsel %vm348, %v334, 0
    %v443 = vsel %vm348, %v335, 0
    %445 = vmatpush.bf16.msra.mxu0 0
    %446 = vmatpush.bf16.msra.mxu0 0
    %447 = vmatpush.bf16.msra.mxu0 0
    %448 = vmatpush.bf16.msra.mxu0 0
    %449 = vmatpush.bf16.msra.mxu0 0
    %450 = vmatpush.bf16.msra.mxu0 0
    %451 = vmatpush.bf16.msra.mxu0 %v345
    %452 = vmatpush.bf16.msra.mxu0 %v344
    %453 = vmatmul.bf16.gmra.mxu0 %v350
    %v454 = vpop.f32.mrf.mxu0
    %v455 = vadd.f32 %v174, %v454
    %v456 = vpop.f32.mrf.mxu0
    %v457 = vadd.f32 %v174, %v456
    %458 = vmatmul.bf16.gmra.mxu0 %v353
    %v459 = vpop.f32.mrf.mxu0
    %v460 = vadd.f32 %v174, %v459
    %v461 = vpop.f32.mrf.mxu0
    %v462 = vadd.f32 %v174, %v461
    %463 = vmatmul.bf16.gmra.mxu0 %v356
    %v464 = vpop.f32.mrf.mxu0
    %v465 = vadd.f32 %v174, %v464
    %v466 = vpop.f32.mrf.mxu0
    %v467 = vadd.f32 %v174, %v466
    %468 = vmatmul.bf16.gmra.mxu0 %v359
    %v469 = vpop.f32.mrf.mxu0
    %v470 = vadd.f32 %v174, %v469
    %v471 = vpop.f32.mrf.mxu0
    %v472 = vadd.f32 %v174, %v471
    %473 = vmatmul.bf16.gmra.mxu0 %v362
    %v474 = vpop.f32.mrf.mxu0
    %v475 = vadd.f32 %v174, %v474
    %v476 = vpop.f32.mrf.mxu0
    %v477 = vadd.f32 %v174, %v476
    %478 = vmatmul.bf16.gmra.mxu0 %v365
    %v479 = vpop.f32.mrf.mxu0
    %v480 = vadd.f32 %v174, %v479
    %v481 = vpop.f32.mrf.mxu0
    %v482 = vadd.f32 %v174, %v481
    %483 = vmatmul.bf16.gmra.mxu0 %v368
    %v484 = vpop.f32.mrf.mxu0
    %v485 = vadd.f32 %v174, %v484
    %v486 = vpop.f32.mrf.mxu0
    %v487 = vadd.f32 %v174, %v486
    %488 = vmatmul.bf16.gmra.mxu0 %v371
    %v489 = vpop.f32.mrf.mxu0
    %v490 = vadd.f32 %v174, %v489
    %v491 = vpop.f32.mrf.mxu0
    %v492 = vadd.f32 %v174, %v491
    %493 = vmatmul.bf16.gmra.mxu0 %v374
    %v494 = vpop.f32.mrf.mxu0
    %v495 = vadd.f32 %v174, %v494
    %v496 = vpop.f32.mrf.mxu0
    %v497 = vadd.f32 %v174, %v496
    %498 = vmatmul.bf16.gmra.mxu0 %v377
    %v499 = vpop.f32.mrf.mxu0
    %v500 = vadd.f32 %v174, %v499
    %v501 = vpop.f32.mrf.mxu0
    %v502 = vadd.f32 %v174, %v501
    %503 = vmatmul.bf16.gmra.mxu0 %v380
    %v504 = vpop.f32.mrf.mxu0
    %v505 = vadd.f32 %v174, %v504
    %v506 = vpop.f32.mrf.mxu0
    %v507 = vadd.f32 %v174, %v506
    %508 = vmatmul.bf16.gmra.mxu0 %v383
    %v509 = vpop.f32.mrf.mxu0
    %v510 = vadd.f32 %v174, %v509
    %v511 = vpop.f32.mrf.mxu0
    %v512 = vadd.f32 %v174, %v511
    %513 = vmatmul.bf16.gmra.mxu0 %v386
    %v514 = vpop.f32.mrf.mxu0
    %v515 = vadd.f32 %v174, %v514
    %v516 = vpop.f32.mrf.mxu0
    %v517 = vadd.f32 %v174, %v516
    %518 = vmatmul.bf16.gmra.mxu0 %v389
    %v519 = vpop.f32.mrf.mxu0
    %v520 = vadd.f32 %v174, %v519
    %v521 = vpop.f32.mrf.mxu0
    %v522 = vadd.f32 %v174, %v521
    %523 = vmatmul.bf16.gmra.mxu0 %v392
    %v524 = vpop.f32.mrf.mxu0
    %v525 = vadd.f32 %v174, %v524
    %v526 = vpop.f32.mrf.mxu0
    %v527 = vadd.f32 %v174, %v526
    %528 = vmatmul.bf16.gmra.mxu0 %v395
    %v529 = vpop.f32.mrf.mxu0
    %v530 = vadd.f32 %v174, %v529
    %v531 = vpop.f32.mrf.mxu0
    %v532 = vadd.f32 %v174, %v531
    %533 = vmatmul.bf16.gmra.mxu0 %v398
    %v534 = vpop.f32.mrf.mxu0
    %v535 = vadd.f32 %v174, %v534
    %v536 = vpop.f32.mrf.mxu0
    %v537 = vadd.f32 %v174, %v536
    %538 = vmatmul.bf16.gmra.mxu0 %v401
    %v539 = vpop.f32.mrf.mxu0
    %v540 = vadd.f32 %v174, %v539
    %v541 = vpop.f32.mrf.mxu0
    %v542 = vadd.f32 %v174, %v541
    %543 = vmatmul.bf16.gmra.mxu0 %v404
    %v544 = vpop.f32.mrf.mxu0
    %v545 = vadd.f32 %v174, %v544
    %v546 = vpop.f32.mrf.mxu0
    %v547 = vadd.f32 %v174, %v546
    %548 = vmatmul.bf16.gmra.mxu0 %v407
    %v549 = vpop.f32.mrf.mxu0
    %v550 = vadd.f32 %v174, %v549
    %v551 = vpop.f32.mrf.mxu0
    %v552 = vadd.f32 %v174, %v551
    %553 = vmatmul.bf16.gmra.mxu0 %v410
    %v554 = vpop.f32.mrf.mxu0
    %v555 = vadd.f32 %v174, %v554
    %v556 = vpop.f32.mrf.mxu0
    %v557 = vadd.f32 %v174, %v556
    %558 = vmatmul.bf16.gmra.mxu0 %v413
    %v559 = vpop.f32.mrf.mxu0
    %v560 = vadd.f32 %v174, %v559
    %v561 = vpop.f32.mrf.mxu0
    %v562 = vadd.f32 %v174, %v561
    %563 = vmatmul.bf16.gmra.mxu0 %v416
    %v564 = vpop.f32.mrf.mxu0
    %v565 = vadd.f32 %v174, %v564
    %v566 = vpop.f32.mrf.mxu0
    %v567 = vadd.f32 %v174, %v566
    %568 = vmatmul.bf16.gmra.mxu0 %v419
    %v569 = vpop.f32.mrf.mxu0
    %v570 = vadd.f32 %v174, %v569
    %v571 = vpop.f32.mrf.mxu0
    %v572 = vadd.f32 %v174, %v571
    %573 = vmatmul.bf16.gmra.mxu0 %v422
    %v574 = vpop.f32.mrf.mxu0
    %v575 = vadd.f32 %v174, %v574
    %v576 = vpop.f32.mrf.mxu0
    %v577 = vadd.f32 %v174, %v576
    %578 = vmatmul.bf16.gmra.mxu0 %v425
    %v579 = vpop.f32.mrf.mxu0
    %v580 = vadd.f32 %v174, %v579
    %v581 = vpop.f32.mrf.mxu0
    %v582 = vadd.f32 %v174, %v581
    %583 = vmatmul.bf16.gmra.mxu0 %v428
    %v584 = vpop.f32.mrf.mxu0
    %v585 = vadd.f32 %v174, %v584
    %v586 = vpop.f32.mrf.mxu0
    %v587 = vadd.f32 %v174, %v586
    %588 = vmatmul.bf16.gmra.mxu0 %v431
    %v589 = vpop.f32.mrf.mxu0
    %v590 = vadd.f32 %v174, %v589
    %v591 = vpop.f32.mrf.mxu0
    %v592 = vadd.f32 %v174, %v591
    %593 = vmatmul.bf16.gmra.mxu0 %v434
    %v594 = vpop.f32.mrf.mxu0
    %v595 = vadd.f32 %v174, %v594
    %v596 = vpop.f32.mrf.mxu0
    %v597 = vadd.f32 %v174, %v596
    %598 = vmatmul.bf16.gmra.mxu0 %v437
    %v599 = vpop.f32.mrf.mxu0
    %v600 = vadd.f32 %v174, %v599
    %v601 = vpop.f32.mrf.mxu0
    %v602 = vadd.f32 %v174, %v601
    %603 = vmatmul.bf16.gmra.mxu0 %v440
    %v604 = vpop.f32.mrf.mxu0
    %v605 = vadd.f32 %v174, %v604
    %v606 = vpop.f32.mrf.mxu0
    %v607 = vadd.f32 %v174, %v606
    %608 = vmatmul.bf16.gmra.mxu0 %v443
    %v609 = vpop.f32.mrf.mxu0
    %v610 = vadd.f32 %v174, %v609
    %v611 = vpop.f32.mrf.mxu0
    %v612 = vadd.f32 %v174, %v611
    %613 = vdwg.mxu0
    %v614 = vmul.f32 %v455, 0.5
    %v615 = vmul.f32 %v457, 0.5
    %v616 = vmul.f32 %v460, 0.5
    %v617 = vmul.f32 %v462, 0.5
    %v618 = vmul.f32 %v465, 0.5
    %v619 = vmul.f32 %v467, 0.5
    %v620 = vmul.f32 %v470, 0.5
    %v621 = vmul.f32 %v472, 0.5
    %v622 = vmul.f32 %v475, 0.5
    %v623 = vmul.f32 %v477, 0.5
    %v624 = vmul.f32 %v480, 0.5
    %v625 = vmul.f32 %v482, 0.5
    %v626 = vmul.f32 %v485, 0.5
    %v627 = vmul.f32 %v487, 0.5
    %v628 = vmul.f32 %v490, 0.5
    %v629 = vmul.f32 %v492, 0.5
    %v630 = vmul.f32 %v495, 0.5
    %v631 = vmul.f32 %v497, 0.5
    %v632 = vmul.f32 %v500, 0.5
    %v633 = vmul.f32 %v502, 0.5
    %v634 = vmul.f32 %v505, 0.5
    %v635 = vmul.f32 %v507, 0.5
    %v636 = vmul.f32 %v510, 0.5
    %v637 = vmul.f32 %v512, 0.5
    %v638 = vmul.f32 %v515, 0.5
    %v639 = vmul.f32 %v517, 0.5
    %v640 = vmul.f32 %v520, 0.5
    %v641 = vmul.f32 %v522, 0.5
    %v642 = vmul.f32 %v525, 0.5
    %v643 = vmul.f32 %v527, 0.5
    %v644 = vmul.f32 %v530, 0.5
    %v645 = vmul.f32 %v532, 0.5
    %v646 = vmul.f32 %v535, 0.5
    %v647 = vmul.f32 %v537, 0.5
    %v648 = vmul.f32 %v540, 0.5
    %v649 = vmul.f32 %v542, 0.5
    %v650 = vmul.f32 %v545, 0.5
    %v651 = vmul.f32 %v547, 0.5
    %v652 = vmul.f32 %v550, 0.5
    %v653 = vmul.f32 %v552, 0.5
    %v654 = vmul.f32 %v555, 0.5
    %v655 = vmul.f32 %v557, 0.5
    %v656 = vmul.f32 %v560, 0.5
    %v657 = vmul.f32 %v562, 0.5
    %v658 = vmul.f32 %v565, 0.5
    %v659 = vmul.f32 %v567, 0.5
    %v660 = vmul.f32 %v570, 0.5
    %v661 = vmul.f32 %v572, 0.5
    %v662 = vmul.f32 %v575, 0.5
    %v663 = vmul.f32 %v577, 0.5
    %v664 = vmul.f32 %v580, 0.5
    %v665 = vmul.f32 %v582, 0.5
    %v666 = vmul.f32 %v585, 0.5
    %v667 = vmul.f32 %v587, 0.5
    %v668 = vmul.f32 %v590, 0.5
    %v669 = vmul.f32 %v592, 0.5
    %v670 = vmul.f32 %v595, 0.5
    %v671 = vmul.f32 %v597, 0.5
    %v672 = vmul.f32 %v600, 0.5
    %v673 = vmul.f32 %v602, 0.5
    %v674 = vmul.f32 %v605, 0.5
    %v675 = vmul.f32 %v607, 0.5
    %v676 = vmul.f32 %v610, 0.5
    %v677 = vmul.f32 %v612, 0.5
    %v678 = vmul.f32 %v455, 0.70710677
    %v679 = vmul.f32 %v457, 0.70710677
    %v680 = vmul.f32 %v460, 0.70710677
    %v681 = vmul.f32 %v462, 0.70710677
    %v682 = vmul.f32 %v465, 0.70710677
    %v683 = vmul.f32 %v467, 0.70710677
    %v684 = vmul.f32 %v470, 0.70710677
    %v685 = vmul.f32 %v472, 0.70710677
    %v686 = vmul.f32 %v475, 0.70710677
    %v687 = vmul.f32 %v477, 0.70710677
    %v688 = vmul.f32 %v480, 0.70710677
    %v689 = vmul.f32 %v482, 0.70710677
    %v690 = vmul.f32 %v485, 0.70710677
    %v691 = vmul.f32 %v487, 0.70710677
    %v692 = vmul.f32 %v490, 0.70710677
    %v693 = vmul.f32 %v492, 0.70710677
    %v694 = vmul.f32 %v495, 0.70710677
    %v695 = vmul.f32 %v497, 0.70710677
    %v696 = vmul.f32 %v500, 0.70710677
    %v697 = vmul.f32 %v502, 0.70710677
    %v698 = vmul.f32 %v505, 0.70710677
    %v699 = vmul.f32 %v507, 0.70710677
    %v700 = vmul.f32 %v510, 0.70710677
    %v701 = vmul.f32 %v512, 0.70710677
    %v702 = vmul.f32 %v515, 0.70710677
    %v703 = vmul.f32 %v517, 0.70710677
    %v704 = vmul.f32 %v520, 0.70710677
    %v705 = vmul.f32 %v522, 0.70710677
    %v706 = vmul.f32 %v525, 0.70710677
    %v707 = vmul.f32 %v527, 0.70710677
    %v708 = vmul.f32 %v530, 0.70710677
    %v709 = vmul.f32 %v532, 0.70710677
    %v710 = vmul.f32 %v535, 0.70710677
    %v711 = vmul.f32 %v537, 0.70710677
    %v712 = vmul.f32 %v540, 0.70710677
    %v713 = vmul.f32 %v542, 0.70710677
    %v714 = vmul.f32 %v545, 0.70710677
    %v715 = vmul.f32 %v547, 0.70710677
    %v716 = vmul.f32 %v550, 0.70710677
    %v717 = vmul.f32 %v552, 0.70710677
    %v718 = vmul.f32 %v555, 0.70710677
    %v719 = vmul.f32 %v557, 0.70710677
    %v720 = vmul.f32 %v560, 0.70710677
    %v721 = vmul.f32 %v562, 0.70710677
    %v722 = vmul.f32 %v565, 0.70710677
    %v723 = vmul.f32 %v567, 0.70710677
    %v724 = vmul.f32 %v570, 0.70710677
    %v725 = vmul.f32 %v572, 0.70710677
    %v726 = vmul.f32 %v575, 0.70710677
    %v727 = vmul.f32 %v577, 0.70710677
    %v728 = vmul.f32 %v580, 0.70710677
    %v729 = vmul.f32 %v582, 0.70710677
    %v730 = vmul.f32 %v585, 0.70710677
    %v731 = vmul.f32 %v587, 0.70710677
    %v732 = vmul.f32 %v590, 0.70710677
    %v733 = vmul.f32 %v592, 0.70710677
    %v734 = vmul.f32 %v595, 0.70710677
    %v735 = vmul.f32 %v597, 0.70710677
    %v736 = vmul.f32 %v600, 0.70710677
    %v737 = vmul.f32 %v602, 0.70710677
    %v738 = vmul.f32 %v605, 0.70710677
    %v739 = vmul.f32 %v607, 0.70710677
    %v740 = vmul.f32 %v610, 0.70710677
    %v741 = vmul.f32 %v612, 0.70710677
    %v742 = vmul.f32 %v678, %v678
    %v743 = vmin.f32 16.0, %v742
    %v744 = vmul.f32 %v743, 2.1237322e-06
    %v745 = vadd.f32 %v744, 0.00028619796
    %v746 = vmul.f32 %v743, %v745
    %v747 = vadd.f32 %v746, 0.0036580483
    %v748 = vmul.f32 %v743, %v747
    %v749 = vadd.f32 %v748, 0.05243302
    %v750 = vmul.f32 %v743, %v749
    %v751 = vadd.f32 %v750, 0.18741608
    %v752 = vmul.f32 %v743, %v751
    %v753 = vadd.f32 %v752, 1.1283791
    %v754 = vmul.f32 %v678, %v753
    %v755 = vmul.f32 %v743, 3.8918573e-05
    %v756 = vadd.f32 %v755, 0.001143296
    %v757 = vmul.f32 %v743, %v756
    %v758 = vadd.f32 %v757, 0.014752088
    %v759 = vmul.f32 %v743, %v758
    %v760 = vadd.f32 %v759, 0.112945676
    %v761 = vmul.f32 %v743, %v760
    %v762 = vadd.f32 %v761, 0.4994258
    %v763 = vmul.f32 %v743, %v762
    %v764 = vadd.f32 %v763, 1.0
    %v765 = vrcp.pop %v764
    %v766 = vmul.f32 %v764, %v765
    %v767 = vsub.f32 1.0, %v766
    %v768 = vmul.f32 %v765, %v767
    %v769 = vadd.f32 %v765, %v768
    %vm770 = vweird.f32 %v764
    %vm771 = vweird.f32 %v765
    %vm772 = vmor %vm770, %vm771
    %v773 = vsel %vm772, %v765, %v769
    %v774 = vand.u32 2147483647, %v764
    %vm775 = vcmp.eq.f32.partialorder %v774, 8.507059e+37
    %v776 = vand.u32 %v764, 2147483648
    %v777 = vor.u32 1.1754944e-38, %v776
    %v778 = vsel %vm775, %v777, %v773
    %v779 = vmul.f32 %v754, %v778
    %v780 = vmin.f32 %v779, 1.0
    %v781 = vmax.f32 %v780, -1.0
    %v782 = vmul.f32 %v679, %v679
    %v783 = vmin.f32 16.0, %v782
    %v784 = vmul.f32 %v783, 2.1237322e-06
    %v785 = vadd.f32 %v784, 0.00028619796
    %v786 = vmul.f32 %v783, %v785
    %v787 = vadd.f32 %v786, 0.0036580483
    %v788 = vmul.f32 %v783, %v787
    %v789 = vadd.f32 %v788, 0.05243302
    %v790 = vmul.f32 %v783, %v789
    %v791 = vadd.f32 %v790, 0.18741608
    %v792 = vmul.f32 %v783, %v791
    %v793 = vadd.f32 %v792, 1.1283791
    %v794 = vmul.f32 %v679, %v793
    %v795 = vmul.f32 %v783, 3.8918573e-05
    %v796 = vadd.f32 %v795, 0.001143296
    %v797 = vmul.f32 %v783, %v796
    %v798 = vadd.f32 %v797, 0.014752088
    %v799 = vmul.f32 %v783, %v798
    %v800 = vadd.f32 %v799, 0.112945676
    %v801 = vmul.f32 %v783, %v800
    %v802 = vadd.f32 %v801, 0.4994258
    %v803 = vmul.f32 %v783, %v802
    %v804 = vadd.f32 %v803, 1.0
    %v805 = vrcp.pop %v804
    %v806 = vmul.f32 %v804, %v805
    %v807 = vsub.f32 1.0, %v806
    %v808 = vmul.f32 %v805, %v807
    %v809 = vadd.f32 %v805, %v808
    %vm810 = vweird.f32 %v804
    %vm811 = vweird.f32 %v805
    %vm812 = vmor %vm810, %vm811
    %v813 = vsel %vm812, %v805, %v809
    %v814 = vand.u32 2147483647, %v804
    %vm815 = vcmp.eq.f32.partialorder %v814, 8.507059e+37
    %v816 = vand.u32 %v804, 2147483648
    %v817 = vor.u32 1.1754944e-38, %v816
    %v818 = vsel %vm815, %v817, %v813
    %v819 = vmul.f32 %v794, %v818
    %v820 = vmin.f32 %v819, 1.0
    %v821 = vmax.f32 %v820, -1.0
    %v822 = vmul.f32 %v680, %v680
    %v823 = vmin.f32 16.0, %v822
    %v824 = vmul.f32 %v823, 2.1237322e-06
    %v825 = vadd.f32 %v824, 0.00028619796
    %v826 = vmul.f32 %v823, %v825
    %v827 = vadd.f32 %v826, 0.0036580483
    %v828 = vmul.f32 %v823, %v827
    %v829 = vadd.f32 %v828, 0.05243302
    %v830 = vmul.f32 %v823, %v829
    %v831 = vadd.f32 %v830, 0.18741608
    %v832 = vmul.f32 %v823, %v831
    %v833 = vadd.f32 %v832, 1.1283791
    %v834 = vmul.f32 %v680, %v833
    %v835 = vmul.f32 %v823, 3.8918573e-05
    %v836 = vadd.f32 %v835, 0.001143296
    %v837 = vmul.f32 %v823, %v836
    %v838 = vadd.f32 %v837, 0.014752088
    %v839 = vmul.f32 %v823, %v838
    %v840 = vadd.f32 %v839, 0.112945676
    %v841 = vmul.f32 %v823, %v840
    %v842 = vadd.f32 %v841, 0.4994258
    %v843 = vmul.f32 %v823, %v842
    %v844 = vadd.f32 %v843, 1.0
    %v845 = vrcp.pop %v844
    %v846 = vmul.f32 %v844, %v845
    %v847 = vsub.f32 1.0, %v846
    %v848 = vmul.f32 %v845, %v847
    %v849 = vadd.f32 %v845, %v848
    %vm850 = vweird.f32 %v844
    %vm851 = vweird.f32 %v845
    %vm852 = vmor %vm850, %vm851
    %v853 = vsel %vm852, %v845, %v849
    %v854 = vand.u32 2147483647, %v844
    %vm855 = vcmp.eq.f32.partialorder %v854, 8.507059e+37
    %v856 = vand.u32 %v844, 2147483648
    %v857 = vor.u32 1.1754944e-38, %v856
    %v858 = vsel %vm855, %v857, %v853
    %v859 = vmul.f32 %v834, %v858
    %v860 = vmin.f32 %v859, 1.0
    %v861 = vmax.f32 %v860, -1.0
    %v862 = vmul.f32 %v681, %v681
    %v863 = vmin.f32 16.0, %v862
    %v864 = vmul.f32 %v863, 2.1237322e-06
    %v865 = vadd.f32 %v864, 0.00028619796
    %v866 = vmul.f32 %v863, %v865
    %v867 = vadd.f32 %v866, 0.0036580483
    %v868 = vmul.f32 %v863, %v867
    %v869 = vadd.f32 %v868, 0.05243302
    %v870 = vmul.f32 %v863, %v869
    %v871 = vadd.f32 %v870, 0.18741608
    %v872 = vmul.f32 %v863, %v871
    %v873 = vadd.f32 %v872, 1.1283791
    %v874 = vmul.f32 %v681, %v873
    %v875 = vmul.f32 %v863, 3.8918573e-05
    %v876 = vadd.f32 %v875, 0.001143296
    %v877 = vmul.f32 %v863, %v876
    %v878 = vadd.f32 %v877, 0.014752088
    %v879 = vmul.f32 %v863, %v878
    %v880 = vadd.f32 %v879, 0.112945676
    %v881 = vmul.f32 %v863, %v880
    %v882 = vadd.f32 %v881, 0.4994258
    %v883 = vmul.f32 %v863, %v882
    %v884 = vadd.f32 %v883, 1.0
    %v885 = vrcp.pop %v884
    %v886 = vmul.f32 %v884, %v885
    %v887 = vsub.f32 1.0, %v886
    %v888 = vmul.f32 %v885, %v887
    %v889 = vadd.f32 %v885, %v888
    %vm890 = vweird.f32 %v884
    %vm891 = vweird.f32 %v885
    %vm892 = vmor %vm890, %vm891
    %v893 = vsel %vm892, %v885, %v889
    %v894 = vand.u32 2147483647, %v884
    %vm895 = vcmp.eq.f32.partialorder %v894, 8.507059e+37
    %v896 = vand.u32 %v884, 2147483648
    %v897 = vor.u32 1.1754944e-38, %v896
    %v898 = vsel %vm895, %v897, %v893
    %v899 = vmul.f32 %v874, %v898
    %v900 = vmin.f32 %v899, 1.0
    %v901 = vmax.f32 %v900, -1.0
    %v902 = vmul.f32 %v682, %v682
    %v903 = vmin.f32 16.0, %v902
    %v904 = vmul.f32 %v903, 2.1237322e-06
    %v905 = vadd.f32 %v904, 0.00028619796
    %v906 = vmul.f32 %v903, %v905
    %v907 = vadd.f32 %v906, 0.0036580483
    %v908 = vmul.f32 %v903, %v907
    %v909 = vadd.f32 %v908, 0.05243302
    %v910 = vmul.f32 %v903, %v909
    %v911 = vadd.f32 %v910, 0.18741608
    %v912 = vmul.f32 %v903, %v911
    %v913 = vadd.f32 %v912, 1.1283791
    %v914 = vmul.f32 %v682, %v913
    %v915 = vmul.f32 %v903, 3.8918573e-05
    %v916 = vadd.f32 %v915, 0.001143296
    %v917 = vmul.f32 %v903, %v916
    %v918 = vadd.f32 %v917, 0.014752088
    %v919 = vmul.f32 %v903, %v918
    %v920 = vadd.f32 %v919, 0.112945676
    %v921 = vmul.f32 %v903, %v920
    %v922 = vadd.f32 %v921, 0.4994258
    %v923 = vmul.f32 %v903, %v922
    %v924 = vadd.f32 %v923, 1.0
    %v925 = vrcp.pop %v924
    %v926 = vmul.f32 %v924, %v925
    %v927 = vsub.f32 1.0, %v926
    %v928 = vmul.f32 %v925, %v927
    %v929 = vadd.f32 %v925, %v928
    %vm930 = vweird.f32 %v924
    %vm931 = vweird.f32 %v925
    %vm932 = vmor %vm930, %vm931
    %v933 = vsel %vm932, %v925, %v929
    %v934 = vand.u32 2147483647, %v924
    %vm935 = vcmp.eq.f32.partialorder %v934, 8.507059e+37
    %v936 = vand.u32 %v924, 2147483648
    %v937 = vor.u32 1.1754944e-38, %v936
    %v938 = vsel %vm935, %v937, %v933
    %v939 = vmul.f32 %v914, %v938
    %v940 = vmin.f32 %v939, 1.0
    %v941 = vmax.f32 %v940, -1.0
    %v942 = vmul.f32 %v683, %v683
    %v943 = vmin.f32 16.0, %v942
    %v944 = vmul.f32 %v943, 2.1237322e-06
    %v945 = vadd.f32 %v944, 0.00028619796
    %v946 = vmul.f32 %v943, %v945
    %v947 = vadd.f32 %v946, 0.0036580483
    %v948 = vmul.f32 %v943, %v947
    %v949 = vadd.f32 %v948, 0.05243302
    %v950 = vmul.f32 %v943, %v949
    %v951 = vadd.f32 %v950, 0.18741608
    %v952 = vmul.f32 %v943, %v951
    %v953 = vadd.f32 %v952, 1.1283791
    %v954 = vmul.f32 %v683, %v953
    %v955 = vmul.f32 %v943, 3.8918573e-05
    %v956 = vadd.f32 %v955, 0.001143296
    %v957 = vmul.f32 %v943, %v956
    %v958 = vadd.f32 %v957, 0.014752088
    %v959 = vmul.f32 %v943, %v958
    %v960 = vadd.f32 %v959, 0.112945676
    %v961 = vmul.f32 %v943, %v960
    %v962 = vadd.f32 %v961, 0.4994258
    %v963 = vmul.f32 %v943, %v962
    %v964 = vadd.f32 %v963, 1.0
    %v965 = vrcp.pop %v964
    %v966 = vmul.f32 %v964, %v965
    %v967 = vsub.f32 1.0, %v966
    %v968 = vmul.f32 %v965, %v967
    %v969 = vadd.f32 %v965, %v968
    %vm970 = vweird.f32 %v964
    %vm971 = vweird.f32 %v965
    %vm972 = vmor %vm970, %vm971
    %v973 = vsel %vm972, %v965, %v969
    %v974 = vand.u32 2147483647, %v964
    %vm975 = vcmp.eq.f32.partialorder %v974, 8.507059e+37
    %v976 = vand.u32 %v964, 2147483648
    %v977 = vor.u32 1.1754944e-38, %v976
    %v978 = vsel %vm975, %v977, %v973
    %v979 = vmul.f32 %v954, %v978
    %v980 = vmin.f32 %v979, 1.0
    %v981 = vmax.f32 %v980, -1.0
    %v982 = vmul.f32 %v684, %v684
    %v983 = vmin.f32 16.0, %v982
    %v984 = vmul.f32 %v983, 2.1237322e-06
    %v985 = vadd.f32 %v984, 0.00028619796
    %v986 = vmul.f32 %v983, %v985
    %v987 = vadd.f32 %v986, 0.0036580483
    %v988 = vmul.f32 %v983, %v987
    %v989 = vadd.f32 %v988, 0.05243302
    %v990 = vmul.f32 %v983, %v989
    %v991 = vadd.f32 %v990, 0.18741608
    %v992 = vmul.f32 %v983, %v991
    %v993 = vadd.f32 %v992, 1.1283791
    %v994 = vmul.f32 %v684, %v993
    %v995 = vmul.f32 %v983, 3.8918573e-05
    %v996 = vadd.f32 %v995, 0.001143296
    %v997 = vmul.f32 %v983, %v996
    %v998 = vadd.f32 %v997, 0.014752088
    %v999 = vmul.f32 %v983, %v998
    %v1000 = vadd.f32 %v999, 0.112945676
    %v1001 = vmul.f32 %v983, %v1000
    %v1002 = vadd.f32 %v1001, 0.4994258
    %v1003 = vmul.f32 %v983, %v1002
    %v1004 = vadd.f32 %v1003, 1.0
    %v1005 = vrcp.pop %v1004
    %v1006 = vmul.f32 %v1004, %v1005
    %v1007 = vsub.f32 1.0, %v1006
    %v1008 = vmul.f32 %v1005, %v1007
    %v1009 = vadd.f32 %v1005, %v1008
    %vm1010 = vweird.f32 %v1004
    %vm1011 = vweird.f32 %v1005
    %vm1012 = vmor %vm1010, %vm1011
    %v1013 = vsel %vm1012, %v1005, %v1009
    %v1014 = vand.u32 2147483647, %v1004
    %vm1015 = vcmp.eq.f32.partialorder %v1014, 8.507059e+37
    %v1016 = vand.u32 %v1004, 2147483648
    %v1017 = vor.u32 1.1754944e-38, %v1016
    %v1018 = vsel %vm1015, %v1017, %v1013
    %v1019 = vmul.f32 %v994, %v1018
    %v1020 = vmin.f32 %v1019, 1.0
    %v1021 = vmax.f32 %v1020, -1.0
    %v1022 = vmul.f32 %v685, %v685
    %v1023 = vmin.f32 16.0, %v1022
    %v1024 = vmul.f32 %v1023, 2.1237322e-06
    %v1025 = vadd.f32 %v1024, 0.00028619796
    %v1026 = vmul.f32 %v1023, %v1025
    %v1027 = vadd.f32 %v1026, 0.0036580483
    %v1028 = vmul.f32 %v1023, %v1027
    %v1029 = vadd.f32 %v1028, 0.05243302
    %v1030 = vmul.f32 %v1023, %v1029
    %v1031 = vadd.f32 %v1030, 0.18741608
    %v1032 = vmul.f32 %v1023, %v1031
    %v1033 = vadd.f32 %v1032, 1.1283791
    %v1034 = vmul.f32 %v685, %v1033
    %v1035 = vmul.f32 %v1023, 3.8918573e-05
    %v1036 = vadd.f32 %v1035, 0.001143296
    %v1037 = vmul.f32 %v1023, %v1036
    %v1038 = vadd.f32 %v1037, 0.014752088
    %v1039 = vmul.f32 %v1023, %v1038
    %v1040 = vadd.f32 %v1039, 0.112945676
    %v1041 = vmul.f32 %v1023, %v1040
    %v1042 = vadd.f32 %v1041, 0.4994258
    %v1043 = vmul.f32 %v1023, %v1042
    %v1044 = vadd.f32 %v1043, 1.0
    %v1045 = vrcp.pop %v1044
    %v1046 = vmul.f32 %v1044, %v1045
    %v1047 = vsub.f32 1.0, %v1046
    %v1048 = vmul.f32 %v1045, %v1047
    %v1049 = vadd.f32 %v1045, %v1048
    %vm1050 = vweird.f32 %v1044
    %vm1051 = vweird.f32 %v1045
    %vm1052 = vmor %vm1050, %vm1051
    %v1053 = vsel %vm1052, %v1045, %v1049
    %v1054 = vand.u32 2147483647, %v1044
    %vm1055 = vcmp.eq.f32.partialorder %v1054, 8.507059e+37
    %v1056 = vand.u32 %v1044, 2147483648
    %v1057 = vor.u32 1.1754944e-38, %v1056
    %v1058 = vsel %vm1055, %v1057, %v1053
    %v1059 = vmul.f32 %v1034, %v1058
    %v1060 = vmin.f32 %v1059, 1.0
    %v1061 = vmax.f32 %v1060, -1.0
    %v1062 = vmul.f32 %v686, %v686
    %v1063 = vmin.f32 16.0, %v1062
    %v1064 = vmul.f32 %v1063, 2.1237322e-06
    %v1065 = vadd.f32 %v1064, 0.00028619796
    %v1066 = vmul.f32 %v1063, %v1065
    %v1067 = vadd.f32 %v1066, 0.0036580483
    %v1068 = vmul.f32 %v1063, %v1067
    %v1069 = vadd.f32 %v1068, 0.05243302
    %v1070 = vmul.f32 %v1063, %v1069
    %v1071 = vadd.f32 %v1070, 0.18741608
    %v1072 = vmul.f32 %v1063, %v1071
    %v1073 = vadd.f32 %v1072, 1.1283791
    %v1074 = vmul.f32 %v686, %v1073
    %v1075 = vmul.f32 %v1063, 3.8918573e-05
    %v1076 = vadd.f32 %v1075, 0.001143296
    %v1077 = vmul.f32 %v1063, %v1076
    %v1078 = vadd.f32 %v1077, 0.014752088
    %v1079 = vmul.f32 %v1063, %v1078
    %v1080 = vadd.f32 %v1079, 0.112945676
    %v1081 = vmul.f32 %v1063, %v1080
    %v1082 = vadd.f32 %v1081, 0.4994258
    %v1083 = vmul.f32 %v1063, %v1082
    %v1084 = vadd.f32 %v1083, 1.0
    %v1085 = vrcp.pop %v1084
    %v1086 = vmul.f32 %v1084, %v1085
    %v1087 = vsub.f32 1.0, %v1086
    %v1088 = vmul.f32 %v1085, %v1087
    %v1089 = vadd.f32 %v1085, %v1088
    %vm1090 = vweird.f32 %v1084
    %vm1091 = vweird.f32 %v1085
    %vm1092 = vmor %vm1090, %vm1091
    %v1093 = vsel %vm1092, %v1085, %v1089
    %v1094 = vand.u32 2147483647, %v1084
    %vm1095 = vcmp.eq.f32.partialorder %v1094, 8.507059e+37
    %v1096 = vand.u32 %v1084, 2147483648
    %v1097 = vor.u32 1.1754944e-38, %v1096
    %v1098 = vsel %vm1095, %v1097, %v1093
    %v1099 = vmul.f32 %v1074, %v1098
    %v1100 = vmin.f32 %v1099, 1.0
    %v1101 = vmax.f32 %v1100, -1.0
    %v1102 = vmul.f32 %v687, %v687
    %v1103 = vmin.f32 16.0, %v1102
    %v1104 = vmul.f32 %v1103, 2.1237322e-06
    %v1105 = vadd.f32 %v1104, 0.00028619796
    %v1106 = vmul.f32 %v1103, %v1105
    %v1107 = vadd.f32 %v1106, 0.0036580483
    %v1108 = vmul.f32 %v1103, %v1107
    %v1109 = vadd.f32 %v1108, 0.05243302
    %v1110 = vmul.f32 %v1103, %v1109
    %v1111 = vadd.f32 %v1110, 0.18741608
    %v1112 = vmul.f32 %v1103, %v1111
    %v1113 = vadd.f32 %v1112, 1.1283791
    %v1114 = vmul.f32 %v687, %v1113
    %v1115 = vmul.f32 %v1103, 3.8918573e-05
    %v1116 = vadd.f32 %v1115, 0.001143296
    %v1117 = vmul.f32 %v1103, %v1116
    %v1118 = vadd.f32 %v1117, 0.014752088
    %v1119 = vmul.f32 %v1103, %v1118
    %v1120 = vadd.f32 %v1119, 0.112945676
    %v1121 = vmul.f32 %v1103, %v1120
    %v1122 = vadd.f32 %v1121, 0.4994258
    %v1123 = vmul.f32 %v1103, %v1122
    %v1124 = vadd.f32 %v1123, 1.0
    %v1125 = vrcp.pop %v1124
    %v1126 = vmul.f32 %v1124, %v1125
    %v1127 = vsub.f32 1.0, %v1126
    %v1128 = vmul.f32 %v1125, %v1127
    %v1129 = vadd.f32 %v1125, %v1128
    %vm1130 = vweird.f32 %v1124
    %vm1131 = vweird.f32 %v1125
    %vm1132 = vmor %vm1130, %vm1131
    %v1133 = vsel %vm1132, %v1125, %v1129
    %v1134 = vand.u32 2147483647, %v1124
    %vm1135 = vcmp.eq.f32.partialorder %v1134, 8.507059e+37
    %v1136 = vand.u32 %v1124, 2147483648
    %v1137 = vor.u32 1.1754944e-38, %v1136
    %v1138 = vsel %vm1135, %v1137, %v1133
    %v1139 = vmul.f32 %v1114, %v1138
    %v1140 = vmin.f32 %v1139, 1.0
    %v1141 = vmax.f32 %v1140, -1.0
    %v1142 = vmul.f32 %v688, %v688
    %v1143 = vmin.f32 16.0, %v1142
    %v1144 = vmul.f32 %v1143, 2.1237322e-06
    %v1145 = vadd.f32 %v1144, 0.00028619796
    %v1146 = vmul.f32 %v1143, %v1145
    %v1147 = vadd.f32 %v1146, 0.0036580483
    %v1148 = vmul.f32 %v1143, %v1147
    %v1149 = vadd.f32 %v1148, 0.05243302
    %v1150 = vmul.f32 %v1143, %v1149
    %v1151 = vadd.f32 %v1150, 0.18741608
    %v1152 = vmul.f32 %v1143, %v1151
    %v1153 = vadd.f32 %v1152, 1.1283791
    %v1154 = vmul.f32 %v688, %v1153
    %v1155 = vmul.f32 %v1143, 3.8918573e-05
    %v1156 = vadd.f32 %v1155, 0.001143296
    %v1157 = vmul.f32 %v1143, %v1156
    %v1158 = vadd.f32 %v1157, 0.014752088
    %v1159 = vmul.f32 %v1143, %v1158
    %v1160 = vadd.f32 %v1159, 0.112945676
    %v1161 = vmul.f32 %v1143, %v1160
    %v1162 = vadd.f32 %v1161, 0.4994258
    %v1163 = vmul.f32 %v1143, %v1162
    %v1164 = vadd.f32 %v1163, 1.0
    %v1165 = vrcp.pop %v1164
    %v1166 = vmul.f32 %v1164, %v1165
    %v1167 = vsub.f32 1.0, %v1166
    %v1168 = vmul.f32 %v1165, %v1167
    %v1169 = vadd.f32 %v1165, %v1168
    %vm1170 = vweird.f32 %v1164
    %vm1171 = vweird.f32 %v1165
    %vm1172 = vmor %vm1170, %vm1171
    %v1173 = vsel %vm1172, %v1165, %v1169
    %v1174 = vand.u32 2147483647, %v1164
    %vm1175 = vcmp.eq.f32.partialorder %v1174, 8.507059e+37
    %v1176 = vand.u32 %v1164, 2147483648
    %v1177 = vor.u32 1.1754944e-38, %v1176
    %v1178 = vsel %vm1175, %v1177, %v1173
    %v1179 = vmul.f32 %v1154, %v1178
    %v1180 = vmin.f32 %v1179, 1.0
    %v1181 = vmax.f32 %v1180, -1.0
    %v1182 = vmul.f32 %v689, %v689
    %v1183 = vmin.f32 16.0, %v1182
    %v1184 = vmul.f32 %v1183, 2.1237322e-06
    %v1185 = vadd.f32 %v1184, 0.00028619796
    %v1186 = vmul.f32 %v1183, %v1185
    %v1187 = vadd.f32 %v1186, 0.0036580483
    %v1188 = vmul.f32 %v1183, %v1187
    %v1189 = vadd.f32 %v1188, 0.05243302
    %v1190 = vmul.f32 %v1183, %v1189
    %v1191 = vadd.f32 %v1190, 0.18741608
    %v1192 = vmul.f32 %v1183, %v1191
    %v1193 = vadd.f32 %v1192, 1.1283791
    %v1194 = vmul.f32 %v689, %v1193
    %v1195 = vmul.f32 %v1183, 3.8918573e-05
    %v1196 = vadd.f32 %v1195, 0.001143296
    %v1197 = vmul.f32 %v1183, %v1196
    %v1198 = vadd.f32 %v1197, 0.014752088
    %v1199 = vmul.f32 %v1183, %v1198
    %v1200 = vadd.f32 %v1199, 0.112945676
    %v1201 = vmul.f32 %v1183, %v1200
    %v1202 = vadd.f32 %v1201, 0.4994258
    %v1203 = vmul.f32 %v1183, %v1202
    %v1204 = vadd.f32 %v1203, 1.0
    %v1205 = vrcp.pop %v1204
    %v1206 = vmul.f32 %v1204, %v1205
    %v1207 = vsub.f32 1.0, %v1206
    %v1208 = vmul.f32 %v1205, %v1207
    %v1209 = vadd.f32 %v1205, %v1208
    %vm1210 = vweird.f32 %v1204
    %vm1211 = vweird.f32 %v1205
    %vm1212 = vmor %vm1210, %vm1211
    %v1213 = vsel %vm1212, %v1205, %v1209
    %v1214 = vand.u32 2147483647, %v1204
    %vm1215 = vcmp.eq.f32.partialorder %v1214, 8.507059e+37
    %v1216 = vand.u32 %v1204, 2147483648
    %v1217 = vor.u32 1.1754944e-38, %v1216
    %v1218 = vsel %vm1215, %v1217, %v1213
    %v1219 = vmul.f32 %v1194, %v1218
    %v1220 = vmin.f32 %v1219, 1.0
    %v1221 = vmax.f32 %v1220, -1.0
    %v1222 = vmul.f32 %v690, %v690
    %v1223 = vmin.f32 16.0, %v1222
    %v1224 = vmul.f32 %v1223, 2.1237322e-06
    %v1225 = vadd.f32 %v1224, 0.00028619796
    %v1226 = vmul.f32 %v1223, %v1225
    %v1227 = vadd.f32 %v1226, 0.0036580483
    %v1228 = vmul.f32 %v1223, %v1227
    %v1229 = vadd.f32 %v1228, 0.05243302
    %v1230 = vmul.f32 %v1223, %v1229
    %v1231 = vadd.f32 %v1230, 0.18741608
    %v1232 = vmul.f32 %v1223, %v1231
    %v1233 = vadd.f32 %v1232, 1.1283791
    %v1234 = vmul.f32 %v690, %v1233
    %v1235 = vmul.f32 %v1223, 3.8918573e-05
    %v1236 = vadd.f32 %v1235, 0.001143296
    %v1237 = vmul.f32 %v1223, %v1236
    %v1238 = vadd.f32 %v1237, 0.014752088
    %v1239 = vmul.f32 %v1223, %v1238
    %v1240 = vadd.f32 %v1239, 0.112945676
    %v1241 = vmul.f32 %v1223, %v1240
    %v1242 = vadd.f32 %v1241, 0.4994258
    %v1243 = vmul.f32 %v1223, %v1242
    %v1244 = vadd.f32 %v1243, 1.0
    %v1245 = vrcp.pop %v1244
    %v1246 = vmul.f32 %v1244, %v1245
    %v1247 = vsub.f32 1.0, %v1246
    %v1248 = vmul.f32 %v1245, %v1247
    %v1249 = vadd.f32 %v1245, %v1248
    %vm1250 = vweird.f32 %v1244
    %vm1251 = vweird.f32 %v1245
    %vm1252 = vmor %vm1250, %vm1251
    %v1253 = vsel %vm1252, %v1245, %v1249
    %v1254 = vand.u32 2147483647, %v1244
    %vm1255 = vcmp.eq.f32.partialorder %v1254, 8.507059e+37
    %v1256 = vand.u32 %v1244, 2147483648
    %v1257 = vor.u32 1.1754944e-38, %v1256
    %v1258 = vsel %vm1255, %v1257, %v1253
    %v1259 = vmul.f32 %v1234, %v1258
    %v1260 = vmin.f32 %v1259, 1.0
    %v1261 = vmax.f32 %v1260, -1.0
    %v1262 = vmul.f32 %v691, %v691
    %v1263 = vmin.f32 16.0, %v1262
    %v1264 = vmul.f32 %v1263, 2.1237322e-06
    %v1265 = vadd.f32 %v1264, 0.00028619796
    %v1266 = vmul.f32 %v1263, %v1265
    %v1267 = vadd.f32 %v1266, 0.0036580483
    %v1268 = vmul.f32 %v1263, %v1267
    %v1269 = vadd.f32 %v1268, 0.05243302
    %v1270 = vmul.f32 %v1263, %v1269
    %v1271 = vadd.f32 %v1270, 0.18741608
    %v1272 = vmul.f32 %v1263, %v1271
    %v1273 = vadd.f32 %v1272, 1.1283791
    %v1274 = vmul.f32 %v691, %v1273
    %v1275 = vmul.f32 %v1263, 3.8918573e-05
    %v1276 = vadd.f32 %v1275, 0.001143296
    %v1277 = vmul.f32 %v1263, %v1276
    %v1278 = vadd.f32 %v1277, 0.014752088
    %v1279 = vmul.f32 %v1263, %v1278
    %v1280 = vadd.f32 %v1279, 0.112945676
    %v1281 = vmul.f32 %v1263, %v1280
    %v1282 = vadd.f32 %v1281, 0.4994258
    %v1283 = vmul.f32 %v1263, %v1282
    %v1284 = vadd.f32 %v1283, 1.0
    %v1285 = vrcp.pop %v1284
    %v1286 = vmul.f32 %v1284, %v1285
    %v1287 = vsub.f32 1.0, %v1286
    %v1288 = vmul.f32 %v1285, %v1287
    %v1289 = vadd.f32 %v1285, %v1288
    %vm1290 = vweird.f32 %v1284
    %vm1291 = vweird.f32 %v1285
    %vm1292 = vmor %vm1290, %vm1291
    %v1293 = vsel %vm1292, %v1285, %v1289
    %v1294 = vand.u32 2147483647, %v1284
    %vm1295 = vcmp.eq.f32.partialorder %v1294, 8.507059e+37
    %v1296 = vand.u32 %v1284, 2147483648
    %v1297 = vor.u32 1.1754944e-38, %v1296
    %v1298 = vsel %vm1295, %v1297, %v1293
    %v1299 = vmul.f32 %v1274, %v1298
    %v1300 = vmin.f32 %v1299, 1.0
    %v1301 = vmax.f32 %v1300, -1.0
    %v1302 = vmul.f32 %v692, %v692
    %v1303 = vmin.f32 16.0, %v1302
    %v1304 = vmul.f32 %v1303, 2.1237322e-06
    %v1305 = vadd.f32 %v1304, 0.00028619796
    %v1306 = vmul.f32 %v1303, %v1305
    %v1307 = vadd.f32 %v1306, 0.0036580483
    %v1308 = vmul.f32 %v1303, %v1307
    %v1309 = vadd.f32 %v1308, 0.05243302
    %v1310 = vmul.f32 %v1303, %v1309
    %v1311 = vadd.f32 %v1310, 0.18741608
    %v1312 = vmul.f32 %v1303, %v1311
    %v1313 = vadd.f32 %v1312, 1.1283791
    %v1314 = vmul.f32 %v692, %v1313
    %v1315 = vmul.f32 %v1303, 3.8918573e-05
    %v1316 = vadd.f32 %v1315, 0.001143296
    %v1317 = vmul.f32 %v1303, %v1316
    %v1318 = vadd.f32 %v1317, 0.014752088
    %v1319 = vmul.f32 %v1303, %v1318
    %v1320 = vadd.f32 %v1319, 0.112945676
    %v1321 = vmul.f32 %v1303, %v1320
    %v1322 = vadd.f32 %v1321, 0.4994258
    %v1323 = vmul.f32 %v1303, %v1322
    %v1324 = vadd.f32 %v1323, 1.0
    %v1325 = vrcp.pop %v1324
    %v1326 = vmul.f32 %v1324, %v1325
    %v1327 = vsub.f32 1.0, %v1326
    %v1328 = vmul.f32 %v1325, %v1327
    %v1329 = vadd.f32 %v1325, %v1328
    %vm1330 = vweird.f32 %v1324
    %vm1331 = vweird.f32 %v1325
    %vm1332 = vmor %vm1330, %vm1331
    %v1333 = vsel %vm1332, %v1325, %v1329
    %v1334 = vand.u32 2147483647, %v1324
    %vm1335 = vcmp.eq.f32.partialorder %v1334, 8.507059e+37
    %v1336 = vand.u32 %v1324, 2147483648
    %v1337 = vor.u32 1.1754944e-38, %v1336
    %v1338 = vsel %vm1335, %v1337, %v1333
    %v1339 = vmul.f32 %v1314, %v1338
    %v1340 = vmin.f32 %v1339, 1.0
    %v1341 = vmax.f32 %v1340, -1.0
    %v1342 = vmul.f32 %v693, %v693
    %v1343 = vmin.f32 16.0, %v1342
    %v1344 = vmul.f32 %v1343, 2.1237322e-06
    %v1345 = vadd.f32 %v1344, 0.00028619796
    %v1346 = vmul.f32 %v1343, %v1345
    %v1347 = vadd.f32 %v1346, 0.0036580483
    %v1348 = vmul.f32 %v1343, %v1347
    %v1349 = vadd.f32 %v1348, 0.05243302
    %v1350 = vmul.f32 %v1343, %v1349
    %v1351 = vadd.f32 %v1350, 0.18741608
    %v1352 = vmul.f32 %v1343, %v1351
    %v1353 = vadd.f32 %v1352, 1.1283791
    %v1354 = vmul.f32 %v693, %v1353
    %v1355 = vmul.f32 %v1343, 3.8918573e-05
    %v1356 = vadd.f32 %v1355, 0.001143296
    %v1357 = vmul.f32 %v1343, %v1356
    %v1358 = vadd.f32 %v1357, 0.014752088
    %v1359 = vmul.f32 %v1343, %v1358
    %v1360 = vadd.f32 %v1359, 0.112945676
    %v1361 = vmul.f32 %v1343, %v1360
    %v1362 = vadd.f32 %v1361, 0.4994258
    %v1363 = vmul.f32 %v1343, %v1362
    %v1364 = vadd.f32 %v1363, 1.0
    %v1365 = vrcp.pop %v1364
    %v1366 = vmul.f32 %v1364, %v1365
    %v1367 = vsub.f32 1.0, %v1366
    %v1368 = vmul.f32 %v1365, %v1367
    %v1369 = vadd.f32 %v1365, %v1368
    %vm1370 = vweird.f32 %v1364
    %vm1371 = vweird.f32 %v1365
    %vm1372 = vmor %vm1370, %vm1371
    %v1373 = vsel %vm1372, %v1365, %v1369
    %v1374 = vand.u32 2147483647, %v1364
    %vm1375 = vcmp.eq.f32.partialorder %v1374, 8.507059e+37
    %v1376 = vand.u32 %v1364, 2147483648
    %v1377 = vor.u32 1.1754944e-38, %v1376
    %v1378 = vsel %vm1375, %v1377, %v1373
    %v1379 = vmul.f32 %v1354, %v1378
    %v1380 = vmin.f32 %v1379, 1.0
    %v1381 = vmax.f32 %v1380, -1.0
    %v1382 = vmul.f32 %v694, %v694
    %v1383 = vmin.f32 16.0, %v1382
    %v1384 = vmul.f32 %v1383, 2.1237322e-06
    %v1385 = vadd.f32 %v1384, 0.00028619796
    %v1386 = vmul.f32 %v1383, %v1385
    %v1387 = vadd.f32 %v1386, 0.0036580483
    %v1388 = vmul.f32 %v1383, %v1387
    %v1389 = vadd.f32 %v1388, 0.05243302
    %v1390 = vmul.f32 %v1383, %v1389
    %v1391 = vadd.f32 %v1390, 0.18741608
    %v1392 = vmul.f32 %v1383, %v1391
    %v1393 = vadd.f32 %v1392, 1.1283791
    %v1394 = vmul.f32 %v694, %v1393
    %v1395 = vmul.f32 %v1383, 3.8918573e-05
    %v1396 = vadd.f32 %v1395, 0.001143296
    %v1397 = vmul.f32 %v1383, %v1396
    %v1398 = vadd.f32 %v1397, 0.014752088
    %v1399 = vmul.f32 %v1383, %v1398
    %v1400 = vadd.f32 %v1399, 0.112945676
    %v1401 = vmul.f32 %v1383, %v1400
    %v1402 = vadd.f32 %v1401, 0.4994258
    %v1403 = vmul.f32 %v1383, %v1402
    %v1404 = vadd.f32 %v1403, 1.0
    %v1405 = vrcp.pop %v1404
    %v1406 = vmul.f32 %v1404, %v1405
    %v1407 = vsub.f32 1.0, %v1406
    %v1408 = vmul.f32 %v1405, %v1407
    %v1409 = vadd.f32 %v1405, %v1408
    %vm1410 = vweird.f32 %v1404
    %vm1411 = vweird.f32 %v1405
    %vm1412 = vmor %vm1410, %vm1411
    %v1413 = vsel %vm1412, %v1405, %v1409
    %v1414 = vand.u32 2147483647, %v1404
    %vm1415 = vcmp.eq.f32.partialorder %v1414, 8.507059e+37
    %v1416 = vand.u32 %v1404, 2147483648
    %v1417 = vor.u32 1.1754944e-38, %v1416
    %v1418 = vsel %vm1415, %v1417, %v1413
    %v1419 = vmul.f32 %v1394, %v1418
    %v1420 = vmin.f32 %v1419, 1.0
    %v1421 = vmax.f32 %v1420, -1.0
    %v1422 = vmul.f32 %v695, %v695
    %v1423 = vmin.f32 16.0, %v1422
    %v1424 = vmul.f32 %v1423, 2.1237322e-06
    %v1425 = vadd.f32 %v1424, 0.00028619796
    %v1426 = vmul.f32 %v1423, %v1425
    %v1427 = vadd.f32 %v1426, 0.0036580483
    %v1428 = vmul.f32 %v1423, %v1427
    %v1429 = vadd.f32 %v1428, 0.05243302
    %v1430 = vmul.f32 %v1423, %v1429
    %v1431 = vadd.f32 %v1430, 0.18741608
    %v1432 = vmul.f32 %v1423, %v1431
    %v1433 = vadd.f32 %v1432, 1.1283791
    %v1434 = vmul.f32 %v695, %v1433
    %v1435 = vmul.f32 %v1423, 3.8918573e-05
    %v1436 = vadd.f32 %v1435, 0.001143296
    %v1437 = vmul.f32 %v1423, %v1436
    %v1438 = vadd.f32 %v1437, 0.014752088
    %v1439 = vmul.f32 %v1423, %v1438
    %v1440 = vadd.f32 %v1439, 0.112945676
    %v1441 = vmul.f32 %v1423, %v1440
    %v1442 = vadd.f32 %v1441, 0.4994258
    %v1443 = vmul.f32 %v1423, %v1442
    %v1444 = vadd.f32 %v1443, 1.0
    %v1445 = vrcp.pop %v1444
    %v1446 = vmul.f32 %v1444, %v1445
    %v1447 = vsub.f32 1.0, %v1446
    %v1448 = vmul.f32 %v1445, %v1447
    %v1449 = vadd.f32 %v1445, %v1448
    %vm1450 = vweird.f32 %v1444
    %vm1451 = vweird.f32 %v1445
    %vm1452 = vmor %vm1450, %vm1451
    %v1453 = vsel %vm1452, %v1445, %v1449
    %v1454 = vand.u32 2147483647, %v1444
    %vm1455 = vcmp.eq.f32.partialorder %v1454, 8.507059e+37
    %v1456 = vand.u32 %v1444, 2147483648
    %v1457 = vor.u32 1.1754944e-38, %v1456
    %v1458 = vsel %vm1455, %v1457, %v1453
    %v1459 = vmul.f32 %v1434, %v1458
    %v1460 = vmin.f32 %v1459, 1.0
    %v1461 = vmax.f32 %v1460, -1.0
    %v1462 = vmul.f32 %v696, %v696
    %v1463 = vmin.f32 16.0, %v1462
    %v1464 = vmul.f32 %v1463, 2.1237322e-06
    %v1465 = vadd.f32 %v1464, 0.00028619796
    %v1466 = vmul.f32 %v1463, %v1465
    %v1467 = vadd.f32 %v1466, 0.0036580483
    %v1468 = vmul.f32 %v1463, %v1467
    %v1469 = vadd.f32 %v1468, 0.05243302
    %v1470 = vmul.f32 %v1463, %v1469
    %v1471 = vadd.f32 %v1470, 0.18741608
    %v1472 = vmul.f32 %v1463, %v1471
    %v1473 = vadd.f32 %v1472, 1.1283791
    %v1474 = vmul.f32 %v696, %v1473
    %v1475 = vmul.f32 %v1463, 3.8918573e-05
    %v1476 = vadd.f32 %v1475, 0.001143296
    %v1477 = vmul.f32 %v1463, %v1476
    %v1478 = vadd.f32 %v1477, 0.014752088
    %v1479 = vmul.f32 %v1463, %v1478
    %v1480 = vadd.f32 %v1479, 0.112945676
    %v1481 = vmul.f32 %v1463, %v1480
    %v1482 = vadd.f32 %v1481, 0.4994258
    %v1483 = vmul.f32 %v1463, %v1482
    %v1484 = vadd.f32 %v1483, 1.0
    %v1485 = vrcp.pop %v1484
    %v1486 = vmul.f32 %v1484, %v1485
    %v1487 = vsub.f32 1.0, %v1486
    %v1488 = vmul.f32 %v1485, %v1487
    %v1489 = vadd.f32 %v1485, %v1488
    %vm1490 = vweird.f32 %v1484
    %vm1491 = vweird.f32 %v1485
    %vm1492 = vmor %vm1490, %vm1491
    %v1493 = vsel %vm1492, %v1485, %v1489
    %v1494 = vand.u32 2147483647, %v1484
    %vm1495 = vcmp.eq.f32.partialorder %v1494, 8.507059e+37
    %v1496 = vand.u32 %v1484, 2147483648
    %v1497 = vor.u32 1.1754944e-38, %v1496
    %v1498 = vsel %vm1495, %v1497, %v1493
    %v1499 = vmul.f32 %v1474, %v1498
    %v1500 = vmin.f32 %v1499, 1.0
    %v1501 = vmax.f32 %v1500, -1.0
    %v1502 = vmul.f32 %v697, %v697
    %v1503 = vmin.f32 16.0, %v1502
    %v1504 = vmul.f32 %v1503, 2.1237322e-06
    %v1505 = vadd.f32 %v1504, 0.00028619796
    %v1506 = vmul.f32 %v1503, %v1505
    %v1507 = vadd.f32 %v1506, 0.0036580483
    %v1508 = vmul.f32 %v1503, %v1507
    %v1509 = vadd.f32 %v1508, 0.05243302
    %v1510 = vmul.f32 %v1503, %v1509
    %v1511 = vadd.f32 %v1510, 0.18741608
    %v1512 = vmul.f32 %v1503, %v1511
    %v1513 = vadd.f32 %v1512, 1.1283791
    %v1514 = vmul.f32 %v697, %v1513
    %v1515 = vmul.f32 %v1503, 3.8918573e-05
    %v1516 = vadd.f32 %v1515, 0.001143296
    %v1517 = vmul.f32 %v1503, %v1516
    %v1518 = vadd.f32 %v1517, 0.014752088
    %v1519 = vmul.f32 %v1503, %v1518
    %v1520 = vadd.f32 %v1519, 0.112945676
    %v1521 = vmul.f32 %v1503, %v1520
    %v1522 = vadd.f32 %v1521, 0.4994258
    %v1523 = vmul.f32 %v1503, %v1522
    %v1524 = vadd.f32 %v1523, 1.0
    %v1525 = vrcp.pop %v1524
    %v1526 = vmul.f32 %v1524, %v1525
    %v1527 = vsub.f32 1.0, %v1526
    %v1528 = vmul.f32 %v1525, %v1527
    %v1529 = vadd.f32 %v1525, %v1528
    %vm1530 = vweird.f32 %v1524
    %vm1531 = vweird.f32 %v1525
    %vm1532 = vmor %vm1530, %vm1531
    %v1533 = vsel %vm1532, %v1525, %v1529
    %v1534 = vand.u32 2147483647, %v1524
    %vm1535 = vcmp.eq.f32.partialorder %v1534, 8.507059e+37
    %v1536 = vand.u32 %v1524, 2147483648
    %v1537 = vor.u32 1.1754944e-38, %v1536
    %v1538 = vsel %vm1535, %v1537, %v1533
    %v1539 = vmul.f32 %v1514, %v1538
    %v1540 = vmin.f32 %v1539, 1.0
    %v1541 = vmax.f32 %v1540, -1.0
    %v1542 = vmul.f32 %v698, %v698
    %v1543 = vmin.f32 16.0, %v1542
    %v1544 = vmul.f32 %v1543, 2.1237322e-06
    %v1545 = vadd.f32 %v1544, 0.00028619796
    %v1546 = vmul.f32 %v1543, %v1545
    %v1547 = vadd.f32 %v1546, 0.0036580483
    %v1548 = vmul.f32 %v1543, %v1547
    %v1549 = vadd.f32 %v1548, 0.05243302
    %v1550 = vmul.f32 %v1543, %v1549
    %v1551 = vadd.f32 %v1550, 0.18741608
    %v1552 = vmul.f32 %v1543, %v1551
    %v1553 = vadd.f32 %v1552, 1.1283791
    %v1554 = vmul.f32 %v698, %v1553
    %v1555 = vmul.f32 %v1543, 3.8918573e-05
    %v1556 = vadd.f32 %v1555, 0.001143296
    %v1557 = vmul.f32 %v1543, %v1556
    %v1558 = vadd.f32 %v1557, 0.014752088
    %v1559 = vmul.f32 %v1543, %v1558
    %v1560 = vadd.f32 %v1559, 0.112945676
    %v1561 = vmul.f32 %v1543, %v1560
    %v1562 = vadd.f32 %v1561, 0.4994258
    %v1563 = vmul.f32 %v1543, %v1562
    %v1564 = vadd.f32 %v1563, 1.0
    %v1565 = vrcp.pop %v1564
    %v1566 = vmul.f32 %v1564, %v1565
    %v1567 = vsub.f32 1.0, %v1566
    %v1568 = vmul.f32 %v1565, %v1567
    %v1569 = vadd.f32 %v1565, %v1568
    %vm1570 = vweird.f32 %v1564
    %vm1571 = vweird.f32 %v1565
    %vm1572 = vmor %vm1570, %vm1571
    %v1573 = vsel %vm1572, %v1565, %v1569
    %v1574 = vand.u32 2147483647, %v1564
    %vm1575 = vcmp.eq.f32.partialorder %v1574, 8.507059e+37
    %v1576 = vand.u32 %v1564, 2147483648
    %v1577 = vor.u32 1.1754944e-38, %v1576
    %v1578 = vsel %vm1575, %v1577, %v1573
    %v1579 = vmul.f32 %v1554, %v1578
    %v1580 = vmin.f32 %v1579, 1.0
    %v1581 = vmax.f32 %v1580, -1.0
    %v1582 = vmul.f32 %v699, %v699
    %v1583 = vmin.f32 16.0, %v1582
    %v1584 = vmul.f32 %v1583, 2.1237322e-06
    %v1585 = vadd.f32 %v1584, 0.00028619796
    %v1586 = vmul.f32 %v1583, %v1585
    %v1587 = vadd.f32 %v1586, 0.0036580483
    %v1588 = vmul.f32 %v1583, %v1587
    %v1589 = vadd.f32 %v1588, 0.05243302
    %v1590 = vmul.f32 %v1583, %v1589
    %v1591 = vadd.f32 %v1590, 0.18741608
    %v1592 = vmul.f32 %v1583, %v1591
    %v1593 = vadd.f32 %v1592, 1.1283791
    %v1594 = vmul.f32 %v699, %v1593
    %v1595 = vmul.f32 %v1583, 3.8918573e-05
    %v1596 = vadd.f32 %v1595, 0.001143296
    %v1597 = vmul.f32 %v1583, %v1596
    %v1598 = vadd.f32 %v1597, 0.014752088
    %v1599 = vmul.f32 %v1583, %v1598
    %v1600 = vadd.f32 %v1599, 0.112945676
    %v1601 = vmul.f32 %v1583, %v1600
    %v1602 = vadd.f32 %v1601, 0.4994258
    %v1603 = vmul.f32 %v1583, %v1602
    %v1604 = vadd.f32 %v1603, 1.0
    %v1605 = vrcp.pop %v1604
    %v1606 = vmul.f32 %v1604, %v1605
    %v1607 = vsub.f32 1.0, %v1606
    %v1608 = vmul.f32 %v1605, %v1607
    %v1609 = vadd.f32 %v1605, %v1608
    %vm1610 = vweird.f32 %v1604
    %vm1611 = vweird.f32 %v1605
    %vm1612 = vmor %vm1610, %vm1611
    %v1613 = vsel %vm1612, %v1605, %v1609
    %v1614 = vand.u32 2147483647, %v1604
    %vm1615 = vcmp.eq.f32.partialorder %v1614, 8.507059e+37
    %v1616 = vand.u32 %v1604, 2147483648
    %v1617 = vor.u32 1.1754944e-38, %v1616
    %v1618 = vsel %vm1615, %v1617, %v1613
    %v1619 = vmul.f32 %v1594, %v1618
    %v1620 = vmin.f32 %v1619, 1.0
    %v1621 = vmax.f32 %v1620, -1.0
    %v1622 = vmul.f32 %v700, %v700
    %v1623 = vmin.f32 16.0, %v1622
    %v1624 = vmul.f32 %v1623, 2.1237322e-06
    %v1625 = vadd.f32 %v1624, 0.00028619796
    %v1626 = vmul.f32 %v1623, %v1625
    %v1627 = vadd.f32 %v1626, 0.0036580483
    %v1628 = vmul.f32 %v1623, %v1627
    %v1629 = vadd.f32 %v1628, 0.05243302
    %v1630 = vmul.f32 %v1623, %v1629
    %v1631 = vadd.f32 %v1630, 0.18741608
    %v1632 = vmul.f32 %v1623, %v1631
    %v1633 = vadd.f32 %v1632, 1.1283791
    %v1634 = vmul.f32 %v700, %v1633
    %v1635 = vmul.f32 %v1623, 3.8918573e-05
    %v1636 = vadd.f32 %v1635, 0.001143296
    %v1637 = vmul.f32 %v1623, %v1636
    %v1638 = vadd.f32 %v1637, 0.014752088
    %v1639 = vmul.f32 %v1623, %v1638
    %v1640 = vadd.f32 %v1639, 0.112945676
    %v1641 = vmul.f32 %v1623, %v1640
    %v1642 = vadd.f32 %v1641, 0.4994258
    %v1643 = vmul.f32 %v1623, %v1642
    %v1644 = vadd.f32 %v1643, 1.0
    %v1645 = vrcp.pop %v1644
    %v1646 = vmul.f32 %v1644, %v1645
    %v1647 = vsub.f32 1.0, %v1646
    %v1648 = vmul.f32 %v1645, %v1647
    %v1649 = vadd.f32 %v1645, %v1648
    %vm1650 = vweird.f32 %v1644
    %vm1651 = vweird.f32 %v1645
    %vm1652 = vmor %vm1650, %vm1651
    %v1653 = vsel %vm1652, %v1645, %v1649
    %v1654 = vand.u32 2147483647, %v1644
    %vm1655 = vcmp.eq.f32.partialorder %v1654, 8.507059e+37
    %v1656 = vand.u32 %v1644, 2147483648
    %v1657 = vor.u32 1.1754944e-38, %v1656
    %v1658 = vsel %vm1655, %v1657, %v1653
    %v1659 = vmul.f32 %v1634, %v1658
    %v1660 = vmin.f32 %v1659, 1.0
    %v1661 = vmax.f32 %v1660, -1.0
    %v1662 = vmul.f32 %v701, %v701
    %v1663 = vmin.f32 16.0, %v1662
    %v1664 = vmul.f32 %v1663, 2.1237322e-06
    %v1665 = vadd.f32 %v1664, 0.00028619796
    %v1666 = vmul.f32 %v1663, %v1665
    %v1667 = vadd.f32 %v1666, 0.0036580483
    %v1668 = vmul.f32 %v1663, %v1667
    %v1669 = vadd.f32 %v1668, 0.05243302
    %v1670 = vmul.f32 %v1663, %v1669
    %v1671 = vadd.f32 %v1670, 0.18741608
    %v1672 = vmul.f32 %v1663, %v1671
    %v1673 = vadd.f32 %v1672, 1.1283791
    %v1674 = vmul.f32 %v701, %v1673
    %v1675 = vmul.f32 %v1663, 3.8918573e-05
    %v1676 = vadd.f32 %v1675, 0.001143296
    %v1677 = vmul.f32 %v1663, %v1676
    %v1678 = vadd.f32 %v1677, 0.014752088
    %v1679 = vmul.f32 %v1663, %v1678
    %v1680 = vadd.f32 %v1679, 0.112945676
    %v1681 = vmul.f32 %v1663, %v1680
    %v1682 = vadd.f32 %v1681, 0.4994258
    %v1683 = vmul.f32 %v1663, %v1682
    %v1684 = vadd.f32 %v1683, 1.0
    %v1685 = vrcp.pop %v1684
    %v1686 = vmul.f32 %v1684, %v1685
    %v1687 = vsub.f32 1.0, %v1686
    %v1688 = vmul.f32 %v1685, %v1687
    %v1689 = vadd.f32 %v1685, %v1688
    %vm1690 = vweird.f32 %v1684
    %vm1691 = vweird.f32 %v1685
    %vm1692 = vmor %vm1690, %vm1691
    %v1693 = vsel %vm1692, %v1685, %v1689
    %v1694 = vand.u32 2147483647, %v1684
    %vm1695 = vcmp.eq.f32.partialorder %v1694, 8.507059e+37
    %v1696 = vand.u32 %v1684, 2147483648
    %v1697 = vor.u32 1.1754944e-38, %v1696
    %v1698 = vsel %vm1695, %v1697, %v1693
    %v1699 = vmul.f32 %v1674, %v1698
    %v1700 = vmin.f32 %v1699, 1.0
    %v1701 = vmax.f32 %v1700, -1.0
    %v1702 = vmul.f32 %v702, %v702
    %v1703 = vmin.f32 16.0, %v1702
    %v1704 = vmul.f32 %v1703, 2.1237322e-06
    %v1705 = vadd.f32 %v1704, 0.00028619796
    %v1706 = vmul.f32 %v1703, %v1705
    %v1707 = vadd.f32 %v1706, 0.0036580483
    %v1708 = vmul.f32 %v1703, %v1707
    %v1709 = vadd.f32 %v1708, 0.05243302
    %v1710 = vmul.f32 %v1703, %v1709
    %v1711 = vadd.f32 %v1710, 0.18741608
    %v1712 = vmul.f32 %v1703, %v1711
    %v1713 = vadd.f32 %v1712, 1.1283791
    %v1714 = vmul.f32 %v702, %v1713
    %v1715 = vmul.f32 %v1703, 3.8918573e-05
    %v1716 = vadd.f32 %v1715, 0.001143296
    %v1717 = vmul.f32 %v1703, %v1716
    %v1718 = vadd.f32 %v1717, 0.014752088
    %v1719 = vmul.f32 %v1703, %v1718
    %v1720 = vadd.f32 %v1719, 0.112945676
    %v1721 = vmul.f32 %v1703, %v1720
    %v1722 = vadd.f32 %v1721, 0.4994258
    %v1723 = vmul.f32 %v1703, %v1722
    %v1724 = vadd.f32 %v1723, 1.0
    %v1725 = vrcp.pop %v1724
    %v1726 = vmul.f32 %v1724, %v1725
    %v1727 = vsub.f32 1.0, %v1726
    %v1728 = vmul.f32 %v1725, %v1727
    %v1729 = vadd.f32 %v1725, %v1728
    %vm1730 = vweird.f32 %v1724
    %vm1731 = vweird.f32 %v1725
    %vm1732 = vmor %vm1730, %vm1731
    %v1733 = vsel %vm1732, %v1725, %v1729
    %v1734 = vand.u32 2147483647, %v1724
    %vm1735 = vcmp.eq.f32.partialorder %v1734, 8.507059e+37
    %v1736 = vand.u32 %v1724, 2147483648
    %v1737 = vor.u32 1.1754944e-38, %v1736
    %v1738 = vsel %vm1735, %v1737, %v1733
    %v1739 = vmul.f32 %v1714, %v1738
    %v1740 = vmin.f32 %v1739, 1.0
    %v1741 = vmax.f32 %v1740, -1.0
    %v1742 = vmul.f32 %v703, %v703
    %v1743 = vmin.f32 16.0, %v1742
    %v1744 = vmul.f32 %v1743, 2.1237322e-06
    %v1745 = vadd.f32 %v1744, 0.00028619796
    %v1746 = vmul.f32 %v1743, %v1745
    %v1747 = vadd.f32 %v1746, 0.0036580483
    %v1748 = vmul.f32 %v1743, %v1747
    %v1749 = vadd.f32 %v1748, 0.05243302
    %v1750 = vmul.f32 %v1743, %v1749
    %v1751 = vadd.f32 %v1750, 0.18741608
    %v1752 = vmul.f32 %v1743, %v1751
    %v1753 = vadd.f32 %v1752, 1.1283791
    %v1754 = vmul.f32 %v703, %v1753
    %v1755 = vmul.f32 %v1743, 3.8918573e-05
    %v1756 = vadd.f32 %v1755, 0.001143296
    %v1757 = vmul.f32 %v1743, %v1756
    %v1758 = vadd.f32 %v1757, 0.014752088
    %v1759 = vmul.f32 %v1743, %v1758
    %v1760 = vadd.f32 %v1759, 0.112945676
    %v1761 = vmul.f32 %v1743, %v1760
    %v1762 = vadd.f32 %v1761, 0.4994258
    %v1763 = vmul.f32 %v1743, %v1762
    %v1764 = vadd.f32 %v1763, 1.0
    %v1765 = vrcp.pop %v1764
    %v1766 = vmul.f32 %v1764, %v1765
    %v1767 = vsub.f32 1.0, %v1766
    %v1768 = vmul.f32 %v1765, %v1767
    %v1769 = vadd.f32 %v1765, %v1768
    %vm1770 = vweird.f32 %v1764
    %vm1771 = vweird.f32 %v1765
    %vm1772 = vmor %vm1770, %vm1771
    %v1773 = vsel %vm1772, %v1765, %v1769
    %v1774 = vand.u32 2147483647, %v1764
    %vm1775 = vcmp.eq.f32.partialorder %v1774, 8.507059e+37
    %v1776 = vand.u32 %v1764, 2147483648
    %v1777 = vor.u32 1.1754944e-38, %v1776
    %v1778 = vsel %vm1775, %v1777, %v1773
    %v1779 = vmul.f32 %v1754, %v1778
    %v1780 = vmin.f32 %v1779, 1.0
    %v1781 = vmax.f32 %v1780, -1.0
    %v1782 = vmul.f32 %v704, %v704
    %v1783 = vmin.f32 16.0, %v1782
    %v1784 = vmul.f32 %v1783, 2.1237322e-06
    %v1785 = vadd.f32 %v1784, 0.00028619796
    %v1786 = vmul.f32 %v1783, %v1785
    %v1787 = vadd.f32 %v1786, 0.0036580483
    %v1788 = vmul.f32 %v1783, %v1787
    %v1789 = vadd.f32 %v1788, 0.05243302
    %v1790 = vmul.f32 %v1783, %v1789
    %v1791 = vadd.f32 %v1790, 0.18741608
    %v1792 = vmul.f32 %v1783, %v1791
    %v1793 = vadd.f32 %v1792, 1.1283791
    %v1794 = vmul.f32 %v704, %v1793
    %v1795 = vmul.f32 %v1783, 3.8918573e-05
    %v1796 = vadd.f32 %v1795, 0.001143296
    %v1797 = vmul.f32 %v1783, %v1796
    %v1798 = vadd.f32 %v1797, 0.014752088
    %v1799 = vmul.f32 %v1783, %v1798
    %v1800 = vadd.f32 %v1799, 0.112945676
    %v1801 = vmul.f32 %v1783, %v1800
    %v1802 = vadd.f32 %v1801, 0.4994258
    %v1803 = vmul.f32 %v1783, %v1802
    %v1804 = vadd.f32 %v1803, 1.0
    %v1805 = vrcp.pop %v1804
    %v1806 = vmul.f32 %v1804, %v1805
    %v1807 = vsub.f32 1.0, %v1806
    %v1808 = vmul.f32 %v1805, %v1807
    %v1809 = vadd.f32 %v1805, %v1808
    %vm1810 = vweird.f32 %v1804
    %vm1811 = vweird.f32 %v1805
    %vm1812 = vmor %vm1810, %vm1811
    %v1813 = vsel %vm1812, %v1805, %v1809
    %v1814 = vand.u32 2147483647, %v1804
    %vm1815 = vcmp.eq.f32.partialorder %v1814, 8.507059e+37
    %v1816 = vand.u32 %v1804, 2147483648
    %v1817 = vor.u32 1.1754944e-38, %v1816
    %v1818 = vsel %vm1815, %v1817, %v1813
    %v1819 = vmul.f32 %v1794, %v1818
    %v1820 = vmin.f32 %v1819, 1.0
    %v1821 = vmax.f32 %v1820, -1.0
    %v1822 = vmul.f32 %v705, %v705
    %v1823 = vmin.f32 16.0, %v1822
    %v1824 = vmul.f32 %v1823, 2.1237322e-06
    %v1825 = vadd.f32 %v1824, 0.00028619796
    %v1826 = vmul.f32 %v1823, %v1825
    %v1827 = vadd.f32 %v1826, 0.0036580483
    %v1828 = vmul.f32 %v1823, %v1827
    %v1829 = vadd.f32 %v1828, 0.05243302
    %v1830 = vmul.f32 %v1823, %v1829
    %v1831 = vadd.f32 %v1830, 0.18741608
    %v1832 = vmul.f32 %v1823, %v1831
    %v1833 = vadd.f32 %v1832, 1.1283791
    %v1834 = vmul.f32 %v705, %v1833
    %v1835 = vmul.f32 %v1823, 3.8918573e-05
    %v1836 = vadd.f32 %v1835, 0.001143296
    %v1837 = vmul.f32 %v1823, %v1836
    %v1838 = vadd.f32 %v1837, 0.014752088
    %v1839 = vmul.f32 %v1823, %v1838
    %v1840 = vadd.f32 %v1839, 0.112945676
    %v1841 = vmul.f32 %v1823, %v1840
    %v1842 = vadd.f32 %v1841, 0.4994258
    %v1843 = vmul.f32 %v1823, %v1842
    %v1844 = vadd.f32 %v1843, 1.0
    %v1845 = vrcp.pop %v1844
    %v1846 = vmul.f32 %v1844, %v1845
    %v1847 = vsub.f32 1.0, %v1846
    %v1848 = vmul.f32 %v1845, %v1847
    %v1849 = vadd.f32 %v1845, %v1848
    %vm1850 = vweird.f32 %v1844
    %vm1851 = vweird.f32 %v1845
    %vm1852 = vmor %vm1850, %vm1851
    %v1853 = vsel %vm1852, %v1845, %v1849
    %v1854 = vand.u32 2147483647, %v1844
    %vm1855 = vcmp.eq.f32.partialorder %v1854, 8.507059e+37
    %v1856 = vand.u32 %v1844, 2147483648
    %v1857 = vor.u32 1.1754944e-38, %v1856
    %v1858 = vsel %vm1855, %v1857, %v1853
    %v1859 = vmul.f32 %v1834, %v1858
    %v1860 = vmin.f32 %v1859, 1.0
    %v1861 = vmax.f32 %v1860, -1.0
    %v1862 = vmul.f32 %v706, %v706
    %v1863 = vmin.f32 16.0, %v1862
    %v1864 = vmul.f32 %v1863, 2.1237322e-06
    %v1865 = vadd.f32 %v1864, 0.00028619796
    %v1866 = vmul.f32 %v1863, %v1865
    %v1867 = vadd.f32 %v1866, 0.0036580483
    %v1868 = vmul.f32 %v1863, %v1867
    %v1869 = vadd.f32 %v1868, 0.05243302
    %v1870 = vmul.f32 %v1863, %v1869
    %v1871 = vadd.f32 %v1870, 0.18741608
    %v1872 = vmul.f32 %v1863, %v1871
    %v1873 = vadd.f32 %v1872, 1.1283791
    %v1874 = vmul.f32 %v706, %v1873
    %v1875 = vmul.f32 %v1863, 3.8918573e-05
    %v1876 = vadd.f32 %v1875, 0.001143296
    %v1877 = vmul.f32 %v1863, %v1876
    %v1878 = vadd.f32 %v1877, 0.014752088
    %v1879 = vmul.f32 %v1863, %v1878
    %v1880 = vadd.f32 %v1879, 0.112945676
    %v1881 = vmul.f32 %v1863, %v1880
    %v1882 = vadd.f32 %v1881, 0.4994258
    %v1883 = vmul.f32 %v1863, %v1882
    %v1884 = vadd.f32 %v1883, 1.0
    %v1885 = vrcp.pop %v1884
    %v1886 = vmul.f32 %v1884, %v1885
    %v1887 = vsub.f32 1.0, %v1886
    %v1888 = vmul.f32 %v1885, %v1887
    %v1889 = vadd.f32 %v1885, %v1888
    %vm1890 = vweird.f32 %v1884
    %vm1891 = vweird.f32 %v1885
    %vm1892 = vmor %vm1890, %vm1891
    %v1893 = vsel %vm1892, %v1885, %v1889
    %v1894 = vand.u32 2147483647, %v1884
    %vm1895 = vcmp.eq.f32.partialorder %v1894, 8.507059e+37
    %v1896 = vand.u32 %v1884, 2147483648
    %v1897 = vor.u32 1.1754944e-38, %v1896
    %v1898 = vsel %vm1895, %v1897, %v1893
    %v1899 = vmul.f32 %v1874, %v1898
    %v1900 = vmin.f32 %v1899, 1.0
    %v1901 = vmax.f32 %v1900, -1.0
    %v1902 = vmul.f32 %v707, %v707
    %v1903 = vmin.f32 16.0, %v1902
    %v1904 = vmul.f32 %v1903, 2.1237322e-06
    %v1905 = vadd.f32 %v1904, 0.00028619796
    %v1906 = vmul.f32 %v1903, %v1905
    %v1907 = vadd.f32 %v1906, 0.0036580483
    %v1908 = vmul.f32 %v1903, %v1907
    %v1909 = vadd.f32 %v1908, 0.05243302
    %v1910 = vmul.f32 %v1903, %v1909
    %v1911 = vadd.f32 %v1910, 0.18741608
    %v1912 = vmul.f32 %v1903, %v1911
    %v1913 = vadd.f32 %v1912, 1.1283791
    %v1914 = vmul.f32 %v707, %v1913
    %v1915 = vmul.f32 %v1903, 3.8918573e-05
    %v1916 = vadd.f32 %v1915, 0.001143296
    %v1917 = vmul.f32 %v1903, %v1916
    %v1918 = vadd.f32 %v1917, 0.014752088
    %v1919 = vmul.f32 %v1903, %v1918
    %v1920 = vadd.f32 %v1919, 0.112945676
    %v1921 = vmul.f32 %v1903, %v1920
    %v1922 = vadd.f32 %v1921, 0.4994258
    %v1923 = vmul.f32 %v1903, %v1922
    %v1924 = vadd.f32 %v1923, 1.0
    %v1925 = vrcp.pop %v1924
    %v1926 = vmul.f32 %v1924, %v1925
    %v1927 = vsub.f32 1.0, %v1926
    %v1928 = vmul.f32 %v1925, %v1927
    %v1929 = vadd.f32 %v1925, %v1928
    %vm1930 = vweird.f32 %v1924
    %vm1931 = vweird.f32 %v1925
    %vm1932 = vmor %vm1930, %vm1931
    %v1933 = vsel %vm1932, %v1925, %v1929
    %v1934 = vand.u32 2147483647, %v1924
    %vm1935 = vcmp.eq.f32.partialorder %v1934, 8.507059e+37
    %v1936 = vand.u32 %v1924, 2147483648
    %v1937 = vor.u32 1.1754944e-38, %v1936
    %v1938 = vsel %vm1935, %v1937, %v1933
    %v1939 = vmul.f32 %v1914, %v1938
    %v1940 = vmin.f32 %v1939, 1.0
    %v1941 = vmax.f32 %v1940, -1.0
    %v1942 = vmul.f32 %v708, %v708
    %v1943 = vmin.f32 16.0, %v1942
    %v1944 = vmul.f32 %v1943, 2.1237322e-06
    %v1945 = vadd.f32 %v1944, 0.00028619796
    %v1946 = vmul.f32 %v1943, %v1945
    %v1947 = vadd.f32 %v1946, 0.0036580483
    %v1948 = vmul.f32 %v1943, %v1947
    %v1949 = vadd.f32 %v1948, 0.05243302
    %v1950 = vmul.f32 %v1943, %v1949
    %v1951 = vadd.f32 %v1950, 0.18741608
    %v1952 = vmul.f32 %v1943, %v1951
    %v1953 = vadd.f32 %v1952, 1.1283791
    %v1954 = vmul.f32 %v708, %v1953
    %v1955 = vmul.f32 %v1943, 3.8918573e-05
    %v1956 = vadd.f32 %v1955, 0.001143296
    %v1957 = vmul.f32 %v1943, %v1956
    %v1958 = vadd.f32 %v1957, 0.014752088
    %v1959 = vmul.f32 %v1943, %v1958
    %v1960 = vadd.f32 %v1959, 0.112945676
    %v1961 = vmul.f32 %v1943, %v1960
    %v1962 = vadd.f32 %v1961, 0.4994258
    %v1963 = vmul.f32 %v1943, %v1962
    %v1964 = vadd.f32 %v1963, 1.0
    %v1965 = vrcp.pop %v1964
    %v1966 = vmul.f32 %v1964, %v1965
    %v1967 = vsub.f32 1.0, %v1966
    %v1968 = vmul.f32 %v1965, %v1967
    %v1969 = vadd.f32 %v1965, %v1968
    %vm1970 = vweird.f32 %v1964
    %vm1971 = vweird.f32 %v1965
    %vm1972 = vmor %vm1970, %vm1971
    %v1973 = vsel %vm1972, %v1965, %v1969
    %v1974 = vand.u32 2147483647, %v1964
    %vm1975 = vcmp.eq.f32.partialorder %v1974, 8.507059e+37
    %v1976 = vand.u32 %v1964, 2147483648
    %v1977 = vor.u32 1.1754944e-38, %v1976
    %v1978 = vsel %vm1975, %v1977, %v1973
    %v1979 = vmul.f32 %v1954, %v1978
    %v1980 = vmin.f32 %v1979, 1.0
    %v1981 = vmax.f32 %v1980, -1.0
    %v1982 = vmul.f32 %v709, %v709
    %v1983 = vmin.f32 16.0, %v1982
    %v1984 = vmul.f32 %v1983, 2.1237322e-06
    %v1985 = vadd.f32 %v1984, 0.00028619796
    %v1986 = vmul.f32 %v1983, %v1985
    %v1987 = vadd.f32 %v1986, 0.0036580483
    %v1988 = vmul.f32 %v1983, %v1987
    %v1989 = vadd.f32 %v1988, 0.05243302
    %v1990 = vmul.f32 %v1983, %v1989
    %v1991 = vadd.f32 %v1990, 0.18741608
    %v1992 = vmul.f32 %v1983, %v1991
    %v1993 = vadd.f32 %v1992, 1.1283791
    %v1994 = vmul.f32 %v709, %v1993
    %v1995 = vmul.f32 %v1983, 3.8918573e-05
    %v1996 = vadd.f32 %v1995, 0.001143296
    %v1997 = vmul.f32 %v1983, %v1996
    %v1998 = vadd.f32 %v1997, 0.014752088
    %v1999 = vmul.f32 %v1983, %v1998
    %v2000 = vadd.f32 %v1999, 0.112945676
    %v2001 = vmul.f32 %v1983, %v2000
    %v2002 = vadd.f32 %v2001, 0.4994258
    %v2003 = vmul.f32 %v1983, %v2002
    %v2004 = vadd.f32 %v2003, 1.0
    %v2005 = vrcp.pop %v2004
    %v2006 = vmul.f32 %v2004, %v2005
    %v2007 = vsub.f32 1.0, %v2006
    %v2008 = vmul.f32 %v2005, %v2007
    %v2009 = vadd.f32 %v2005, %v2008
    %vm2010 = vweird.f32 %v2004
    %vm2011 = vweird.f32 %v2005
    %vm2012 = vmor %vm2010, %vm2011
    %v2013 = vsel %vm2012, %v2005, %v2009
    %v2014 = vand.u32 2147483647, %v2004
    %vm2015 = vcmp.eq.f32.partialorder %v2014, 8.507059e+37
    %v2016 = vand.u32 %v2004, 2147483648
    %v2017 = vor.u32 1.1754944e-38, %v2016
    %v2018 = vsel %vm2015, %v2017, %v2013
    %v2019 = vmul.f32 %v1994, %v2018
    %v2020 = vmin.f32 %v2019, 1.0
    %v2021 = vmax.f32 %v2020, -1.0
    %v2022 = vmul.f32 %v710, %v710
    %v2023 = vmin.f32 16.0, %v2022
    %v2024 = vmul.f32 %v2023, 2.1237322e-06
    %v2025 = vadd.f32 %v2024, 0.00028619796
    %v2026 = vmul.f32 %v2023, %v2025
    %v2027 = vadd.f32 %v2026, 0.0036580483
    %v2028 = vmul.f32 %v2023, %v2027
    %v2029 = vadd.f32 %v2028, 0.05243302
    %v2030 = vmul.f32 %v2023, %v2029
    %v2031 = vadd.f32 %v2030, 0.18741608
    %v2032 = vmul.f32 %v2023, %v2031
    %v2033 = vadd.f32 %v2032, 1.1283791
    %v2034 = vmul.f32 %v710, %v2033
    %v2035 = vmul.f32 %v2023, 3.8918573e-05
    %v2036 = vadd.f32 %v2035, 0.001143296
    %v2037 = vmul.f32 %v2023, %v2036
    %v2038 = vadd.f32 %v2037, 0.014752088
    %v2039 = vmul.f32 %v2023, %v2038
    %v2040 = vadd.f32 %v2039, 0.112945676
    %v2041 = vmul.f32 %v2023, %v2040
    %v2042 = vadd.f32 %v2041, 0.4994258
    %v2043 = vmul.f32 %v2023, %v2042
    %v2044 = vadd.f32 %v2043, 1.0
    %v2045 = vrcp.pop %v2044
    %v2046 = vmul.f32 %v2044, %v2045
    %v2047 = vsub.f32 1.0, %v2046
    %v2048 = vmul.f32 %v2045, %v2047
    %v2049 = vadd.f32 %v2045, %v2048
    %vm2050 = vweird.f32 %v2044
    %vm2051 = vweird.f32 %v2045
    %vm2052 = vmor %vm2050, %vm2051
    %v2053 = vsel %vm2052, %v2045, %v2049
    %v2054 = vand.u32 2147483647, %v2044
    %vm2055 = vcmp.eq.f32.partialorder %v2054, 8.507059e+37
    %v2056 = vand.u32 %v2044, 2147483648
    %v2057 = vor.u32 1.1754944e-38, %v2056
    %v2058 = vsel %vm2055, %v2057, %v2053
    %v2059 = vmul.f32 %v2034, %v2058
    %v2060 = vmin.f32 %v2059, 1.0
    %v2061 = vmax.f32 %v2060, -1.0
    %v2062 = vmul.f32 %v711, %v711
    %v2063 = vmin.f32 16.0, %v2062
    %v2064 = vmul.f32 %v2063, 2.1237322e-06
    %v2065 = vadd.f32 %v2064, 0.00028619796
    %v2066 = vmul.f32 %v2063, %v2065
    %v2067 = vadd.f32 %v2066, 0.0036580483
    %v2068 = vmul.f32 %v2063, %v2067
    %v2069 = vadd.f32 %v2068, 0.05243302
    %v2070 = vmul.f32 %v2063, %v2069
    %v2071 = vadd.f32 %v2070, 0.18741608
    %v2072 = vmul.f32 %v2063, %v2071
    %v2073 = vadd.f32 %v2072, 1.1283791
    %v2074 = vmul.f32 %v711, %v2073
    %v2075 = vmul.f32 %v2063, 3.8918573e-05
    %v2076 = vadd.f32 %v2075, 0.001143296
    %v2077 = vmul.f32 %v2063, %v2076
    %v2078 = vadd.f32 %v2077, 0.014752088
    %v2079 = vmul.f32 %v2063, %v2078
    %v2080 = vadd.f32 %v2079, 0.112945676
    %v2081 = vmul.f32 %v2063, %v2080
    %v2082 = vadd.f32 %v2081, 0.4994258
    %v2083 = vmul.f32 %v2063, %v2082
    %v2084 = vadd.f32 %v2083, 1.0
    %v2085 = vrcp.pop %v2084
    %v2086 = vmul.f32 %v2084, %v2085
    %v2087 = vsub.f32 1.0, %v2086
    %v2088 = vmul.f32 %v2085, %v2087
    %v2089 = vadd.f32 %v2085, %v2088
    %vm2090 = vweird.f32 %v2084
    %vm2091 = vweird.f32 %v2085
    %vm2092 = vmor %vm2090, %vm2091
    %v2093 = vsel %vm2092, %v2085, %v2089
    %v2094 = vand.u32 2147483647, %v2084
    %vm2095 = vcmp.eq.f32.partialorder %v2094, 8.507059e+37
    %v2096 = vand.u32 %v2084, 2147483648
    %v2097 = vor.u32 1.1754944e-38, %v2096
    %v2098 = vsel %vm2095, %v2097, %v2093
    %v2099 = vmul.f32 %v2074, %v2098
    %v2100 = vmin.f32 %v2099, 1.0
    %v2101 = vmax.f32 %v2100, -1.0
    %v2102 = vmul.f32 %v712, %v712
    %v2103 = vmin.f32 16.0, %v2102
    %v2104 = vmul.f32 %v2103, 2.1237322e-06
    %v2105 = vadd.f32 %v2104, 0.00028619796
    %v2106 = vmul.f32 %v2103, %v2105
    %v2107 = vadd.f32 %v2106, 0.0036580483
    %v2108 = vmul.f32 %v2103, %v2107
    %v2109 = vadd.f32 %v2108, 0.05243302
    %v2110 = vmul.f32 %v2103, %v2109
    %v2111 = vadd.f32 %v2110, 0.18741608
    %v2112 = vmul.f32 %v2103, %v2111
    %v2113 = vadd.f32 %v2112, 1.1283791
    %v2114 = vmul.f32 %v712, %v2113
    %v2115 = vmul.f32 %v2103, 3.8918573e-05
    %v2116 = vadd.f32 %v2115, 0.001143296
    %v2117 = vmul.f32 %v2103, %v2116
    %v2118 = vadd.f32 %v2117, 0.014752088
    %v2119 = vmul.f32 %v2103, %v2118
    %v2120 = vadd.f32 %v2119, 0.112945676
    %v2121 = vmul.f32 %v2103, %v2120
    %v2122 = vadd.f32 %v2121, 0.4994258
    %v2123 = vmul.f32 %v2103, %v2122
    %v2124 = vadd.f32 %v2123, 1.0
    %v2125 = vrcp.pop %v2124
    %v2126 = vmul.f32 %v2124, %v2125
    %v2127 = vsub.f32 1.0, %v2126
    %v2128 = vmul.f32 %v2125, %v2127
    %v2129 = vadd.f32 %v2125, %v2128
    %vm2130 = vweird.f32 %v2124
    %vm2131 = vweird.f32 %v2125
    %vm2132 = vmor %vm2130, %vm2131
    %v2133 = vsel %vm2132, %v2125, %v2129
    %v2134 = vand.u32 2147483647, %v2124
    %vm2135 = vcmp.eq.f32.partialorder %v2134, 8.507059e+37
    %v2136 = vand.u32 %v2124, 2147483648
    %v2137 = vor.u32 1.1754944e-38, %v2136
    %v2138 = vsel %vm2135, %v2137, %v2133
    %v2139 = vmul.f32 %v2114, %v2138
    %v2140 = vmin.f32 %v2139, 1.0
    %v2141 = vmax.f32 %v2140, -1.0
    %v2142 = vmul.f32 %v713, %v713
    %v2143 = vmin.f32 16.0, %v2142
    %v2144 = vmul.f32 %v2143, 2.1237322e-06
    %v2145 = vadd.f32 %v2144, 0.00028619796
    %v2146 = vmul.f32 %v2143, %v2145
    %v2147 = vadd.f32 %v2146, 0.0036580483
    %v2148 = vmul.f32 %v2143, %v2147
    %v2149 = vadd.f32 %v2148, 0.05243302
    %v2150 = vmul.f32 %v2143, %v2149
    %v2151 = vadd.f32 %v2150, 0.18741608
    %v2152 = vmul.f32 %v2143, %v2151
    %v2153 = vadd.f32 %v2152, 1.1283791
    %v2154 = vmul.f32 %v713, %v2153
    %v2155 = vmul.f32 %v2143, 3.8918573e-05
    %v2156 = vadd.f32 %v2155, 0.001143296
    %v2157 = vmul.f32 %v2143, %v2156
    %v2158 = vadd.f32 %v2157, 0.014752088
    %v2159 = vmul.f32 %v2143, %v2158
    %v2160 = vadd.f32 %v2159, 0.112945676
    %v2161 = vmul.f32 %v2143, %v2160
    %v2162 = vadd.f32 %v2161, 0.4994258
    %v2163 = vmul.f32 %v2143, %v2162
    %v2164 = vadd.f32 %v2163, 1.0
    %v2165 = vrcp.pop %v2164
    %v2166 = vmul.f32 %v2164, %v2165
    %v2167 = vsub.f32 1.0, %v2166
    %v2168 = vmul.f32 %v2165, %v2167
    %v2169 = vadd.f32 %v2165, %v2168
    %vm2170 = vweird.f32 %v2164
    %vm2171 = vweird.f32 %v2165
    %vm2172 = vmor %vm2170, %vm2171
    %v2173 = vsel %vm2172, %v2165, %v2169
    %v2174 = vand.u32 2147483647, %v2164
    %vm2175 = vcmp.eq.f32.partialorder %v2174, 8.507059e+37
    %v2176 = vand.u32 %v2164, 2147483648
    %v2177 = vor.u32 1.1754944e-38, %v2176
    %v2178 = vsel %vm2175, %v2177, %v2173
    %v2179 = vmul.f32 %v2154, %v2178
    %v2180 = vmin.f32 %v2179, 1.0
    %v2181 = vmax.f32 %v2180, -1.0
    %v2182 = vmul.f32 %v714, %v714
    %v2183 = vmin.f32 16.0, %v2182
    %v2184 = vmul.f32 %v2183, 2.1237322e-06
    %v2185 = vadd.f32 %v2184, 0.00028619796
    %v2186 = vmul.f32 %v2183, %v2185
    %v2187 = vadd.f32 %v2186, 0.0036580483
    %v2188 = vmul.f32 %v2183, %v2187
    %v2189 = vadd.f32 %v2188, 0.05243302
    %v2190 = vmul.f32 %v2183, %v2189
    %v2191 = vadd.f32 %v2190, 0.18741608
    %v2192 = vmul.f32 %v2183, %v2191
    %v2193 = vadd.f32 %v2192, 1.1283791
    %v2194 = vmul.f32 %v714, %v2193
    %v2195 = vmul.f32 %v2183, 3.8918573e-05
    %v2196 = vadd.f32 %v2195, 0.001143296
    %v2197 = vmul.f32 %v2183, %v2196
    %v2198 = vadd.f32 %v2197, 0.014752088
    %v2199 = vmul.f32 %v2183, %v2198
    %v2200 = vadd.f32 %v2199, 0.112945676
    %v2201 = vmul.f32 %v2183, %v2200
    %v2202 = vadd.f32 %v2201, 0.4994258
    %v2203 = vmul.f32 %v2183, %v2202
    %v2204 = vadd.f32 %v2203, 1.0
    %v2205 = vrcp.pop %v2204
    %v2206 = vmul.f32 %v2204, %v2205
    %v2207 = vsub.f32 1.0, %v2206
    %v2208 = vmul.f32 %v2205, %v2207
    %v2209 = vadd.f32 %v2205, %v2208
    %vm2210 = vweird.f32 %v2204
    %vm2211 = vweird.f32 %v2205
    %vm2212 = vmor %vm2210, %vm2211
    %v2213 = vsel %vm2212, %v2205, %v2209
    %v2214 = vand.u32 2147483647, %v2204
    %vm2215 = vcmp.eq.f32.partialorder %v2214, 8.507059e+37
    %v2216 = vand.u32 %v2204, 2147483648
    %v2217 = vor.u32 1.1754944e-38, %v2216
    %v2218 = vsel %vm2215, %v2217, %v2213
    %v2219 = vmul.f32 %v2194, %v2218
    %v2220 = vmin.f32 %v2219, 1.0
    %v2221 = vmax.f32 %v2220, -1.0
    %v2222 = vmul.f32 %v715, %v715
    %v2223 = vmin.f32 16.0, %v2222
    %v2224 = vmul.f32 %v2223, 2.1237322e-06
    %v2225 = vadd.f32 %v2224, 0.00028619796
    %v2226 = vmul.f32 %v2223, %v2225
    %v2227 = vadd.f32 %v2226, 0.0036580483
    %v2228 = vmul.f32 %v2223, %v2227
    %v2229 = vadd.f32 %v2228, 0.05243302
    %v2230 = vmul.f32 %v2223, %v2229
    %v2231 = vadd.f32 %v2230, 0.18741608
    %v2232 = vmul.f32 %v2223, %v2231
    %v2233 = vadd.f32 %v2232, 1.1283791
    %v2234 = vmul.f32 %v715, %v2233
    %v2235 = vmul.f32 %v2223, 3.8918573e-05
    %v2236 = vadd.f32 %v2235, 0.001143296
    %v2237 = vmul.f32 %v2223, %v2236
    %v2238 = vadd.f32 %v2237, 0.014752088
    %v2239 = vmul.f32 %v2223, %v2238
    %v2240 = vadd.f32 %v2239, 0.112945676
    %v2241 = vmul.f32 %v2223, %v2240
    %v2242 = vadd.f32 %v2241, 0.4994258
    %v2243 = vmul.f32 %v2223, %v2242
    %v2244 = vadd.f32 %v2243, 1.0
    %v2245 = vrcp.pop %v2244
    %v2246 = vmul.f32 %v2244, %v2245
    %v2247 = vsub.f32 1.0, %v2246
    %v2248 = vmul.f32 %v2245, %v2247
    %v2249 = vadd.f32 %v2245, %v2248
    %vm2250 = vweird.f32 %v2244
    %vm2251 = vweird.f32 %v2245
    %vm2252 = vmor %vm2250, %vm2251
    %v2253 = vsel %vm2252, %v2245, %v2249
    %v2254 = vand.u32 2147483647, %v2244
    %vm2255 = vcmp.eq.f32.partialorder %v2254, 8.507059e+37
    %v2256 = vand.u32 %v2244, 2147483648
    %v2257 = vor.u32 1.1754944e-38, %v2256
    %v2258 = vsel %vm2255, %v2257, %v2253
    %v2259 = vmul.f32 %v2234, %v2258
    %v2260 = vmin.f32 %v2259, 1.0
    %v2261 = vmax.f32 %v2260, -1.0
    %v2262 = vmul.f32 %v716, %v716
    %v2263 = vmin.f32 16.0, %v2262
    %v2264 = vmul.f32 %v2263, 2.1237322e-06
    %v2265 = vadd.f32 %v2264, 0.00028619796
    %v2266 = vmul.f32 %v2263, %v2265
    %v2267 = vadd.f32 %v2266, 0.0036580483
    %v2268 = vmul.f32 %v2263, %v2267
    %v2269 = vadd.f32 %v2268, 0.05243302
    %v2270 = vmul.f32 %v2263, %v2269
    %v2271 = vadd.f32 %v2270, 0.18741608
    %v2272 = vmul.f32 %v2263, %v2271
    %v2273 = vadd.f32 %v2272, 1.1283791
    %v2274 = vmul.f32 %v716, %v2273
    %v2275 = vmul.f32 %v2263, 3.8918573e-05
    %v2276 = vadd.f32 %v2275, 0.001143296
    %v2277 = vmul.f32 %v2263, %v2276
    %v2278 = vadd.f32 %v2277, 0.014752088
    %v2279 = vmul.f32 %v2263, %v2278
    %v2280 = vadd.f32 %v2279, 0.112945676
    %v2281 = vmul.f32 %v2263, %v2280
    %v2282 = vadd.f32 %v2281, 0.4994258
    %v2283 = vmul.f32 %v2263, %v2282
    %v2284 = vadd.f32 %v2283, 1.0
    %v2285 = vrcp.pop %v2284
    %v2286 = vmul.f32 %v2284, %v2285
    %v2287 = vsub.f32 1.0, %v2286
    %v2288 = vmul.f32 %v2285, %v2287
    %v2289 = vadd.f32 %v2285, %v2288
    %vm2290 = vweird.f32 %v2284
    %vm2291 = vweird.f32 %v2285
    %vm2292 = vmor %vm2290, %vm2291
    %v2293 = vsel %vm2292, %v2285, %v2289
    %v2294 = vand.u32 2147483647, %v2284
    %vm2295 = vcmp.eq.f32.partialorder %v2294, 8.507059e+37
    %v2296 = vand.u32 %v2284, 2147483648
    %v2297 = vor.u32 1.1754944e-38, %v2296
    %v2298 = vsel %vm2295, %v2297, %v2293
    %v2299 = vmul.f32 %v2274, %v2298
    %v2300 = vmin.f32 %v2299, 1.0
    %v2301 = vmax.f32 %v2300, -1.0
    %v2302 = vmul.f32 %v717, %v717
    %v2303 = vmin.f32 16.0, %v2302
    %v2304 = vmul.f32 %v2303, 2.1237322e-06
    %v2305 = vadd.f32 %v2304, 0.00028619796
    %v2306 = vmul.f32 %v2303, %v2305
    %v2307 = vadd.f32 %v2306, 0.0036580483
    %v2308 = vmul.f32 %v2303, %v2307
    %v2309 = vadd.f32 %v2308, 0.05243302
    %v2310 = vmul.f32 %v2303, %v2309
    %v2311 = vadd.f32 %v2310, 0.18741608
    %v2312 = vmul.f32 %v2303, %v2311
    %v2313 = vadd.f32 %v2312, 1.1283791
    %v2314 = vmul.f32 %v717, %v2313
    %v2315 = vmul.f32 %v2303, 3.8918573e-05
    %v2316 = vadd.f32 %v2315, 0.001143296
    %v2317 = vmul.f32 %v2303, %v2316
    %v2318 = vadd.f32 %v2317, 0.014752088
    %v2319 = vmul.f32 %v2303, %v2318
    %v2320 = vadd.f32 %v2319, 0.112945676
    %v2321 = vmul.f32 %v2303, %v2320
    %v2322 = vadd.f32 %v2321, 0.4994258
    %v2323 = vmul.f32 %v2303, %v2322
    %v2324 = vadd.f32 %v2323, 1.0
    %v2325 = vrcp.pop %v2324
    %v2326 = vmul.f32 %v2324, %v2325
    %v2327 = vsub.f32 1.0, %v2326
    %v2328 = vmul.f32 %v2325, %v2327
    %v2329 = vadd.f32 %v2325, %v2328
    %vm2330 = vweird.f32 %v2324
    %vm2331 = vweird.f32 %v2325
    %vm2332 = vmor %vm2330, %vm2331
    %v2333 = vsel %vm2332, %v2325, %v2329
    %v2334 = vand.u32 2147483647, %v2324
    %vm2335 = vcmp.eq.f32.partialorder %v2334, 8.507059e+37
    %v2336 = vand.u32 %v2324, 2147483648
    %v2337 = vor.u32 1.1754944e-38, %v2336
    %v2338 = vsel %vm2335, %v2337, %v2333
    %v2339 = vmul.f32 %v2314, %v2338
    %v2340 = vmin.f32 %v2339, 1.0
    %v2341 = vmax.f32 %v2340, -1.0
    %v2342 = vmul.f32 %v718, %v718
    %v2343 = vmin.f32 16.0, %v2342
    %v2344 = vmul.f32 %v2343, 2.1237322e-06
    %v2345 = vadd.f32 %v2344, 0.00028619796
    %v2346 = vmul.f32 %v2343, %v2345
    %v2347 = vadd.f32 %v2346, 0.0036580483
    %v2348 = vmul.f32 %v2343, %v2347
    %v2349 = vadd.f32 %v2348, 0.05243302
    %v2350 = vmul.f32 %v2343, %v2349
    %v2351 = vadd.f32 %v2350, 0.18741608
    %v2352 = vmul.f32 %v2343, %v2351
    %v2353 = vadd.f32 %v2352, 1.1283791
    %v2354 = vmul.f32 %v718, %v2353
    %v2355 = vmul.f32 %v2343, 3.8918573e-05
    %v2356 = vadd.f32 %v2355, 0.001143296
    %v2357 = vmul.f32 %v2343, %v2356
    %v2358 = vadd.f32 %v2357, 0.014752088
    %v2359 = vmul.f32 %v2343, %v2358
    %v2360 = vadd.f32 %v2359, 0.112945676
    %v2361 = vmul.f32 %v2343, %v2360
    %v2362 = vadd.f32 %v2361, 0.4994258
    %v2363 = vmul.f32 %v2343, %v2362
    %v2364 = vadd.f32 %v2363, 1.0
    %v2365 = vrcp.pop %v2364
    %v2366 = vmul.f32 %v2364, %v2365
    %v2367 = vsub.f32 1.0, %v2366
    %v2368 = vmul.f32 %v2365, %v2367
    %v2369 = vadd.f32 %v2365, %v2368
    %vm2370 = vweird.f32 %v2364
    %vm2371 = vweird.f32 %v2365
    %vm2372 = vmor %vm2370, %vm2371
    %v2373 = vsel %vm2372, %v2365, %v2369
    %v2374 = vand.u32 2147483647, %v2364
    %vm2375 = vcmp.eq.f32.partialorder %v2374, 8.507059e+37
    %v2376 = vand.u32 %v2364, 2147483648
    %v2377 = vor.u32 1.1754944e-38, %v2376
    %v2378 = vsel %vm2375, %v2377, %v2373
    %v2379 = vmul.f32 %v2354, %v2378
    %v2380 = vmin.f32 %v2379, 1.0
    %v2381 = vmax.f32 %v2380, -1.0
    %v2382 = vmul.f32 %v719, %v719
    %v2383 = vmin.f32 16.0, %v2382
    %v2384 = vmul.f32 %v2383, 2.1237322e-06
    %v2385 = vadd.f32 %v2384, 0.00028619796
    %v2386 = vmul.f32 %v2383, %v2385
    %v2387 = vadd.f32 %v2386, 0.0036580483
    %v2388 = vmul.f32 %v2383, %v2387
    %v2389 = vadd.f32 %v2388, 0.05243302
    %v2390 = vmul.f32 %v2383, %v2389
    %v2391 = vadd.f32 %v2390, 0.18741608
    %v2392 = vmul.f32 %v2383, %v2391
    %v2393 = vadd.f32 %v2392, 1.1283791
    %v2394 = vmul.f32 %v719, %v2393
    %v2395 = vmul.f32 %v2383, 3.8918573e-05
    %v2396 = vadd.f32 %v2395, 0.001143296
    %v2397 = vmul.f32 %v2383, %v2396
    %v2398 = vadd.f32 %v2397, 0.014752088
    %v2399 = vmul.f32 %v2383, %v2398
    %v2400 = vadd.f32 %v2399, 0.112945676
    %v2401 = vmul.f32 %v2383, %v2400
    %v2402 = vadd.f32 %v2401, 0.4994258
    %v2403 = vmul.f32 %v2383, %v2402
    %v2404 = vadd.f32 %v2403, 1.0
    %v2405 = vrcp.pop %v2404
    %v2406 = vmul.f32 %v2404, %v2405
    %v2407 = vsub.f32 1.0, %v2406
    %v2408 = vmul.f32 %v2405, %v2407
    %v2409 = vadd.f32 %v2405, %v2408
    %vm2410 = vweird.f32 %v2404
    %vm2411 = vweird.f32 %v2405
    %vm2412 = vmor %vm2410, %vm2411
    %v2413 = vsel %vm2412, %v2405, %v2409
    %v2414 = vand.u32 2147483647, %v2404
    %vm2415 = vcmp.eq.f32.partialorder %v2414, 8.507059e+37
    %v2416 = vand.u32 %v2404, 2147483648
    %v2417 = vor.u32 1.1754944e-38, %v2416
    %v2418 = vsel %vm2415, %v2417, %v2413
    %v2419 = vmul.f32 %v2394, %v2418
    %v2420 = vmin.f32 %v2419, 1.0
    %v2421 = vmax.f32 %v2420, -1.0
    %v2422 = vmul.f32 %v720, %v720
    %v2423 = vmin.f32 16.0, %v2422
    %v2424 = vmul.f32 %v2423, 2.1237322e-06
    %v2425 = vadd.f32 %v2424, 0.00028619796
    %v2426 = vmul.f32 %v2423, %v2425
    %v2427 = vadd.f32 %v2426, 0.0036580483
    %v2428 = vmul.f32 %v2423, %v2427
    %v2429 = vadd.f32 %v2428, 0.05243302
    %v2430 = vmul.f32 %v2423, %v2429
    %v2431 = vadd.f32 %v2430, 0.18741608
    %v2432 = vmul.f32 %v2423, %v2431
    %v2433 = vadd.f32 %v2432, 1.1283791
    %v2434 = vmul.f32 %v720, %v2433
    %v2435 = vmul.f32 %v2423, 3.8918573e-05
    %v2436 = vadd.f32 %v2435, 0.001143296
    %v2437 = vmul.f32 %v2423, %v2436
    %v2438 = vadd.f32 %v2437, 0.014752088
    %v2439 = vmul.f32 %v2423, %v2438
    %v2440 = vadd.f32 %v2439, 0.112945676
    %v2441 = vmul.f32 %v2423, %v2440
    %v2442 = vadd.f32 %v2441, 0.4994258
    %v2443 = vmul.f32 %v2423, %v2442
    %v2444 = vadd.f32 %v2443, 1.0
    %v2445 = vrcp.pop %v2444
    %v2446 = vmul.f32 %v2444, %v2445
    %v2447 = vsub.f32 1.0, %v2446
    %v2448 = vmul.f32 %v2445, %v2447
    %v2449 = vadd.f32 %v2445, %v2448
    %vm2450 = vweird.f32 %v2444
    %vm2451 = vweird.f32 %v2445
    %vm2452 = vmor %vm2450, %vm2451
    %v2453 = vsel %vm2452, %v2445, %v2449
    %v2454 = vand.u32 2147483647, %v2444
    %vm2455 = vcmp.eq.f32.partialorder %v2454, 8.507059e+37
    %v2456 = vand.u32 %v2444, 2147483648
    %v2457 = vor.u32 1.1754944e-38, %v2456
    %v2458 = vsel %vm2455, %v2457, %v2453
    %v2459 = vmul.f32 %v2434, %v2458
    %v2460 = vmin.f32 %v2459, 1.0
    %v2461 = vmax.f32 %v2460, -1.0
    %v2462 = vmul.f32 %v721, %v721
    %v2463 = vmin.f32 16.0, %v2462
    %v2464 = vmul.f32 %v2463, 2.1237322e-06
    %v2465 = vadd.f32 %v2464, 0.00028619796
    %v2466 = vmul.f32 %v2463, %v2465
    %v2467 = vadd.f32 %v2466, 0.0036580483
    %v2468 = vmul.f32 %v2463, %v2467
    %v2469 = vadd.f32 %v2468, 0.05243302
    %v2470 = vmul.f32 %v2463, %v2469
    %v2471 = vadd.f32 %v2470, 0.18741608
    %v2472 = vmul.f32 %v2463, %v2471
    %v2473 = vadd.f32 %v2472, 1.1283791
    %v2474 = vmul.f32 %v721, %v2473
    %v2475 = vmul.f32 %v2463, 3.8918573e-05
    %v2476 = vadd.f32 %v2475, 0.001143296
    %v2477 = vmul.f32 %v2463, %v2476
    %v2478 = vadd.f32 %v2477, 0.014752088
    %v2479 = vmul.f32 %v2463, %v2478
    %v2480 = vadd.f32 %v2479, 0.112945676
    %v2481 = vmul.f32 %v2463, %v2480
    %v2482 = vadd.f32 %v2481, 0.4994258
    %v2483 = vmul.f32 %v2463, %v2482
    %v2484 = vadd.f32 %v2483, 1.0
    %v2485 = vrcp.pop %v2484
    %v2486 = vmul.f32 %v2484, %v2485
    %v2487 = vsub.f32 1.0, %v2486
    %v2488 = vmul.f32 %v2485, %v2487
    %v2489 = vadd.f32 %v2485, %v2488
    %vm2490 = vweird.f32 %v2484
    %vm2491 = vweird.f32 %v2485
    %vm2492 = vmor %vm2490, %vm2491
    %v2493 = vsel %vm2492, %v2485, %v2489
    %v2494 = vand.u32 2147483647, %v2484
    %vm2495 = vcmp.eq.f32.partialorder %v2494, 8.507059e+37
    %v2496 = vand.u32 %v2484, 2147483648
    %v2497 = vor.u32 1.1754944e-38, %v2496
    %v2498 = vsel %vm2495, %v2497, %v2493
    %v2499 = vmul.f32 %v2474, %v2498
    %v2500 = vmin.f32 %v2499, 1.0
    %v2501 = vmax.f32 %v2500, -1.0
    %v2502 = vmul.f32 %v722, %v722
    %v2503 = vmin.f32 16.0, %v2502
    %v2504 = vmul.f32 %v2503, 2.1237322e-06
    %v2505 = vadd.f32 %v2504, 0.00028619796
    %v2506 = vmul.f32 %v2503, %v2505
    %v2507 = vadd.f32 %v2506, 0.0036580483
    %v2508 = vmul.f32 %v2503, %v2507
    %v2509 = vadd.f32 %v2508, 0.05243302
    %v2510 = vmul.f32 %v2503, %v2509
    %v2511 = vadd.f32 %v2510, 0.18741608
    %v2512 = vmul.f32 %v2503, %v2511
    %v2513 = vadd.f32 %v2512, 1.1283791
    %v2514 = vmul.f32 %v722, %v2513
    %v2515 = vmul.f32 %v2503, 3.8918573e-05
    %v2516 = vadd.f32 %v2515, 0.001143296
    %v2517 = vmul.f32 %v2503, %v2516
    %v2518 = vadd.f32 %v2517, 0.014752088
    %v2519 = vmul.f32 %v2503, %v2518
    %v2520 = vadd.f32 %v2519, 0.112945676
    %v2521 = vmul.f32 %v2503, %v2520
    %v2522 = vadd.f32 %v2521, 0.4994258
    %v2523 = vmul.f32 %v2503, %v2522
    %v2524 = vadd.f32 %v2523, 1.0
    %v2525 = vrcp.pop %v2524
    %v2526 = vmul.f32 %v2524, %v2525
    %v2527 = vsub.f32 1.0, %v2526
    %v2528 = vmul.f32 %v2525, %v2527
    %v2529 = vadd.f32 %v2525, %v2528
    %vm2530 = vweird.f32 %v2524
    %vm2531 = vweird.f32 %v2525
    %vm2532 = vmor %vm2530, %vm2531
    %v2533 = vsel %vm2532, %v2525, %v2529
    %v2534 = vand.u32 2147483647, %v2524
    %vm2535 = vcmp.eq.f32.partialorder %v2534, 8.507059e+37
    %v2536 = vand.u32 %v2524, 2147483648
    %v2537 = vor.u32 1.1754944e-38, %v2536
    %v2538 = vsel %vm2535, %v2537, %v2533
    %v2539 = vmul.f32 %v2514, %v2538
    %v2540 = vmin.f32 %v2539, 1.0
    %v2541 = vmax.f32 %v2540, -1.0
    %v2542 = vmul.f32 %v723, %v723
    %v2543 = vmin.f32 16.0, %v2542
    %v2544 = vmul.f32 %v2543, 2.1237322e-06
    %v2545 = vadd.f32 %v2544, 0.00028619796
    %v2546 = vmul.f32 %v2543, %v2545
    %v2547 = vadd.f32 %v2546, 0.0036580483
    %v2548 = vmul.f32 %v2543, %v2547
    %v2549 = vadd.f32 %v2548, 0.05243302
    %v2550 = vmul.f32 %v2543, %v2549
    %v2551 = vadd.f32 %v2550, 0.18741608
    %v2552 = vmul.f32 %v2543, %v2551
    %v2553 = vadd.f32 %v2552, 1.1283791
    %v2554 = vmul.f32 %v723, %v2553
    %v2555 = vmul.f32 %v2543, 3.8918573e-05
    %v2556 = vadd.f32 %v2555, 0.001143296
    %v2557 = vmul.f32 %v2543, %v2556
    %v2558 = vadd.f32 %v2557, 0.014752088
    %v2559 = vmul.f32 %v2543, %v2558
    %v2560 = vadd.f32 %v2559, 0.112945676
    %v2561 = vmul.f32 %v2543, %v2560
    %v2562 = vadd.f32 %v2561, 0.4994258
    %v2563 = vmul.f32 %v2543, %v2562
    %v2564 = vadd.f32 %v2563, 1.0
    %v2565 = vrcp.pop %v2564
    %v2566 = vmul.f32 %v2564, %v2565
    %v2567 = vsub.f32 1.0, %v2566
    %v2568 = vmul.f32 %v2565, %v2567
    %v2569 = vadd.f32 %v2565, %v2568
    %vm2570 = vweird.f32 %v2564
    %vm2571 = vweird.f32 %v2565
    %vm2572 = vmor %vm2570, %vm2571
    %v2573 = vsel %vm2572, %v2565, %v2569
    %v2574 = vand.u32 2147483647, %v2564
    %vm2575 = vcmp.eq.f32.partialorder %v2574, 8.507059e+37
    %v2576 = vand.u32 %v2564, 2147483648
    %v2577 = vor.u32 1.1754944e-38, %v2576
    %v2578 = vsel %vm2575, %v2577, %v2573
    %v2579 = vmul.f32 %v2554, %v2578
    %v2580 = vmin.f32 %v2579, 1.0
    %v2581 = vmax.f32 %v2580, -1.0
    %v2582 = vmul.f32 %v724, %v724
    %v2583 = vmin.f32 16.0, %v2582
    %v2584 = vmul.f32 %v2583, 2.1237322e-06
    %v2585 = vadd.f32 %v2584, 0.00028619796
    %v2586 = vmul.f32 %v2583, %v2585
    %v2587 = vadd.f32 %v2586, 0.0036580483
    %v2588 = vmul.f32 %v2583, %v2587
    %v2589 = vadd.f32 %v2588, 0.05243302
    %v2590 = vmul.f32 %v2583, %v2589
    %v2591 = vadd.f32 %v2590, 0.18741608
    %v2592 = vmul.f32 %v2583, %v2591
    %v2593 = vadd.f32 %v2592, 1.1283791
    %v2594 = vmul.f32 %v724, %v2593
    %v2595 = vmul.f32 %v2583, 3.8918573e-05
    %v2596 = vadd.f32 %v2595, 0.001143296
    %v2597 = vmul.f32 %v2583, %v2596
    %v2598 = vadd.f32 %v2597, 0.014752088
    %v2599 = vmul.f32 %v2583, %v2598
    %v2600 = vadd.f32 %v2599, 0.112945676
    %v2601 = vmul.f32 %v2583, %v2600
    %v2602 = vadd.f32 %v2601, 0.4994258
    %v2603 = vmul.f32 %v2583, %v2602
    %v2604 = vadd.f32 %v2603, 1.0
    %v2605 = vrcp.pop %v2604
    %v2606 = vmul.f32 %v2604, %v2605
    %v2607 = vsub.f32 1.0, %v2606
    %v2608 = vmul.f32 %v2605, %v2607
    %v2609 = vadd.f32 %v2605, %v2608
    %vm2610 = vweird.f32 %v2604
    %vm2611 = vweird.f32 %v2605
    %vm2612 = vmor %vm2610, %vm2611
    %v2613 = vsel %vm2612, %v2605, %v2609
    %v2614 = vand.u32 2147483647, %v2604
    %vm2615 = vcmp.eq.f32.partialorder %v2614, 8.507059e+37
    %v2616 = vand.u32 %v2604, 2147483648
    %v2617 = vor.u32 1.1754944e-38, %v2616
    %v2618 = vsel %vm2615, %v2617, %v2613
    %v2619 = vmul.f32 %v2594, %v2618
    %v2620 = vmin.f32 %v2619, 1.0
    %v2621 = vmax.f32 %v2620, -1.0
    %v2622 = vmul.f32 %v725, %v725
    %v2623 = vmin.f32 16.0, %v2622
    %v2624 = vmul.f32 %v2623, 2.1237322e-06
    %v2625 = vadd.f32 %v2624, 0.00028619796
    %v2626 = vmul.f32 %v2623, %v2625
    %v2627 = vadd.f32 %v2626, 0.0036580483
    %v2628 = vmul.f32 %v2623, %v2627
    %v2629 = vadd.f32 %v2628, 0.05243302
    %v2630 = vmul.f32 %v2623, %v2629
    %v2631 = vadd.f32 %v2630, 0.18741608
    %v2632 = vmul.f32 %v2623, %v2631
    %v2633 = vadd.f32 %v2632, 1.1283791
    %v2634 = vmul.f32 %v725, %v2633
    %v2635 = vmul.f32 %v2623, 3.8918573e-05
    %v2636 = vadd.f32 %v2635, 0.001143296
    %v2637 = vmul.f32 %v2623, %v2636
    %v2638 = vadd.f32 %v2637, 0.014752088
    %v2639 = vmul.f32 %v2623, %v2638
    %v2640 = vadd.f32 %v2639, 0.112945676
    %v2641 = vmul.f32 %v2623, %v2640
    %v2642 = vadd.f32 %v2641, 0.4994258
    %v2643 = vmul.f32 %v2623, %v2642
    %v2644 = vadd.f32 %v2643, 1.0
    %v2645 = vrcp.pop %v2644
    %v2646 = vmul.f32 %v2644, %v2645
    %v2647 = vsub.f32 1.0, %v2646
    %v2648 = vmul.f32 %v2645, %v2647
    %v2649 = vadd.f32 %v2645, %v2648
    %vm2650 = vweird.f32 %v2644
    %vm2651 = vweird.f32 %v2645
    %vm2652 = vmor %vm2650, %vm2651
    %v2653 = vsel %vm2652, %v2645, %v2649
    %v2654 = vand.u32 2147483647, %v2644
    %vm2655 = vcmp.eq.f32.partialorder %v2654, 8.507059e+37
    %v2656 = vand.u32 %v2644, 2147483648
    %v2657 = vor.u32 1.1754944e-38, %v2656
    %v2658 = vsel %vm2655, %v2657, %v2653
    %v2659 = vmul.f32 %v2634, %v2658
    %v2660 = vmin.f32 %v2659, 1.0
    %v2661 = vmax.f32 %v2660, -1.0
    %v2662 = vmul.f32 %v726, %v726
    %v2663 = vmin.f32 16.0, %v2662
    %v2664 = vmul.f32 %v2663, 2.1237322e-06
    %v2665 = vadd.f32 %v2664, 0.00028619796
    %v2666 = vmul.f32 %v2663, %v2665
    %v2667 = vadd.f32 %v2666, 0.0036580483
    %v2668 = vmul.f32 %v2663, %v2667
    %v2669 = vadd.f32 %v2668, 0.05243302
    %v2670 = vmul.f32 %v2663, %v2669
    %v2671 = vadd.f32 %v2670, 0.18741608
    %v2672 = vmul.f32 %v2663, %v2671
    %v2673 = vadd.f32 %v2672, 1.1283791
    %v2674 = vmul.f32 %v726, %v2673
    %v2675 = vmul.f32 %v2663, 3.8918573e-05
    %v2676 = vadd.f32 %v2675, 0.001143296
    %v2677 = vmul.f32 %v2663, %v2676
    %v2678 = vadd.f32 %v2677, 0.014752088
    %v2679 = vmul.f32 %v2663, %v2678
    %v2680 = vadd.f32 %v2679, 0.112945676
    %v2681 = vmul.f32 %v2663, %v2680
    %v2682 = vadd.f32 %v2681, 0.4994258
    %v2683 = vmul.f32 %v2663, %v2682
    %v2684 = vadd.f32 %v2683, 1.0
    %v2685 = vrcp.pop %v2684
    %v2686 = vmul.f32 %v2684, %v2685
    %v2687 = vsub.f32 1.0, %v2686
    %v2688 = vmul.f32 %v2685, %v2687
    %v2689 = vadd.f32 %v2685, %v2688
    %vm2690 = vweird.f32 %v2684
    %vm2691 = vweird.f32 %v2685
    %vm2692 = vmor %vm2690, %vm2691
    %v2693 = vsel %vm2692, %v2685, %v2689
    %v2694 = vand.u32 2147483647, %v2684
    %vm2695 = vcmp.eq.f32.partialorder %v2694, 8.507059e+37
    %v2696 = vand.u32 %v2684, 2147483648
    %v2697 = vor.u32 1.1754944e-38, %v2696
    %v2698 = vsel %vm2695, %v2697, %v2693
    %v2699 = vmul.f32 %v2674, %v2698
    %v2700 = vmin.f32 %v2699, 1.0
    %v2701 = vmax.f32 %v2700, -1.0
    %v2702 = vmul.f32 %v727, %v727
    %v2703 = vmin.f32 16.0, %v2702
    %v2704 = vmul.f32 %v2703, 2.1237322e-06
    %v2705 = vadd.f32 %v2704, 0.00028619796
    %v2706 = vmul.f32 %v2703, %v2705
    %v2707 = vadd.f32 %v2706, 0.0036580483
    %v2708 = vmul.f32 %v2703, %v2707
    %v2709 = vadd.f32 %v2708, 0.05243302
    %v2710 = vmul.f32 %v2703, %v2709
    %v2711 = vadd.f32 %v2710, 0.18741608
    %v2712 = vmul.f32 %v2703, %v2711
    %v2713 = vadd.f32 %v2712, 1.1283791
    %v2714 = vmul.f32 %v727, %v2713
    %v2715 = vmul.f32 %v2703, 3.8918573e-05
    %v2716 = vadd.f32 %v2715, 0.001143296
    %v2717 = vmul.f32 %v2703, %v2716
    %v2718 = vadd.f32 %v2717, 0.014752088
    %v2719 = vmul.f32 %v2703, %v2718
    %v2720 = vadd.f32 %v2719, 0.112945676
    %v2721 = vmul.f32 %v2703, %v2720
    %v2722 = vadd.f32 %v2721, 0.4994258
    %v2723 = vmul.f32 %v2703, %v2722
    %v2724 = vadd.f32 %v2723, 1.0
    %v2725 = vrcp.pop %v2724
    %v2726 = vmul.f32 %v2724, %v2725
    %v2727 = vsub.f32 1.0, %v2726
    %v2728 = vmul.f32 %v2725, %v2727
    %v2729 = vadd.f32 %v2725, %v2728
    %vm2730 = vweird.f32 %v2724
    %vm2731 = vweird.f32 %v2725
    %vm2732 = vmor %vm2730, %vm2731
    %v2733 = vsel %vm2732, %v2725, %v2729
    %v2734 = vand.u32 2147483647, %v2724
    %vm2735 = vcmp.eq.f32.partialorder %v2734, 8.507059e+37
    %v2736 = vand.u32 %v2724, 2147483648
    %v2737 = vor.u32 1.1754944e-38, %v2736
    %v2738 = vsel %vm2735, %v2737, %v2733
    %v2739 = vmul.f32 %v2714, %v2738
    %v2740 = vmin.f32 %v2739, 1.0
    %v2741 = vmax.f32 %v2740, -1.0
    %v2742 = vmul.f32 %v728, %v728
    %v2743 = vmin.f32 16.0, %v2742
    %v2744 = vmul.f32 %v2743, 2.1237322e-06
    %v2745 = vadd.f32 %v2744, 0.00028619796
    %v2746 = vmul.f32 %v2743, %v2745
    %v2747 = vadd.f32 %v2746, 0.0036580483
    %v2748 = vmul.f32 %v2743, %v2747
    %v2749 = vadd.f32 %v2748, 0.05243302
    %v2750 = vmul.f32 %v2743, %v2749
    %v2751 = vadd.f32 %v2750, 0.18741608
    %v2752 = vmul.f32 %v2743, %v2751
    %v2753 = vadd.f32 %v2752, 1.1283791
    %v2754 = vmul.f32 %v728, %v2753
    %v2755 = vmul.f32 %v2743, 3.8918573e-05
    %v2756 = vadd.f32 %v2755, 0.001143296
    %v2757 = vmul.f32 %v2743, %v2756
    %v2758 = vadd.f32 %v2757, 0.014752088
    %v2759 = vmul.f32 %v2743, %v2758
    %v2760 = vadd.f32 %v2759, 0.112945676
    %v2761 = vmul.f32 %v2743, %v2760
    %v2762 = vadd.f32 %v2761, 0.4994258
    %v2763 = vmul.f32 %v2743, %v2762
    %v2764 = vadd.f32 %v2763, 1.0
    %v2765 = vrcp.pop %v2764
    %v2766 = vmul.f32 %v2764, %v2765
    %v2767 = vsub.f32 1.0, %v2766
    %v2768 = vmul.f32 %v2765, %v2767
    %v2769 = vadd.f32 %v2765, %v2768
    %vm2770 = vweird.f32 %v2764
    %vm2771 = vweird.f32 %v2765
    %vm2772 = vmor %vm2770, %vm2771
    %v2773 = vsel %vm2772, %v2765, %v2769
    %v2774 = vand.u32 2147483647, %v2764
    %vm2775 = vcmp.eq.f32.partialorder %v2774, 8.507059e+37
    %v2776 = vand.u32 %v2764, 2147483648
    %v2777 = vor.u32 1.1754944e-38, %v2776
    %v2778 = vsel %vm2775, %v2777, %v2773
    %v2779 = vmul.f32 %v2754, %v2778
    %v2780 = vmin.f32 %v2779, 1.0
    %v2781 = vmax.f32 %v2780, -1.0
    %v2782 = vmul.f32 %v729, %v729
    %v2783 = vmin.f32 16.0, %v2782
    %v2784 = vmul.f32 %v2783, 2.1237322e-06
    %v2785 = vadd.f32 %v2784, 0.00028619796
    %v2786 = vmul.f32 %v2783, %v2785
    %v2787 = vadd.f32 %v2786, 0.0036580483
    %v2788 = vmul.f32 %v2783, %v2787
    %v2789 = vadd.f32 %v2788, 0.05243302
    %v2790 = vmul.f32 %v2783, %v2789
    %v2791 = vadd.f32 %v2790, 0.18741608
    %v2792 = vmul.f32 %v2783, %v2791
    %v2793 = vadd.f32 %v2792, 1.1283791
    %v2794 = vmul.f32 %v729, %v2793
    %v2795 = vmul.f32 %v2783, 3.8918573e-05
    %v2796 = vadd.f32 %v2795, 0.001143296
    %v2797 = vmul.f32 %v2783, %v2796
    %v2798 = vadd.f32 %v2797, 0.014752088
    %v2799 = vmul.f32 %v2783, %v2798
    %v2800 = vadd.f32 %v2799, 0.112945676
    %v2801 = vmul.f32 %v2783, %v2800
    %v2802 = vadd.f32 %v2801, 0.4994258
    %v2803 = vmul.f32 %v2783, %v2802
    %v2804 = vadd.f32 %v2803, 1.0
    %v2805 = vrcp.pop %v2804
    %v2806 = vmul.f32 %v2804, %v2805
    %v2807 = vsub.f32 1.0, %v2806
    %v2808 = vmul.f32 %v2805, %v2807
    %v2809 = vadd.f32 %v2805, %v2808
    %vm2810 = vweird.f32 %v2804
    %vm2811 = vweird.f32 %v2805
    %vm2812 = vmor %vm2810, %vm2811
    %v2813 = vsel %vm2812, %v2805, %v2809
    %v2814 = vand.u32 2147483647, %v2804
    %vm2815 = vcmp.eq.f32.partialorder %v2814, 8.507059e+37
    %v2816 = vand.u32 %v2804, 2147483648
    %v2817 = vor.u32 1.1754944e-38, %v2816
    %v2818 = vsel %vm2815, %v2817, %v2813
    %v2819 = vmul.f32 %v2794, %v2818
    %v2820 = vmin.f32 %v2819, 1.0
    %v2821 = vmax.f32 %v2820, -1.0
    %v2822 = vmul.f32 %v730, %v730
    %v2823 = vmin.f32 16.0, %v2822
    %v2824 = vmul.f32 %v2823, 2.1237322e-06
    %v2825 = vadd.f32 %v2824, 0.00028619796
    %v2826 = vmul.f32 %v2823, %v2825
    %v2827 = vadd.f32 %v2826, 0.0036580483
    %v2828 = vmul.f32 %v2823, %v2827
    %v2829 = vadd.f32 %v2828, 0.05243302
    %v2830 = vmul.f32 %v2823, %v2829
    %v2831 = vadd.f32 %v2830, 0.18741608
    %v2832 = vmul.f32 %v2823, %v2831
    %v2833 = vadd.f32 %v2832, 1.1283791
    %v2834 = vmul.f32 %v730, %v2833
    %v2835 = vmul.f32 %v2823, 3.8918573e-05
    %v2836 = vadd.f32 %v2835, 0.001143296
    %v2837 = vmul.f32 %v2823, %v2836
    %v2838 = vadd.f32 %v2837, 0.014752088
    %v2839 = vmul.f32 %v2823, %v2838
    %v2840 = vadd.f32 %v2839, 0.112945676
    %v2841 = vmul.f32 %v2823, %v2840
    %v2842 = vadd.f32 %v2841, 0.4994258
    %v2843 = vmul.f32 %v2823, %v2842
    %v2844 = vadd.f32 %v2843, 1.0
    %v2845 = vrcp.pop %v2844
    %v2846 = vmul.f32 %v2844, %v2845
    %v2847 = vsub.f32 1.0, %v2846
    %v2848 = vmul.f32 %v2845, %v2847
    %v2849 = vadd.f32 %v2845, %v2848
    %vm2850 = vweird.f32 %v2844
    %vm2851 = vweird.f32 %v2845
    %vm2852 = vmor %vm2850, %vm2851
    %v2853 = vsel %vm2852, %v2845, %v2849
    %v2854 = vand.u32 2147483647, %v2844
    %vm2855 = vcmp.eq.f32.partialorder %v2854, 8.507059e+37
    %v2856 = vand.u32 %v2844, 2147483648
    %v2857 = vor.u32 1.1754944e-38, %v2856
    %v2858 = vsel %vm2855, %v2857, %v2853
    %v2859 = vmul.f32 %v2834, %v2858
    %v2860 = vmin.f32 %v2859, 1.0
    %v2861 = vmax.f32 %v2860, -1.0
    %v2862 = vmul.f32 %v731, %v731
    %v2863 = vmin.f32 16.0, %v2862
    %v2864 = vmul.f32 %v2863, 2.1237322e-06
    %v2865 = vadd.f32 %v2864, 0.00028619796
    %v2866 = vmul.f32 %v2863, %v2865
    %v2867 = vadd.f32 %v2866, 0.0036580483
    %v2868 = vmul.f32 %v2863, %v2867
    %v2869 = vadd.f32 %v2868, 0.05243302
    %v2870 = vmul.f32 %v2863, %v2869
    %v2871 = vadd.f32 %v2870, 0.18741608
    %v2872 = vmul.f32 %v2863, %v2871
    %v2873 = vadd.f32 %v2872, 1.1283791
    %v2874 = vmul.f32 %v731, %v2873
    %v2875 = vmul.f32 %v2863, 3.8918573e-05
    %v2876 = vadd.f32 %v2875, 0.001143296
    %v2877 = vmul.f32 %v2863, %v2876
    %v2878 = vadd.f32 %v2877, 0.014752088
    %v2879 = vmul.f32 %v2863, %v2878
    %v2880 = vadd.f32 %v2879, 0.112945676
    %v2881 = vmul.f32 %v2863, %v2880
    %v2882 = vadd.f32 %v2881, 0.4994258
    %v2883 = vmul.f32 %v2863, %v2882
    %v2884 = vadd.f32 %v2883, 1.0
    %v2885 = vrcp.pop %v2884
    %v2886 = vmul.f32 %v2884, %v2885
    %v2887 = vsub.f32 1.0, %v2886
    %v2888 = vmul.f32 %v2885, %v2887
    %v2889 = vadd.f32 %v2885, %v2888
    %vm2890 = vweird.f32 %v2884
    %vm2891 = vweird.f32 %v2885
    %vm2892 = vmor %vm2890, %vm2891
    %v2893 = vsel %vm2892, %v2885, %v2889
    %v2894 = vand.u32 2147483647, %v2884
    %vm2895 = vcmp.eq.f32.partialorder %v2894, 8.507059e+37
    %v2896 = vand.u32 %v2884, 2147483648
    %v2897 = vor.u32 1.1754944e-38, %v2896
    %v2898 = vsel %vm2895, %v2897, %v2893
    %v2899 = vmul.f32 %v2874, %v2898
    %v2900 = vmin.f32 %v2899, 1.0
    %v2901 = vmax.f32 %v2900, -1.0
    %v2902 = vmul.f32 %v732, %v732
    %v2903 = vmin.f32 16.0, %v2902
    %v2904 = vmul.f32 %v2903, 2.1237322e-06
    %v2905 = vadd.f32 %v2904, 0.00028619796
    %v2906 = vmul.f32 %v2903, %v2905
    %v2907 = vadd.f32 %v2906, 0.0036580483
    %v2908 = vmul.f32 %v2903, %v2907
    %v2909 = vadd.f32 %v2908, 0.05243302
    %v2910 = vmul.f32 %v2903, %v2909
    %v2911 = vadd.f32 %v2910, 0.18741608
    %v2912 = vmul.f32 %v2903, %v2911
    %v2913 = vadd.f32 %v2912, 1.1283791
    %v2914 = vmul.f32 %v732, %v2913
    %v2915 = vmul.f32 %v2903, 3.8918573e-05
    %v2916 = vadd.f32 %v2915, 0.001143296
    %v2917 = vmul.f32 %v2903, %v2916
    %v2918 = vadd.f32 %v2917, 0.014752088
    %v2919 = vmul.f32 %v2903, %v2918
    %v2920 = vadd.f32 %v2919, 0.112945676
    %v2921 = vmul.f32 %v2903, %v2920
    %v2922 = vadd.f32 %v2921, 0.4994258
    %v2923 = vmul.f32 %v2903, %v2922
    %v2924 = vadd.f32 %v2923, 1.0
    %v2925 = vrcp.pop %v2924
    %v2926 = vmul.f32 %v2924, %v2925
    %v2927 = vsub.f32 1.0, %v2926
    %v2928 = vmul.f32 %v2925, %v2927
    %v2929 = vadd.f32 %v2925, %v2928
    %vm2930 = vweird.f32 %v2924
    %vm2931 = vweird.f32 %v2925
    %vm2932 = vmor %vm2930, %vm2931
    %v2933 = vsel %vm2932, %v2925, %v2929
    %v2934 = vand.u32 2147483647, %v2924
    %vm2935 = vcmp.eq.f32.partialorder %v2934, 8.507059e+37
    %v2936 = vand.u32 %v2924, 2147483648
    %v2937 = vor.u32 1.1754944e-38, %v2936
    %v2938 = vsel %vm2935, %v2937, %v2933
    %v2939 = vmul.f32 %v2914, %v2938
    %v2940 = vmin.f32 %v2939, 1.0
    %v2941 = vmax.f32 %v2940, -1.0
    %v2942 = vmul.f32 %v733, %v733
    %v2943 = vmin.f32 16.0, %v2942
    %v2944 = vmul.f32 %v2943, 2.1237322e-06
    %v2945 = vadd.f32 %v2944, 0.00028619796
    %v2946 = vmul.f32 %v2943, %v2945
    %v2947 = vadd.f32 %v2946, 0.0036580483
    %v2948 = vmul.f32 %v2943, %v2947
    %v2949 = vadd.f32 %v2948, 0.05243302
    %v2950 = vmul.f32 %v2943, %v2949
    %v2951 = vadd.f32 %v2950, 0.18741608
    %v2952 = vmul.f32 %v2943, %v2951
    %v2953 = vadd.f32 %v2952, 1.1283791
    %v2954 = vmul.f32 %v733, %v2953
    %v2955 = vmul.f32 %v2943, 3.8918573e-05
    %v2956 = vadd.f32 %v2955, 0.001143296
    %v2957 = vmul.f32 %v2943, %v2956
    %v2958 = vadd.f32 %v2957, 0.014752088
    %v2959 = vmul.f32 %v2943, %v2958
    %v2960 = vadd.f32 %v2959, 0.112945676
    %v2961 = vmul.f32 %v2943, %v2960
    %v2962 = vadd.f32 %v2961, 0.4994258
    %v2963 = vmul.f32 %v2943, %v2962
    %v2964 = vadd.f32 %v2963, 1.0
    %v2965 = vrcp.pop %v2964
    %v2966 = vmul.f32 %v2964, %v2965
    %v2967 = vsub.f32 1.0, %v2966
    %v2968 = vmul.f32 %v2965, %v2967
    %v2969 = vadd.f32 %v2965, %v2968
    %vm2970 = vweird.f32 %v2964
    %vm2971 = vweird.f32 %v2965
    %vm2972 = vmor %vm2970, %vm2971
    %v2973 = vsel %vm2972, %v2965, %v2969
    %v2974 = vand.u32 2147483647, %v2964
    %vm2975 = vcmp.eq.f32.partialorder %v2974, 8.507059e+37
    %v2976 = vand.u32 %v2964, 2147483648
    %v2977 = vor.u32 1.1754944e-38, %v2976
    %v2978 = vsel %vm2975, %v2977, %v2973
    %v2979 = vmul.f32 %v2954, %v2978
    %v2980 = vmin.f32 %v2979, 1.0
    %v2981 = vmax.f32 %v2980, -1.0
    %v2982 = vmul.f32 %v734, %v734
    %v2983 = vmin.f32 16.0, %v2982
    %v2984 = vmul.f32 %v2983, 2.1237322e-06
    %v2985 = vadd.f32 %v2984, 0.00028619796
    %v2986 = vmul.f32 %v2983, %v2985
    %v2987 = vadd.f32 %v2986, 0.0036580483
    %v2988 = vmul.f32 %v2983, %v2987
    %v2989 = vadd.f32 %v2988, 0.05243302
    %v2990 = vmul.f32 %v2983, %v2989
    %v2991 = vadd.f32 %v2990, 0.18741608
    %v2992 = vmul.f32 %v2983, %v2991
    %v2993 = vadd.f32 %v2992, 1.1283791
    %v2994 = vmul.f32 %v734, %v2993
    %v2995 = vmul.f32 %v2983, 3.8918573e-05
    %v2996 = vadd.f32 %v2995, 0.001143296
    %v2997 = vmul.f32 %v2983, %v2996
    %v2998 = vadd.f32 %v2997, 0.014752088
    %v2999 = vmul.f32 %v2983, %v2998
    %v3000 = vadd.f32 %v2999, 0.112945676
    %v3001 = vmul.f32 %v2983, %v3000
    %v3002 = vadd.f32 %v3001, 0.4994258
    %v3003 = vmul.f32 %v2983, %v3002
    %v3004 = vadd.f32 %v3003, 1.0
    %v3005 = vrcp.pop %v3004
    %v3006 = vmul.f32 %v3004, %v3005
    %v3007 = vsub.f32 1.0, %v3006
    %v3008 = vmul.f32 %v3005, %v3007
    %v3009 = vadd.f32 %v3005, %v3008
    %vm3010 = vweird.f32 %v3004
    %vm3011 = vweird.f32 %v3005
    %vm3012 = vmor %vm3010, %vm3011
    %v3013 = vsel %vm3012, %v3005, %v3009
    %v3014 = vand.u32 2147483647, %v3004
    %vm3015 = vcmp.eq.f32.partialorder %v3014, 8.507059e+37
    %v3016 = vand.u32 %v3004, 2147483648
    %v3017 = vor.u32 1.1754944e-38, %v3016
    %v3018 = vsel %vm3015, %v3017, %v3013
    %v3019 = vmul.f32 %v2994, %v3018
    %v3020 = vmin.f32 %v3019, 1.0
    %v3021 = vmax.f32 %v3020, -1.0
    %v3022 = vmul.f32 %v735, %v735
    %v3023 = vmin.f32 16.0, %v3022
    %v3024 = vmul.f32 %v3023, 2.1237322e-06
    %v3025 = vadd.f32 %v3024, 0.00028619796
    %v3026 = vmul.f32 %v3023, %v3025
    %v3027 = vadd.f32 %v3026, 0.0036580483
    %v3028 = vmul.f32 %v3023, %v3027
    %v3029 = vadd.f32 %v3028, 0.05243302
    %v3030 = vmul.f32 %v3023, %v3029
    %v3031 = vadd.f32 %v3030, 0.18741608
    %v3032 = vmul.f32 %v3023, %v3031
    %v3033 = vadd.f32 %v3032, 1.1283791
    %v3034 = vmul.f32 %v735, %v3033
    %v3035 = vmul.f32 %v3023, 3.8918573e-05
    %v3036 = vadd.f32 %v3035, 0.001143296
    %v3037 = vmul.f32 %v3023, %v3036
    %v3038 = vadd.f32 %v3037, 0.014752088
    %v3039 = vmul.f32 %v3023, %v3038
    %v3040 = vadd.f32 %v3039, 0.112945676
    %v3041 = vmul.f32 %v3023, %v3040
    %v3042 = vadd.f32 %v3041, 0.4994258
    %v3043 = vmul.f32 %v3023, %v3042
    %v3044 = vadd.f32 %v3043, 1.0
    %v3045 = vrcp.pop %v3044
    %v3046 = vmul.f32 %v3044, %v3045
    %v3047 = vsub.f32 1.0, %v3046
    %v3048 = vmul.f32 %v3045, %v3047
    %v3049 = vadd.f32 %v3045, %v3048
    %vm3050 = vweird.f32 %v3044
    %vm3051 = vweird.f32 %v3045
    %vm3052 = vmor %vm3050, %vm3051
    %v3053 = vsel %vm3052, %v3045, %v3049
    %v3054 = vand.u32 2147483647, %v3044
    %vm3055 = vcmp.eq.f32.partialorder %v3054, 8.507059e+37
    %v3056 = vand.u32 %v3044, 2147483648
    %v3057 = vor.u32 1.1754944e-38, %v3056
    %v3058 = vsel %vm3055, %v3057, %v3053
    %v3059 = vmul.f32 %v3034, %v3058
    %v3060 = vmin.f32 %v3059, 1.0
    %v3061 = vmax.f32 %v3060, -1.0
    %v3062 = vmul.f32 %v736, %v736
    %v3063 = vmin.f32 16.0, %v3062
    %v3064 = vmul.f32 %v3063, 2.1237322e-06
    %v3065 = vadd.f32 %v3064, 0.00028619796
    %v3066 = vmul.f32 %v3063, %v3065
    %v3067 = vadd.f32 %v3066, 0.0036580483
    %v3068 = vmul.f32 %v3063, %v3067
    %v3069 = vadd.f32 %v3068, 0.05243302
    %v3070 = vmul.f32 %v3063, %v3069
    %v3071 = vadd.f32 %v3070, 0.18741608
    %v3072 = vmul.f32 %v3063, %v3071
    %v3073 = vadd.f32 %v3072, 1.1283791
    %v3074 = vmul.f32 %v736, %v3073
    %v3075 = vmul.f32 %v3063, 3.8918573e-05
    %v3076 = vadd.f32 %v3075, 0.001143296
    %v3077 = vmul.f32 %v3063, %v3076
    %v3078 = vadd.f32 %v3077, 0.014752088
    %v3079 = vmul.f32 %v3063, %v3078
    %v3080 = vadd.f32 %v3079, 0.112945676
    %v3081 = vmul.f32 %v3063, %v3080
    %v3082 = vadd.f32 %v3081, 0.4994258
    %v3083 = vmul.f32 %v3063, %v3082
    %v3084 = vadd.f32 %v3083, 1.0
    %v3085 = vrcp.pop %v3084
    %v3086 = vmul.f32 %v3084, %v3085
    %v3087 = vsub.f32 1.0, %v3086
    %v3088 = vmul.f32 %v3085, %v3087
    %v3089 = vadd.f32 %v3085, %v3088
    %vm3090 = vweird.f32 %v3084
    %vm3091 = vweird.f32 %v3085
    %vm3092 = vmor %vm3090, %vm3091
    %v3093 = vsel %vm3092, %v3085, %v3089
    %v3094 = vand.u32 2147483647, %v3084
    %vm3095 = vcmp.eq.f32.partialorder %v3094, 8.507059e+37
    %v3096 = vand.u32 %v3084, 2147483648
    %v3097 = vor.u32 1.1754944e-38, %v3096
    %v3098 = vsel %vm3095, %v3097, %v3093
    %v3099 = vmul.f32 %v3074, %v3098
    %v3100 = vmin.f32 %v3099, 1.0
    %v3101 = vmax.f32 %v3100, -1.0
    %v3102 = vmul.f32 %v737, %v737
    %v3103 = vmin.f32 16.0, %v3102
    %v3104 = vmul.f32 %v3103, 2.1237322e-06
    %v3105 = vadd.f32 %v3104, 0.00028619796
    %v3106 = vmul.f32 %v3103, %v3105
    %v3107 = vadd.f32 %v3106, 0.0036580483
    %v3108 = vmul.f32 %v3103, %v3107
    %v3109 = vadd.f32 %v3108, 0.05243302
    %v3110 = vmul.f32 %v3103, %v3109
    %v3111 = vadd.f32 %v3110, 0.18741608
    %v3112 = vmul.f32 %v3103, %v3111
    %v3113 = vadd.f32 %v3112, 1.1283791
    %v3114 = vmul.f32 %v737, %v3113
    %v3115 = vmul.f32 %v3103, 3.8918573e-05
    %v3116 = vadd.f32 %v3115, 0.001143296
    %v3117 = vmul.f32 %v3103, %v3116
    %v3118 = vadd.f32 %v3117, 0.014752088
    %v3119 = vmul.f32 %v3103, %v3118
    %v3120 = vadd.f32 %v3119, 0.112945676
    %v3121 = vmul.f32 %v3103, %v3120
    %v3122 = vadd.f32 %v3121, 0.4994258
    %v3123 = vmul.f32 %v3103, %v3122
    %v3124 = vadd.f32 %v3123, 1.0
    %v3125 = vrcp.pop %v3124
    %v3126 = vmul.f32 %v3124, %v3125
    %v3127 = vsub.f32 1.0, %v3126
    %v3128 = vmul.f32 %v3125, %v3127
    %v3129 = vadd.f32 %v3125, %v3128
    %vm3130 = vweird.f32 %v3124
    %vm3131 = vweird.f32 %v3125
    %vm3132 = vmor %vm3130, %vm3131
    %v3133 = vsel %vm3132, %v3125, %v3129
    %v3134 = vand.u32 2147483647, %v3124
    %vm3135 = vcmp.eq.f32.partialorder %v3134, 8.507059e+37
    %v3136 = vand.u32 %v3124, 2147483648
    %v3137 = vor.u32 1.1754944e-38, %v3136
    %v3138 = vsel %vm3135, %v3137, %v3133
    %v3139 = vmul.f32 %v3114, %v3138
    %v3140 = vmin.f32 %v3139, 1.0
    %v3141 = vmax.f32 %v3140, -1.0
    %v3142 = vmul.f32 %v738, %v738
    %v3143 = vmin.f32 16.0, %v3142
    %v3144 = vmul.f32 %v3143, 2.1237322e-06
    %v3145 = vadd.f32 %v3144, 0.00028619796
    %v3146 = vmul.f32 %v3143, %v3145
    %v3147 = vadd.f32 %v3146, 0.0036580483
    %v3148 = vmul.f32 %v3143, %v3147
    %v3149 = vadd.f32 %v3148, 0.05243302
    %v3150 = vmul.f32 %v3143, %v3149
    %v3151 = vadd.f32 %v3150, 0.18741608
    %v3152 = vmul.f32 %v3143, %v3151
    %v3153 = vadd.f32 %v3152, 1.1283791
    %v3154 = vmul.f32 %v738, %v3153
    %v3155 = vmul.f32 %v3143, 3.8918573e-05
    %v3156 = vadd.f32 %v3155, 0.001143296
    %v3157 = vmul.f32 %v3143, %v3156
    %v3158 = vadd.f32 %v3157, 0.014752088
    %v3159 = vmul.f32 %v3143, %v3158
    %v3160 = vadd.f32 %v3159, 0.112945676
    %v3161 = vmul.f32 %v3143, %v3160
    %v3162 = vadd.f32 %v3161, 0.4994258
    %v3163 = vmul.f32 %v3143, %v3162
    %v3164 = vadd.f32 %v3163, 1.0
    %v3165 = vrcp.pop %v3164
    %v3166 = vmul.f32 %v3164, %v3165
    %v3167 = vsub.f32 1.0, %v3166
    %v3168 = vmul.f32 %v3165, %v3167
    %v3169 = vadd.f32 %v3165, %v3168
    %vm3170 = vweird.f32 %v3164
    %vm3171 = vweird.f32 %v3165
    %vm3172 = vmor %vm3170, %vm3171
    %v3173 = vsel %vm3172, %v3165, %v3169
    %v3174 = vand.u32 2147483647, %v3164
    %vm3175 = vcmp.eq.f32.partialorder %v3174, 8.507059e+37
    %v3176 = vand.u32 %v3164, 2147483648
    %v3177 = vor.u32 1.1754944e-38, %v3176
    %v3178 = vsel %vm3175, %v3177, %v3173
    %v3179 = vmul.f32 %v3154, %v3178
    %v3180 = vmin.f32 %v3179, 1.0
    %v3181 = vmax.f32 %v3180, -1.0
    %v3182 = vmul.f32 %v739, %v739
    %v3183 = vmin.f32 16.0, %v3182
    %v3184 = vmul.f32 %v3183, 2.1237322e-06
    %v3185 = vadd.f32 %v3184, 0.00028619796
    %v3186 = vmul.f32 %v3183, %v3185
    %v3187 = vadd.f32 %v3186, 0.0036580483
    %v3188 = vmul.f32 %v3183, %v3187
    %v3189 = vadd.f32 %v3188, 0.05243302
    %v3190 = vmul.f32 %v3183, %v3189
    %v3191 = vadd.f32 %v3190, 0.18741608
    %v3192 = vmul.f32 %v3183, %v3191
    %v3193 = vadd.f32 %v3192, 1.1283791
    %v3194 = vmul.f32 %v739, %v3193
    %v3195 = vmul.f32 %v3183, 3.8918573e-05
    %v3196 = vadd.f32 %v3195, 0.001143296
    %v3197 = vmul.f32 %v3183, %v3196
    %v3198 = vadd.f32 %v3197, 0.014752088
    %v3199 = vmul.f32 %v3183, %v3198
    %v3200 = vadd.f32 %v3199, 0.112945676
    %v3201 = vmul.f32 %v3183, %v3200
    %v3202 = vadd.f32 %v3201, 0.4994258
    %v3203 = vmul.f32 %v3183, %v3202
    %v3204 = vadd.f32 %v3203, 1.0
    %v3205 = vrcp.pop %v3204
    %v3206 = vmul.f32 %v3204, %v3205
    %v3207 = vsub.f32 1.0, %v3206
    %v3208 = vmul.f32 %v3205, %v3207
    %v3209 = vadd.f32 %v3205, %v3208
    %vm3210 = vweird.f32 %v3204
    %vm3211 = vweird.f32 %v3205
    %vm3212 = vmor %vm3210, %vm3211
    %v3213 = vsel %vm3212, %v3205, %v3209
    %v3214 = vand.u32 2147483647, %v3204
    %vm3215 = vcmp.eq.f32.partialorder %v3214, 8.507059e+37
    %v3216 = vand.u32 %v3204, 2147483648
    %v3217 = vor.u32 1.1754944e-38, %v3216
    %v3218 = vsel %vm3215, %v3217, %v3213
    %v3219 = vmul.f32 %v3194, %v3218
    %v3220 = vmin.f32 %v3219, 1.0
    %v3221 = vmax.f32 %v3220, -1.0
    %v3222 = vmul.f32 %v740, %v740
    %v3223 = vmin.f32 16.0, %v3222
    %v3224 = vmul.f32 %v3223, 2.1237322e-06
    %v3225 = vadd.f32 %v3224, 0.00028619796
    %v3226 = vmul.f32 %v3223, %v3225
    %v3227 = vadd.f32 %v3226, 0.0036580483
    %v3228 = vmul.f32 %v3223, %v3227
    %v3229 = vadd.f32 %v3228, 0.05243302
    %v3230 = vmul.f32 %v3223, %v3229
    %v3231 = vadd.f32 %v3230, 0.18741608
    %v3232 = vmul.f32 %v3223, %v3231
    %v3233 = vadd.f32 %v3232, 1.1283791
    %v3234 = vmul.f32 %v740, %v3233
    %v3235 = vmul.f32 %v3223, 3.8918573e-05
    %v3236 = vadd.f32 %v3235, 0.001143296
    %v3237 = vmul.f32 %v3223, %v3236
    %v3238 = vadd.f32 %v3237, 0.014752088
    %v3239 = vmul.f32 %v3223, %v3238
    %v3240 = vadd.f32 %v3239, 0.112945676
    %v3241 = vmul.f32 %v3223, %v3240
    %v3242 = vadd.f32 %v3241, 0.4994258
    %v3243 = vmul.f32 %v3223, %v3242
    %v3244 = vadd.f32 %v3243, 1.0
    %v3245 = vrcp.pop %v3244
    %v3246 = vmul.f32 %v3244, %v3245
    %v3247 = vsub.f32 1.0, %v3246
    %v3248 = vmul.f32 %v3245, %v3247
    %v3249 = vadd.f32 %v3245, %v3248
    %vm3250 = vweird.f32 %v3244
    %vm3251 = vweird.f32 %v3245
    %vm3252 = vmor %vm3250, %vm3251
    %v3253 = vsel %vm3252, %v3245, %v3249
    %v3254 = vand.u32 2147483647, %v3244
    %vm3255 = vcmp.eq.f32.partialorder %v3254, 8.507059e+37
    %v3256 = vand.u32 %v3244, 2147483648
    %v3257 = vor.u32 1.1754944e-38, %v3256
    %v3258 = vsel %vm3255, %v3257, %v3253
    %v3259 = vmul.f32 %v3234, %v3258
    %v3260 = vmin.f32 %v3259, 1.0
    %v3261 = vmax.f32 %v3260, -1.0
    %v3262 = vmul.f32 %v741, %v741
    %v3263 = vmin.f32 16.0, %v3262
    %v3264 = vmul.f32 %v3263, 2.1237322e-06
    %v3265 = vadd.f32 %v3264, 0.00028619796
    %v3266 = vmul.f32 %v3263, %v3265
    %v3267 = vadd.f32 %v3266, 0.0036580483
    %v3268 = vmul.f32 %v3263, %v3267
    %v3269 = vadd.f32 %v3268, 0.05243302
    %v3270 = vmul.f32 %v3263, %v3269
    %v3271 = vadd.f32 %v3270, 0.18741608
    %v3272 = vmul.f32 %v3263, %v3271
    %v3273 = vadd.f32 %v3272, 1.1283791
    %v3274 = vmul.f32 %v741, %v3273
    %v3275 = vmul.f32 %v3263, 3.8918573e-05
    %v3276 = vadd.f32 %v3275, 0.001143296
    %v3277 = vmul.f32 %v3263, %v3276
    %v3278 = vadd.f32 %v3277, 0.014752088
    %v3279 = vmul.f32 %v3263, %v3278
    %v3280 = vadd.f32 %v3279, 0.112945676
    %v3281 = vmul.f32 %v3263, %v3280
    %v3282 = vadd.f32 %v3281, 0.4994258
    %v3283 = vmul.f32 %v3263, %v3282
    %v3284 = vadd.f32 %v3283, 1.0
    %v3285 = vrcp.pop %v3284
    %v3286 = vmul.f32 %v3284, %v3285
    %v3287 = vsub.f32 1.0, %v3286
    %v3288 = vmul.f32 %v3285, %v3287
    %v3289 = vadd.f32 %v3285, %v3288
    %vm3290 = vweird.f32 %v3284
    %vm3291 = vweird.f32 %v3285
    %vm3292 = vmor %vm3290, %vm3291
    %v3293 = vsel %vm3292, %v3285, %v3289
    %v3294 = vand.u32 2147483647, %v3284
    %vm3295 = vcmp.eq.f32.partialorder %v3294, 8.507059e+37
    %v3296 = vand.u32 %v3284, 2147483648
    %v3297 = vor.u32 1.1754944e-38, %v3296
    %v3298 = vsel %vm3295, %v3297, %v3293
    %v3299 = vmul.f32 %v3274, %v3298
    %v3300 = vmin.f32 %v3299, 1.0
    %v3301 = vmax.f32 %v3300, -1.0
    %v3302 = vadd.f32 %v781, 1.0
    %v3303 = vadd.f32 %v821, 1.0
    %v3304 = vadd.f32 %v861, 1.0
    %v3305 = vadd.f32 %v901, 1.0
    %v3306 = vadd.f32 %v941, 1.0
    %v3307 = vadd.f32 %v981, 1.0
    %v3308 = vadd.f32 %v1021, 1.0
    %v3309 = vadd.f32 %v1061, 1.0
    %v3310 = vadd.f32 %v1101, 1.0
    %v3311 = vadd.f32 %v1141, 1.0
    %v3312 = vadd.f32 %v1181, 1.0
    %v3313 = vadd.f32 %v1221, 1.0
    %v3314 = vadd.f32 %v1261, 1.0
    %v3315 = vadd.f32 %v1301, 1.0
    %v3316 = vadd.f32 %v1341, 1.0
    %v3317 = vadd.f32 %v1381, 1.0
    %v3318 = vadd.f32 %v1421, 1.0
    %v3319 = vadd.f32 %v1461, 1.0
    %v3320 = vadd.f32 %v1501, 1.0
    %v3321 = vadd.f32 %v1541, 1.0
    %v3322 = vadd.f32 %v1581, 1.0
    %v3323 = vadd.f32 %v1621, 1.0
    %v3324 = vadd.f32 %v1661, 1.0
    %v3325 = vadd.f32 %v1701, 1.0
    %v3326 = vadd.f32 %v1741, 1.0
    %v3327 = vadd.f32 %v1781, 1.0
    %v3328 = vadd.f32 %v1821, 1.0
    %v3329 = vadd.f32 %v1861, 1.0
    %v3330 = vadd.f32 %v1901, 1.0
    %v3331 = vadd.f32 %v1941, 1.0
    %v3332 = vadd.f32 %v1981, 1.0
    %v3333 = vadd.f32 %v2021, 1.0
    %v3334 = vadd.f32 %v2061, 1.0
    %v3335 = vadd.f32 %v2101, 1.0
    %v3336 = vadd.f32 %v2141, 1.0
    %v3337 = vadd.f32 %v2181, 1.0
    %v3338 = vadd.f32 %v2221, 1.0
    %v3339 = vadd.f32 %v2261, 1.0
    %v3340 = vadd.f32 %v2301, 1.0
    %v3341 = vadd.f32 %v2341, 1.0
    %v3342 = vadd.f32 %v2381, 1.0
    %v3343 = vadd.f32 %v2421, 1.0
    %v3344 = vadd.f32 %v2461, 1.0
    %v3345 = vadd.f32 %v2501, 1.0
    %v3346 = vadd.f32 %v2541, 1.0
    %v3347 = vadd.f32 %v2581, 1.0
    %v3348 = vadd.f32 %v2621, 1.0
    %v3349 = vadd.f32 %v2661, 1.0
    %v3350 = vadd.f32 %v2701, 1.0
    %v3351 = vadd.f32 %v2741, 1.0
    %v3352 = vadd.f32 %v2781, 1.0
    %v3353 = vadd.f32 %v2821, 1.0
    %v3354 = vadd.f32 %v2861, 1.0
    %v3355 = vadd.f32 %v2901, 1.0
    %v3356 = vadd.f32 %v2941, 1.0
    %v3357 = vadd.f32 %v2981, 1.0
    %v3358 = vadd.f32 %v3021, 1.0
    %v3359 = vadd.f32 %v3061, 1.0
    %v3360 = vadd.f32 %v3101, 1.0
    %v3361 = vadd.f32 %v3141, 1.0
    %v3362 = vadd.f32 %v3181, 1.0
    %v3363 = vadd.f32 %v3221, 1.0
    %v3364 = vadd.f32 %v3261, 1.0
    %v3365 = vadd.f32 %v3301, 1.0
    %v3366 = vmul.f32 %v614, %v3302
    %v3367 = vmul.f32 %v615, %v3303
    %v3368 = vmul.f32 %v616, %v3304
    %v3369 = vmul.f32 %v617, %v3305
    %v3370 = vmul.f32 %v618, %v3306
    %v3371 = vmul.f32 %v619, %v3307
    %v3372 = vmul.f32 %v620, %v3308
    %v3373 = vmul.f32 %v621, %v3309
    %v3374 = vmul.f32 %v622, %v3310
    %v3375 = vmul.f32 %v623, %v3311
    %v3376 = vmul.f32 %v624, %v3312
    %v3377 = vmul.f32 %v625, %v3313
    %v3378 = vmul.f32 %v626, %v3314
    %v3379 = vmul.f32 %v627, %v3315
    %v3380 = vmul.f32 %v628, %v3316
    %v3381 = vmul.f32 %v629, %v3317
    %v3382 = vmul.f32 %v630, %v3318
    %v3383 = vmul.f32 %v631, %v3319
    %v3384 = vmul.f32 %v632, %v3320
    %v3385 = vmul.f32 %v633, %v3321
    %v3386 = vmul.f32 %v634, %v3322
    %v3387 = vmul.f32 %v635, %v3323
    %v3388 = vmul.f32 %v636, %v3324
    %v3389 = vmul.f32 %v637, %v3325
    %v3390 = vmul.f32 %v638, %v3326
    %v3391 = vmul.f32 %v639, %v3327
    %v3392 = vmul.f32 %v640, %v3328
    %v3393 = vmul.f32 %v641, %v3329
    %v3394 = vmul.f32 %v642, %v3330
    %v3395 = vmul.f32 %v643, %v3331
    %v3396 = vmul.f32 %v644, %v3332
    %v3397 = vmul.f32 %v645, %v3333
    %v3398 = vmul.f32 %v646, %v3334
    %v3399 = vmul.f32 %v647, %v3335
    %v3400 = vmul.f32 %v648, %v3336
    %v3401 = vmul.f32 %v649, %v3337
    %v3402 = vmul.f32 %v650, %v3338
    %v3403 = vmul.f32 %v651, %v3339
    %v3404 = vmul.f32 %v652, %v3340
    %v3405 = vmul.f32 %v653, %v3341
    %v3406 = vmul.f32 %v654, %v3342
    %v3407 = vmul.f32 %v655, %v3343
    %v3408 = vmul.f32 %v656, %v3344
    %v3409 = vmul.f32 %v657, %v3345
    %v3410 = vmul.f32 %v658, %v3346
    %v3411 = vmul.f32 %v659, %v3347
    %v3412 = vmul.f32 %v660, %v3348
    %v3413 = vmul.f32 %v661, %v3349
    %v3414 = vmul.f32 %v662, %v3350
    %v3415 = vmul.f32 %v663, %v3351
    %v3416 = vmul.f32 %v664, %v3352
    %v3417 = vmul.f32 %v665, %v3353
    %v3418 = vmul.f32 %v666, %v3354
    %v3419 = vmul.f32 %v667, %v3355
    %v3420 = vmul.f32 %v668, %v3356
    %v3421 = vmul.f32 %v669, %v3357
    %v3422 = vmul.f32 %v670, %v3358
    %v3423 = vmul.f32 %v671, %v3359
    %v3424 = vmul.f32 %v672, %v3360
    %v3425 = vmul.f32 %v673, %v3361
    %v3426 = vmul.f32 %v674, %v3362
    %v3427 = vmul.f32 %v675, %v3363
    %v3428 = vmul.f32 %v676, %v3364
    %v3429 = vmul.f32 %v677, %v3365
    %v3430 = vpack.c.bf16 %v3366, %v3366
    %v3431 = vpack.c.bf16 %v3367, %v3367
    %v3432 = vpack.c.bf16 %v3368, %v3368
    %v3433 = vpack.c.bf16 %v3369, %v3369
    %v3434 = vpack.c.bf16 %v3370, %v3370
    %v3435 = vpack.c.bf16 %v3371, %v3371
    %v3436 = vpack.c.bf16 %v3372, %v3372
    %v3437 = vpack.c.bf16 %v3373, %v3373
    %v3438 = vpack.c.bf16 %v3374, %v3374
    %v3439 = vpack.c.bf16 %v3375, %v3375
    %v3440 = vpack.c.bf16 %v3376, %v3376
    %v3441 = vpack.c.bf16 %v3377, %v3377
    %v3442 = vpack.c.bf16 %v3378, %v3378
    %v3443 = vpack.c.bf16 %v3379, %v3379
    %v3444 = vpack.c.bf16 %v3380, %v3380
    %v3445 = vpack.c.bf16 %v3381, %v3381
    %v3446 = vpack.c.bf16 %v3382, %v3382
    %v3447 = vpack.c.bf16 %v3383, %v3383
    %v3448 = vpack.c.bf16 %v3384, %v3384
    %v3449 = vpack.c.bf16 %v3385, %v3385
    %v3450 = vpack.c.bf16 %v3386, %v3386
    %v3451 = vpack.c.bf16 %v3387, %v3387
    %v3452 = vpack.c.bf16 %v3388, %v3388
    %v3453 = vpack.c.bf16 %v3389, %v3389
    %v3454 = vpack.c.bf16 %v3390, %v3390
    %v3455 = vpack.c.bf16 %v3391, %v3391
    %v3456 = vpack.c.bf16 %v3392, %v3392
    %v3457 = vpack.c.bf16 %v3393, %v3393
    %v3458 = vpack.c.bf16 %v3394, %v3394
    %v3459 = vpack.c.bf16 %v3395, %v3395
    %v3460 = vpack.c.bf16 %v3396, %v3396
    %v3461 = vpack.c.bf16 %v3397, %v3397
    %v3462 = vpack.c.bf16 %v3398, %v3398
    %v3463 = vpack.c.bf16 %v3399, %v3399
    %v3464 = vpack.c.bf16 %v3400, %v3400
    %v3465 = vpack.c.bf16 %v3401, %v3401
    %v3466 = vpack.c.bf16 %v3402, %v3402
    %v3467 = vpack.c.bf16 %v3403, %v3403
    %v3468 = vpack.c.bf16 %v3404, %v3404
    %v3469 = vpack.c.bf16 %v3405, %v3405
    %v3470 = vpack.c.bf16 %v3406, %v3406
    %v3471 = vpack.c.bf16 %v3407, %v3407
    %v3472 = vpack.c.bf16 %v3408, %v3408
    %v3473 = vpack.c.bf16 %v3409, %v3409
    %v3474 = vpack.c.bf16 %v3410, %v3410
    %v3475 = vpack.c.bf16 %v3411, %v3411
    %v3476 = vpack.c.bf16 %v3412, %v3412
    %v3477 = vpack.c.bf16 %v3413, %v3413
    %v3478 = vpack.c.bf16 %v3414, %v3414
    %v3479 = vpack.c.bf16 %v3415, %v3415
    %v3480 = vpack.c.bf16 %v3416, %v3416
    %v3481 = vpack.c.bf16 %v3417, %v3417
    %v3482 = vpack.c.bf16 %v3418, %v3418
    %v3483 = vpack.c.bf16 %v3419, %v3419
    %v3484 = vpack.c.bf16 %v3420, %v3420
    %v3485 = vpack.c.bf16 %v3421, %v3421
    %v3486 = vpack.c.bf16 %v3422, %v3422
    %v3487 = vpack.c.bf16 %v3423, %v3423
    %v3488 = vpack.c.bf16 %v3424, %v3424
    %v3489 = vpack.c.bf16 %v3425, %v3425
    %v3490 = vpack.c.bf16 %v3426, %v3426
    %v3491 = vpack.c.bf16 %v3427, %v3427
    %v3492 = vpack.c.bf16 %v3428, %v3428
    %v3493 = vpack.c.bf16 %v3429, %v3429
    %v3494 = vld [vmem:[%s4] sm:$0xf]
    %v3495 = vld [vmem:[%s4 + $0x4] sm:$0xf]
    %v3496 = vld [vmem:[%s5] sm:$0x1]
    %v3498 = vperm.slane %v3496, 0
    %v3564 = vunpack.c.l.b16 %v3430
    %v3565 = vunpack.c.l.b16 %v3431
    %v3566 = vunpack.c.l.b16 %v3432
    %v3567 = vunpack.c.l.b16 %v3433
    %v3568 = vunpack.c.l.b16 %v3434
    %v3569 = vunpack.c.l.b16 %v3435
    %v3570 = vunpack.c.l.b16 %v3436
    %v3571 = vunpack.c.l.b16 %v3437
    %v3572 = vunpack.c.l.b16 %v3438
    %v3573 = vunpack.c.l.b16 %v3439
    %v3574 = vunpack.c.l.b16 %v3440
    %v3575 = vunpack.c.l.b16 %v3441
    %v3576 = vunpack.c.l.b16 %v3442
    %v3577 = vunpack.c.l.b16 %v3443
    %v3578 = vunpack.c.l.b16 %v3444
    %v3579 = vunpack.c.l.b16 %v3445
    %v3580 = vunpack.c.l.b16 %v3446
    %v3581 = vunpack.c.l.b16 %v3447
    %v3582 = vunpack.c.l.b16 %v3448
    %v3583 = vunpack.c.l.b16 %v3449
    %v3584 = vunpack.c.l.b16 %v3450
    %v3585 = vunpack.c.l.b16 %v3451
    %v3586 = vunpack.c.l.b16 %v3452
    %v3587 = vunpack.c.l.b16 %v3453
    %v3588 = vunpack.c.l.b16 %v3454
    %v3589 = vunpack.c.l.b16 %v3455
    %v3590 = vunpack.c.l.b16 %v3456
    %v3591 = vunpack.c.l.b16 %v3457
    %v3592 = vunpack.c.l.b16 %v3458
    %v3593 = vunpack.c.l.b16 %v3459
    %v3594 = vunpack.c.l.b16 %v3460
    %v3595 = vunpack.c.l.b16 %v3461
    %v3596 = vunpack.c.l.b16 %v3462
    %v3597 = vunpack.c.l.b16 %v3463
    %v3598 = vunpack.c.l.b16 %v3464
    %v3599 = vunpack.c.l.b16 %v3465
    %v3600 = vunpack.c.l.b16 %v3466
    %v3601 = vunpack.c.l.b16 %v3467
    %v3602 = vunpack.c.l.b16 %v3468
    %v3603 = vunpack.c.l.b16 %v3469
    %v3604 = vunpack.c.l.b16 %v3470
    %v3605 = vunpack.c.l.b16 %v3471
    %v3606 = vunpack.c.l.b16 %v3472
    %v3607 = vunpack.c.l.b16 %v3473
    %v3608 = vunpack.c.l.b16 %v3474
    %v3609 = vunpack.c.l.b16 %v3475
    %v3610 = vunpack.c.l.b16 %v3476
    %v3611 = vunpack.c.l.b16 %v3477
    %v3612 = vunpack.c.l.b16 %v3478
    %v3613 = vunpack.c.l.b16 %v3479
    %v3614 = vunpack.c.l.b16 %v3480
    %v3615 = vunpack.c.l.b16 %v3481
    %v3616 = vunpack.c.l.b16 %v3482
    %v3617 = vunpack.c.l.b16 %v3483
    %v3618 = vunpack.c.l.b16 %v3484
    %v3619 = vunpack.c.l.b16 %v3485
    %v3620 = vunpack.c.l.b16 %v3486
    %v3621 = vunpack.c.l.b16 %v3487
    %v3622 = vunpack.c.l.b16 %v3488
    %v3623 = vunpack.c.l.b16 %v3489
    %v3624 = vunpack.c.l.b16 %v3490
    %v3625 = vunpack.c.l.b16 %v3491
    %v3626 = vunpack.c.l.b16 %v3492
    %v3627 = vunpack.c.l.b16 %v3493
    %v3628 = vpack.c.b16 %v3565, %v3564
    %v3629 = vpack.c.b16 %v3567, %v3566
    %v3630 = vpack.c.b16 %v3569, %v3568
    %v3631 = vpack.c.b16 %v3571, %v3570
    %v3632 = vpack.c.b16 %v3573, %v3572
    %v3633 = vpack.c.b16 %v3575, %v3574
    %v3634 = vpack.c.b16 %v3577, %v3576
    %v3635 = vpack.c.b16 %v3579, %v3578
    %v3636 = vpack.c.b16 %v3581, %v3580
    %v3637 = vpack.c.b16 %v3583, %v3582
    %v3638 = vpack.c.b16 %v3585, %v3584
    %v3639 = vpack.c.b16 %v3587, %v3586
    %v3640 = vpack.c.b16 %v3589, %v3588
    %v3641 = vpack.c.b16 %v3591, %v3590
    %v3642 = vpack.c.b16 %v3593, %v3592
    %v3643 = vpack.c.b16 %v3595, %v3594
    %v3644 = vpack.c.b16 %v3597, %v3596
    %v3645 = vpack.c.b16 %v3599, %v3598
    %v3646 = vpack.c.b16 %v3601, %v3600
    %v3647 = vpack.c.b16 %v3603, %v3602
    %v3648 = vpack.c.b16 %v3605, %v3604
    %v3649 = vpack.c.b16 %v3607, %v3606
    %v3650 = vpack.c.b16 %v3609, %v3608
    %v3651 = vpack.c.b16 %v3611, %v3610
    %v3652 = vpack.c.b16 %v3613, %v3612
    %v3653 = vpack.c.b16 %v3615, %v3614
    %v3654 = vpack.c.b16 %v3617, %v3616
    %v3655 = vpack.c.b16 %v3619, %v3618
    %v3656 = vpack.c.b16 %v3621, %v3620
    %v3657 = vpack.c.b16 %v3623, %v3622
    %v3658 = vpack.c.b16 %v3625, %v3624
    %v3659 = vpack.c.b16 %v3627, %v3626
    %v3662 = vunpack.c.l.b16 %v3494
    %v3663 = vunpack.c.l.b16 %v3495
    %v3664 = vpack.c.b16 %v3663, %v3662
    %vm3666 = vcmask 130048
    %v3668 = vsel %vm3666, %v3628, 0
    %v3671 = vsel %vm3666, %v3629, 0
    %v3674 = vsel %vm3666, %v3630, 0
    %v3677 = vsel %vm3666, %v3631, 0
    %v3680 = vsel %vm3666, %v3632, 0
    %v3683 = vsel %vm3666, %v3633, 0
    %v3686 = vsel %vm3666, %v3634, 0
    %v3689 = vsel %vm3666, %v3635, 0
    %v3692 = vsel %vm3666, %v3636, 0
    %v3695 = vsel %vm3666, %v3637, 0
    %v3698 = vsel %vm3666, %v3638, 0
    %v3701 = vsel %vm3666, %v3639, 0
    %v3704 = vsel %vm3666, %v3640, 0
    %v3707 = vsel %vm3666, %v3641, 0
    %v3710 = vsel %vm3666, %v3642, 0
    %v3713 = vsel %vm3666, %v3643, 0
    %v3716 = vsel %vm3666, %v3644, 0
    %v3719 = vsel %vm3666, %v3645, 0
    %v3722 = vsel %vm3666, %v3646, 0
    %v3725 = vsel %vm3666, %v3647, 0
    %v3728 = vsel %vm3666, %v3648, 0
    %v3731 = vsel %vm3666, %v3649, 0
    %v3734 = vsel %vm3666, %v3650, 0
    %v3737 = vsel %vm3666, %v3651, 0
    %v3740 = vsel %vm3666, %v3652, 0
    %v3743 = vsel %vm3666, %v3653, 0
    %v3746 = vsel %vm3666, %v3654, 0
    %v3749 = vsel %vm3666, %v3655, 0
    %v3752 = vsel %vm3666, %v3656, 0
    %v3755 = vsel %vm3666, %v3657, 0
    %v3758 = vsel %vm3666, %v3658, 0
    %v3761 = vsel %vm3666, %v3659, 0
    %3763 = vmatpush.bf16.msra.mxu0 0
    %3764 = vmatpush.bf16.msra.mxu0 0
    %3765 = vmatpush.bf16.msra.mxu0 0
    %3766 = vmatpush.bf16.msra.mxu0 0
    %3767 = vmatpush.bf16.msra.mxu0 0
    %3768 = vmatpush.bf16.msra.mxu0 0
    %3769 = vmatpush.bf16.msra.mxu0 0
    %3770 = vmatpush.bf16.msra.mxu0 %v3664
    %3771 = vmatmul.bf16.gmra.mxu0 %v3668
    %v3772 = vpop.f32.mrf.mxu0
    %v3773 = vadd.f32 %v3498, %v3772
    %v3774 = vpop.f32.mrf.mxu0
    %v3775 = vadd.f32 %v3498, %v3774
    %3776 = vmatmul.bf16.gmra.mxu0 %v3671
    %v3777 = vpop.f32.mrf.mxu0
    %v3778 = vadd.f32 %v3498, %v3777
    %v3779 = vpop.f32.mrf.mxu0
    %v3780 = vadd.f32 %v3498, %v3779
    %3781 = vmatmul.bf16.gmra.mxu0 %v3674
    %v3782 = vpop.f32.mrf.mxu0
    %v3783 = vadd.f32 %v3498, %v3782
    %v3784 = vpop.f32.mrf.mxu0
    %v3785 = vadd.f32 %v3498, %v3784
    %3786 = vmatmul.bf16.gmra.mxu0 %v3677
    %v3787 = vpop.f32.mrf.mxu0
    %v3788 = vadd.f32 %v3498, %v3787
    %v3789 = vpop.f32.mrf.mxu0
    %v3790 = vadd.f32 %v3498, %v3789
    %3791 = vmatmul.bf16.gmra.mxu0 %v3680
    %v3792 = vpop.f32.mrf.mxu0
    %v3793 = vadd.f32 %v3498, %v3792
    %v3794 = vpop.f32.mrf.mxu0
    %v3795 = vadd.f32 %v3498, %v3794
    %3796 = vmatmul.bf16.gmra.mxu0 %v3683
    %v3797 = vpop.f32.mrf.mxu0
    %v3798 = vadd.f32 %v3498, %v3797
    %v3799 = vpop.f32.mrf.mxu0
    %v3800 = vadd.f32 %v3498, %v3799
    %3801 = vmatmul.bf16.gmra.mxu0 %v3686
    %v3802 = vpop.f32.mrf.mxu0
    %v3803 = vadd.f32 %v3498, %v3802
    %v3804 = vpop.f32.mrf.mxu0
    %v3805 = vadd.f32 %v3498, %v3804
    %3806 = vmatmul.bf16.gmra.mxu0 %v3689
    %v3807 = vpop.f32.mrf.mxu0
    %v3808 = vadd.f32 %v3498, %v3807
    %v3809 = vpop.f32.mrf.mxu0
    %v3810 = vadd.f32 %v3498, %v3809
    %3811 = vmatmul.bf16.gmra.mxu0 %v3692
    %v3812 = vpop.f32.mrf.mxu0
    %v3813 = vadd.f32 %v3498, %v3812
    %v3814 = vpop.f32.mrf.mxu0
    %v3815 = vadd.f32 %v3498, %v3814
    %3816 = vmatmul.bf16.gmra.mxu0 %v3695
    %v3817 = vpop.f32.mrf.mxu0
    %v3818 = vadd.f32 %v3498, %v3817
    %v3819 = vpop.f32.mrf.mxu0
    %v3820 = vadd.f32 %v3498, %v3819
    %3821 = vmatmul.bf16.gmra.mxu0 %v3698
    %v3822 = vpop.f32.mrf.mxu0
    %v3823 = vadd.f32 %v3498, %v3822
    %v3824 = vpop.f32.mrf.mxu0
    %v3825 = vadd.f32 %v3498, %v3824
    %3826 = vmatmul.bf16.gmra.mxu0 %v3701
    %v3827 = vpop.f32.mrf.mxu0
    %v3828 = vadd.f32 %v3498, %v3827
    %v3829 = vpop.f32.mrf.mxu0
    %v3830 = vadd.f32 %v3498, %v3829
    %3831 = vmatmul.bf16.gmra.mxu0 %v3704
    %v3832 = vpop.f32.mrf.mxu0
    %v3833 = vadd.f32 %v3498, %v3832
    %v3834 = vpop.f32.mrf.mxu0
    %v3835 = vadd.f32 %v3498, %v3834
    %3836 = vmatmul.bf16.gmra.mxu0 %v3707
    %v3837 = vpop.f32.mrf.mxu0
    %v3838 = vadd.f32 %v3498, %v3837
    %v3839 = vpop.f32.mrf.mxu0
    %v3840 = vadd.f32 %v3498, %v3839
    %3841 = vmatmul.bf16.gmra.mxu0 %v3710
    %v3842 = vpop.f32.mrf.mxu0
    %v3843 = vadd.f32 %v3498, %v3842
    %v3844 = vpop.f32.mrf.mxu0
    %v3845 = vadd.f32 %v3498, %v3844
    %3846 = vmatmul.bf16.gmra.mxu0 %v3713
    %v3847 = vpop.f32.mrf.mxu0
    %v3848 = vadd.f32 %v3498, %v3847
    %v3849 = vpop.f32.mrf.mxu0
    %v3850 = vadd.f32 %v3498, %v3849
    %3851 = vmatmul.bf16.gmra.mxu0 %v3716
    %v3852 = vpop.f32.mrf.mxu0
    %v3853 = vadd.f32 %v3498, %v3852
    %v3854 = vpop.f32.mrf.mxu0
    %v3855 = vadd.f32 %v3498, %v3854
    %3856 = vmatmul.bf16.gmra.mxu0 %v3719
    %v3857 = vpop.f32.mrf.mxu0
    %v3858 = vadd.f32 %v3498, %v3857
    %v3859 = vpop.f32.mrf.mxu0
    %v3860 = vadd.f32 %v3498, %v3859
    %3861 = vmatmul.bf16.gmra.mxu0 %v3722
    %v3862 = vpop.f32.mrf.mxu0
    %v3863 = vadd.f32 %v3498, %v3862
    %v3864 = vpop.f32.mrf.mxu0
    %v3865 = vadd.f32 %v3498, %v3864
    %3866 = vmatmul.bf16.gmra.mxu0 %v3725
    %v3867 = vpop.f32.mrf.mxu0
    %v3868 = vadd.f32 %v3498, %v3867
    %v3869 = vpop.f32.mrf.mxu0
    %v3870 = vadd.f32 %v3498, %v3869
    %3871 = vmatmul.bf16.gmra.mxu0 %v3728
    %v3872 = vpop.f32.mrf.mxu0
    %v3873 = vadd.f32 %v3498, %v3872
    %v3874 = vpop.f32.mrf.mxu0
    %v3875 = vadd.f32 %v3498, %v3874
    %3876 = vmatmul.bf16.gmra.mxu0 %v3731
    %v3877 = vpop.f32.mrf.mxu0
    %v3878 = vadd.f32 %v3498, %v3877
    %v3879 = vpop.f32.mrf.mxu0
    %v3880 = vadd.f32 %v3498, %v3879
    %3881 = vmatmul.bf16.gmra.mxu0 %v3734
    %v3882 = vpop.f32.mrf.mxu0
    %v3883 = vadd.f32 %v3498, %v3882
    %v3884 = vpop.f32.mrf.mxu0
    %v3885 = vadd.f32 %v3498, %v3884
    %3886 = vmatmul.bf16.gmra.mxu0 %v3737
    %v3887 = vpop.f32.mrf.mxu0
    %v3888 = vadd.f32 %v3498, %v3887
    %v3889 = vpop.f32.mrf.mxu0
    %v3890 = vadd.f32 %v3498, %v3889
    %3891 = vmatmul.bf16.gmra.mxu0 %v3740
    %v3892 = vpop.f32.mrf.mxu0
    %v3893 = vadd.f32 %v3498, %v3892
    %v3894 = vpop.f32.mrf.mxu0
    %v3895 = vadd.f32 %v3498, %v3894
    %3896 = vmatmul.bf16.gmra.mxu0 %v3743
    %v3897 = vpop.f32.mrf.mxu0
    %v3898 = vadd.f32 %v3498, %v3897
    %v3899 = vpop.f32.mrf.mxu0
    %v3900 = vadd.f32 %v3498, %v3899
    %3901 = vmatmul.bf16.gmra.mxu0 %v3746
    %v3902 = vpop.f32.mrf.mxu0
    %v3903 = vadd.f32 %v3498, %v3902
    %v3904 = vpop.f32.mrf.mxu0
    %v3905 = vadd.f32 %v3498, %v3904
    %3906 = vmatmul.bf16.gmra.mxu0 %v3749
    %v3907 = vpop.f32.mrf.mxu0
    %v3908 = vadd.f32 %v3498, %v3907
    %v3909 = vpop.f32.mrf.mxu0
    %v3910 = vadd.f32 %v3498, %v3909
    %3911 = vmatmul.bf16.gmra.mxu0 %v3752
    %v3912 = vpop.f32.mrf.mxu0
    %v3913 = vadd.f32 %v3498, %v3912
    %v3914 = vpop.f32.mrf.mxu0
    %v3915 = vadd.f32 %v3498, %v3914
    %3916 = vmatmul.bf16.gmra.mxu0 %v3755
    %v3917 = vpop.f32.mrf.mxu0
    %v3918 = vadd.f32 %v3498, %v3917
    %v3919 = vpop.f32.mrf.mxu0
    %v3920 = vadd.f32 %v3498, %v3919
    %3921 = vmatmul.bf16.gmra.mxu0 %v3758
    %v3922 = vpop.f32.mrf.mxu0
    %v3923 = vadd.f32 %v3498, %v3922
    %v3924 = vpop.f32.mrf.mxu0
    %v3925 = vadd.f32 %v3498, %v3924
    %3926 = vmatmul.bf16.gmra.mxu0 %v3761
    %v3927 = vpop.f32.mrf.mxu0
    %v3928 = vadd.f32 %v3498, %v3927
    %v3929 = vpop.f32.mrf.mxu0
    %v3930 = vadd.f32 %v3498, %v3929
    %3931 = vdwg.mxu0
    %v3932 = vmul.f32 %v3773, 0.5
    %v3933 = vmul.f32 %v3775, 0.5
    %v3934 = vmul.f32 %v3778, 0.5
    %v3935 = vmul.f32 %v3780, 0.5
    %v3936 = vmul.f32 %v3783, 0.5
    %v3937 = vmul.f32 %v3785, 0.5
    %v3938 = vmul.f32 %v3788, 0.5
    %v3939 = vmul.f32 %v3790, 0.5
    %v3940 = vmul.f32 %v3793, 0.5
    %v3941 = vmul.f32 %v3795, 0.5
    %v3942 = vmul.f32 %v3798, 0.5
    %v3943 = vmul.f32 %v3800, 0.5
    %v3944 = vmul.f32 %v3803, 0.5
    %v3945 = vmul.f32 %v3805, 0.5
    %v3946 = vmul.f32 %v3808, 0.5
    %v3947 = vmul.f32 %v3810, 0.5
    %v3948 = vmul.f32 %v3813, 0.5
    %v3949 = vmul.f32 %v3815, 0.5
    %v3950 = vmul.f32 %v3818, 0.5
    %v3951 = vmul.f32 %v3820, 0.5
    %v3952 = vmul.f32 %v3823, 0.5
    %v3953 = vmul.f32 %v3825, 0.5
    %v3954 = vmul.f32 %v3828, 0.5
    %v3955 = vmul.f32 %v3830, 0.5
    %v3956 = vmul.f32 %v3833, 0.5
    %v3957 = vmul.f32 %v3835, 0.5
    %v3958 = vmul.f32 %v3838, 0.5
    %v3959 = vmul.f32 %v3840, 0.5
    %v3960 = vmul.f32 %v3843, 0.5
    %v3961 = vmul.f32 %v3845, 0.5
    %v3962 = vmul.f32 %v3848, 0.5
    %v3963 = vmul.f32 %v3850, 0.5
    %v3964 = vmul.f32 %v3853, 0.5
    %v3965 = vmul.f32 %v3855, 0.5
    %v3966 = vmul.f32 %v3858, 0.5
    %v3967 = vmul.f32 %v3860, 0.5
    %v3968 = vmul.f32 %v3863, 0.5
    %v3969 = vmul.f32 %v3865, 0.5
    %v3970 = vmul.f32 %v3868, 0.5
    %v3971 = vmul.f32 %v3870, 0.5
    %v3972 = vmul.f32 %v3873, 0.5
    %v3973 = vmul.f32 %v3875, 0.5
    %v3974 = vmul.f32 %v3878, 0.5
    %v3975 = vmul.f32 %v3880, 0.5
    %v3976 = vmul.f32 %v3883, 0.5
    %v3977 = vmul.f32 %v3885, 0.5
    %v3978 = vmul.f32 %v3888, 0.5
    %v3979 = vmul.f32 %v3890, 0.5
    %v3980 = vmul.f32 %v3893, 0.5
    %v3981 = vmul.f32 %v3895, 0.5
    %v3982 = vmul.f32 %v3898, 0.5
    %v3983 = vmul.f32 %v3900, 0.5
    %v3984 = vmul.f32 %v3903, 0.5
    %v3985 = vmul.f32 %v3905, 0.5
    %v3986 = vmul.f32 %v3908, 0.5
    %v3987 = vmul.f32 %v3910, 0.5
    %v3988 = vmul.f32 %v3913, 0.5
    %v3989 = vmul.f32 %v3915, 0.5
    %v3990 = vmul.f32 %v3918, 0.5
    %v3991 = vmul.f32 %v3920, 0.5
    %v3992 = vmul.f32 %v3923, 0.5
    %v3993 = vmul.f32 %v3925, 0.5
    %v3994 = vmul.f32 %v3928, 0.5
    %v3995 = vmul.f32 %v3930, 0.5
    %v3996 = vmul.f32 %v3773, 0.70710677
    %v3997 = vmul.f32 %v3775, 0.70710677
    %v3998 = vmul.f32 %v3778, 0.70710677
    %v3999 = vmul.f32 %v3780, 0.70710677
    %v4000 = vmul.f32 %v3783, 0.70710677
    %v4001 = vmul.f32 %v3785, 0.70710677
    %v4002 = vmul.f32 %v3788, 0.70710677
    %v4003 = vmul.f32 %v3790, 0.70710677
    %v4004 = vmul.f32 %v3793, 0.70710677
    %v4005 = vmul.f32 %v3795, 0.70710677
    %v4006 = vmul.f32 %v3798, 0.70710677
    %v4007 = vmul.f32 %v3800, 0.70710677
    %v4008 = vmul.f32 %v3803, 0.70710677
    %v4009 = vmul.f32 %v3805, 0.70710677
    %v4010 = vmul.f32 %v3808, 0.70710677
    %v4011 = vmul.f32 %v3810, 0.70710677
    %v4012 = vmul.f32 %v3813, 0.70710677
    %v4013 = vmul.f32 %v3815, 0.70710677
    %v4014 = vmul.f32 %v3818, 0.70710677
    %v4015 = vmul.f32 %v3820, 0.70710677
    %v4016 = vmul.f32 %v3823, 0.70710677
    %v4017 = vmul.f32 %v3825, 0.70710677
    %v4018 = vmul.f32 %v3828, 0.70710677
    %v4019 = vmul.f32 %v3830, 0.70710677
    %v4020 = vmul.f32 %v3833, 0.70710677
    %v4021 = vmul.f32 %v3835, 0.70710677
    %v4022 = vmul.f32 %v3838, 0.70710677
    %v4023 = vmul.f32 %v3840, 0.70710677
    %v4024 = vmul.f32 %v3843, 0.70710677
    %v4025 = vmul.f32 %v3845, 0.70710677
    %v4026 = vmul.f32 %v3848, 0.70710677
    %v4027 = vmul.f32 %v3850, 0.70710677
    %v4028 = vmul.f32 %v3853, 0.70710677
    %v4029 = vmul.f32 %v3855, 0.70710677
    %v4030 = vmul.f32 %v3858, 0.70710677
    %v4031 = vmul.f32 %v3860, 0.70710677
    %v4032 = vmul.f32 %v3863, 0.70710677
    %v4033 = vmul.f32 %v3865, 0.70710677
    %v4034 = vmul.f32 %v3868, 0.70710677
    %v4035 = vmul.f32 %v3870, 0.70710677
    %v4036 = vmul.f32 %v3873, 0.70710677
    %v4037 = vmul.f32 %v3875, 0.70710677
    %v4038 = vmul.f32 %v3878, 0.70710677
    %v4039 = vmul.f32 %v3880, 0.70710677
    %v4040 = vmul.f32 %v3883, 0.70710677
    %v4041 = vmul.f32 %v3885, 0.70710677
    %v4042 = vmul.f32 %v3888, 0.70710677
    %v4043 = vmul.f32 %v3890, 0.70710677
    %v4044 = vmul.f32 %v3893, 0.70710677
    %v4045 = vmul.f32 %v3895, 0.70710677
    %v4046 = vmul.f32 %v3898, 0.70710677
    %v4047 = vmul.f32 %v3900, 0.70710677
    %v4048 = vmul.f32 %v3903, 0.70710677
    %v4049 = vmul.f32 %v3905, 0.70710677
    %v4050 = vmul.f32 %v3908, 0.70710677
    %v4051 = vmul.f32 %v3910, 0.70710677
    %v4052 = vmul.f32 %v3913, 0.70710677
    %v4053 = vmul.f32 %v3915, 0.70710677
    %v4054 = vmul.f32 %v3918, 0.70710677
    %v4055 = vmul.f32 %v3920, 0.70710677
    %v4056 = vmul.f32 %v3923, 0.70710677
    %v4057 = vmul.f32 %v3925, 0.70710677
    %v4058 = vmul.f32 %v3928, 0.70710677
    %v4059 = vmul.f32 %v3930, 0.70710677
    %v4060 = vmul.f32 %v3996, %v3996
    %v4061 = vmin.f32 16.0, %v4060
    %v4062 = vmul.f32 %v4061, 2.1237322e-06
    %v4063 = vadd.f32 %v4062, 0.00028619796
    %v4064 = vmul.f32 %v4061, %v4063
    %v4065 = vadd.f32 %v4064, 0.0036580483
    %v4066 = vmul.f32 %v4061, %v4065
    %v4067 = vadd.f32 %v4066, 0.05243302
    %v4068 = vmul.f32 %v4061, %v4067
    %v4069 = vadd.f32 %v4068, 0.18741608
    %v4070 = vmul.f32 %v4061, %v4069
    %v4071 = vadd.f32 %v4070, 1.1283791
    %v4072 = vmul.f32 %v3996, %v4071
    %v4073 = vmul.f32 %v4061, 3.8918573e-05
    %v4074 = vadd.f32 %v4073, 0.001143296
    %v4075 = vmul.f32 %v4061, %v4074
    %v4076 = vadd.f32 %v4075, 0.014752088
    %v4077 = vmul.f32 %v4061, %v4076
    %v4078 = vadd.f32 %v4077, 0.112945676
    %v4079 = vmul.f32 %v4061, %v4078
    %v4080 = vadd.f32 %v4079, 0.4994258
    %v4081 = vmul.f32 %v4061, %v4080
    %v4082 = vadd.f32 %v4081, 1.0
    %v4083 = vrcp.pop %v4082
    %v4084 = vmul.f32 %v4082, %v4083
    %v4085 = vsub.f32 1.0, %v4084
    %v4086 = vmul.f32 %v4083, %v4085
    %v4087 = vadd.f32 %v4083, %v4086
    %vm4088 = vweird.f32 %v4082
    %vm4089 = vweird.f32 %v4083
    %vm4090 = vmor %vm4088, %vm4089
    %v4091 = vsel %vm4090, %v4083, %v4087
    %v4092 = vand.u32 2147483647, %v4082
    %vm4093 = vcmp.eq.f32.partialorder %v4092, 8.507059e+37
    %v4094 = vand.u32 %v4082, 2147483648
    %v4095 = vor.u32 1.1754944e-38, %v4094
    %v4096 = vsel %vm4093, %v4095, %v4091
    %v4097 = vmul.f32 %v4072, %v4096
    %v4098 = vmin.f32 %v4097, 1.0
    %v4099 = vmax.f32 %v4098, -1.0
    %v4100 = vmul.f32 %v3997, %v3997
    %v4101 = vmin.f32 16.0, %v4100
    %v4102 = vmul.f32 %v4101, 2.1237322e-06
    %v4103 = vadd.f32 %v4102, 0.00028619796
    %v4104 = vmul.f32 %v4101, %v4103
    %v4105 = vadd.f32 %v4104, 0.0036580483
    %v4106 = vmul.f32 %v4101, %v4105
    %v4107 = vadd.f32 %v4106, 0.05243302
    %v4108 = vmul.f32 %v4101, %v4107
    %v4109 = vadd.f32 %v4108, 0.18741608
    %v4110 = vmul.f32 %v4101, %v4109
    %v4111 = vadd.f32 %v4110, 1.1283791
    %v4112 = vmul.f32 %v3997, %v4111
    %v4113 = vmul.f32 %v4101, 3.8918573e-05
    %v4114 = vadd.f32 %v4113, 0.001143296
    %v4115 = vmul.f32 %v4101, %v4114
    %v4116 = vadd.f32 %v4115, 0.014752088
    %v4117 = vmul.f32 %v4101, %v4116
    %v4118 = vadd.f32 %v4117, 0.112945676
    %v4119 = vmul.f32 %v4101, %v4118
    %v4120 = vadd.f32 %v4119, 0.4994258
    %v4121 = vmul.f32 %v4101, %v4120
    %v4122 = vadd.f32 %v4121, 1.0
    %v4123 = vrcp.pop %v4122
    %v4124 = vmul.f32 %v4122, %v4123
    %v4125 = vsub.f32 1.0, %v4124
    %v4126 = vmul.f32 %v4123, %v4125
    %v4127 = vadd.f32 %v4123, %v4126
    %vm4128 = vweird.f32 %v4122
    %vm4129 = vweird.f32 %v4123
    %vm4130 = vmor %vm4128, %vm4129
    %v4131 = vsel %vm4130, %v4123, %v4127
    %v4132 = vand.u32 2147483647, %v4122
    %vm4133 = vcmp.eq.f32.partialorder %v4132, 8.507059e+37
    %v4134 = vand.u32 %v4122, 2147483648
    %v4135 = vor.u32 1.1754944e-38, %v4134
    %v4136 = vsel %vm4133, %v4135, %v4131
    %v4137 = vmul.f32 %v4112, %v4136
    %v4138 = vmin.f32 %v4137, 1.0
    %v4139 = vmax.f32 %v4138, -1.0
    %v4140 = vmul.f32 %v3998, %v3998
    %v4141 = vmin.f32 16.0, %v4140
    %v4142 = vmul.f32 %v4141, 2.1237322e-06
    %v4143 = vadd.f32 %v4142, 0.00028619796
    %v4144 = vmul.f32 %v4141, %v4143
    %v4145 = vadd.f32 %v4144, 0.0036580483
    %v4146 = vmul.f32 %v4141, %v4145
    %v4147 = vadd.f32 %v4146, 0.05243302
    %v4148 = vmul.f32 %v4141, %v4147
    %v4149 = vadd.f32 %v4148, 0.18741608
    %v4150 = vmul.f32 %v4141, %v4149
    %v4151 = vadd.f32 %v4150, 1.1283791
    %v4152 = vmul.f32 %v3998, %v4151
    %v4153 = vmul.f32 %v4141, 3.8918573e-05
    %v4154 = vadd.f32 %v4153, 0.001143296
    %v4155 = vmul.f32 %v4141, %v4154
    %v4156 = vadd.f32 %v4155, 0.014752088
    %v4157 = vmul.f32 %v4141, %v4156
    %v4158 = vadd.f32 %v4157, 0.112945676
    %v4159 = vmul.f32 %v4141, %v4158
    %v4160 = vadd.f32 %v4159, 0.4994258
    %v4161 = vmul.f32 %v4141, %v4160
    %v4162 = vadd.f32 %v4161, 1.0
    %v4163 = vrcp.pop %v4162
    %v4164 = vmul.f32 %v4162, %v4163
    %v4165 = vsub.f32 1.0, %v4164
    %v4166 = vmul.f32 %v4163, %v4165
    %v4167 = vadd.f32 %v4163, %v4166
    %vm4168 = vweird.f32 %v4162
    %vm4169 = vweird.f32 %v4163
    %vm4170 = vmor %vm4168, %vm4169
    %v4171 = vsel %vm4170, %v4163, %v4167
    %v4172 = vand.u32 2147483647, %v4162
    %vm4173 = vcmp.eq.f32.partialorder %v4172, 8.507059e+37
    %v4174 = vand.u32 %v4162, 2147483648
    %v4175 = vor.u32 1.1754944e-38, %v4174
    %v4176 = vsel %vm4173, %v4175, %v4171
    %v4177 = vmul.f32 %v4152, %v4176
    %v4178 = vmin.f32 %v4177, 1.0
    %v4179 = vmax.f32 %v4178, -1.0
    %v4180 = vmul.f32 %v3999, %v3999
    %v4181 = vmin.f32 16.0, %v4180
    %v4182 = vmul.f32 %v4181, 2.1237322e-06
    %v4183 = vadd.f32 %v4182, 0.00028619796
    %v4184 = vmul.f32 %v4181, %v4183
    %v4185 = vadd.f32 %v4184, 0.0036580483
    %v4186 = vmul.f32 %v4181, %v4185
    %v4187 = vadd.f32 %v4186, 0.05243302
    %v4188 = vmul.f32 %v4181, %v4187
    %v4189 = vadd.f32 %v4188, 0.18741608
    %v4190 = vmul.f32 %v4181, %v4189
    %v4191 = vadd.f32 %v4190, 1.1283791
    %v4192 = vmul.f32 %v3999, %v4191
    %v4193 = vmul.f32 %v4181, 3.8918573e-05
    %v4194 = vadd.f32 %v4193, 0.001143296
    %v4195 = vmul.f32 %v4181, %v4194
    %v4196 = vadd.f32 %v4195, 0.014752088
    %v4197 = vmul.f32 %v4181, %v4196
    %v4198 = vadd.f32 %v4197, 0.112945676
    %v4199 = vmul.f32 %v4181, %v4198
    %v4200 = vadd.f32 %v4199, 0.4994258
    %v4201 = vmul.f32 %v4181, %v4200
    %v4202 = vadd.f32 %v4201, 1.0
    %v4203 = vrcp.pop %v4202
    %v4204 = vmul.f32 %v4202, %v4203
    %v4205 = vsub.f32 1.0, %v4204
    %v4206 = vmul.f32 %v4203, %v4205
    %v4207 = vadd.f32 %v4203, %v4206
    %vm4208 = vweird.f32 %v4202
    %vm4209 = vweird.f32 %v4203
    %vm4210 = vmor %vm4208, %vm4209
    %v4211 = vsel %vm4210, %v4203, %v4207
    %v4212 = vand.u32 2147483647, %v4202
    %vm4213 = vcmp.eq.f32.partialorder %v4212, 8.507059e+37
    %v4214 = vand.u32 %v4202, 2147483648
    %v4215 = vor.u32 1.1754944e-38, %v4214
    %v4216 = vsel %vm4213, %v4215, %v4211
    %v4217 = vmul.f32 %v4192, %v4216
    %v4218 = vmin.f32 %v4217, 1.0
    %v4219 = vmax.f32 %v4218, -1.0
    %v4220 = vmul.f32 %v4000, %v4000
    %v4221 = vmin.f32 16.0, %v4220
    %v4222 = vmul.f32 %v4221, 2.1237322e-06
    %v4223 = vadd.f32 %v4222, 0.00028619796
    %v4224 = vmul.f32 %v4221, %v4223
    %v4225 = vadd.f32 %v4224, 0.0036580483
    %v4226 = vmul.f32 %v4221, %v4225
    %v4227 = vadd.f32 %v4226, 0.05243302
    %v4228 = vmul.f32 %v4221, %v4227
    %v4229 = vadd.f32 %v4228, 0.18741608
    %v4230 = vmul.f32 %v4221, %v4229
    %v4231 = vadd.f32 %v4230, 1.1283791
    %v4232 = vmul.f32 %v4000, %v4231
    %v4233 = vmul.f32 %v4221, 3.8918573e-05
    %v4234 = vadd.f32 %v4233, 0.001143296
    %v4235 = vmul.f32 %v4221, %v4234
    %v4236 = vadd.f32 %v4235, 0.014752088
    %v4237 = vmul.f32 %v4221, %v4236
    %v4238 = vadd.f32 %v4237, 0.112945676
    %v4239 = vmul.f32 %v4221, %v4238
    %v4240 = vadd.f32 %v4239, 0.4994258
    %v4241 = vmul.f32 %v4221, %v4240
    %v4242 = vadd.f32 %v4241, 1.0
    %v4243 = vrcp.pop %v4242
    %v4244 = vmul.f32 %v4242, %v4243
    %v4245 = vsub.f32 1.0, %v4244
    %v4246 = vmul.f32 %v4243, %v4245
    %v4247 = vadd.f32 %v4243, %v4246
    %vm4248 = vweird.f32 %v4242
    %vm4249 = vweird.f32 %v4243
    %vm4250 = vmor %vm4248, %vm4249
    %v4251 = vsel %vm4250, %v4243, %v4247
    %v4252 = vand.u32 2147483647, %v4242
    %vm4253 = vcmp.eq.f32.partialorder %v4252, 8.507059e+37
    %v4254 = vand.u32 %v4242, 2147483648
    %v4255 = vor.u32 1.1754944e-38, %v4254
    %v4256 = vsel %vm4253, %v4255, %v4251
    %v4257 = vmul.f32 %v4232, %v4256
    %v4258 = vmin.f32 %v4257, 1.0
    %v4259 = vmax.f32 %v4258, -1.0
    %v4260 = vmul.f32 %v4001, %v4001
    %v4261 = vmin.f32 16.0, %v4260
    %v4262 = vmul.f32 %v4261, 2.1237322e-06
    %v4263 = vadd.f32 %v4262, 0.00028619796
    %v4264 = vmul.f32 %v4261, %v4263
    %v4265 = vadd.f32 %v4264, 0.0036580483
    %v4266 = vmul.f32 %v4261, %v4265
    %v4267 = vadd.f32 %v4266, 0.05243302
    %v4268 = vmul.f32 %v4261, %v4267
    %v4269 = vadd.f32 %v4268, 0.18741608
    %v4270 = vmul.f32 %v4261, %v4269
    %v4271 = vadd.f32 %v4270, 1.1283791
    %v4272 = vmul.f32 %v4001, %v4271
    %v4273 = vmul.f32 %v4261, 3.8918573e-05
    %v4274 = vadd.f32 %v4273, 0.001143296
    %v4275 = vmul.f32 %v4261, %v4274
    %v4276 = vadd.f32 %v4275, 0.014752088
    %v4277 = vmul.f32 %v4261, %v4276
    %v4278 = vadd.f32 %v4277, 0.112945676
    %v4279 = vmul.f32 %v4261, %v4278
    %v4280 = vadd.f32 %v4279, 0.4994258
    %v4281 = vmul.f32 %v4261, %v4280
    %v4282 = vadd.f32 %v4281, 1.0
    %v4283 = vrcp.pop %v4282
    %v4284 = vmul.f32 %v4282, %v4283
    %v4285 = vsub.f32 1.0, %v4284
    %v4286 = vmul.f32 %v4283, %v4285
    %v4287 = vadd.f32 %v4283, %v4286
    %vm4288 = vweird.f32 %v4282
    %vm4289 = vweird.f32 %v4283
    %vm4290 = vmor %vm4288, %vm4289
    %v4291 = vsel %vm4290, %v4283, %v4287
    %v4292 = vand.u32 2147483647, %v4282
    %vm4293 = vcmp.eq.f32.partialorder %v4292, 8.507059e+37
    %v4294 = vand.u32 %v4282, 2147483648
    %v4295 = vor.u32 1.1754944e-38, %v4294
    %v4296 = vsel %vm4293, %v4295, %v4291
    %v4297 = vmul.f32 %v4272, %v4296
    %v4298 = vmin.f32 %v4297, 1.0
    %v4299 = vmax.f32 %v4298, -1.0
    %v4300 = vmul.f32 %v4002, %v4002
    %v4301 = vmin.f32 16.0, %v4300
    %v4302 = vmul.f32 %v4301, 2.1237322e-06
    %v4303 = vadd.f32 %v4302, 0.00028619796
    %v4304 = vmul.f32 %v4301, %v4303
    %v4305 = vadd.f32 %v4304, 0.0036580483
    %v4306 = vmul.f32 %v4301, %v4305
    %v4307 = vadd.f32 %v4306, 0.05243302
    %v4308 = vmul.f32 %v4301, %v4307
    %v4309 = vadd.f32 %v4308, 0.18741608
    %v4310 = vmul.f32 %v4301, %v4309
    %v4311 = vadd.f32 %v4310, 1.1283791
    %v4312 = vmul.f32 %v4002, %v4311
    %v4313 = vmul.f32 %v4301, 3.8918573e-05
    %v4314 = vadd.f32 %v4313, 0.001143296
    %v4315 = vmul.f32 %v4301, %v4314
    %v4316 = vadd.f32 %v4315, 0.014752088
    %v4317 = vmul.f32 %v4301, %v4316
    %v4318 = vadd.f32 %v4317, 0.112945676
    %v4319 = vmul.f32 %v4301, %v4318
    %v4320 = vadd.f32 %v4319, 0.4994258
    %v4321 = vmul.f32 %v4301, %v4320
    %v4322 = vadd.f32 %v4321, 1.0
    %v4323 = vrcp.pop %v4322
    %v4324 = vmul.f32 %v4322, %v4323
    %v4325 = vsub.f32 1.0, %v4324
    %v4326 = vmul.f32 %v4323, %v4325
    %v4327 = vadd.f32 %v4323, %v4326
    %vm4328 = vweird.f32 %v4322
    %vm4329 = vweird.f32 %v4323
    %vm4330 = vmor %vm4328, %vm4329
    %v4331 = vsel %vm4330, %v4323, %v4327
    %v4332 = vand.u32 2147483647, %v4322
    %vm4333 = vcmp.eq.f32.partialorder %v4332, 8.507059e+37
    %v4334 = vand.u32 %v4322, 2147483648
    %v4335 = vor.u32 1.1754944e-38, %v4334
    %v4336 = vsel %vm4333, %v4335, %v4331
    %v4337 = vmul.f32 %v4312, %v4336
    %v4338 = vmin.f32 %v4337, 1.0
    %v4339 = vmax.f32 %v4338, -1.0
    %v4340 = vmul.f32 %v4003, %v4003
    %v4341 = vmin.f32 16.0, %v4340
    %v4342 = vmul.f32 %v4341, 2.1237322e-06
    %v4343 = vadd.f32 %v4342, 0.00028619796
    %v4344 = vmul.f32 %v4341, %v4343
    %v4345 = vadd.f32 %v4344, 0.0036580483
    %v4346 = vmul.f32 %v4341, %v4345
    %v4347 = vadd.f32 %v4346, 0.05243302
    %v4348 = vmul.f32 %v4341, %v4347
    %v4349 = vadd.f32 %v4348, 0.18741608
    %v4350 = vmul.f32 %v4341, %v4349
    %v4351 = vadd.f32 %v4350, 1.1283791
    %v4352 = vmul.f32 %v4003, %v4351
    %v4353 = vmul.f32 %v4341, 3.8918573e-05
    %v4354 = vadd.f32 %v4353, 0.001143296
    %v4355 = vmul.f32 %v4341, %v4354
    %v4356 = vadd.f32 %v4355, 0.014752088
    %v4357 = vmul.f32 %v4341, %v4356
    %v4358 = vadd.f32 %v4357, 0.112945676
    %v4359 = vmul.f32 %v4341, %v4358
    %v4360 = vadd.f32 %v4359, 0.4994258
    %v4361 = vmul.f32 %v4341, %v4360
    %v4362 = vadd.f32 %v4361, 1.0
    %v4363 = vrcp.pop %v4362
    %v4364 = vmul.f32 %v4362, %v4363
    %v4365 = vsub.f32 1.0, %v4364
    %v4366 = vmul.f32 %v4363, %v4365
    %v4367 = vadd.f32 %v4363, %v4366
    %vm4368 = vweird.f32 %v4362
    %vm4369 = vweird.f32 %v4363
    %vm4370 = vmor %vm4368, %vm4369
    %v4371 = vsel %vm4370, %v4363, %v4367
    %v4372 = vand.u32 2147483647, %v4362
    %vm4373 = vcmp.eq.f32.partialorder %v4372, 8.507059e+37
    %v4374 = vand.u32 %v4362, 2147483648
    %v4375 = vor.u32 1.1754944e-38, %v4374
    %v4376 = vsel %vm4373, %v4375, %v4371
    %v4377 = vmul.f32 %v4352, %v4376
    %v4378 = vmin.f32 %v4377, 1.0
    %v4379 = vmax.f32 %v4378, -1.0
    %v4380 = vmul.f32 %v4004, %v4004
    %v4381 = vmin.f32 16.0, %v4380
    %v4382 = vmul.f32 %v4381, 2.1237322e-06
    %v4383 = vadd.f32 %v4382, 0.00028619796
    %v4384 = vmul.f32 %v4381, %v4383
    %v4385 = vadd.f32 %v4384, 0.0036580483
    %v4386 = vmul.f32 %v4381, %v4385
    %v4387 = vadd.f32 %v4386, 0.05243302
    %v4388 = vmul.f32 %v4381, %v4387
    %v4389 = vadd.f32 %v4388, 0.18741608
    %v4390 = vmul.f32 %v4381, %v4389
    %v4391 = vadd.f32 %v4390, 1.1283791
    %v4392 = vmul.f32 %v4004, %v4391
    %v4393 = vmul.f32 %v4381, 3.8918573e-05
    %v4394 = vadd.f32 %v4393, 0.001143296
    %v4395 = vmul.f32 %v4381, %v4394
    %v4396 = vadd.f32 %v4395, 0.014752088
    %v4397 = vmul.f32 %v4381, %v4396
    %v4398 = vadd.f32 %v4397, 0.112945676
    %v4399 = vmul.f32 %v4381, %v4398
    %v4400 = vadd.f32 %v4399, 0.4994258
    %v4401 = vmul.f32 %v4381, %v4400
    %v4402 = vadd.f32 %v4401, 1.0
    %v4403 = vrcp.pop %v4402
    %v4404 = vmul.f32 %v4402, %v4403
    %v4405 = vsub.f32 1.0, %v4404
    %v4406 = vmul.f32 %v4403, %v4405
    %v4407 = vadd.f32 %v4403, %v4406
    %vm4408 = vweird.f32 %v4402
    %vm4409 = vweird.f32 %v4403
    %vm4410 = vmor %vm4408, %vm4409
    %v4411 = vsel %vm4410, %v4403, %v4407
    %v4412 = vand.u32 2147483647, %v4402
    %vm4413 = vcmp.eq.f32.partialorder %v4412, 8.507059e+37
    %v4414 = vand.u32 %v4402, 2147483648
    %v4415 = vor.u32 1.1754944e-38, %v4414
    %v4416 = vsel %vm4413, %v4415, %v4411
    %v4417 = vmul.f32 %v4392, %v4416
    %v4418 = vmin.f32 %v4417, 1.0
    %v4419 = vmax.f32 %v4418, -1.0
    %v4420 = vmul.f32 %v4005, %v4005
    %v4421 = vmin.f32 16.0, %v4420
    %v4422 = vmul.f32 %v4421, 2.1237322e-06
    %v4423 = vadd.f32 %v4422, 0.00028619796
    %v4424 = vmul.f32 %v4421, %v4423
    %v4425 = vadd.f32 %v4424, 0.0036580483
    %v4426 = vmul.f32 %v4421, %v4425
    %v4427 = vadd.f32 %v4426, 0.05243302
    %v4428 = vmul.f32 %v4421, %v4427
    %v4429 = vadd.f32 %v4428, 0.18741608
    %v4430 = vmul.f32 %v4421, %v4429
    %v4431 = vadd.f32 %v4430, 1.1283791
    %v4432 = vmul.f32 %v4005, %v4431
    %v4433 = vmul.f32 %v4421, 3.8918573e-05
    %v4434 = vadd.f32 %v4433, 0.001143296
    %v4435 = vmul.f32 %v4421, %v4434
    %v4436 = vadd.f32 %v4435, 0.014752088
    %v4437 = vmul.f32 %v4421, %v4436
    %v4438 = vadd.f32 %v4437, 0.112945676
    %v4439 = vmul.f32 %v4421, %v4438
    %v4440 = vadd.f32 %v4439, 0.4994258
    %v4441 = vmul.f32 %v4421, %v4440
    %v4442 = vadd.f32 %v4441, 1.0
    %v4443 = vrcp.pop %v4442
    %v4444 = vmul.f32 %v4442, %v4443
    %v4445 = vsub.f32 1.0, %v4444
    %v4446 = vmul.f32 %v4443, %v4445
    %v4447 = vadd.f32 %v4443, %v4446
    %vm4448 = vweird.f32 %v4442
    %vm4449 = vweird.f32 %v4443
    %vm4450 = vmor %vm4448, %vm4449
    %v4451 = vsel %vm4450, %v4443, %v4447
    %v4452 = vand.u32 2147483647, %v4442
    %vm4453 = vcmp.eq.f32.partialorder %v4452, 8.507059e+37
    %v4454 = vand.u32 %v4442, 2147483648
    %v4455 = vor.u32 1.1754944e-38, %v4454
    %v4456 = vsel %vm4453, %v4455, %v4451
    %v4457 = vmul.f32 %v4432, %v4456
    %v4458 = vmin.f32 %v4457, 1.0
    %v4459 = vmax.f32 %v4458, -1.0
    %v4460 = vmul.f32 %v4006, %v4006
    %v4461 = vmin.f32 16.0, %v4460
    %v4462 = vmul.f32 %v4461, 2.1237322e-06
    %v4463 = vadd.f32 %v4462, 0.00028619796
    %v4464 = vmul.f32 %v4461, %v4463
    %v4465 = vadd.f32 %v4464, 0.0036580483
    %v4466 = vmul.f32 %v4461, %v4465
    %v4467 = vadd.f32 %v4466, 0.05243302
    %v4468 = vmul.f32 %v4461, %v4467
    %v4469 = vadd.f32 %v4468, 0.18741608
    %v4470 = vmul.f32 %v4461, %v4469
    %v4471 = vadd.f32 %v4470, 1.1283791
    %v4472 = vmul.f32 %v4006, %v4471
    %v4473 = vmul.f32 %v4461, 3.8918573e-05
    %v4474 = vadd.f32 %v4473, 0.001143296
    %v4475 = vmul.f32 %v4461, %v4474
    %v4476 = vadd.f32 %v4475, 0.014752088
    %v4477 = vmul.f32 %v4461, %v4476
    %v4478 = vadd.f32 %v4477, 0.112945676
    %v4479 = vmul.f32 %v4461, %v4478
    %v4480 = vadd.f32 %v4479, 0.4994258
    %v4481 = vmul.f32 %v4461, %v4480
    %v4482 = vadd.f32 %v4481, 1.0
    %v4483 = vrcp.pop %v4482
    %v4484 = vmul.f32 %v4482, %v4483
    %v4485 = vsub.f32 1.0, %v4484
    %v4486 = vmul.f32 %v4483, %v4485
    %v4487 = vadd.f32 %v4483, %v4486
    %vm4488 = vweird.f32 %v4482
    %vm4489 = vweird.f32 %v4483
    %vm4490 = vmor %vm4488, %vm4489
    %v4491 = vsel %vm4490, %v4483, %v4487
    %v4492 = vand.u32 2147483647, %v4482
    %vm4493 = vcmp.eq.f32.partialorder %v4492, 8.507059e+37
    %v4494 = vand.u32 %v4482, 2147483648
    %v4495 = vor.u32 1.1754944e-38, %v4494
    %v4496 = vsel %vm4493, %v4495, %v4491
    %v4497 = vmul.f32 %v4472, %v4496
    %v4498 = vmin.f32 %v4497, 1.0
    %v4499 = vmax.f32 %v4498, -1.0
    %v4500 = vmul.f32 %v4007, %v4007
    %v4501 = vmin.f32 16.0, %v4500
    %v4502 = vmul.f32 %v4501, 2.1237322e-06
    %v4503 = vadd.f32 %v4502, 0.00028619796
    %v4504 = vmul.f32 %v4501, %v4503
    %v4505 = vadd.f32 %v4504, 0.0036580483
    %v4506 = vmul.f32 %v4501, %v4505
    %v4507 = vadd.f32 %v4506, 0.05243302
    %v4508 = vmul.f32 %v4501, %v4507
    %v4509 = vadd.f32 %v4508, 0.18741608
    %v4510 = vmul.f32 %v4501, %v4509
    %v4511 = vadd.f32 %v4510, 1.1283791
    %v4512 = vmul.f32 %v4007, %v4511
    %v4513 = vmul.f32 %v4501, 3.8918573e-05
    %v4514 = vadd.f32 %v4513, 0.001143296
    %v4515 = vmul.f32 %v4501, %v4514
    %v4516 = vadd.f32 %v4515, 0.014752088
    %v4517 = vmul.f32 %v4501, %v4516
    %v4518 = vadd.f32 %v4517, 0.112945676
    %v4519 = vmul.f32 %v4501, %v4518
    %v4520 = vadd.f32 %v4519, 0.4994258
    %v4521 = vmul.f32 %v4501, %v4520
    %v4522 = vadd.f32 %v4521, 1.0
    %v4523 = vrcp.pop %v4522
    %v4524 = vmul.f32 %v4522, %v4523
    %v4525 = vsub.f32 1.0, %v4524
    %v4526 = vmul.f32 %v4523, %v4525
    %v4527 = vadd.f32 %v4523, %v4526
    %vm4528 = vweird.f32 %v4522
    %vm4529 = vweird.f32 %v4523
    %vm4530 = vmor %vm4528, %vm4529
    %v4531 = vsel %vm4530, %v4523, %v4527
    %v4532 = vand.u32 2147483647, %v4522
    %vm4533 = vcmp.eq.f32.partialorder %v4532, 8.507059e+37
    %v4534 = vand.u32 %v4522, 2147483648
    %v4535 = vor.u32 1.1754944e-38, %v4534
    %v4536 = vsel %vm4533, %v4535, %v4531
    %v4537 = vmul.f32 %v4512, %v4536
    %v4538 = vmin.f32 %v4537, 1.0
    %v4539 = vmax.f32 %v4538, -1.0
    %v4540 = vmul.f32 %v4008, %v4008
    %v4541 = vmin.f32 16.0, %v4540
    %v4542 = vmul.f32 %v4541, 2.1237322e-06
    %v4543 = vadd.f32 %v4542, 0.00028619796
    %v4544 = vmul.f32 %v4541, %v4543
    %v4545 = vadd.f32 %v4544, 0.0036580483
    %v4546 = vmul.f32 %v4541, %v4545
    %v4547 = vadd.f32 %v4546, 0.05243302
    %v4548 = vmul.f32 %v4541, %v4547
    %v4549 = vadd.f32 %v4548, 0.18741608
    %v4550 = vmul.f32 %v4541, %v4549
    %v4551 = vadd.f32 %v4550, 1.1283791
    %v4552 = vmul.f32 %v4008, %v4551
    %v4553 = vmul.f32 %v4541, 3.8918573e-05
    %v4554 = vadd.f32 %v4553, 0.001143296
    %v4555 = vmul.f32 %v4541, %v4554
    %v4556 = vadd.f32 %v4555, 0.014752088
    %v4557 = vmul.f32 %v4541, %v4556
    %v4558 = vadd.f32 %v4557, 0.112945676
    %v4559 = vmul.f32 %v4541, %v4558
    %v4560 = vadd.f32 %v4559, 0.4994258
    %v4561 = vmul.f32 %v4541, %v4560
    %v4562 = vadd.f32 %v4561, 1.0
    %v4563 = vrcp.pop %v4562
    %v4564 = vmul.f32 %v4562, %v4563
    %v4565 = vsub.f32 1.0, %v4564
    %v4566 = vmul.f32 %v4563, %v4565
    %v4567 = vadd.f32 %v4563, %v4566
    %vm4568 = vweird.f32 %v4562
    %vm4569 = vweird.f32 %v4563
    %vm4570 = vmor %vm4568, %vm4569
    %v4571 = vsel %vm4570, %v4563, %v4567
    %v4572 = vand.u32 2147483647, %v4562
    %vm4573 = vcmp.eq.f32.partialorder %v4572, 8.507059e+37
    %v4574 = vand.u32 %v4562, 2147483648
    %v4575 = vor.u32 1.1754944e-38, %v4574
    %v4576 = vsel %vm4573, %v4575, %v4571
    %v4577 = vmul.f32 %v4552, %v4576
    %v4578 = vmin.f32 %v4577, 1.0
    %v4579 = vmax.f32 %v4578, -1.0
    %v4580 = vmul.f32 %v4009, %v4009
    %v4581 = vmin.f32 16.0, %v4580
    %v4582 = vmul.f32 %v4581, 2.1237322e-06
    %v4583 = vadd.f32 %v4582, 0.00028619796
    %v4584 = vmul.f32 %v4581, %v4583
    %v4585 = vadd.f32 %v4584, 0.0036580483
    %v4586 = vmul.f32 %v4581, %v4585
    %v4587 = vadd.f32 %v4586, 0.05243302
    %v4588 = vmul.f32 %v4581, %v4587
    %v4589 = vadd.f32 %v4588, 0.18741608
    %v4590 = vmul.f32 %v4581, %v4589
    %v4591 = vadd.f32 %v4590, 1.1283791
    %v4592 = vmul.f32 %v4009, %v4591
    %v4593 = vmul.f32 %v4581, 3.8918573e-05
    %v4594 = vadd.f32 %v4593, 0.001143296
    %v4595 = vmul.f32 %v4581, %v4594
    %v4596 = vadd.f32 %v4595, 0.014752088
    %v4597 = vmul.f32 %v4581, %v4596
    %v4598 = vadd.f32 %v4597, 0.112945676
    %v4599 = vmul.f32 %v4581, %v4598
    %v4600 = vadd.f32 %v4599, 0.4994258
    %v4601 = vmul.f32 %v4581, %v4600
    %v4602 = vadd.f32 %v4601, 1.0
    %v4603 = vrcp.pop %v4602
    %v4604 = vmul.f32 %v4602, %v4603
    %v4605 = vsub.f32 1.0, %v4604
    %v4606 = vmul.f32 %v4603, %v4605
    %v4607 = vadd.f32 %v4603, %v4606
    %vm4608 = vweird.f32 %v4602
    %vm4609 = vweird.f32 %v4603
    %vm4610 = vmor %vm4608, %vm4609
    %v4611 = vsel %vm4610, %v4603, %v4607
    %v4612 = vand.u32 2147483647, %v4602
    %vm4613 = vcmp.eq.f32.partialorder %v4612, 8.507059e+37
    %v4614 = vand.u32 %v4602, 2147483648
    %v4615 = vor.u32 1.1754944e-38, %v4614
    %v4616 = vsel %vm4613, %v4615, %v4611
    %v4617 = vmul.f32 %v4592, %v4616
    %v4618 = vmin.f32 %v4617, 1.0
    %v4619 = vmax.f32 %v4618, -1.0
    %v4620 = vmul.f32 %v4010, %v4010
    %v4621 = vmin.f32 16.0, %v4620
    %v4622 = vmul.f32 %v4621, 2.1237322e-06
    %v4623 = vadd.f32 %v4622, 0.00028619796
    %v4624 = vmul.f32 %v4621, %v4623
    %v4625 = vadd.f32 %v4624, 0.0036580483
    %v4626 = vmul.f32 %v4621, %v4625
    %v4627 = vadd.f32 %v4626, 0.05243302
    %v4628 = vmul.f32 %v4621, %v4627
    %v4629 = vadd.f32 %v4628, 0.18741608
    %v4630 = vmul.f32 %v4621, %v4629
    %v4631 = vadd.f32 %v4630, 1.1283791
    %v4632 = vmul.f32 %v4010, %v4631
    %v4633 = vmul.f32 %v4621, 3.8918573e-05
    %v4634 = vadd.f32 %v4633, 0.001143296
    %v4635 = vmul.f32 %v4621, %v4634
    %v4636 = vadd.f32 %v4635, 0.014752088
    %v4637 = vmul.f32 %v4621, %v4636
    %v4638 = vadd.f32 %v4637, 0.112945676
    %v4639 = vmul.f32 %v4621, %v4638
    %v4640 = vadd.f32 %v4639, 0.4994258
    %v4641 = vmul.f32 %v4621, %v4640
    %v4642 = vadd.f32 %v4641, 1.0
    %v4643 = vrcp.pop %v4642
    %v4644 = vmul.f32 %v4642, %v4643
    %v4645 = vsub.f32 1.0, %v4644
    %v4646 = vmul.f32 %v4643, %v4645
    %v4647 = vadd.f32 %v4643, %v4646
    %vm4648 = vweird.f32 %v4642
    %vm4649 = vweird.f32 %v4643
    %vm4650 = vmor %vm4648, %vm4649
    %v4651 = vsel %vm4650, %v4643, %v4647
    %v4652 = vand.u32 2147483647, %v4642
    %vm4653 = vcmp.eq.f32.partialorder %v4652, 8.507059e+37
    %v4654 = vand.u32 %v4642, 2147483648
    %v4655 = vor.u32 1.1754944e-38, %v4654
    %v4656 = vsel %vm4653, %v4655, %v4651
    %v4657 = vmul.f32 %v4632, %v4656
    %v4658 = vmin.f32 %v4657, 1.0
    %v4659 = vmax.f32 %v4658, -1.0
    %v4660 = vmul.f32 %v4011, %v4011
    %v4661 = vmin.f32 16.0, %v4660
    %v4662 = vmul.f32 %v4661, 2.1237322e-06
    %v4663 = vadd.f32 %v4662, 0.00028619796
    %v4664 = vmul.f32 %v4661, %v4663
    %v4665 = vadd.f32 %v4664, 0.0036580483
    %v4666 = vmul.f32 %v4661, %v4665
    %v4667 = vadd.f32 %v4666, 0.05243302
    %v4668 = vmul.f32 %v4661, %v4667
    %v4669 = vadd.f32 %v4668, 0.18741608
    %v4670 = vmul.f32 %v4661, %v4669
    %v4671 = vadd.f32 %v4670, 1.1283791
    %v4672 = vmul.f32 %v4011, %v4671
    %v4673 = vmul.f32 %v4661, 3.8918573e-05
    %v4674 = vadd.f32 %v4673, 0.001143296
    %v4675 = vmul.f32 %v4661, %v4674
    %v4676 = vadd.f32 %v4675, 0.014752088
    %v4677 = vmul.f32 %v4661, %v4676
    %v4678 = vadd.f32 %v4677, 0.112945676
    %v4679 = vmul.f32 %v4661, %v4678
    %v4680 = vadd.f32 %v4679, 0.4994258
    %v4681 = vmul.f32 %v4661, %v4680
    %v4682 = vadd.f32 %v4681, 1.0
    %v4683 = vrcp.pop %v4682
    %v4684 = vmul.f32 %v4682, %v4683
    %v4685 = vsub.f32 1.0, %v4684
    %v4686 = vmul.f32 %v4683, %v4685
    %v4687 = vadd.f32 %v4683, %v4686
    %vm4688 = vweird.f32 %v4682
    %vm4689 = vweird.f32 %v4683
    %vm4690 = vmor %vm4688, %vm4689
    %v4691 = vsel %vm4690, %v4683, %v4687
    %v4692 = vand.u32 2147483647, %v4682
    %vm4693 = vcmp.eq.f32.partialorder %v4692, 8.507059e+37
    %v4694 = vand.u32 %v4682, 2147483648
    %v4695 = vor.u32 1.1754944e-38, %v4694
    %v4696 = vsel %vm4693, %v4695, %v4691
    %v4697 = vmul.f32 %v4672, %v4696
    %v4698 = vmin.f32 %v4697, 1.0
    %v4699 = vmax.f32 %v4698, -1.0
    %v4700 = vmul.f32 %v4012, %v4012
    %v4701 = vmin.f32 16.0, %v4700
    %v4702 = vmul.f32 %v4701, 2.1237322e-06
    %v4703 = vadd.f32 %v4702, 0.00028619796
    %v4704 = vmul.f32 %v4701, %v4703
    %v4705 = vadd.f32 %v4704, 0.0036580483
    %v4706 = vmul.f32 %v4701, %v4705
    %v4707 = vadd.f32 %v4706, 0.05243302
    %v4708 = vmul.f32 %v4701, %v4707
    %v4709 = vadd.f32 %v4708, 0.18741608
    %v4710 = vmul.f32 %v4701, %v4709
    %v4711 = vadd.f32 %v4710, 1.1283791
    %v4712 = vmul.f32 %v4012, %v4711
    %v4713 = vmul.f32 %v4701, 3.8918573e-05
    %v4714 = vadd.f32 %v4713, 0.001143296
    %v4715 = vmul.f32 %v4701, %v4714
    %v4716 = vadd.f32 %v4715, 0.014752088
    %v4717 = vmul.f32 %v4701, %v4716
    %v4718 = vadd.f32 %v4717, 0.112945676
    %v4719 = vmul.f32 %v4701, %v4718
    %v4720 = vadd.f32 %v4719, 0.4994258
    %v4721 = vmul.f32 %v4701, %v4720
    %v4722 = vadd.f32 %v4721, 1.0
    %v4723 = vrcp.pop %v4722
    %v4724 = vmul.f32 %v4722, %v4723
    %v4725 = vsub.f32 1.0, %v4724
    %v4726 = vmul.f32 %v4723, %v4725
    %v4727 = vadd.f32 %v4723, %v4726
    %vm4728 = vweird.f32 %v4722
    %vm4729 = vweird.f32 %v4723
    %vm4730 = vmor %vm4728, %vm4729
    %v4731 = vsel %vm4730, %v4723, %v4727
    %v4732 = vand.u32 2147483647, %v4722
    %vm4733 = vcmp.eq.f32.partialorder %v4732, 8.507059e+37
    %v4734 = vand.u32 %v4722, 2147483648
    %v4735 = vor.u32 1.1754944e-38, %v4734
    %v4736 = vsel %vm4733, %v4735, %v4731
    %v4737 = vmul.f32 %v4712, %v4736
    %v4738 = vmin.f32 %v4737, 1.0
    %v4739 = vmax.f32 %v4738, -1.0
    %v4740 = vmul.f32 %v4013, %v4013
    %v4741 = vmin.f32 16.0, %v4740
    %v4742 = vmul.f32 %v4741, 2.1237322e-06
    %v4743 = vadd.f32 %v4742, 0.00028619796
    %v4744 = vmul.f32 %v4741, %v4743
    %v4745 = vadd.f32 %v4744, 0.0036580483
    %v4746 = vmul.f32 %v4741, %v4745
    %v4747 = vadd.f32 %v4746, 0.05243302
    %v4748 = vmul.f32 %v4741, %v4747
    %v4749 = vadd.f32 %v4748, 0.18741608
    %v4750 = vmul.f32 %v4741, %v4749
    %v4751 = vadd.f32 %v4750, 1.1283791
    %v4752 = vmul.f32 %v4013, %v4751
    %v4753 = vmul.f32 %v4741, 3.8918573e-05
    %v4754 = vadd.f32 %v4753, 0.001143296
    %v4755 = vmul.f32 %v4741, %v4754
    %v4756 = vadd.f32 %v4755, 0.014752088
    %v4757 = vmul.f32 %v4741, %v4756
    %v4758 = vadd.f32 %v4757, 0.112945676
    %v4759 = vmul.f32 %v4741, %v4758
    %v4760 = vadd.f32 %v4759, 0.4994258
    %v4761 = vmul.f32 %v4741, %v4760
    %v4762 = vadd.f32 %v4761, 1.0
    %v4763 = vrcp.pop %v4762
    %v4764 = vmul.f32 %v4762, %v4763
    %v4765 = vsub.f32 1.0, %v4764
    %v4766 = vmul.f32 %v4763, %v4765
    %v4767 = vadd.f32 %v4763, %v4766
    %vm4768 = vweird.f32 %v4762
    %vm4769 = vweird.f32 %v4763
    %vm4770 = vmor %vm4768, %vm4769
    %v4771 = vsel %vm4770, %v4763, %v4767
    %v4772 = vand.u32 2147483647, %v4762
    %vm4773 = vcmp.eq.f32.partialorder %v4772, 8.507059e+37
    %v4774 = vand.u32 %v4762, 2147483648
    %v4775 = vor.u32 1.1754944e-38, %v4774
    %v4776 = vsel %vm4773, %v4775, %v4771
    %v4777 = vmul.f32 %v4752, %v4776
    %v4778 = vmin.f32 %v4777, 1.0
    %v4779 = vmax.f32 %v4778, -1.0
    %v4780 = vmul.f32 %v4014, %v4014
    %v4781 = vmin.f32 16.0, %v4780
    %v4782 = vmul.f32 %v4781, 2.1237322e-06
    %v4783 = vadd.f32 %v4782, 0.00028619796
    %v4784 = vmul.f32 %v4781, %v4783
    %v4785 = vadd.f32 %v4784, 0.0036580483
    %v4786 = vmul.f32 %v4781, %v4785
    %v4787 = vadd.f32 %v4786, 0.05243302
    %v4788 = vmul.f32 %v4781, %v4787
    %v4789 = vadd.f32 %v4788, 0.18741608
    %v4790 = vmul.f32 %v4781, %v4789
    %v4791 = vadd.f32 %v4790, 1.1283791
    %v4792 = vmul.f32 %v4014, %v4791
    %v4793 = vmul.f32 %v4781, 3.8918573e-05
    %v4794 = vadd.f32 %v4793, 0.001143296
    %v4795 = vmul.f32 %v4781, %v4794
    %v4796 = vadd.f32 %v4795, 0.014752088
    %v4797 = vmul.f32 %v4781, %v4796
    %v4798 = vadd.f32 %v4797, 0.112945676
    %v4799 = vmul.f32 %v4781, %v4798
    %v4800 = vadd.f32 %v4799, 0.4994258
    %v4801 = vmul.f32 %v4781, %v4800
    %v4802 = vadd.f32 %v4801, 1.0
    %v4803 = vrcp.pop %v4802
    %v4804 = vmul.f32 %v4802, %v4803
    %v4805 = vsub.f32 1.0, %v4804
    %v4806 = vmul.f32 %v4803, %v4805
    %v4807 = vadd.f32 %v4803, %v4806
    %vm4808 = vweird.f32 %v4802
    %vm4809 = vweird.f32 %v4803
    %vm4810 = vmor %vm4808, %vm4809
    %v4811 = vsel %vm4810, %v4803, %v4807
    %v4812 = vand.u32 2147483647, %v4802
    %vm4813 = vcmp.eq.f32.partialorder %v4812, 8.507059e+37
    %v4814 = vand.u32 %v4802, 2147483648
    %v4815 = vor.u32 1.1754944e-38, %v4814
    %v4816 = vsel %vm4813, %v4815, %v4811
    %v4817 = vmul.f32 %v4792, %v4816
    %v4818 = vmin.f32 %v4817, 1.0
    %v4819 = vmax.f32 %v4818, -1.0
    %v4820 = vmul.f32 %v4015, %v4015
    %v4821 = vmin.f32 16.0, %v4820
    %v4822 = vmul.f32 %v4821, 2.1237322e-06
    %v4823 = vadd.f32 %v4822, 0.00028619796
    %v4824 = vmul.f32 %v4821, %v4823
    %v4825 = vadd.f32 %v4824, 0.0036580483
    %v4826 = vmul.f32 %v4821, %v4825
    %v4827 = vadd.f32 %v4826, 0.05243302
    %v4828 = vmul.f32 %v4821, %v4827
    %v4829 = vadd.f32 %v4828, 0.18741608
    %v4830 = vmul.f32 %v4821, %v4829
    %v4831 = vadd.f32 %v4830, 1.1283791
    %v4832 = vmul.f32 %v4015, %v4831
    %v4833 = vmul.f32 %v4821, 3.8918573e-05
    %v4834 = vadd.f32 %v4833, 0.001143296
    %v4835 = vmul.f32 %v4821, %v4834
    %v4836 = vadd.f32 %v4835, 0.014752088
    %v4837 = vmul.f32 %v4821, %v4836
    %v4838 = vadd.f32 %v4837, 0.112945676
    %v4839 = vmul.f32 %v4821, %v4838
    %v4840 = vadd.f32 %v4839, 0.4994258
    %v4841 = vmul.f32 %v4821, %v4840
    %v4842 = vadd.f32 %v4841, 1.0
    %v4843 = vrcp.pop %v4842
    %v4844 = vmul.f32 %v4842, %v4843
    %v4845 = vsub.f32 1.0, %v4844
    %v4846 = vmul.f32 %v4843, %v4845
    %v4847 = vadd.f32 %v4843, %v4846
    %vm4848 = vweird.f32 %v4842
    %vm4849 = vweird.f32 %v4843
    %vm4850 = vmor %vm4848, %vm4849
    %v4851 = vsel %vm4850, %v4843, %v4847
    %v4852 = vand.u32 2147483647, %v4842
    %vm4853 = vcmp.eq.f32.partialorder %v4852, 8.507059e+37
    %v4854 = vand.u32 %v4842, 2147483648
    %v4855 = vor.u32 1.1754944e-38, %v4854
    %v4856 = vsel %vm4853, %v4855, %v4851
    %v4857 = vmul.f32 %v4832, %v4856
    %v4858 = vmin.f32 %v4857, 1.0
    %v4859 = vmax.f32 %v4858, -1.0
    %v4860 = vmul.f32 %v4016, %v4016
    %v4861 = vmin.f32 16.0, %v4860
    %v4862 = vmul.f32 %v4861, 2.1237322e-06
    %v4863 = vadd.f32 %v4862, 0.00028619796
    %v4864 = vmul.f32 %v4861, %v4863
    %v4865 = vadd.f32 %v4864, 0.0036580483
    %v4866 = vmul.f32 %v4861, %v4865
    %v4867 = vadd.f32 %v4866, 0.05243302
    %v4868 = vmul.f32 %v4861, %v4867
    %v4869 = vadd.f32 %v4868, 0.18741608
    %v4870 = vmul.f32 %v4861, %v4869
    %v4871 = vadd.f32 %v4870, 1.1283791
    %v4872 = vmul.f32 %v4016, %v4871
    %v4873 = vmul.f32 %v4861, 3.8918573e-05
    %v4874 = vadd.f32 %v4873, 0.001143296
    %v4875 = vmul.f32 %v4861, %v4874
    %v4876 = vadd.f32 %v4875, 0.014752088
    %v4877 = vmul.f32 %v4861, %v4876
    %v4878 = vadd.f32 %v4877, 0.112945676
    %v4879 = vmul.f32 %v4861, %v4878
    %v4880 = vadd.f32 %v4879, 0.4994258
    %v4881 = vmul.f32 %v4861, %v4880
    %v4882 = vadd.f32 %v4881, 1.0
    %v4883 = vrcp.pop %v4882
    %v4884 = vmul.f32 %v4882, %v4883
    %v4885 = vsub.f32 1.0, %v4884
    %v4886 = vmul.f32 %v4883, %v4885
    %v4887 = vadd.f32 %v4883, %v4886
    %vm4888 = vweird.f32 %v4882
    %vm4889 = vweird.f32 %v4883
    %vm4890 = vmor %vm4888, %vm4889
    %v4891 = vsel %vm4890, %v4883, %v4887
    %v4892 = vand.u32 2147483647, %v4882
    %vm4893 = vcmp.eq.f32.partialorder %v4892, 8.507059e+37
    %v4894 = vand.u32 %v4882, 2147483648
    %v4895 = vor.u32 1.1754944e-38, %v4894
    %v4896 = vsel %vm4893, %v4895, %v4891
    %v4897 = vmul.f32 %v4872, %v4896
    %v4898 = vmin.f32 %v4897, 1.0
    %v4899 = vmax.f32 %v4898, -1.0
    %v4900 = vmul.f32 %v4017, %v4017
    %v4901 = vmin.f32 16.0, %v4900
    %v4902 = vmul.f32 %v4901, 2.1237322e-06
    %v4903 = vadd.f32 %v4902, 0.00028619796
    %v4904 = vmul.f32 %v4901, %v4903
    %v4905 = vadd.f32 %v4904, 0.0036580483
    %v4906 = vmul.f32 %v4901, %v4905
    %v4907 = vadd.f32 %v4906, 0.05243302
    %v4908 = vmul.f32 %v4901, %v4907
    %v4909 = vadd.f32 %v4908, 0.18741608
    %v4910 = vmul.f32 %v4901, %v4909
    %v4911 = vadd.f32 %v4910, 1.1283791
    %v4912 = vmul.f32 %v4017, %v4911
    %v4913 = vmul.f32 %v4901, 3.8918573e-05
    %v4914 = vadd.f32 %v4913, 0.001143296
    %v4915 = vmul.f32 %v4901, %v4914
    %v4916 = vadd.f32 %v4915, 0.014752088
    %v4917 = vmul.f32 %v4901, %v4916
    %v4918 = vadd.f32 %v4917, 0.112945676
    %v4919 = vmul.f32 %v4901, %v4918
    %v4920 = vadd.f32 %v4919, 0.4994258
    %v4921 = vmul.f32 %v4901, %v4920
    %v4922 = vadd.f32 %v4921, 1.0
    %v4923 = vrcp.pop %v4922
    %v4924 = vmul.f32 %v4922, %v4923
    %v4925 = vsub.f32 1.0, %v4924
    %v4926 = vmul.f32 %v4923, %v4925
    %v4927 = vadd.f32 %v4923, %v4926
    %vm4928 = vweird.f32 %v4922
    %vm4929 = vweird.f32 %v4923
    %vm4930 = vmor %vm4928, %vm4929
    %v4931 = vsel %vm4930, %v4923, %v4927
    %v4932 = vand.u32 2147483647, %v4922
    %vm4933 = vcmp.eq.f32.partialorder %v4932, 8.507059e+37
    %v4934 = vand.u32 %v4922, 2147483648
    %v4935 = vor.u32 1.1754944e-38, %v4934
    %v4936 = vsel %vm4933, %v4935, %v4931
    %v4937 = vmul.f32 %v4912, %v4936
    %v4938 = vmin.f32 %v4937, 1.0
    %v4939 = vmax.f32 %v4938, -1.0
    %v4940 = vmul.f32 %v4018, %v4018
    %v4941 = vmin.f32 16.0, %v4940
    %v4942 = vmul.f32 %v4941, 2.1237322e-06
    %v4943 = vadd.f32 %v4942, 0.00028619796
    %v4944 = vmul.f32 %v4941, %v4943
    %v4945 = vadd.f32 %v4944, 0.0036580483
    %v4946 = vmul.f32 %v4941, %v4945
    %v4947 = vadd.f32 %v4946, 0.05243302
    %v4948 = vmul.f32 %v4941, %v4947
    %v4949 = vadd.f32 %v4948, 0.18741608
    %v4950 = vmul.f32 %v4941, %v4949
    %v4951 = vadd.f32 %v4950, 1.1283791
    %v4952 = vmul.f32 %v4018, %v4951
    %v4953 = vmul.f32 %v4941, 3.8918573e-05
    %v4954 = vadd.f32 %v4953, 0.001143296
    %v4955 = vmul.f32 %v4941, %v4954
    %v4956 = vadd.f32 %v4955, 0.014752088
    %v4957 = vmul.f32 %v4941, %v4956
    %v4958 = vadd.f32 %v4957, 0.112945676
    %v4959 = vmul.f32 %v4941, %v4958
    %v4960 = vadd.f32 %v4959, 0.4994258
    %v4961 = vmul.f32 %v4941, %v4960
    %v4962 = vadd.f32 %v4961, 1.0
    %v4963 = vrcp.pop %v4962
    %v4964 = vmul.f32 %v4962, %v4963
    %v4965 = vsub.f32 1.0, %v4964
    %v4966 = vmul.f32 %v4963, %v4965
    %v4967 = vadd.f32 %v4963, %v4966
    %vm4968 = vweird.f32 %v4962
    %vm4969 = vweird.f32 %v4963
    %vm4970 = vmor %vm4968, %vm4969
    %v4971 = vsel %vm4970, %v4963, %v4967
    %v4972 = vand.u32 2147483647, %v4962
    %vm4973 = vcmp.eq.f32.partialorder %v4972, 8.507059e+37
    %v4974 = vand.u32 %v4962, 2147483648
    %v4975 = vor.u32 1.1754944e-38, %v4974
    %v4976 = vsel %vm4973, %v4975, %v4971
    %v4977 = vmul.f32 %v4952, %v4976
    %v4978 = vmin.f32 %v4977, 1.0
    %v4979 = vmax.f32 %v4978, -1.0
    %v4980 = vmul.f32 %v4019, %v4019
    %v4981 = vmin.f32 16.0, %v4980
    %v4982 = vmul.f32 %v4981, 2.1237322e-06
    %v4983 = vadd.f32 %v4982, 0.00028619796
    %v4984 = vmul.f32 %v4981, %v4983
    %v4985 = vadd.f32 %v4984, 0.0036580483
    %v4986 = vmul.f32 %v4981, %v4985
    %v4987 = vadd.f32 %v4986, 0.05243302
    %v4988 = vmul.f32 %v4981, %v4987
    %v4989 = vadd.f32 %v4988, 0.18741608
    %v4990 = vmul.f32 %v4981, %v4989
    %v4991 = vadd.f32 %v4990, 1.1283791
    %v4992 = vmul.f32 %v4019, %v4991
    %v4993 = vmul.f32 %v4981, 3.8918573e-05
    %v4994 = vadd.f32 %v4993, 0.001143296
    %v4995 = vmul.f32 %v4981, %v4994
    %v4996 = vadd.f32 %v4995, 0.014752088
    %v4997 = vmul.f32 %v4981, %v4996
    %v4998 = vadd.f32 %v4997, 0.112945676
    %v4999 = vmul.f32 %v4981, %v4998
    %v5000 = vadd.f32 %v4999, 0.4994258
    %v5001 = vmul.f32 %v4981, %v5000
    %v5002 = vadd.f32 %v5001, 1.0
    %v5003 = vrcp.pop %v5002
    %v5004 = vmul.f32 %v5002, %v5003
    %v5005 = vsub.f32 1.0, %v5004
    %v5006 = vmul.f32 %v5003, %v5005
    %v5007 = vadd.f32 %v5003, %v5006
    %vm5008 = vweird.f32 %v5002
    %vm5009 = vweird.f32 %v5003
    %vm5010 = vmor %vm5008, %vm5009
    %v5011 = vsel %vm5010, %v5003, %v5007
    %v5012 = vand.u32 2147483647, %v5002
    %vm5013 = vcmp.eq.f32.partialorder %v5012, 8.507059e+37
    %v5014 = vand.u32 %v5002, 2147483648
    %v5015 = vor.u32 1.1754944e-38, %v5014
    %v5016 = vsel %vm5013, %v5015, %v5011
    %v5017 = vmul.f32 %v4992, %v5016
    %v5018 = vmin.f32 %v5017, 1.0
    %v5019 = vmax.f32 %v5018, -1.0
    %v5020 = vmul.f32 %v4020, %v4020
    %v5021 = vmin.f32 16.0, %v5020
    %v5022 = vmul.f32 %v5021, 2.1237322e-06
    %v5023 = vadd.f32 %v5022, 0.00028619796
    %v5024 = vmul.f32 %v5021, %v5023
    %v5025 = vadd.f32 %v5024, 0.0036580483
    %v5026 = vmul.f32 %v5021, %v5025
    %v5027 = vadd.f32 %v5026, 0.05243302
    %v5028 = vmul.f32 %v5021, %v5027
    %v5029 = vadd.f32 %v5028, 0.18741608
    %v5030 = vmul.f32 %v5021, %v5029
    %v5031 = vadd.f32 %v5030, 1.1283791
    %v5032 = vmul.f32 %v4020, %v5031
    %v5033 = vmul.f32 %v5021, 3.8918573e-05
    %v5034 = vadd.f32 %v5033, 0.001143296
    %v5035 = vmul.f32 %v5021, %v5034
    %v5036 = vadd.f32 %v5035, 0.014752088
    %v5037 = vmul.f32 %v5021, %v5036
    %v5038 = vadd.f32 %v5037, 0.112945676
    %v5039 = vmul.f32 %v5021, %v5038
    %v5040 = vadd.f32 %v5039, 0.4994258
    %v5041 = vmul.f32 %v5021, %v5040
    %v5042 = vadd.f32 %v5041, 1.0
    %v5043 = vrcp.pop %v5042
    %v5044 = vmul.f32 %v5042, %v5043
    %v5045 = vsub.f32 1.0, %v5044
    %v5046 = vmul.f32 %v5043, %v5045
    %v5047 = vadd.f32 %v5043, %v5046
    %vm5048 = vweird.f32 %v5042
    %vm5049 = vweird.f32 %v5043
    %vm5050 = vmor %vm5048, %vm5049
    %v5051 = vsel %vm5050, %v5043, %v5047
    %v5052 = vand.u32 2147483647, %v5042
    %vm5053 = vcmp.eq.f32.partialorder %v5052, 8.507059e+37
    %v5054 = vand.u32 %v5042, 2147483648
    %v5055 = vor.u32 1.1754944e-38, %v5054
    %v5056 = vsel %vm5053, %v5055, %v5051
    %v5057 = vmul.f32 %v5032, %v5056
    %v5058 = vmin.f32 %v5057, 1.0
    %v5059 = vmax.f32 %v5058, -1.0
    %v5060 = vmul.f32 %v4021, %v4021
    %v5061 = vmin.f32 16.0, %v5060
    %v5062 = vmul.f32 %v5061, 2.1237322e-06
    %v5063 = vadd.f32 %v5062, 0.00028619796
    %v5064 = vmul.f32 %v5061, %v5063
    %v5065 = vadd.f32 %v5064, 0.0036580483
    %v5066 = vmul.f32 %v5061, %v5065
    %v5067 = vadd.f32 %v5066, 0.05243302
    %v5068 = vmul.f32 %v5061, %v5067
    %v5069 = vadd.f32 %v5068, 0.18741608
    %v5070 = vmul.f32 %v5061, %v5069
    %v5071 = vadd.f32 %v5070, 1.1283791
    %v5072 = vmul.f32 %v4021, %v5071
    %v5073 = vmul.f32 %v5061, 3.8918573e-05
    %v5074 = vadd.f32 %v5073, 0.001143296
    %v5075 = vmul.f32 %v5061, %v5074
    %v5076 = vadd.f32 %v5075, 0.014752088
    %v5077 = vmul.f32 %v5061, %v5076
    %v5078 = vadd.f32 %v5077, 0.112945676
    %v5079 = vmul.f32 %v5061, %v5078
    %v5080 = vadd.f32 %v5079, 0.4994258
    %v5081 = vmul.f32 %v5061, %v5080
    %v5082 = vadd.f32 %v5081, 1.0
    %v5083 = vrcp.pop %v5082
    %v5084 = vmul.f32 %v5082, %v5083
    %v5085 = vsub.f32 1.0, %v5084
    %v5086 = vmul.f32 %v5083, %v5085
    %v5087 = vadd.f32 %v5083, %v5086
    %vm5088 = vweird.f32 %v5082
    %vm5089 = vweird.f32 %v5083
    %vm5090 = vmor %vm5088, %vm5089
    %v5091 = vsel %vm5090, %v5083, %v5087
    %v5092 = vand.u32 2147483647, %v5082
    %vm5093 = vcmp.eq.f32.partialorder %v5092, 8.507059e+37
    %v5094 = vand.u32 %v5082, 2147483648
    %v5095 = vor.u32 1.1754944e-38, %v5094
    %v5096 = vsel %vm5093, %v5095, %v5091
    %v5097 = vmul.f32 %v5072, %v5096
    %v5098 = vmin.f32 %v5097, 1.0
    %v5099 = vmax.f32 %v5098, -1.0
    %v5100 = vmul.f32 %v4022, %v4022
    %v5101 = vmin.f32 16.0, %v5100
    %v5102 = vmul.f32 %v5101, 2.1237322e-06
    %v5103 = vadd.f32 %v5102, 0.00028619796
    %v5104 = vmul.f32 %v5101, %v5103
    %v5105 = vadd.f32 %v5104, 0.0036580483
    %v5106 = vmul.f32 %v5101, %v5105
    %v5107 = vadd.f32 %v5106, 0.05243302
    %v5108 = vmul.f32 %v5101, %v5107
    %v5109 = vadd.f32 %v5108, 0.18741608
    %v5110 = vmul.f32 %v5101, %v5109
    %v5111 = vadd.f32 %v5110, 1.1283791
    %v5112 = vmul.f32 %v4022, %v5111
    %v5113 = vmul.f32 %v5101, 3.8918573e-05
    %v5114 = vadd.f32 %v5113, 0.001143296
    %v5115 = vmul.f32 %v5101, %v5114
    %v5116 = vadd.f32 %v5115, 0.014752088
    %v5117 = vmul.f32 %v5101, %v5116
    %v5118 = vadd.f32 %v5117, 0.112945676
    %v5119 = vmul.f32 %v5101, %v5118
    %v5120 = vadd.f32 %v5119, 0.4994258
    %v5121 = vmul.f32 %v5101, %v5120
    %v5122 = vadd.f32 %v5121, 1.0
    %v5123 = vrcp.pop %v5122
    %v5124 = vmul.f32 %v5122, %v5123
    %v5125 = vsub.f32 1.0, %v5124
    %v5126 = vmul.f32 %v5123, %v5125
    %v5127 = vadd.f32 %v5123, %v5126
    %vm5128 = vweird.f32 %v5122
    %vm5129 = vweird.f32 %v5123
    %vm5130 = vmor %vm5128, %vm5129
    %v5131 = vsel %vm5130, %v5123, %v5127
    %v5132 = vand.u32 2147483647, %v5122
    %vm5133 = vcmp.eq.f32.partialorder %v5132, 8.507059e+37
    %v5134 = vand.u32 %v5122, 2147483648
    %v5135 = vor.u32 1.1754944e-38, %v5134
    %v5136 = vsel %vm5133, %v5135, %v5131
    %v5137 = vmul.f32 %v5112, %v5136
    %v5138 = vmin.f32 %v5137, 1.0
    %v5139 = vmax.f32 %v5138, -1.0
    %v5140 = vmul.f32 %v4023, %v4023
    %v5141 = vmin.f32 16.0, %v5140
    %v5142 = vmul.f32 %v5141, 2.1237322e-06
    %v5143 = vadd.f32 %v5142, 0.00028619796
    %v5144 = vmul.f32 %v5141, %v5143
    %v5145 = vadd.f32 %v5144, 0.0036580483
    %v5146 = vmul.f32 %v5141, %v5145
    %v5147 = vadd.f32 %v5146, 0.05243302
    %v5148 = vmul.f32 %v5141, %v5147
    %v5149 = vadd.f32 %v5148, 0.18741608
    %v5150 = vmul.f32 %v5141, %v5149
    %v5151 = vadd.f32 %v5150, 1.1283791
    %v5152 = vmul.f32 %v4023, %v5151
    %v5153 = vmul.f32 %v5141, 3.8918573e-05
    %v5154 = vadd.f32 %v5153, 0.001143296
    %v5155 = vmul.f32 %v5141, %v5154
    %v5156 = vadd.f32 %v5155, 0.014752088
    %v5157 = vmul.f32 %v5141, %v5156
    %v5158 = vadd.f32 %v5157, 0.112945676
    %v5159 = vmul.f32 %v5141, %v5158
    %v5160 = vadd.f32 %v5159, 0.4994258
    %v5161 = vmul.f32 %v5141, %v5160
    %v5162 = vadd.f32 %v5161, 1.0
    %v5163 = vrcp.pop %v5162
    %v5164 = vmul.f32 %v5162, %v5163
    %v5165 = vsub.f32 1.0, %v5164
    %v5166 = vmul.f32 %v5163, %v5165
    %v5167 = vadd.f32 %v5163, %v5166
    %vm5168 = vweird.f32 %v5162
    %vm5169 = vweird.f32 %v5163
    %vm5170 = vmor %vm5168, %vm5169
    %v5171 = vsel %vm5170, %v5163, %v5167
    %v5172 = vand.u32 2147483647, %v5162
    %vm5173 = vcmp.eq.f32.partialorder %v5172, 8.507059e+37
    %v5174 = vand.u32 %v5162, 2147483648
    %v5175 = vor.u32 1.1754944e-38, %v5174
    %v5176 = vsel %vm5173, %v5175, %v5171
    %v5177 = vmul.f32 %v5152, %v5176
    %v5178 = vmin.f32 %v5177, 1.0
    %v5179 = vmax.f32 %v5178, -1.0
    %v5180 = vmul.f32 %v4024, %v4024
    %v5181 = vmin.f32 16.0, %v5180
    %v5182 = vmul.f32 %v5181, 2.1237322e-06
    %v5183 = vadd.f32 %v5182, 0.00028619796
    %v5184 = vmul.f32 %v5181, %v5183
    %v5185 = vadd.f32 %v5184, 0.0036580483
    %v5186 = vmul.f32 %v5181, %v5185
    %v5187 = vadd.f32 %v5186, 0.05243302
    %v5188 = vmul.f32 %v5181, %v5187
    %v5189 = vadd.f32 %v5188, 0.18741608
    %v5190 = vmul.f32 %v5181, %v5189
    %v5191 = vadd.f32 %v5190, 1.1283791
    %v5192 = vmul.f32 %v4024, %v5191
    %v5193 = vmul.f32 %v5181, 3.8918573e-05
    %v5194 = vadd.f32 %v5193, 0.001143296
    %v5195 = vmul.f32 %v5181, %v5194
    %v5196 = vadd.f32 %v5195, 0.014752088
    %v5197 = vmul.f32 %v5181, %v5196
    %v5198 = vadd.f32 %v5197, 0.112945676
    %v5199 = vmul.f32 %v5181, %v5198
    %v5200 = vadd.f32 %v5199, 0.4994258
    %v5201 = vmul.f32 %v5181, %v5200
    %v5202 = vadd.f32 %v5201, 1.0
    %v5203 = vrcp.pop %v5202
    %v5204 = vmul.f32 %v5202, %v5203
    %v5205 = vsub.f32 1.0, %v5204
    %v5206 = vmul.f32 %v5203, %v5205
    %v5207 = vadd.f32 %v5203, %v5206
    %vm5208 = vweird.f32 %v5202
    %vm5209 = vweird.f32 %v5203
    %vm5210 = vmor %vm5208, %vm5209
    %v5211 = vsel %vm5210, %v5203, %v5207
    %v5212 = vand.u32 2147483647, %v5202
    %vm5213 = vcmp.eq.f32.partialorder %v5212, 8.507059e+37
    %v5214 = vand.u32 %v5202, 2147483648
    %v5215 = vor.u32 1.1754944e-38, %v5214
    %v5216 = vsel %vm5213, %v5215, %v5211
    %v5217 = vmul.f32 %v5192, %v5216
    %v5218 = vmin.f32 %v5217, 1.0
    %v5219 = vmax.f32 %v5218, -1.0
    %v5220 = vmul.f32 %v4025, %v4025
    %v5221 = vmin.f32 16.0, %v5220
    %v5222 = vmul.f32 %v5221, 2.1237322e-06
    %v5223 = vadd.f32 %v5222, 0.00028619796
    %v5224 = vmul.f32 %v5221, %v5223
    %v5225 = vadd.f32 %v5224, 0.0036580483
    %v5226 = vmul.f32 %v5221, %v5225
    %v5227 = vadd.f32 %v5226, 0.05243302
    %v5228 = vmul.f32 %v5221, %v5227
    %v5229 = vadd.f32 %v5228, 0.18741608
    %v5230 = vmul.f32 %v5221, %v5229
    %v5231 = vadd.f32 %v5230, 1.1283791
    %v5232 = vmul.f32 %v4025, %v5231
    %v5233 = vmul.f32 %v5221, 3.8918573e-05
    %v5234 = vadd.f32 %v5233, 0.001143296
    %v5235 = vmul.f32 %v5221, %v5234
    %v5236 = vadd.f32 %v5235, 0.014752088
    %v5237 = vmul.f32 %v5221, %v5236
    %v5238 = vadd.f32 %v5237, 0.112945676
    %v5239 = vmul.f32 %v5221, %v5238
    %v5240 = vadd.f32 %v5239, 0.4994258
    %v5241 = vmul.f32 %v5221, %v5240
    %v5242 = vadd.f32 %v5241, 1.0
    %v5243 = vrcp.pop %v5242
    %v5244 = vmul.f32 %v5242, %v5243
    %v5245 = vsub.f32 1.0, %v5244
    %v5246 = vmul.f32 %v5243, %v5245
    %v5247 = vadd.f32 %v5243, %v5246
    %vm5248 = vweird.f32 %v5242
    %vm5249 = vweird.f32 %v5243
    %vm5250 = vmor %vm5248, %vm5249
    %v5251 = vsel %vm5250, %v5243, %v5247
    %v5252 = vand.u32 2147483647, %v5242
    %vm5253 = vcmp.eq.f32.partialorder %v5252, 8.507059e+37
    %v5254 = vand.u32 %v5242, 2147483648
    %v5255 = vor.u32 1.1754944e-38, %v5254
    %v5256 = vsel %vm5253, %v5255, %v5251
    %v5257 = vmul.f32 %v5232, %v5256
    %v5258 = vmin.f32 %v5257, 1.0
    %v5259 = vmax.f32 %v5258, -1.0
    %v5260 = vmul.f32 %v4026, %v4026
    %v5261 = vmin.f32 16.0, %v5260
    %v5262 = vmul.f32 %v5261, 2.1237322e-06
    %v5263 = vadd.f32 %v5262, 0.00028619796
    %v5264 = vmul.f32 %v5261, %v5263
    %v5265 = vadd.f32 %v5264, 0.0036580483
    %v5266 = vmul.f32 %v5261, %v5265
    %v5267 = vadd.f32 %v5266, 0.05243302
    %v5268 = vmul.f32 %v5261, %v5267
    %v5269 = vadd.f32 %v5268, 0.18741608
    %v5270 = vmul.f32 %v5261, %v5269
    %v5271 = vadd.f32 %v5270, 1.1283791
    %v5272 = vmul.f32 %v4026, %v5271
    %v5273 = vmul.f32 %v5261, 3.8918573e-05
    %v5274 = vadd.f32 %v5273, 0.001143296
    %v5275 = vmul.f32 %v5261, %v5274
    %v5276 = vadd.f32 %v5275, 0.014752088
    %v5277 = vmul.f32 %v5261, %v5276
    %v5278 = vadd.f32 %v5277, 0.112945676
    %v5279 = vmul.f32 %v5261, %v5278
    %v5280 = vadd.f32 %v5279, 0.4994258
    %v5281 = vmul.f32 %v5261, %v5280
    %v5282 = vadd.f32 %v5281, 1.0
    %v5283 = vrcp.pop %v5282
    %v5284 = vmul.f32 %v5282, %v5283
    %v5285 = vsub.f32 1.0, %v5284
    %v5286 = vmul.f32 %v5283, %v5285
    %v5287 = vadd.f32 %v5283, %v5286
    %vm5288 = vweird.f32 %v5282
    %vm5289 = vweird.f32 %v5283
    %vm5290 = vmor %vm5288, %vm5289
    %v5291 = vsel %vm5290, %v5283, %v5287
    %v5292 = vand.u32 2147483647, %v5282
    %vm5293 = vcmp.eq.f32.partialorder %v5292, 8.507059e+37
    %v5294 = vand.u32 %v5282, 2147483648
    %v5295 = vor.u32 1.1754944e-38, %v5294
    %v5296 = vsel %vm5293, %v5295, %v5291
    %v5297 = vmul.f32 %v5272, %v5296
    %v5298 = vmin.f32 %v5297, 1.0
    %v5299 = vmax.f32 %v5298, -1.0
    %v5300 = vmul.f32 %v4027, %v4027
    %v5301 = vmin.f32 16.0, %v5300
    %v5302 = vmul.f32 %v5301, 2.1237322e-06
    %v5303 = vadd.f32 %v5302, 0.00028619796
    %v5304 = vmul.f32 %v5301, %v5303
    %v5305 = vadd.f32 %v5304, 0.0036580483
    %v5306 = vmul.f32 %v5301, %v5305
    %v5307 = vadd.f32 %v5306, 0.05243302
    %v5308 = vmul.f32 %v5301, %v5307
    %v5309 = vadd.f32 %v5308, 0.18741608
    %v5310 = vmul.f32 %v5301, %v5309
    %v5311 = vadd.f32 %v5310, 1.1283791
    %v5312 = vmul.f32 %v4027, %v5311
    %v5313 = vmul.f32 %v5301, 3.8918573e-05
    %v5314 = vadd.f32 %v5313, 0.001143296
    %v5315 = vmul.f32 %v5301, %v5314
    %v5316 = vadd.f32 %v5315, 0.014752088
    %v5317 = vmul.f32 %v5301, %v5316
    %v5318 = vadd.f32 %v5317, 0.112945676
    %v5319 = vmul.f32 %v5301, %v5318
    %v5320 = vadd.f32 %v5319, 0.4994258
    %v5321 = vmul.f32 %v5301, %v5320
    %v5322 = vadd.f32 %v5321, 1.0
    %v5323 = vrcp.pop %v5322
    %v5324 = vmul.f32 %v5322, %v5323
    %v5325 = vsub.f32 1.0, %v5324
    %v5326 = vmul.f32 %v5323, %v5325
    %v5327 = vadd.f32 %v5323, %v5326
    %vm5328 = vweird.f32 %v5322
    %vm5329 = vweird.f32 %v5323
    %vm5330 = vmor %vm5328, %vm5329
    %v5331 = vsel %vm5330, %v5323, %v5327
    %v5332 = vand.u32 2147483647, %v5322
    %vm5333 = vcmp.eq.f32.partialorder %v5332, 8.507059e+37
    %v5334 = vand.u32 %v5322, 2147483648
    %v5335 = vor.u32 1.1754944e-38, %v5334
    %v5336 = vsel %vm5333, %v5335, %v5331
    %v5337 = vmul.f32 %v5312, %v5336
    %v5338 = vmin.f32 %v5337, 1.0
    %v5339 = vmax.f32 %v5338, -1.0
    %v5340 = vmul.f32 %v4028, %v4028
    %v5341 = vmin.f32 16.0, %v5340
    %v5342 = vmul.f32 %v5341, 2.1237322e-06
    %v5343 = vadd.f32 %v5342, 0.00028619796
    %v5344 = vmul.f32 %v5341, %v5343
    %v5345 = vadd.f32 %v5344, 0.0036580483
    %v5346 = vmul.f32 %v5341, %v5345
    %v5347 = vadd.f32 %v5346, 0.05243302
    %v5348 = vmul.f32 %v5341, %v5347
    %v5349 = vadd.f32 %v5348, 0.18741608
    %v5350 = vmul.f32 %v5341, %v5349
    %v5351 = vadd.f32 %v5350, 1.1283791
    %v5352 = vmul.f32 %v4028, %v5351
    %v5353 = vmul.f32 %v5341, 3.8918573e-05
    %v5354 = vadd.f32 %v5353, 0.001143296
    %v5355 = vmul.f32 %v5341, %v5354
    %v5356 = vadd.f32 %v5355, 0.014752088
    %v5357 = vmul.f32 %v5341, %v5356
    %v5358 = vadd.f32 %v5357, 0.112945676
    %v5359 = vmul.f32 %v5341, %v5358
    %v5360 = vadd.f32 %v5359, 0.4994258
    %v5361 = vmul.f32 %v5341, %v5360
    %v5362 = vadd.f32 %v5361, 1.0
    %v5363 = vrcp.pop %v5362
    %v5364 = vmul.f32 %v5362, %v5363
    %v5365 = vsub.f32 1.0, %v5364
    %v5366 = vmul.f32 %v5363, %v5365
    %v5367 = vadd.f32 %v5363, %v5366
    %vm5368 = vweird.f32 %v5362
    %vm5369 = vweird.f32 %v5363
    %vm5370 = vmor %vm5368, %vm5369
    %v5371 = vsel %vm5370, %v5363, %v5367
    %v5372 = vand.u32 2147483647, %v5362
    %vm5373 = vcmp.eq.f32.partialorder %v5372, 8.507059e+37
    %v5374 = vand.u32 %v5362, 2147483648
    %v5375 = vor.u32 1.1754944e-38, %v5374
    %v5376 = vsel %vm5373, %v5375, %v5371
    %v5377 = vmul.f32 %v5352, %v5376
    %v5378 = vmin.f32 %v5377, 1.0
    %v5379 = vmax.f32 %v5378, -1.0
    %v5380 = vmul.f32 %v4029, %v4029
    %v5381 = vmin.f32 16.0, %v5380
    %v5382 = vmul.f32 %v5381, 2.1237322e-06
    %v5383 = vadd.f32 %v5382, 0.00028619796
    %v5384 = vmul.f32 %v5381, %v5383
    %v5385 = vadd.f32 %v5384, 0.0036580483
    %v5386 = vmul.f32 %v5381, %v5385
    %v5387 = vadd.f32 %v5386, 0.05243302
    %v5388 = vmul.f32 %v5381, %v5387
    %v5389 = vadd.f32 %v5388, 0.18741608
    %v5390 = vmul.f32 %v5381, %v5389
    %v5391 = vadd.f32 %v5390, 1.1283791
    %v5392 = vmul.f32 %v4029, %v5391
    %v5393 = vmul.f32 %v5381, 3.8918573e-05
    %v5394 = vadd.f32 %v5393, 0.001143296
    %v5395 = vmul.f32 %v5381, %v5394
    %v5396 = vadd.f32 %v5395, 0.014752088
    %v5397 = vmul.f32 %v5381, %v5396
    %v5398 = vadd.f32 %v5397, 0.112945676
    %v5399 = vmul.f32 %v5381, %v5398
    %v5400 = vadd.f32 %v5399, 0.4994258
    %v5401 = vmul.f32 %v5381, %v5400
    %v5402 = vadd.f32 %v5401, 1.0
    %v5403 = vrcp.pop %v5402
    %v5404 = vmul.f32 %v5402, %v5403
    %v5405 = vsub.f32 1.0, %v5404
    %v5406 = vmul.f32 %v5403, %v5405
    %v5407 = vadd.f32 %v5403, %v5406
    %vm5408 = vweird.f32 %v5402
    %vm5409 = vweird.f32 %v5403
    %vm5410 = vmor %vm5408, %vm5409
    %v5411 = vsel %vm5410, %v5403, %v5407
    %v5412 = vand.u32 2147483647, %v5402
    %vm5413 = vcmp.eq.f32.partialorder %v5412, 8.507059e+37
    %v5414 = vand.u32 %v5402, 2147483648
    %v5415 = vor.u32 1.1754944e-38, %v5414
    %v5416 = vsel %vm5413, %v5415, %v5411
    %v5417 = vmul.f32 %v5392, %v5416
    %v5418 = vmin.f32 %v5417, 1.0
    %v5419 = vmax.f32 %v5418, -1.0
    %v5420 = vmul.f32 %v4030, %v4030
    %v5421 = vmin.f32 16.0, %v5420
    %v5422 = vmul.f32 %v5421, 2.1237322e-06
    %v5423 = vadd.f32 %v5422, 0.00028619796
    %v5424 = vmul.f32 %v5421, %v5423
    %v5425 = vadd.f32 %v5424, 0.0036580483
    %v5426 = vmul.f32 %v5421, %v5425
    %v5427 = vadd.f32 %v5426, 0.05243302
    %v5428 = vmul.f32 %v5421, %v5427
    %v5429 = vadd.f32 %v5428, 0.18741608
    %v5430 = vmul.f32 %v5421, %v5429
    %v5431 = vadd.f32 %v5430, 1.1283791
    %v5432 = vmul.f32 %v4030, %v5431
    %v5433 = vmul.f32 %v5421, 3.8918573e-05
    %v5434 = vadd.f32 %v5433, 0.001143296
    %v5435 = vmul.f32 %v5421, %v5434
    %v5436 = vadd.f32 %v5435, 0.014752088
    %v5437 = vmul.f32 %v5421, %v5436
    %v5438 = vadd.f32 %v5437, 0.112945676
    %v5439 = vmul.f32 %v5421, %v5438
    %v5440 = vadd.f32 %v5439, 0.4994258
    %v5441 = vmul.f32 %v5421, %v5440
    %v5442 = vadd.f32 %v5441, 1.0
    %v5443 = vrcp.pop %v5442
    %v5444 = vmul.f32 %v5442, %v5443
    %v5445 = vsub.f32 1.0, %v5444
    %v5446 = vmul.f32 %v5443, %v5445
    %v5447 = vadd.f32 %v5443, %v5446
    %vm5448 = vweird.f32 %v5442
    %vm5449 = vweird.f32 %v5443
    %vm5450 = vmor %vm5448, %vm5449
    %v5451 = vsel %vm5450, %v5443, %v5447
    %v5452 = vand.u32 2147483647, %v5442
    %vm5453 = vcmp.eq.f32.partialorder %v5452, 8.507059e+37
    %v5454 = vand.u32 %v5442, 2147483648
    %v5455 = vor.u32 1.1754944e-38, %v5454
    %v5456 = vsel %vm5453, %v5455, %v5451
    %v5457 = vmul.f32 %v5432, %v5456
    %v5458 = vmin.f32 %v5457, 1.0
    %v5459 = vmax.f32 %v5458, -1.0
    %v5460 = vmul.f32 %v4031, %v4031
    %v5461 = vmin.f32 16.0, %v5460
    %v5462 = vmul.f32 %v5461, 2.1237322e-06
    %v5463 = vadd.f32 %v5462, 0.00028619796
    %v5464 = vmul.f32 %v5461, %v5463
    %v5465 = vadd.f32 %v5464, 0.0036580483
    %v5466 = vmul.f32 %v5461, %v5465
    %v5467 = vadd.f32 %v5466, 0.05243302
    %v5468 = vmul.f32 %v5461, %v5467
    %v5469 = vadd.f32 %v5468, 0.18741608
    %v5470 = vmul.f32 %v5461, %v5469
    %v5471 = vadd.f32 %v5470, 1.1283791
    %v5472 = vmul.f32 %v4031, %v5471
    %v5473 = vmul.f32 %v5461, 3.8918573e-05
    %v5474 = vadd.f32 %v5473, 0.001143296
    %v5475 = vmul.f32 %v5461, %v5474
    %v5476 = vadd.f32 %v5475, 0.014752088
    %v5477 = vmul.f32 %v5461, %v5476
    %v5478 = vadd.f32 %v5477, 0.112945676
    %v5479 = vmul.f32 %v5461, %v5478
    %v5480 = vadd.f32 %v5479, 0.4994258
    %v5481 = vmul.f32 %v5461, %v5480
    %v5482 = vadd.f32 %v5481, 1.0
    %v5483 = vrcp.pop %v5482
    %v5484 = vmul.f32 %v5482, %v5483
    %v5485 = vsub.f32 1.0, %v5484
    %v5486 = vmul.f32 %v5483, %v5485
    %v5487 = vadd.f32 %v5483, %v5486
    %vm5488 = vweird.f32 %v5482
    %vm5489 = vweird.f32 %v5483
    %vm5490 = vmor %vm5488, %vm5489
    %v5491 = vsel %vm5490, %v5483, %v5487
    %v5492 = vand.u32 2147483647, %v5482
    %vm5493 = vcmp.eq.f32.partialorder %v5492, 8.507059e+37
    %v5494 = vand.u32 %v5482, 2147483648
    %v5495 = vor.u32 1.1754944e-38, %v5494
    %v5496 = vsel %vm5493, %v5495, %v5491
    %v5497 = vmul.f32 %v5472, %v5496
    %v5498 = vmin.f32 %v5497, 1.0
    %v5499 = vmax.f32 %v5498, -1.0
    %v5500 = vmul.f32 %v4032, %v4032
    %v5501 = vmin.f32 16.0, %v5500
    %v5502 = vmul.f32 %v5501, 2.1237322e-06
    %v5503 = vadd.f32 %v5502, 0.00028619796
    %v5504 = vmul.f32 %v5501, %v5503
    %v5505 = vadd.f32 %v5504, 0.0036580483
    %v5506 = vmul.f32 %v5501, %v5505
    %v5507 = vadd.f32 %v5506, 0.05243302
    %v5508 = vmul.f32 %v5501, %v5507
    %v5509 = vadd.f32 %v5508, 0.18741608
    %v5510 = vmul.f32 %v5501, %v5509
    %v5511 = vadd.f32 %v5510, 1.1283791
    %v5512 = vmul.f32 %v4032, %v5511
    %v5513 = vmul.f32 %v5501, 3.8918573e-05
    %v5514 = vadd.f32 %v5513, 0.001143296
    %v5515 = vmul.f32 %v5501, %v5514
    %v5516 = vadd.f32 %v5515, 0.014752088
    %v5517 = vmul.f32 %v5501, %v5516
    %v5518 = vadd.f32 %v5517, 0.112945676
    %v5519 = vmul.f32 %v5501, %v5518
    %v5520 = vadd.f32 %v5519, 0.4994258
    %v5521 = vmul.f32 %v5501, %v5520
    %v5522 = vadd.f32 %v5521, 1.0
    %v5523 = vrcp.pop %v5522
    %v5524 = vmul.f32 %v5522, %v5523
    %v5525 = vsub.f32 1.0, %v5524
    %v5526 = vmul.f32 %v5523, %v5525
    %v5527 = vadd.f32 %v5523, %v5526
    %vm5528 = vweird.f32 %v5522
    %vm5529 = vweird.f32 %v5523
    %vm5530 = vmor %vm5528, %vm5529
    %v5531 = vsel %vm5530, %v5523, %v5527
    %v5532 = vand.u32 2147483647, %v5522
    %vm5533 = vcmp.eq.f32.partialorder %v5532, 8.507059e+37
    %v5534 = vand.u32 %v5522, 2147483648
    %v5535 = vor.u32 1.1754944e-38, %v5534
    %v5536 = vsel %vm5533, %v5535, %v5531
    %v5537 = vmul.f32 %v5512, %v5536
    %v5538 = vmin.f32 %v5537, 1.0
    %v5539 = vmax.f32 %v5538, -1.0
    %v5540 = vmul.f32 %v4033, %v4033
    %v5541 = vmin.f32 16.0, %v5540
    %v5542 = vmul.f32 %v5541, 2.1237322e-06
    %v5543 = vadd.f32 %v5542, 0.00028619796
    %v5544 = vmul.f32 %v5541, %v5543
    %v5545 = vadd.f32 %v5544, 0.0036580483
    %v5546 = vmul.f32 %v5541, %v5545
    %v5547 = vadd.f32 %v5546, 0.05243302
    %v5548 = vmul.f32 %v5541, %v5547
    %v5549 = vadd.f32 %v5548, 0.18741608
    %v5550 = vmul.f32 %v5541, %v5549
    %v5551 = vadd.f32 %v5550, 1.1283791
    %v5552 = vmul.f32 %v4033, %v5551
    %v5553 = vmul.f32 %v5541, 3.8918573e-05
    %v5554 = vadd.f32 %v5553, 0.001143296
    %v5555 = vmul.f32 %v5541, %v5554
    %v5556 = vadd.f32 %v5555, 0.014752088
    %v5557 = vmul.f32 %v5541, %v5556
    %v5558 = vadd.f32 %v5557, 0.112945676
    %v5559 = vmul.f32 %v5541, %v5558
    %v5560 = vadd.f32 %v5559, 0.4994258
    %v5561 = vmul.f32 %v5541, %v5560
    %v5562 = vadd.f32 %v5561, 1.0
    %v5563 = vrcp.pop %v5562
    %v5564 = vmul.f32 %v5562, %v5563
    %v5565 = vsub.f32 1.0, %v5564
    %v5566 = vmul.f32 %v5563, %v5565
    %v5567 = vadd.f32 %v5563, %v5566
    %vm5568 = vweird.f32 %v5562
    %vm5569 = vweird.f32 %v5563
    %vm5570 = vmor %vm5568, %vm5569
    %v5571 = vsel %vm5570, %v5563, %v5567
    %v5572 = vand.u32 2147483647, %v5562
    %vm5573 = vcmp.eq.f32.partialorder %v5572, 8.507059e+37
    %v5574 = vand.u32 %v5562, 2147483648
    %v5575 = vor.u32 1.1754944e-38, %v5574
    %v5576 = vsel %vm5573, %v5575, %v5571
    %v5577 = vmul.f32 %v5552, %v5576
    %v5578 = vmin.f32 %v5577, 1.0
    %v5579 = vmax.f32 %v5578, -1.0
    %v5580 = vmul.f32 %v4034, %v4034
    %v5581 = vmin.f32 16.0, %v5580
    %v5582 = vmul.f32 %v5581, 2.1237322e-06
    %v5583 = vadd.f32 %v5582, 0.00028619796
    %v5584 = vmul.f32 %v5581, %v5583
    %v5585 = vadd.f32 %v5584, 0.0036580483
    %v5586 = vmul.f32 %v5581, %v5585
    %v5587 = vadd.f32 %v5586, 0.05243302
    %v5588 = vmul.f32 %v5581, %v5587
    %v5589 = vadd.f32 %v5588, 0.18741608
    %v5590 = vmul.f32 %v5581, %v5589
    %v5591 = vadd.f32 %v5590, 1.1283791
    %v5592 = vmul.f32 %v4034, %v5591
    %v5593 = vmul.f32 %v5581, 3.8918573e-05
    %v5594 = vadd.f32 %v5593, 0.001143296
    %v5595 = vmul.f32 %v5581, %v5594
    %v5596 = vadd.f32 %v5595, 0.014752088
    %v5597 = vmul.f32 %v5581, %v5596
    %v5598 = vadd.f32 %v5597, 0.112945676
    %v5599 = vmul.f32 %v5581, %v5598
    %v5600 = vadd.f32 %v5599, 0.4994258
    %v5601 = vmul.f32 %v5581, %v5600
    %v5602 = vadd.f32 %v5601, 1.0
    %v5603 = vrcp.pop %v5602
    %v5604 = vmul.f32 %v5602, %v5603
    %v5605 = vsub.f32 1.0, %v5604
    %v5606 = vmul.f32 %v5603, %v5605
    %v5607 = vadd.f32 %v5603, %v5606
    %vm5608 = vweird.f32 %v5602
    %vm5609 = vweird.f32 %v5603
    %vm5610 = vmor %vm5608, %vm5609
    %v5611 = vsel %vm5610, %v5603, %v5607
    %v5612 = vand.u32 2147483647, %v5602
    %vm5613 = vcmp.eq.f32.partialorder %v5612, 8.507059e+37
    %v5614 = vand.u32 %v5602, 2147483648
    %v5615 = vor.u32 1.1754944e-38, %v5614
    %v5616 = vsel %vm5613, %v5615, %v5611
    %v5617 = vmul.f32 %v5592, %v5616
    %v5618 = vmin.f32 %v5617, 1.0
    %v5619 = vmax.f32 %v5618, -1.0
    %v5620 = vmul.f32 %v4035, %v4035
    %v5621 = vmin.f32 16.0, %v5620
    %v5622 = vmul.f32 %v5621, 2.1237322e-06
    %v5623 = vadd.f32 %v5622, 0.00028619796
    %v5624 = vmul.f32 %v5621, %v5623
    %v5625 = vadd.f32 %v5624, 0.0036580483
    %v5626 = vmul.f32 %v5621, %v5625
    %v5627 = vadd.f32 %v5626, 0.05243302
    %v5628 = vmul.f32 %v5621, %v5627
    %v5629 = vadd.f32 %v5628, 0.18741608
    %v5630 = vmul.f32 %v5621, %v5629
    %v5631 = vadd.f32 %v5630, 1.1283791
    %v5632 = vmul.f32 %v4035, %v5631
    %v5633 = vmul.f32 %v5621, 3.8918573e-05
    %v5634 = vadd.f32 %v5633, 0.001143296
    %v5635 = vmul.f32 %v5621, %v5634
    %v5636 = vadd.f32 %v5635, 0.014752088
    %v5637 = vmul.f32 %v5621, %v5636
    %v5638 = vadd.f32 %v5637, 0.112945676
    %v5639 = vmul.f32 %v5621, %v5638
    %v5640 = vadd.f32 %v5639, 0.4994258
    %v5641 = vmul.f32 %v5621, %v5640
    %v5642 = vadd.f32 %v5641, 1.0
    %v5643 = vrcp.pop %v5642
    %v5644 = vmul.f32 %v5642, %v5643
    %v5645 = vsub.f32 1.0, %v5644
    %v5646 = vmul.f32 %v5643, %v5645
    %v5647 = vadd.f32 %v5643, %v5646
    %vm5648 = vweird.f32 %v5642
    %vm5649 = vweird.f32 %v5643
    %vm5650 = vmor %vm5648, %vm5649
    %v5651 = vsel %vm5650, %v5643, %v5647
    %v5652 = vand.u32 2147483647, %v5642
    %vm5653 = vcmp.eq.f32.partialorder %v5652, 8.507059e+37
    %v5654 = vand.u32 %v5642, 2147483648
    %v5655 = vor.u32 1.1754944e-38, %v5654
    %v5656 = vsel %vm5653, %v5655, %v5651
    %v5657 = vmul.f32 %v5632, %v5656
    %v5658 = vmin.f32 %v5657, 1.0
    %v5659 = vmax.f32 %v5658, -1.0
    %v5660 = vmul.f32 %v4036, %v4036
    %v5661 = vmin.f32 16.0, %v5660
    %v5662 = vmul.f32 %v5661, 2.1237322e-06
    %v5663 = vadd.f32 %v5662, 0.00028619796
    %v5664 = vmul.f32 %v5661, %v5663
    %v5665 = vadd.f32 %v5664, 0.0036580483
    %v5666 = vmul.f32 %v5661, %v5665
    %v5667 = vadd.f32 %v5666, 0.05243302
    %v5668 = vmul.f32 %v5661, %v5667
    %v5669 = vadd.f32 %v5668, 0.18741608
    %v5670 = vmul.f32 %v5661, %v5669
    %v5671 = vadd.f32 %v5670, 1.1283791
    %v5672 = vmul.f32 %v4036, %v5671
    %v5673 = vmul.f32 %v5661, 3.8918573e-05
    %v5674 = vadd.f32 %v5673, 0.001143296
    %v5675 = vmul.f32 %v5661, %v5674
    %v5676 = vadd.f32 %v5675, 0.014752088
    %v5677 = vmul.f32 %v5661, %v5676
    %v5678 = vadd.f32 %v5677, 0.112945676
    %v5679 = vmul.f32 %v5661, %v5678
    %v5680 = vadd.f32 %v5679, 0.4994258
    %v5681 = vmul.f32 %v5661, %v5680
    %v5682 = vadd.f32 %v5681, 1.0
    %v5683 = vrcp.pop %v5682
    %v5684 = vmul.f32 %v5682, %v5683
    %v5685 = vsub.f32 1.0, %v5684
    %v5686 = vmul.f32 %v5683, %v5685
    %v5687 = vadd.f32 %v5683, %v5686
    %vm5688 = vweird.f32 %v5682
    %vm5689 = vweird.f32 %v5683
    %vm5690 = vmor %vm5688, %vm5689
    %v5691 = vsel %vm5690, %v5683, %v5687
    %v5692 = vand.u32 2147483647, %v5682
    %vm5693 = vcmp.eq.f32.partialorder %v5692, 8.507059e+37
    %v5694 = vand.u32 %v5682, 2147483648
    %v5695 = vor.u32 1.1754944e-38, %v5694
    %v5696 = vsel %vm5693, %v5695, %v5691
    %v5697 = vmul.f32 %v5672, %v5696
    %v5698 = vmin.f32 %v5697, 1.0
    %v5699 = vmax.f32 %v5698, -1.0
    %v5700 = vmul.f32 %v4037, %v4037
    %v5701 = vmin.f32 16.0, %v5700
    %v5702 = vmul.f32 %v5701, 2.1237322e-06
    %v5703 = vadd.f32 %v5702, 0.00028619796
    %v5704 = vmul.f32 %v5701, %v5703
    %v5705 = vadd.f32 %v5704, 0.0036580483
    %v5706 = vmul.f32 %v5701, %v5705
    %v5707 = vadd.f32 %v5706, 0.05243302
    %v5708 = vmul.f32 %v5701, %v5707
    %v5709 = vadd.f32 %v5708, 0.18741608
    %v5710 = vmul.f32 %v5701, %v5709
    %v5711 = vadd.f32 %v5710, 1.1283791
    %v5712 = vmul.f32 %v4037, %v5711
    %v5713 = vmul.f32 %v5701, 3.8918573e-05
    %v5714 = vadd.f32 %v5713, 0.001143296
    %v5715 = vmul.f32 %v5701, %v5714
    %v5716 = vadd.f32 %v5715, 0.014752088
    %v5717 = vmul.f32 %v5701, %v5716
    %v5718 = vadd.f32 %v5717, 0.112945676
    %v5719 = vmul.f32 %v5701, %v5718
    %v5720 = vadd.f32 %v5719, 0.4994258
    %v5721 = vmul.f32 %v5701, %v5720
    %v5722 = vadd.f32 %v5721, 1.0
    %v5723 = vrcp.pop %v5722
    %v5724 = vmul.f32 %v5722, %v5723
    %v5725 = vsub.f32 1.0, %v5724
    %v5726 = vmul.f32 %v5723, %v5725
    %v5727 = vadd.f32 %v5723, %v5726
    %vm5728 = vweird.f32 %v5722
    %vm5729 = vweird.f32 %v5723
    %vm5730 = vmor %vm5728, %vm5729
    %v5731 = vsel %vm5730, %v5723, %v5727
    %v5732 = vand.u32 2147483647, %v5722
    %vm5733 = vcmp.eq.f32.partialorder %v5732, 8.507059e+37
    %v5734 = vand.u32 %v5722, 2147483648
    %v5735 = vor.u32 1.1754944e-38, %v5734
    %v5736 = vsel %vm5733, %v5735, %v5731
    %v5737 = vmul.f32 %v5712, %v5736
    %v5738 = vmin.f32 %v5737, 1.0
    %v5739 = vmax.f32 %v5738, -1.0
    %v5740 = vmul.f32 %v4038, %v4038
    %v5741 = vmin.f32 16.0, %v5740
    %v5742 = vmul.f32 %v5741, 2.1237322e-06
    %v5743 = vadd.f32 %v5742, 0.00028619796
    %v5744 = vmul.f32 %v5741, %v5743
    %v5745 = vadd.f32 %v5744, 0.0036580483
    %v5746 = vmul.f32 %v5741, %v5745
    %v5747 = vadd.f32 %v5746, 0.05243302
    %v5748 = vmul.f32 %v5741, %v5747
    %v5749 = vadd.f32 %v5748, 0.18741608
    %v5750 = vmul.f32 %v5741, %v5749
    %v5751 = vadd.f32 %v5750, 1.1283791
    %v5752 = vmul.f32 %v4038, %v5751
    %v5753 = vmul.f32 %v5741, 3.8918573e-05
    %v5754 = vadd.f32 %v5753, 0.001143296
    %v5755 = vmul.f32 %v5741, %v5754
    %v5756 = vadd.f32 %v5755, 0.014752088
    %v5757 = vmul.f32 %v5741, %v5756
    %v5758 = vadd.f32 %v5757, 0.112945676
    %v5759 = vmul.f32 %v5741, %v5758
    %v5760 = vadd.f32 %v5759, 0.4994258
    %v5761 = vmul.f32 %v5741, %v5760
    %v5762 = vadd.f32 %v5761, 1.0
    %v5763 = vrcp.pop %v5762
    %v5764 = vmul.f32 %v5762, %v5763
    %v5765 = vsub.f32 1.0, %v5764
    %v5766 = vmul.f32 %v5763, %v5765
    %v5767 = vadd.f32 %v5763, %v5766
    %vm5768 = vweird.f32 %v5762
    %vm5769 = vweird.f32 %v5763
    %vm5770 = vmor %vm5768, %vm5769
    %v5771 = vsel %vm5770, %v5763, %v5767
    %v5772 = vand.u32 2147483647, %v5762
    %vm5773 = vcmp.eq.f32.partialorder %v5772, 8.507059e+37
    %v5774 = vand.u32 %v5762, 2147483648
    %v5775 = vor.u32 1.1754944e-38, %v5774
    %v5776 = vsel %vm5773, %v5775, %v5771
    %v5777 = vmul.f32 %v5752, %v5776
    %v5778 = vmin.f32 %v5777, 1.0
    %v5779 = vmax.f32 %v5778, -1.0
    %v5780 = vmul.f32 %v4039, %v4039
    %v5781 = vmin.f32 16.0, %v5780
    %v5782 = vmul.f32 %v5781, 2.1237322e-06
    %v5783 = vadd.f32 %v5782, 0.00028619796
    %v5784 = vmul.f32 %v5781, %v5783
    %v5785 = vadd.f32 %v5784, 0.0036580483
    %v5786 = vmul.f32 %v5781, %v5785
    %v5787 = vadd.f32 %v5786, 0.05243302
    %v5788 = vmul.f32 %v5781, %v5787
    %v5789 = vadd.f32 %v5788, 0.18741608
    %v5790 = vmul.f32 %v5781, %v5789
    %v5791 = vadd.f32 %v5790, 1.1283791
    %v5792 = vmul.f32 %v4039, %v5791
    %v5793 = vmul.f32 %v5781, 3.8918573e-05
    %v5794 = vadd.f32 %v5793, 0.001143296
    %v5795 = vmul.f32 %v5781, %v5794
    %v5796 = vadd.f32 %v5795, 0.014752088
    %v5797 = vmul.f32 %v5781, %v5796
    %v5798 = vadd.f32 %v5797, 0.112945676
    %v5799 = vmul.f32 %v5781, %v5798
    %v5800 = vadd.f32 %v5799, 0.4994258
    %v5801 = vmul.f32 %v5781, %v5800
    %v5802 = vadd.f32 %v5801, 1.0
    %v5803 = vrcp.pop %v5802
    %v5804 = vmul.f32 %v5802, %v5803
    %v5805 = vsub.f32 1.0, %v5804
    %v5806 = vmul.f32 %v5803, %v5805
    %v5807 = vadd.f32 %v5803, %v5806
    %vm5808 = vweird.f32 %v5802
    %vm5809 = vweird.f32 %v5803
    %vm5810 = vmor %vm5808, %vm5809
    %v5811 = vsel %vm5810, %v5803, %v5807
    %v5812 = vand.u32 2147483647, %v5802
    %vm5813 = vcmp.eq.f32.partialorder %v5812, 8.507059e+37
    %v5814 = vand.u32 %v5802, 2147483648
    %v5815 = vor.u32 1.1754944e-38, %v5814
    %v5816 = vsel %vm5813, %v5815, %v5811
    %v5817 = vmul.f32 %v5792, %v5816
    %v5818 = vmin.f32 %v5817, 1.0
    %v5819 = vmax.f32 %v5818, -1.0
    %v5820 = vmul.f32 %v4040, %v4040
    %v5821 = vmin.f32 16.0, %v5820
    %v5822 = vmul.f32 %v5821, 2.1237322e-06
    %v5823 = vadd.f32 %v5822, 0.00028619796
    %v5824 = vmul.f32 %v5821, %v5823
    %v5825 = vadd.f32 %v5824, 0.0036580483
    %v5826 = vmul.f32 %v5821, %v5825
    %v5827 = vadd.f32 %v5826, 0.05243302
    %v5828 = vmul.f32 %v5821, %v5827
    %v5829 = vadd.f32 %v5828, 0.18741608
    %v5830 = vmul.f32 %v5821, %v5829
    %v5831 = vadd.f32 %v5830, 1.1283791
    %v5832 = vmul.f32 %v4040, %v5831
    %v5833 = vmul.f32 %v5821, 3.8918573e-05
    %v5834 = vadd.f32 %v5833, 0.001143296
    %v5835 = vmul.f32 %v5821, %v5834
    %v5836 = vadd.f32 %v5835, 0.014752088
    %v5837 = vmul.f32 %v5821, %v5836
    %v5838 = vadd.f32 %v5837, 0.112945676
    %v5839 = vmul.f32 %v5821, %v5838
    %v5840 = vadd.f32 %v5839, 0.4994258
    %v5841 = vmul.f32 %v5821, %v5840
    %v5842 = vadd.f32 %v5841, 1.0
    %v5843 = vrcp.pop %v5842
    %v5844 = vmul.f32 %v5842, %v5843
    %v5845 = vsub.f32 1.0, %v5844
    %v5846 = vmul.f32 %v5843, %v5845
    %v5847 = vadd.f32 %v5843, %v5846
    %vm5848 = vweird.f32 %v5842
    %vm5849 = vweird.f32 %v5843
    %vm5850 = vmor %vm5848, %vm5849
    %v5851 = vsel %vm5850, %v5843, %v5847
    %v5852 = vand.u32 2147483647, %v5842
    %vm5853 = vcmp.eq.f32.partialorder %v5852, 8.507059e+37
    %v5854 = vand.u32 %v5842, 2147483648
    %v5855 = vor.u32 1.1754944e-38, %v5854
    %v5856 = vsel %vm5853, %v5855, %v5851
    %v5857 = vmul.f32 %v5832, %v5856
    %v5858 = vmin.f32 %v5857, 1.0
    %v5859 = vmax.f32 %v5858, -1.0
    %v5860 = vmul.f32 %v4041, %v4041
    %v5861 = vmin.f32 16.0, %v5860
    %v5862 = vmul.f32 %v5861, 2.1237322e-06
    %v5863 = vadd.f32 %v5862, 0.00028619796
    %v5864 = vmul.f32 %v5861, %v5863
    %v5865 = vadd.f32 %v5864, 0.0036580483
    %v5866 = vmul.f32 %v5861, %v5865
    %v5867 = vadd.f32 %v5866, 0.05243302
    %v5868 = vmul.f32 %v5861, %v5867
    %v5869 = vadd.f32 %v5868, 0.18741608
    %v5870 = vmul.f32 %v5861, %v5869
    %v5871 = vadd.f32 %v5870, 1.1283791
    %v5872 = vmul.f32 %v4041, %v5871
    %v5873 = vmul.f32 %v5861, 3.8918573e-05
    %v5874 = vadd.f32 %v5873, 0.001143296
    %v5875 = vmul.f32 %v5861, %v5874
    %v5876 = vadd.f32 %v5875, 0.014752088
    %v5877 = vmul.f32 %v5861, %v5876
    %v5878 = vadd.f32 %v5877, 0.112945676
    %v5879 = vmul.f32 %v5861, %v5878
    %v5880 = vadd.f32 %v5879, 0.4994258
    %v5881 = vmul.f32 %v5861, %v5880
    %v5882 = vadd.f32 %v5881, 1.0
    %v5883 = vrcp.pop %v5882
    %v5884 = vmul.f32 %v5882, %v5883
    %v5885 = vsub.f32 1.0, %v5884
    %v5886 = vmul.f32 %v5883, %v5885
    %v5887 = vadd.f32 %v5883, %v5886
    %vm5888 = vweird.f32 %v5882
    %vm5889 = vweird.f32 %v5883
    %vm5890 = vmor %vm5888, %vm5889
    %v5891 = vsel %vm5890, %v5883, %v5887
    %v5892 = vand.u32 2147483647, %v5882
    %vm5893 = vcmp.eq.f32.partialorder %v5892, 8.507059e+37
    %v5894 = vand.u32 %v5882, 2147483648
    %v5895 = vor.u32 1.1754944e-38, %v5894
    %v5896 = vsel %vm5893, %v5895, %v5891
    %v5897 = vmul.f32 %v5872, %v5896
    %v5898 = vmin.f32 %v5897, 1.0
    %v5899 = vmax.f32 %v5898, -1.0
    %v5900 = vmul.f32 %v4042, %v4042
    %v5901 = vmin.f32 16.0, %v5900
    %v5902 = vmul.f32 %v5901, 2.1237322e-06
    %v5903 = vadd.f32 %v5902, 0.00028619796
    %v5904 = vmul.f32 %v5901, %v5903
    %v5905 = vadd.f32 %v5904, 0.0036580483
    %v5906 = vmul.f32 %v5901, %v5905
    %v5907 = vadd.f32 %v5906, 0.05243302
    %v5908 = vmul.f32 %v5901, %v5907
    %v5909 = vadd.f32 %v5908, 0.18741608
    %v5910 = vmul.f32 %v5901, %v5909
    %v5911 = vadd.f32 %v5910, 1.1283791
    %v5912 = vmul.f32 %v4042, %v5911
    %v5913 = vmul.f32 %v5901, 3.8918573e-05
    %v5914 = vadd.f32 %v5913, 0.001143296
    %v5915 = vmul.f32 %v5901, %v5914
    %v5916 = vadd.f32 %v5915, 0.014752088
    %v5917 = vmul.f32 %v5901, %v5916
    %v5918 = vadd.f32 %v5917, 0.112945676
    %v5919 = vmul.f32 %v5901, %v5918
    %v5920 = vadd.f32 %v5919, 0.4994258
    %v5921 = vmul.f32 %v5901, %v5920
    %v5922 = vadd.f32 %v5921, 1.0
    %v5923 = vrcp.pop %v5922
    %v5924 = vmul.f32 %v5922, %v5923
    %v5925 = vsub.f32 1.0, %v5924
    %v5926 = vmul.f32 %v5923, %v5925
    %v5927 = vadd.f32 %v5923, %v5926
    %vm5928 = vweird.f32 %v5922
    %vm5929 = vweird.f32 %v5923
    %vm5930 = vmor %vm5928, %vm5929
    %v5931 = vsel %vm5930, %v5923, %v5927
    %v5932 = vand.u32 2147483647, %v5922
    %vm5933 = vcmp.eq.f32.partialorder %v5932, 8.507059e+37
    %v5934 = vand.u32 %v5922, 2147483648
    %v5935 = vor.u32 1.1754944e-38, %v5934
    %v5936 = vsel %vm5933, %v5935, %v5931
    %v5937 = vmul.f32 %v5912, %v5936
    %v5938 = vmin.f32 %v5937, 1.0
    %v5939 = vmax.f32 %v5938, -1.0
    %v5940 = vmul.f32 %v4043, %v4043
    %v5941 = vmin.f32 16.0, %v5940
    %v5942 = vmul.f32 %v5941, 2.1237322e-06
    %v5943 = vadd.f32 %v5942, 0.00028619796
    %v5944 = vmul.f32 %v5941, %v5943
    %v5945 = vadd.f32 %v5944, 0.0036580483
    %v5946 = vmul.f32 %v5941, %v5945
    %v5947 = vadd.f32 %v5946, 0.05243302
    %v5948 = vmul.f32 %v5941, %v5947
    %v5949 = vadd.f32 %v5948, 0.18741608
    %v5950 = vmul.f32 %v5941, %v5949
    %v5951 = vadd.f32 %v5950, 1.1283791
    %v5952 = vmul.f32 %v4043, %v5951
    %v5953 = vmul.f32 %v5941, 3.8918573e-05
    %v5954 = vadd.f32 %v5953, 0.001143296
    %v5955 = vmul.f32 %v5941, %v5954
    %v5956 = vadd.f32 %v5955, 0.014752088
    %v5957 = vmul.f32 %v5941, %v5956
    %v5958 = vadd.f32 %v5957, 0.112945676
    %v5959 = vmul.f32 %v5941, %v5958
    %v5960 = vadd.f32 %v5959, 0.4994258
    %v5961 = vmul.f32 %v5941, %v5960
    %v5962 = vadd.f32 %v5961, 1.0
    %v5963 = vrcp.pop %v5962
    %v5964 = vmul.f32 %v5962, %v5963
    %v5965 = vsub.f32 1.0, %v5964
    %v5966 = vmul.f32 %v5963, %v5965
    %v5967 = vadd.f32 %v5963, %v5966
    %vm5968 = vweird.f32 %v5962
    %vm5969 = vweird.f32 %v5963
    %vm5970 = vmor %vm5968, %vm5969
    %v5971 = vsel %vm5970, %v5963, %v5967
    %v5972 = vand.u32 2147483647, %v5962
    %vm5973 = vcmp.eq.f32.partialorder %v5972, 8.507059e+37
    %v5974 = vand.u32 %v5962, 2147483648
    %v5975 = vor.u32 1.1754944e-38, %v5974
    %v5976 = vsel %vm5973, %v5975, %v5971
    %v5977 = vmul.f32 %v5952, %v5976
    %v5978 = vmin.f32 %v5977, 1.0
    %v5979 = vmax.f32 %v5978, -1.0
    %v5980 = vmul.f32 %v4044, %v4044
    %v5981 = vmin.f32 16.0, %v5980
    %v5982 = vmul.f32 %v5981, 2.1237322e-06
    %v5983 = vadd.f32 %v5982, 0.00028619796
    %v5984 = vmul.f32 %v5981, %v5983
    %v5985 = vadd.f32 %v5984, 0.0036580483
    %v5986 = vmul.f32 %v5981, %v5985
    %v5987 = vadd.f32 %v5986, 0.05243302
    %v5988 = vmul.f32 %v5981, %v5987
    %v5989 = vadd.f32 %v5988, 0.18741608
    %v5990 = vmul.f32 %v5981, %v5989
    %v5991 = vadd.f32 %v5990, 1.1283791
    %v5992 = vmul.f32 %v4044, %v5991
    %v5993 = vmul.f32 %v5981, 3.8918573e-05
    %v5994 = vadd.f32 %v5993, 0.001143296
    %v5995 = vmul.f32 %v5981, %v5994
    %v5996 = vadd.f32 %v5995, 0.014752088
    %v5997 = vmul.f32 %v5981, %v5996
    %v5998 = vadd.f32 %v5997, 0.112945676
    %v5999 = vmul.f32 %v5981, %v5998
    %v6000 = vadd.f32 %v5999, 0.4994258
    %v6001 = vmul.f32 %v5981, %v6000
    %v6002 = vadd.f32 %v6001, 1.0
    %v6003 = vrcp.pop %v6002
    %v6004 = vmul.f32 %v6002, %v6003
    %v6005 = vsub.f32 1.0, %v6004
    %v6006 = vmul.f32 %v6003, %v6005
    %v6007 = vadd.f32 %v6003, %v6006
    %vm6008 = vweird.f32 %v6002
    %vm6009 = vweird.f32 %v6003
    %vm6010 = vmor %vm6008, %vm6009
    %v6011 = vsel %vm6010, %v6003, %v6007
    %v6012 = vand.u32 2147483647, %v6002
    %vm6013 = vcmp.eq.f32.partialorder %v6012, 8.507059e+37
    %v6014 = vand.u32 %v6002, 2147483648
    %v6015 = vor.u32 1.1754944e-38, %v6014
    %v6016 = vsel %vm6013, %v6015, %v6011
    %v6017 = vmul.f32 %v5992, %v6016
    %v6018 = vmin.f32 %v6017, 1.0
    %v6019 = vmax.f32 %v6018, -1.0
    %v6020 = vmul.f32 %v4045, %v4045
    %v6021 = vmin.f32 16.0, %v6020
    %v6022 = vmul.f32 %v6021, 2.1237322e-06
    %v6023 = vadd.f32 %v6022, 0.00028619796
    %v6024 = vmul.f32 %v6021, %v6023
    %v6025 = vadd.f32 %v6024, 0.0036580483
    %v6026 = vmul.f32 %v6021, %v6025
    %v6027 = vadd.f32 %v6026, 0.05243302
    %v6028 = vmul.f32 %v6021, %v6027
    %v6029 = vadd.f32 %v6028, 0.18741608
    %v6030 = vmul.f32 %v6021, %v6029
    %v6031 = vadd.f32 %v6030, 1.1283791
    %v6032 = vmul.f32 %v4045, %v6031
    %v6033 = vmul.f32 %v6021, 3.8918573e-05
    %v6034 = vadd.f32 %v6033, 0.001143296
    %v6035 = vmul.f32 %v6021, %v6034
    %v6036 = vadd.f32 %v6035, 0.014752088
    %v6037 = vmul.f32 %v6021, %v6036
    %v6038 = vadd.f32 %v6037, 0.112945676
    %v6039 = vmul.f32 %v6021, %v6038
    %v6040 = vadd.f32 %v6039, 0.4994258
    %v6041 = vmul.f32 %v6021, %v6040
    %v6042 = vadd.f32 %v6041, 1.0
    %v6043 = vrcp.pop %v6042
    %v6044 = vmul.f32 %v6042, %v6043
    %v6045 = vsub.f32 1.0, %v6044
    %v6046 = vmul.f32 %v6043, %v6045
    %v6047 = vadd.f32 %v6043, %v6046
    %vm6048 = vweird.f32 %v6042
    %vm6049 = vweird.f32 %v6043
    %vm6050 = vmor %vm6048, %vm6049
    %v6051 = vsel %vm6050, %v6043, %v6047
    %v6052 = vand.u32 2147483647, %v6042
    %vm6053 = vcmp.eq.f32.partialorder %v6052, 8.507059e+37
    %v6054 = vand.u32 %v6042, 2147483648
    %v6055 = vor.u32 1.1754944e-38, %v6054
    %v6056 = vsel %vm6053, %v6055, %v6051
    %v6057 = vmul.f32 %v6032, %v6056
    %v6058 = vmin.f32 %v6057, 1.0
    %v6059 = vmax.f32 %v6058, -1.0
    %v6060 = vmul.f32 %v4046, %v4046
    %v6061 = vmin.f32 16.0, %v6060
    %v6062 = vmul.f32 %v6061, 2.1237322e-06
    %v6063 = vadd.f32 %v6062, 0.00028619796
    %v6064 = vmul.f32 %v6061, %v6063
    %v6065 = vadd.f32 %v6064, 0.0036580483
    %v6066 = vmul.f32 %v6061, %v6065
    %v6067 = vadd.f32 %v6066, 0.05243302
    %v6068 = vmul.f32 %v6061, %v6067
    %v6069 = vadd.f32 %v6068, 0.18741608
    %v6070 = vmul.f32 %v6061, %v6069
    %v6071 = vadd.f32 %v6070, 1.1283791
    %v6072 = vmul.f32 %v4046, %v6071
    %v6073 = vmul.f32 %v6061, 3.8918573e-05
    %v6074 = vadd.f32 %v6073, 0.001143296
    %v6075 = vmul.f32 %v6061, %v6074
    %v6076 = vadd.f32 %v6075, 0.014752088
    %v6077 = vmul.f32 %v6061, %v6076
    %v6078 = vadd.f32 %v6077, 0.112945676
    %v6079 = vmul.f32 %v6061, %v6078
    %v6080 = vadd.f32 %v6079, 0.4994258
    %v6081 = vmul.f32 %v6061, %v6080
    %v6082 = vadd.f32 %v6081, 1.0
    %v6083 = vrcp.pop %v6082
    %v6084 = vmul.f32 %v6082, %v6083
    %v6085 = vsub.f32 1.0, %v6084
    %v6086 = vmul.f32 %v6083, %v6085
    %v6087 = vadd.f32 %v6083, %v6086
    %vm6088 = vweird.f32 %v6082
    %vm6089 = vweird.f32 %v6083
    %vm6090 = vmor %vm6088, %vm6089
    %v6091 = vsel %vm6090, %v6083, %v6087
    %v6092 = vand.u32 2147483647, %v6082
    %vm6093 = vcmp.eq.f32.partialorder %v6092, 8.507059e+37
    %v6094 = vand.u32 %v6082, 2147483648
    %v6095 = vor.u32 1.1754944e-38, %v6094
    %v6096 = vsel %vm6093, %v6095, %v6091
    %v6097 = vmul.f32 %v6072, %v6096
    %v6098 = vmin.f32 %v6097, 1.0
    %v6099 = vmax.f32 %v6098, -1.0
    %v6100 = vmul.f32 %v4047, %v4047
    %v6101 = vmin.f32 16.0, %v6100
    %v6102 = vmul.f32 %v6101, 2.1237322e-06
    %v6103 = vadd.f32 %v6102, 0.00028619796
    %v6104 = vmul.f32 %v6101, %v6103
    %v6105 = vadd.f32 %v6104, 0.0036580483
    %v6106 = vmul.f32 %v6101, %v6105
    %v6107 = vadd.f32 %v6106, 0.05243302
    %v6108 = vmul.f32 %v6101, %v6107
    %v6109 = vadd.f32 %v6108, 0.18741608
    %v6110 = vmul.f32 %v6101, %v6109
    %v6111 = vadd.f32 %v6110, 1.1283791
    %v6112 = vmul.f32 %v4047, %v6111
    %v6113 = vmul.f32 %v6101, 3.8918573e-05
    %v6114 = vadd.f32 %v6113, 0.001143296
    %v6115 = vmul.f32 %v6101, %v6114
    %v6116 = vadd.f32 %v6115, 0.014752088
    %v6117 = vmul.f32 %v6101, %v6116
    %v6118 = vadd.f32 %v6117, 0.112945676
    %v6119 = vmul.f32 %v6101, %v6118
    %v6120 = vadd.f32 %v6119, 0.4994258
    %v6121 = vmul.f32 %v6101, %v6120
    %v6122 = vadd.f32 %v6121, 1.0
    %v6123 = vrcp.pop %v6122
    %v6124 = vmul.f32 %v6122, %v6123
    %v6125 = vsub.f32 1.0, %v6124
    %v6126 = vmul.f32 %v6123, %v6125
    %v6127 = vadd.f32 %v6123, %v6126
    %vm6128 = vweird.f32 %v6122
    %vm6129 = vweird.f32 %v6123
    %vm6130 = vmor %vm6128, %vm6129
    %v6131 = vsel %vm6130, %v6123, %v6127
    %v6132 = vand.u32 2147483647, %v6122
    %vm6133 = vcmp.eq.f32.partialorder %v6132, 8.507059e+37
    %v6134 = vand.u32 %v6122, 2147483648
    %v6135 = vor.u32 1.1754944e-38, %v6134
    %v6136 = vsel %vm6133, %v6135, %v6131
    %v6137 = vmul.f32 %v6112, %v6136
    %v6138 = vmin.f32 %v6137, 1.0
    %v6139 = vmax.f32 %v6138, -1.0
    %v6140 = vmul.f32 %v4048, %v4048
    %v6141 = vmin.f32 16.0, %v6140
    %v6142 = vmul.f32 %v6141, 2.1237322e-06
    %v6143 = vadd.f32 %v6142, 0.00028619796
    %v6144 = vmul.f32 %v6141, %v6143
    %v6145 = vadd.f32 %v6144, 0.0036580483
    %v6146 = vmul.f32 %v6141, %v6145
    %v6147 = vadd.f32 %v6146, 0.05243302
    %v6148 = vmul.f32 %v6141, %v6147
    %v6149 = vadd.f32 %v6148, 0.18741608
    %v6150 = vmul.f32 %v6141, %v6149
    %v6151 = vadd.f32 %v6150, 1.1283791
    %v6152 = vmul.f32 %v4048, %v6151
    %v6153 = vmul.f32 %v6141, 3.8918573e-05
    %v6154 = vadd.f32 %v6153, 0.001143296
    %v6155 = vmul.f32 %v6141, %v6154
    %v6156 = vadd.f32 %v6155, 0.014752088
    %v6157 = vmul.f32 %v6141, %v6156
    %v6158 = vadd.f32 %v6157, 0.112945676
    %v6159 = vmul.f32 %v6141, %v6158
    %v6160 = vadd.f32 %v6159, 0.4994258
    %v6161 = vmul.f32 %v6141, %v6160
    %v6162 = vadd.f32 %v6161, 1.0
    %v6163 = vrcp.pop %v6162
    %v6164 = vmul.f32 %v6162, %v6163
    %v6165 = vsub.f32 1.0, %v6164
    %v6166 = vmul.f32 %v6163, %v6165
    %v6167 = vadd.f32 %v6163, %v6166
    %vm6168 = vweird.f32 %v6162
    %vm6169 = vweird.f32 %v6163
    %vm6170 = vmor %vm6168, %vm6169
    %v6171 = vsel %vm6170, %v6163, %v6167
    %v6172 = vand.u32 2147483647, %v6162
    %vm6173 = vcmp.eq.f32.partialorder %v6172, 8.507059e+37
    %v6174 = vand.u32 %v6162, 2147483648
    %v6175 = vor.u32 1.1754944e-38, %v6174
    %v6176 = vsel %vm6173, %v6175, %v6171
    %v6177 = vmul.f32 %v6152, %v6176
    %v6178 = vmin.f32 %v6177, 1.0
    %v6179 = vmax.f32 %v6178, -1.0
    %v6180 = vmul.f32 %v4049, %v4049
    %v6181 = vmin.f32 16.0, %v6180
    %v6182 = vmul.f32 %v6181, 2.1237322e-06
    %v6183 = vadd.f32 %v6182, 0.00028619796
    %v6184 = vmul.f32 %v6181, %v6183
    %v6185 = vadd.f32 %v6184, 0.0036580483
    %v6186 = vmul.f32 %v6181, %v6185
    %v6187 = vadd.f32 %v6186, 0.05243302
    %v6188 = vmul.f32 %v6181, %v6187
    %v6189 = vadd.f32 %v6188, 0.18741608
    %v6190 = vmul.f32 %v6181, %v6189
    %v6191 = vadd.f32 %v6190, 1.1283791
    %v6192 = vmul.f32 %v4049, %v6191
    %v6193 = vmul.f32 %v6181, 3.8918573e-05
    %v6194 = vadd.f32 %v6193, 0.001143296
    %v6195 = vmul.f32 %v6181, %v6194
    %v6196 = vadd.f32 %v6195, 0.014752088
    %v6197 = vmul.f32 %v6181, %v6196
    %v6198 = vadd.f32 %v6197, 0.112945676
    %v6199 = vmul.f32 %v6181, %v6198
    %v6200 = vadd.f32 %v6199, 0.4994258
    %v6201 = vmul.f32 %v6181, %v6200
    %v6202 = vadd.f32 %v6201, 1.0
    %v6203 = vrcp.pop %v6202
    %v6204 = vmul.f32 %v6202, %v6203
    %v6205 = vsub.f32 1.0, %v6204
    %v6206 = vmul.f32 %v6203, %v6205
    %v6207 = vadd.f32 %v6203, %v6206
    %vm6208 = vweird.f32 %v6202
    %vm6209 = vweird.f32 %v6203
    %vm6210 = vmor %vm6208, %vm6209
    %v6211 = vsel %vm6210, %v6203, %v6207
    %v6212 = vand.u32 2147483647, %v6202
    %vm6213 = vcmp.eq.f32.partialorder %v6212, 8.507059e+37
    %v6214 = vand.u32 %v6202, 2147483648
    %v6215 = vor.u32 1.1754944e-38, %v6214
    %v6216 = vsel %vm6213, %v6215, %v6211
    %v6217 = vmul.f32 %v6192, %v6216
    %v6218 = vmin.f32 %v6217, 1.0
    %v6219 = vmax.f32 %v6218, -1.0
    %v6220 = vmul.f32 %v4050, %v4050
    %v6221 = vmin.f32 16.0, %v6220
    %v6222 = vmul.f32 %v6221, 2.1237322e-06
    %v6223 = vadd.f32 %v6222, 0.00028619796
    %v6224 = vmul.f32 %v6221, %v6223
    %v6225 = vadd.f32 %v6224, 0.0036580483
    %v6226 = vmul.f32 %v6221, %v6225
    %v6227 = vadd.f32 %v6226, 0.05243302
    %v6228 = vmul.f32 %v6221, %v6227
    %v6229 = vadd.f32 %v6228, 0.18741608
    %v6230 = vmul.f32 %v6221, %v6229
    %v6231 = vadd.f32 %v6230, 1.1283791
    %v6232 = vmul.f32 %v4050, %v6231
    %v6233 = vmul.f32 %v6221, 3.8918573e-05
    %v6234 = vadd.f32 %v6233, 0.001143296
    %v6235 = vmul.f32 %v6221, %v6234
    %v6236 = vadd.f32 %v6235, 0.014752088
    %v6237 = vmul.f32 %v6221, %v6236
    %v6238 = vadd.f32 %v6237, 0.112945676
    %v6239 = vmul.f32 %v6221, %v6238
    %v6240 = vadd.f32 %v6239, 0.4994258
    %v6241 = vmul.f32 %v6221, %v6240
    %v6242 = vadd.f32 %v6241, 1.0
    %v6243 = vrcp.pop %v6242
    %v6244 = vmul.f32 %v6242, %v6243
    %v6245 = vsub.f32 1.0, %v6244
    %v6246 = vmul.f32 %v6243, %v6245
    %v6247 = vadd.f32 %v6243, %v6246
    %vm6248 = vweird.f32 %v6242
    %vm6249 = vweird.f32 %v6243
    %vm6250 = vmor %vm6248, %vm6249
    %v6251 = vsel %vm6250, %v6243, %v6247
    %v6252 = vand.u32 2147483647, %v6242
    %vm6253 = vcmp.eq.f32.partialorder %v6252, 8.507059e+37
    %v6254 = vand.u32 %v6242, 2147483648
    %v6255 = vor.u32 1.1754944e-38, %v6254
    %v6256 = vsel %vm6253, %v6255, %v6251
    %v6257 = vmul.f32 %v6232, %v6256
    %v6258 = vmin.f32 %v6257, 1.0
    %v6259 = vmax.f32 %v6258, -1.0
    %v6260 = vmul.f32 %v4051, %v4051
    %v6261 = vmin.f32 16.0, %v6260
    %v6262 = vmul.f32 %v6261, 2.1237322e-06
    %v6263 = vadd.f32 %v6262, 0.00028619796
    %v6264 = vmul.f32 %v6261, %v6263
    %v6265 = vadd.f32 %v6264, 0.0036580483
    %v6266 = vmul.f32 %v6261, %v6265
    %v6267 = vadd.f32 %v6266, 0.05243302
    %v6268 = vmul.f32 %v6261, %v6267
    %v6269 = vadd.f32 %v6268, 0.18741608
    %v6270 = vmul.f32 %v6261, %v6269
    %v6271 = vadd.f32 %v6270, 1.1283791
    %v6272 = vmul.f32 %v4051, %v6271
    %v6273 = vmul.f32 %v6261, 3.8918573e-05
    %v6274 = vadd.f32 %v6273, 0.001143296
    %v6275 = vmul.f32 %v6261, %v6274
    %v6276 = vadd.f32 %v6275, 0.014752088
    %v6277 = vmul.f32 %v6261, %v6276
    %v6278 = vadd.f32 %v6277, 0.112945676
    %v6279 = vmul.f32 %v6261, %v6278
    %v6280 = vadd.f32 %v6279, 0.4994258
    %v6281 = vmul.f32 %v6261, %v6280
    %v6282 = vadd.f32 %v6281, 1.0
    %v6283 = vrcp.pop %v6282
    %v6284 = vmul.f32 %v6282, %v6283
    %v6285 = vsub.f32 1.0, %v6284
    %v6286 = vmul.f32 %v6283, %v6285
    %v6287 = vadd.f32 %v6283, %v6286
    %vm6288 = vweird.f32 %v6282
    %vm6289 = vweird.f32 %v6283
    %vm6290 = vmor %vm6288, %vm6289
    %v6291 = vsel %vm6290, %v6283, %v6287
    %v6292 = vand.u32 2147483647, %v6282
    %vm6293 = vcmp.eq.f32.partialorder %v6292, 8.507059e+37
    %v6294 = vand.u32 %v6282, 2147483648
    %v6295 = vor.u32 1.1754944e-38, %v6294
    %v6296 = vsel %vm6293, %v6295, %v6291
    %v6297 = vmul.f32 %v6272, %v6296
    %v6298 = vmin.f32 %v6297, 1.0
    %v6299 = vmax.f32 %v6298, -1.0
    %v6300 = vmul.f32 %v4052, %v4052
    %v6301 = vmin.f32 16.0, %v6300
    %v6302 = vmul.f32 %v6301, 2.1237322e-06
    %v6303 = vadd.f32 %v6302, 0.00028619796
    %v6304 = vmul.f32 %v6301, %v6303
    %v6305 = vadd.f32 %v6304, 0.0036580483
    %v6306 = vmul.f32 %v6301, %v6305
    %v6307 = vadd.f32 %v6306, 0.05243302
    %v6308 = vmul.f32 %v6301, %v6307
    %v6309 = vadd.f32 %v6308, 0.18741608
    %v6310 = vmul.f32 %v6301, %v6309
    %v6311 = vadd.f32 %v6310, 1.1283791
    %v6312 = vmul.f32 %v4052, %v6311
    %v6313 = vmul.f32 %v6301, 3.8918573e-05
    %v6314 = vadd.f32 %v6313, 0.001143296
    %v6315 = vmul.f32 %v6301, %v6314
    %v6316 = vadd.f32 %v6315, 0.014752088
    %v6317 = vmul.f32 %v6301, %v6316
    %v6318 = vadd.f32 %v6317, 0.112945676
    %v6319 = vmul.f32 %v6301, %v6318
    %v6320 = vadd.f32 %v6319, 0.4994258
    %v6321 = vmul.f32 %v6301, %v6320
    %v6322 = vadd.f32 %v6321, 1.0
    %v6323 = vrcp.pop %v6322
    %v6324 = vmul.f32 %v6322, %v6323
    %v6325 = vsub.f32 1.0, %v6324
    %v6326 = vmul.f32 %v6323, %v6325
    %v6327 = vadd.f32 %v6323, %v6326
    %vm6328 = vweird.f32 %v6322
    %vm6329 = vweird.f32 %v6323
    %vm6330 = vmor %vm6328, %vm6329
    %v6331 = vsel %vm6330, %v6323, %v6327
    %v6332 = vand.u32 2147483647, %v6322
    %vm6333 = vcmp.eq.f32.partialorder %v6332, 8.507059e+37
    %v6334 = vand.u32 %v6322, 2147483648
    %v6335 = vor.u32 1.1754944e-38, %v6334
    %v6336 = vsel %vm6333, %v6335, %v6331
    %v6337 = vmul.f32 %v6312, %v6336
    %v6338 = vmin.f32 %v6337, 1.0
    %v6339 = vmax.f32 %v6338, -1.0
    %v6340 = vmul.f32 %v4053, %v4053
    %v6341 = vmin.f32 16.0, %v6340
    %v6342 = vmul.f32 %v6341, 2.1237322e-06
    %v6343 = vadd.f32 %v6342, 0.00028619796
    %v6344 = vmul.f32 %v6341, %v6343
    %v6345 = vadd.f32 %v6344, 0.0036580483
    %v6346 = vmul.f32 %v6341, %v6345
    %v6347 = vadd.f32 %v6346, 0.05243302
    %v6348 = vmul.f32 %v6341, %v6347
    %v6349 = vadd.f32 %v6348, 0.18741608
    %v6350 = vmul.f32 %v6341, %v6349
    %v6351 = vadd.f32 %v6350, 1.1283791
    %v6352 = vmul.f32 %v4053, %v6351
    %v6353 = vmul.f32 %v6341, 3.8918573e-05
    %v6354 = vadd.f32 %v6353, 0.001143296
    %v6355 = vmul.f32 %v6341, %v6354
    %v6356 = vadd.f32 %v6355, 0.014752088
    %v6357 = vmul.f32 %v6341, %v6356
    %v6358 = vadd.f32 %v6357, 0.112945676
    %v6359 = vmul.f32 %v6341, %v6358
    %v6360 = vadd.f32 %v6359, 0.4994258
    %v6361 = vmul.f32 %v6341, %v6360
    %v6362 = vadd.f32 %v6361, 1.0
    %v6363 = vrcp.pop %v6362
    %v6364 = vmul.f32 %v6362, %v6363
    %v6365 = vsub.f32 1.0, %v6364
    %v6366 = vmul.f32 %v6363, %v6365
    %v6367 = vadd.f32 %v6363, %v6366
    %vm6368 = vweird.f32 %v6362
    %vm6369 = vweird.f32 %v6363
    %vm6370 = vmor %vm6368, %vm6369
    %v6371 = vsel %vm6370, %v6363, %v6367
    %v6372 = vand.u32 2147483647, %v6362
    %vm6373 = vcmp.eq.f32.partialorder %v6372, 8.507059e+37
    %v6374 = vand.u32 %v6362, 2147483648
    %v6375 = vor.u32 1.1754944e-38, %v6374
    %v6376 = vsel %vm6373, %v6375, %v6371
    %v6377 = vmul.f32 %v6352, %v6376
    %v6378 = vmin.f32 %v6377, 1.0
    %v6379 = vmax.f32 %v6378, -1.0
    %v6380 = vmul.f32 %v4054, %v4054
    %v6381 = vmin.f32 16.0, %v6380
    %v6382 = vmul.f32 %v6381, 2.1237322e-06
    %v6383 = vadd.f32 %v6382, 0.00028619796
    %v6384 = vmul.f32 %v6381, %v6383
    %v6385 = vadd.f32 %v6384, 0.0036580483
    %v6386 = vmul.f32 %v6381, %v6385
    %v6387 = vadd.f32 %v6386, 0.05243302
    %v6388 = vmul.f32 %v6381, %v6387
    %v6389 = vadd.f32 %v6388, 0.18741608
    %v6390 = vmul.f32 %v6381, %v6389
    %v6391 = vadd.f32 %v6390, 1.1283791
    %v6392 = vmul.f32 %v4054, %v6391
    %v6393 = vmul.f32 %v6381, 3.8918573e-05
    %v6394 = vadd.f32 %v6393, 0.001143296
    %v6395 = vmul.f32 %v6381, %v6394
    %v6396 = vadd.f32 %v6395, 0.014752088
    %v6397 = vmul.f32 %v6381, %v6396
    %v6398 = vadd.f32 %v6397, 0.112945676
    %v6399 = vmul.f32 %v6381, %v6398
    %v6400 = vadd.f32 %v6399, 0.4994258
    %v6401 = vmul.f32 %v6381, %v6400
    %v6402 = vadd.f32 %v6401, 1.0
    %v6403 = vrcp.pop %v6402
    %v6404 = vmul.f32 %v6402, %v6403
    %v6405 = vsub.f32 1.0, %v6404
    %v6406 = vmul.f32 %v6403, %v6405
    %v6407 = vadd.f32 %v6403, %v6406
    %vm6408 = vweird.f32 %v6402
    %vm6409 = vweird.f32 %v6403
    %vm6410 = vmor %vm6408, %vm6409
    %v6411 = vsel %vm6410, %v6403, %v6407
    %v6412 = vand.u32 2147483647, %v6402
    %vm6413 = vcmp.eq.f32.partialorder %v6412, 8.507059e+37
    %v6414 = vand.u32 %v6402, 2147483648
    %v6415 = vor.u32 1.1754944e-38, %v6414
    %v6416 = vsel %vm6413, %v6415, %v6411
    %v6417 = vmul.f32 %v6392, %v6416
    %v6418 = vmin.f32 %v6417, 1.0
    %v6419 = vmax.f32 %v6418, -1.0
    %v6420 = vmul.f32 %v4055, %v4055
    %v6421 = vmin.f32 16.0, %v6420
    %v6422 = vmul.f32 %v6421, 2.1237322e-06
    %v6423 = vadd.f32 %v6422, 0.00028619796
    %v6424 = vmul.f32 %v6421, %v6423
    %v6425 = vadd.f32 %v6424, 0.0036580483
    %v6426 = vmul.f32 %v6421, %v6425
    %v6427 = vadd.f32 %v6426, 0.05243302
    %v6428 = vmul.f32 %v6421, %v6427
    %v6429 = vadd.f32 %v6428, 0.18741608
    %v6430 = vmul.f32 %v6421, %v6429
    %v6431 = vadd.f32 %v6430, 1.1283791
    %v6432 = vmul.f32 %v4055, %v6431
    %v6433 = vmul.f32 %v6421, 3.8918573e-05
    %v6434 = vadd.f32 %v6433, 0.001143296
    %v6435 = vmul.f32 %v6421, %v6434
    %v6436 = vadd.f32 %v6435, 0.014752088
    %v6437 = vmul.f32 %v6421, %v6436
    %v6438 = vadd.f32 %v6437, 0.112945676
    %v6439 = vmul.f32 %v6421, %v6438
    %v6440 = vadd.f32 %v6439, 0.4994258
    %v6441 = vmul.f32 %v6421, %v6440
    %v6442 = vadd.f32 %v6441, 1.0
    %v6443 = vrcp.pop %v6442
    %v6444 = vmul.f32 %v6442, %v6443
    %v6445 = vsub.f32 1.0, %v6444
    %v6446 = vmul.f32 %v6443, %v6445
    %v6447 = vadd.f32 %v6443, %v6446
    %vm6448 = vweird.f32 %v6442
    %vm6449 = vweird.f32 %v6443
    %vm6450 = vmor %vm6448, %vm6449
    %v6451 = vsel %vm6450, %v6443, %v6447
    %v6452 = vand.u32 2147483647, %v6442
    %vm6453 = vcmp.eq.f32.partialorder %v6452, 8.507059e+37
    %v6454 = vand.u32 %v6442, 2147483648
    %v6455 = vor.u32 1.1754944e-38, %v6454
    %v6456 = vsel %vm6453, %v6455, %v6451
    %v6457 = vmul.f32 %v6432, %v6456
    %v6458 = vmin.f32 %v6457, 1.0
    %v6459 = vmax.f32 %v6458, -1.0
    %v6460 = vmul.f32 %v4056, %v4056
    %v6461 = vmin.f32 16.0, %v6460
    %v6462 = vmul.f32 %v6461, 2.1237322e-06
    %v6463 = vadd.f32 %v6462, 0.00028619796
    %v6464 = vmul.f32 %v6461, %v6463
    %v6465 = vadd.f32 %v6464, 0.0036580483
    %v6466 = vmul.f32 %v6461, %v6465
    %v6467 = vadd.f32 %v6466, 0.05243302
    %v6468 = vmul.f32 %v6461, %v6467
    %v6469 = vadd.f32 %v6468, 0.18741608
    %v6470 = vmul.f32 %v6461, %v6469
    %v6471 = vadd.f32 %v6470, 1.1283791
    %v6472 = vmul.f32 %v4056, %v6471
    %v6473 = vmul.f32 %v6461, 3.8918573e-05
    %v6474 = vadd.f32 %v6473, 0.001143296
    %v6475 = vmul.f32 %v6461, %v6474
    %v6476 = vadd.f32 %v6475, 0.014752088
    %v6477 = vmul.f32 %v6461, %v6476
    %v6478 = vadd.f32 %v6477, 0.112945676
    %v6479 = vmul.f32 %v6461, %v6478
    %v6480 = vadd.f32 %v6479, 0.4994258
    %v6481 = vmul.f32 %v6461, %v6480
    %v6482 = vadd.f32 %v6481, 1.0
    %v6483 = vrcp.pop %v6482
    %v6484 = vmul.f32 %v6482, %v6483
    %v6485 = vsub.f32 1.0, %v6484
    %v6486 = vmul.f32 %v6483, %v6485
    %v6487 = vadd.f32 %v6483, %v6486
    %vm6488 = vweird.f32 %v6482
    %vm6489 = vweird.f32 %v6483
    %vm6490 = vmor %vm6488, %vm6489
    %v6491 = vsel %vm6490, %v6483, %v6487
    %v6492 = vand.u32 2147483647, %v6482
    %vm6493 = vcmp.eq.f32.partialorder %v6492, 8.507059e+37
    %v6494 = vand.u32 %v6482, 2147483648
    %v6495 = vor.u32 1.1754944e-38, %v6494
    %v6496 = vsel %vm6493, %v6495, %v6491
    %v6497 = vmul.f32 %v6472, %v6496
    %v6498 = vmin.f32 %v6497, 1.0
    %v6499 = vmax.f32 %v6498, -1.0
    %v6500 = vmul.f32 %v4057, %v4057
    %v6501 = vmin.f32 16.0, %v6500
    %v6502 = vmul.f32 %v6501, 2.1237322e-06
    %v6503 = vadd.f32 %v6502, 0.00028619796
    %v6504 = vmul.f32 %v6501, %v6503
    %v6505 = vadd.f32 %v6504, 0.0036580483
    %v6506 = vmul.f32 %v6501, %v6505
    %v6507 = vadd.f32 %v6506, 0.05243302
    %v6508 = vmul.f32 %v6501, %v6507
    %v6509 = vadd.f32 %v6508, 0.18741608
    %v6510 = vmul.f32 %v6501, %v6509
    %v6511 = vadd.f32 %v6510, 1.1283791
    %v6512 = vmul.f32 %v4057, %v6511
    %v6513 = vmul.f32 %v6501, 3.8918573e-05
    %v6514 = vadd.f32 %v6513, 0.001143296
    %v6515 = vmul.f32 %v6501, %v6514
    %v6516 = vadd.f32 %v6515, 0.014752088
    %v6517 = vmul.f32 %v6501, %v6516
    %v6518 = vadd.f32 %v6517, 0.112945676
    %v6519 = vmul.f32 %v6501, %v6518
    %v6520 = vadd.f32 %v6519, 0.4994258
    %v6521 = vmul.f32 %v6501, %v6520
    %v6522 = vadd.f32 %v6521, 1.0
    %v6523 = vrcp.pop %v6522
    %v6524 = vmul.f32 %v6522, %v6523
    %v6525 = vsub.f32 1.0, %v6524
    %v6526 = vmul.f32 %v6523, %v6525
    %v6527 = vadd.f32 %v6523, %v6526
    %vm6528 = vweird.f32 %v6522
    %vm6529 = vweird.f32 %v6523
    %vm6530 = vmor %vm6528, %vm6529
    %v6531 = vsel %vm6530, %v6523, %v6527
    %v6532 = vand.u32 2147483647, %v6522
    %vm6533 = vcmp.eq.f32.partialorder %v6532, 8.507059e+37
    %v6534 = vand.u32 %v6522, 2147483648
    %v6535 = vor.u32 1.1754944e-38, %v6534
    %v6536 = vsel %vm6533, %v6535, %v6531
    %v6537 = vmul.f32 %v6512, %v6536
    %v6538 = vmin.f32 %v6537, 1.0
    %v6539 = vmax.f32 %v6538, -1.0
    %v6540 = vmul.f32 %v4058, %v4058
    %v6541 = vmin.f32 16.0, %v6540
    %v6542 = vmul.f32 %v6541, 2.1237322e-06
    %v6543 = vadd.f32 %v6542, 0.00028619796
    %v6544 = vmul.f32 %v6541, %v6543
    %v6545 = vadd.f32 %v6544, 0.0036580483
    %v6546 = vmul.f32 %v6541, %v6545
    %v6547 = vadd.f32 %v6546, 0.05243302
    %v6548 = vmul.f32 %v6541, %v6547
    %v6549 = vadd.f32 %v6548, 0.18741608
    %v6550 = vmul.f32 %v6541, %v6549
    %v6551 = vadd.f32 %v6550, 1.1283791
    %v6552 = vmul.f32 %v4058, %v6551
    %v6553 = vmul.f32 %v6541, 3.8918573e-05
    %v6554 = vadd.f32 %v6553, 0.001143296
    %v6555 = vmul.f32 %v6541, %v6554
    %v6556 = vadd.f32 %v6555, 0.014752088
    %v6557 = vmul.f32 %v6541, %v6556
    %v6558 = vadd.f32 %v6557, 0.112945676
    %v6559 = vmul.f32 %v6541, %v6558
    %v6560 = vadd.f32 %v6559, 0.4994258
    %v6561 = vmul.f32 %v6541, %v6560
    %v6562 = vadd.f32 %v6561, 1.0
    %v6563 = vrcp.pop %v6562
    %v6564 = vmul.f32 %v6562, %v6563
    %v6565 = vsub.f32 1.0, %v6564
    %v6566 = vmul.f32 %v6563, %v6565
    %v6567 = vadd.f32 %v6563, %v6566
    %vm6568 = vweird.f32 %v6562
    %vm6569 = vweird.f32 %v6563
    %vm6570 = vmor %vm6568, %vm6569
    %v6571 = vsel %vm6570, %v6563, %v6567
    %v6572 = vand.u32 2147483647, %v6562
    %vm6573 = vcmp.eq.f32.partialorder %v6572, 8.507059e+37
    %v6574 = vand.u32 %v6562, 2147483648
    %v6575 = vor.u32 1.1754944e-38, %v6574
    %v6576 = vsel %vm6573, %v6575, %v6571
    %v6577 = vmul.f32 %v6552, %v6576
    %v6578 = vmin.f32 %v6577, 1.0
    %v6579 = vmax.f32 %v6578, -1.0
    %v6580 = vmul.f32 %v4059, %v4059
    %v6581 = vmin.f32 16.0, %v6580
    %v6582 = vmul.f32 %v6581, 2.1237322e-06
    %v6583 = vadd.f32 %v6582, 0.00028619796
    %v6584 = vmul.f32 %v6581, %v6583
    %v6585 = vadd.f32 %v6584, 0.0036580483
    %v6586 = vmul.f32 %v6581, %v6585
    %v6587 = vadd.f32 %v6586, 0.05243302
    %v6588 = vmul.f32 %v6581, %v6587
    %v6589 = vadd.f32 %v6588, 0.18741608
    %v6590 = vmul.f32 %v6581, %v6589
    %v6591 = vadd.f32 %v6590, 1.1283791
    %v6592 = vmul.f32 %v4059, %v6591
    %v6593 = vmul.f32 %v6581, 3.8918573e-05
    %v6594 = vadd.f32 %v6593, 0.001143296
    %v6595 = vmul.f32 %v6581, %v6594
    %v6596 = vadd.f32 %v6595, 0.014752088
    %v6597 = vmul.f32 %v6581, %v6596
    %v6598 = vadd.f32 %v6597, 0.112945676
    %v6599 = vmul.f32 %v6581, %v6598
    %v6600 = vadd.f32 %v6599, 0.4994258
    %v6601 = vmul.f32 %v6581, %v6600
    %v6602 = vadd.f32 %v6601, 1.0
    %v6603 = vrcp.pop %v6602
    %v6604 = vmul.f32 %v6602, %v6603
    %v6605 = vsub.f32 1.0, %v6604
    %v6606 = vmul.f32 %v6603, %v6605
    %v6607 = vadd.f32 %v6603, %v6606
    %vm6608 = vweird.f32 %v6602
    %vm6609 = vweird.f32 %v6603
    %vm6610 = vmor %vm6608, %vm6609
    %v6611 = vsel %vm6610, %v6603, %v6607
    %v6612 = vand.u32 2147483647, %v6602
    %vm6613 = vcmp.eq.f32.partialorder %v6612, 8.507059e+37
    %v6614 = vand.u32 %v6602, 2147483648
    %v6615 = vor.u32 1.1754944e-38, %v6614
    %v6616 = vsel %vm6613, %v6615, %v6611
    %v6617 = vmul.f32 %v6592, %v6616
    %v6618 = vmin.f32 %v6617, 1.0
    %v6619 = vmax.f32 %v6618, -1.0
    %v6620 = vadd.f32 %v4099, 1.0
    %v6621 = vadd.f32 %v4139, 1.0
    %v6622 = vadd.f32 %v4179, 1.0
    %v6623 = vadd.f32 %v4219, 1.0
    %v6624 = vadd.f32 %v4259, 1.0
    %v6625 = vadd.f32 %v4299, 1.0
    %v6626 = vadd.f32 %v4339, 1.0
    %v6627 = vadd.f32 %v4379, 1.0
    %v6628 = vadd.f32 %v4419, 1.0
    %v6629 = vadd.f32 %v4459, 1.0
    %v6630 = vadd.f32 %v4499, 1.0
    %v6631 = vadd.f32 %v4539, 1.0
    %v6632 = vadd.f32 %v4579, 1.0
    %v6633 = vadd.f32 %v4619, 1.0
    %v6634 = vadd.f32 %v4659, 1.0
    %v6635 = vadd.f32 %v4699, 1.0
    %v6636 = vadd.f32 %v4739, 1.0
    %v6637 = vadd.f32 %v4779, 1.0
    %v6638 = vadd.f32 %v4819, 1.0
    %v6639 = vadd.f32 %v4859, 1.0
    %v6640 = vadd.f32 %v4899, 1.0
    %v6641 = vadd.f32 %v4939, 1.0
    %v6642 = vadd.f32 %v4979, 1.0
    %v6643 = vadd.f32 %v5019, 1.0
    %v6644 = vadd.f32 %v5059, 1.0
    %v6645 = vadd.f32 %v5099, 1.0
    %v6646 = vadd.f32 %v5139, 1.0
    %v6647 = vadd.f32 %v5179, 1.0
    %v6648 = vadd.f32 %v5219, 1.0
    %v6649 = vadd.f32 %v5259, 1.0
    %v6650 = vadd.f32 %v5299, 1.0
    %v6651 = vadd.f32 %v5339, 1.0
    %v6652 = vadd.f32 %v5379, 1.0
    %v6653 = vadd.f32 %v5419, 1.0
    %v6654 = vadd.f32 %v5459, 1.0
    %v6655 = vadd.f32 %v5499, 1.0
    %v6656 = vadd.f32 %v5539, 1.0
    %v6657 = vadd.f32 %v5579, 1.0
    %v6658 = vadd.f32 %v5619, 1.0
    %v6659 = vadd.f32 %v5659, 1.0
    %v6660 = vadd.f32 %v5699, 1.0
    %v6661 = vadd.f32 %v5739, 1.0
    %v6662 = vadd.f32 %v5779, 1.0
    %v6663 = vadd.f32 %v5819, 1.0
    %v6664 = vadd.f32 %v5859, 1.0
    %v6665 = vadd.f32 %v5899, 1.0
    %v6666 = vadd.f32 %v5939, 1.0
    %v6667 = vadd.f32 %v5979, 1.0
    %v6668 = vadd.f32 %v6019, 1.0
    %v6669 = vadd.f32 %v6059, 1.0
    %v6670 = vadd.f32 %v6099, 1.0
    %v6671 = vadd.f32 %v6139, 1.0
    %v6672 = vadd.f32 %v6179, 1.0
    %v6673 = vadd.f32 %v6219, 1.0
    %v6674 = vadd.f32 %v6259, 1.0
    %v6675 = vadd.f32 %v6299, 1.0
    %v6676 = vadd.f32 %v6339, 1.0
    %v6677 = vadd.f32 %v6379, 1.0
    %v6678 = vadd.f32 %v6419, 1.0
    %v6679 = vadd.f32 %v6459, 1.0
    %v6680 = vadd.f32 %v6499, 1.0
    %v6681 = vadd.f32 %v6539, 1.0
    %v6682 = vadd.f32 %v6579, 1.0
    %v6683 = vadd.f32 %v6619, 1.0
    %v6684 = vmul.f32 %v3932, %v6620
    %v6685 = vmul.f32 %v3933, %v6621
    %v6686 = vmul.f32 %v3934, %v6622
    %v6687 = vmul.f32 %v3935, %v6623
    %v6688 = vmul.f32 %v3936, %v6624
    %v6689 = vmul.f32 %v3937, %v6625
    %v6690 = vmul.f32 %v3938, %v6626
    %v6691 = vmul.f32 %v3939, %v6627
    %v6692 = vmul.f32 %v3940, %v6628
    %v6693 = vmul.f32 %v3941, %v6629
    %v6694 = vmul.f32 %v3942, %v6630
    %v6695 = vmul.f32 %v3943, %v6631
    %v6696 = vmul.f32 %v3944, %v6632
    %v6697 = vmul.f32 %v3945, %v6633
    %v6698 = vmul.f32 %v3946, %v6634
    %v6699 = vmul.f32 %v3947, %v6635
    %v6700 = vmul.f32 %v3948, %v6636
    %v6701 = vmul.f32 %v3949, %v6637
    %v6702 = vmul.f32 %v3950, %v6638
    %v6703 = vmul.f32 %v3951, %v6639
    %v6704 = vmul.f32 %v3952, %v6640
    %v6705 = vmul.f32 %v3953, %v6641
    %v6706 = vmul.f32 %v3954, %v6642
    %v6707 = vmul.f32 %v3955, %v6643
    %v6708 = vmul.f32 %v3956, %v6644
    %v6709 = vmul.f32 %v3957, %v6645
    %v6710 = vmul.f32 %v3958, %v6646
    %v6711 = vmul.f32 %v3959, %v6647
    %v6712 = vmul.f32 %v3960, %v6648
    %v6713 = vmul.f32 %v3961, %v6649
    %v6714 = vmul.f32 %v3962, %v6650
    %v6715 = vmul.f32 %v3963, %v6651
    %v6716 = vmul.f32 %v3964, %v6652
    %v6717 = vmul.f32 %v3965, %v6653
    %v6718 = vmul.f32 %v3966, %v6654
    %v6719 = vmul.f32 %v3967, %v6655
    %v6720 = vmul.f32 %v3968, %v6656
    %v6721 = vmul.f32 %v3969, %v6657
    %v6722 = vmul.f32 %v3970, %v6658
    %v6723 = vmul.f32 %v3971, %v6659
    %v6724 = vmul.f32 %v3972, %v6660
    %v6725 = vmul.f32 %v3973, %v6661
    %v6726 = vmul.f32 %v3974, %v6662
    %v6727 = vmul.f32 %v3975, %v6663
    %v6728 = vmul.f32 %v3976, %v6664
    %v6729 = vmul.f32 %v3977, %v6665
    %v6730 = vmul.f32 %v3978, %v6666
    %v6731 = vmul.f32 %v3979, %v6667
    %v6732 = vmul.f32 %v3980, %v6668
    %v6733 = vmul.f32 %v3981, %v6669
    %v6734 = vmul.f32 %v3982, %v6670
    %v6735 = vmul.f32 %v3983, %v6671
    %v6736 = vmul.f32 %v3984, %v6672
    %v6737 = vmul.f32 %v3985, %v6673
    %v6738 = vmul.f32 %v3986, %v6674
    %v6739 = vmul.f32 %v3987, %v6675
    %v6740 = vmul.f32 %v3988, %v6676
    %v6741 = vmul.f32 %v3989, %v6677
    %v6742 = vmul.f32 %v3990, %v6678
    %v6743 = vmul.f32 %v3991, %v6679
    %v6744 = vmul.f32 %v3992, %v6680
    %v6745 = vmul.f32 %v3993, %v6681
    %v6746 = vmul.f32 %v3994, %v6682
    %v6747 = vmul.f32 %v3995, %v6683
    %v6750 = vunpack.c.l.b16 %v104
    %v6751 = vunpack.c.l.b16 %v105
    %v6752 = vpack.c.b16 %v6751, %v6750
    %v6755 = vsel %vm3666, %v6752, 0
    %6757 = vmatpush.bf16.msra.mxu0 0
    %6758 = vmatpush.bf16.msra.mxu0 0
    %6759 = vmatpush.bf16.msra.mxu0 0
    %6760 = vmatpush.bf16.msra.mxu0 0
    %6761 = vmatpush.bf16.msra.mxu0 0
    %6762 = vmatpush.bf16.msra.mxu0 0
    %6763 = vmatpush.bf16.msra.mxu0 0
    %6764 = vmatpush.bf16.msra.mxu0 %v3628
    %6765 = vmatmul.bf16.gmra.mxu0 %v6755
    %v6766 = vpop.f32.mrf.mxu0
    %v6767 = vadd.f32 0.0, %v6766
    %v6768 = vpop.f32.mrf.mxu0
    %v6769 = vadd.f32 0.0, %v6768
    %6770 = vdwg.mxu0
    %v6773 = vunpack.c.l.b16 %v106
    %v6774 = vunpack.c.l.b16 %v107
    %v6775 = vpack.c.b16 %v6774, %v6773
    %v6778 = vsel %vm3666, %v6775, 0
    %6780 = vmatpush.bf16.msra.mxu0 0
    %6781 = vmatpush.bf16.msra.mxu0 0
    %6782 = vmatpush.bf16.msra.mxu0 0
    %6783 = vmatpush.bf16.msra.mxu0 0
    %6784 = vmatpush.bf16.msra.mxu0 0
    %6785 = vmatpush.bf16.msra.mxu0 0
    %6786 = vmatpush.bf16.msra.mxu0 0
    %6787 = vmatpush.bf16.msra.mxu0 %v3629
    %6788 = vmatmul.bf16.gmra.mxu0 %v6778
    %v6789 = vpop.f32.mrf.mxu0
    %v6790 = vadd.f32 0.0, %v6789
    %v6791 = vpop.f32.mrf.mxu0
    %v6792 = vadd.f32 0.0, %v6791
    %6793 = vdwg.mxu0
    %v6796 = vunpack.c.l.b16 %v108
    %v6797 = vunpack.c.l.b16 %v109
    %v6798 = vpack.c.b16 %v6797, %v6796
    %v6801 = vsel %vm3666, %v6798, 0
    %6803 = vmatpush.bf16.msra.mxu0 0
    %6804 = vmatpush.bf16.msra.mxu0 0
    %6805 = vmatpush.bf16.msra.mxu0 0
    %6806 = vmatpush.bf16.msra.mxu0 0
    %6807 = vmatpush.bf16.msra.mxu0 0
    %6808 = vmatpush.bf16.msra.mxu0 0
    %6809 = vmatpush.bf16.msra.mxu0 0
    %6810 = vmatpush.bf16.msra.mxu0 %v3630
    %6811 = vmatmul.bf16.gmra.mxu0 %v6801
    %v6812 = vpop.f32.mrf.mxu0
    %v6813 = vadd.f32 0.0, %v6812
    %v6814 = vpop.f32.mrf.mxu0
    %v6815 = vadd.f32 0.0, %v6814
    %6816 = vdwg.mxu0
    %v6819 = vunpack.c.l.b16 %v110
    %v6820 = vunpack.c.l.b16 %v111
    %v6821 = vpack.c.b16 %v6820, %v6819
    %v6824 = vsel %vm3666, %v6821, 0
    %6826 = vmatpush.bf16.msra.mxu0 0
    %6827 = vmatpush.bf16.msra.mxu0 0
    %6828 = vmatpush.bf16.msra.mxu0 0
    %6829 = vmatpush.bf16.msra.mxu0 0
    %6830 = vmatpush.bf16.msra.mxu0 0
    %6831 = vmatpush.bf16.msra.mxu0 0
    %6832 = vmatpush.bf16.msra.mxu0 0
    %6833 = vmatpush.bf16.msra.mxu0 %v3631
    %6834 = vmatmul.bf16.gmra.mxu0 %v6824
    %v6835 = vpop.f32.mrf.mxu0
    %v6836 = vadd.f32 0.0, %v6835
    %v6837 = vpop.f32.mrf.mxu0
    %v6838 = vadd.f32 0.0, %v6837
    %6839 = vdwg.mxu0
    %v6842 = vunpack.c.l.b16 %v112
    %v6843 = vunpack.c.l.b16 %v113
    %v6844 = vpack.c.b16 %v6843, %v6842
    %v6847 = vsel %vm3666, %v6844, 0
    %6849 = vmatpush.bf16.msra.mxu0 0
    %6850 = vmatpush.bf16.msra.mxu0 0
    %6851 = vmatpush.bf16.msra.mxu0 0
    %6852 = vmatpush.bf16.msra.mxu0 0
    %6853 = vmatpush.bf16.msra.mxu0 0
    %6854 = vmatpush.bf16.msra.mxu0 0
    %6855 = vmatpush.bf16.msra.mxu0 0
    %6856 = vmatpush.bf16.msra.mxu0 %v3632
    %6857 = vmatmul.bf16.gmra.mxu0 %v6847
    %v6858 = vpop.f32.mrf.mxu0
    %v6859 = vadd.f32 0.0, %v6858
    %v6860 = vpop.f32.mrf.mxu0
    %v6861 = vadd.f32 0.0, %v6860
    %6862 = vdwg.mxu0
    %v6865 = vunpack.c.l.b16 %v114
    %v6866 = vunpack.c.l.b16 %v115
    %v6867 = vpack.c.b16 %v6866, %v6865
    %v6870 = vsel %vm3666, %v6867, 0
    %6872 = vmatpush.bf16.msra.mxu0 0
    %6873 = vmatpush.bf16.msra.mxu0 0
    %6874 = vmatpush.bf16.msra.mxu0 0
    %6875 = vmatpush.bf16.msra.mxu0 0
    %6876 = vmatpush.bf16.msra.mxu0 0
    %6877 = vmatpush.bf16.msra.mxu0 0
    %6878 = vmatpush.bf16.msra.mxu0 0
    %6879 = vmatpush.bf16.msra.mxu0 %v3633
    %6880 = vmatmul.bf16.gmra.mxu0 %v6870
    %v6881 = vpop.f32.mrf.mxu0
    %v6882 = vadd.f32 0.0, %v6881
    %v6883 = vpop.f32.mrf.mxu0
    %v6884 = vadd.f32 0.0, %v6883
    %6885 = vdwg.mxu0
    %v6888 = vunpack.c.l.b16 %v116
    %v6889 = vunpack.c.l.b16 %v117
    %v6890 = vpack.c.b16 %v6889, %v6888
    %v6893 = vsel %vm3666, %v6890, 0
    %6895 = vmatpush.bf16.msra.mxu0 0
    %6896 = vmatpush.bf16.msra.mxu0 0
    %6897 = vmatpush.bf16.msra.mxu0 0
    %6898 = vmatpush.bf16.msra.mxu0 0
    %6899 = vmatpush.bf16.msra.mxu0 0
    %6900 = vmatpush.bf16.msra.mxu0 0
    %6901 = vmatpush.bf16.msra.mxu0 0
    %6902 = vmatpush.bf16.msra.mxu0 %v3634
    %6903 = vmatmul.bf16.gmra.mxu0 %v6893
    %v6904 = vpop.f32.mrf.mxu0
    %v6905 = vadd.f32 0.0, %v6904
    %v6906 = vpop.f32.mrf.mxu0
    %v6907 = vadd.f32 0.0, %v6906
    %6908 = vdwg.mxu0
    %v6911 = vunpack.c.l.b16 %v118
    %v6912 = vunpack.c.l.b16 %v119
    %v6913 = vpack.c.b16 %v6912, %v6911
    %v6916 = vsel %vm3666, %v6913, 0
    %6918 = vmatpush.bf16.msra.mxu0 0
    %6919 = vmatpush.bf16.msra.mxu0 0
    %6920 = vmatpush.bf16.msra.mxu0 0
    %6921 = vmatpush.bf16.msra.mxu0 0
    %6922 = vmatpush.bf16.msra.mxu0 0
    %6923 = vmatpush.bf16.msra.mxu0 0
    %6924 = vmatpush.bf16.msra.mxu0 0
    %6925 = vmatpush.bf16.msra.mxu0 %v3635
    %6926 = vmatmul.bf16.gmra.mxu0 %v6916
    %v6927 = vpop.f32.mrf.mxu0
    %v6928 = vadd.f32 0.0, %v6927
    %v6929 = vpop.f32.mrf.mxu0
    %v6930 = vadd.f32 0.0, %v6929
    %6931 = vdwg.mxu0
    %v6934 = vunpack.c.l.b16 %v120
    %v6935 = vunpack.c.l.b16 %v121
    %v6936 = vpack.c.b16 %v6935, %v6934
    %v6939 = vsel %vm3666, %v6936, 0
    %6941 = vmatpush.bf16.msra.mxu0 0
    %6942 = vmatpush.bf16.msra.mxu0 0
    %6943 = vmatpush.bf16.msra.mxu0 0
    %6944 = vmatpush.bf16.msra.mxu0 0
    %6945 = vmatpush.bf16.msra.mxu0 0
    %6946 = vmatpush.bf16.msra.mxu0 0
    %6947 = vmatpush.bf16.msra.mxu0 0
    %6948 = vmatpush.bf16.msra.mxu0 %v3636
    %6949 = vmatmul.bf16.gmra.mxu0 %v6939
    %v6950 = vpop.f32.mrf.mxu0
    %v6951 = vadd.f32 0.0, %v6950
    %v6952 = vpop.f32.mrf.mxu0
    %v6953 = vadd.f32 0.0, %v6952
    %6954 = vdwg.mxu0
    %v6957 = vunpack.c.l.b16 %v122
    %v6958 = vunpack.c.l.b16 %v123
    %v6959 = vpack.c.b16 %v6958, %v6957
    %v6962 = vsel %vm3666, %v6959, 0
    %6964 = vmatpush.bf16.msra.mxu0 0
    %6965 = vmatpush.bf16.msra.mxu0 0
    %6966 = vmatpush.bf16.msra.mxu0 0
    %6967 = vmatpush.bf16.msra.mxu0 0
    %6968 = vmatpush.bf16.msra.mxu0 0
    %6969 = vmatpush.bf16.msra.mxu0 0
    %6970 = vmatpush.bf16.msra.mxu0 0
    %6971 = vmatpush.bf16.msra.mxu0 %v3637
    %6972 = vmatmul.bf16.gmra.mxu0 %v6962
    %v6973 = vpop.f32.mrf.mxu0
    %v6974 = vadd.f32 0.0, %v6973
    %v6975 = vpop.f32.mrf.mxu0
    %v6976 = vadd.f32 0.0, %v6975
    %6977 = vdwg.mxu0
    %v6980 = vunpack.c.l.b16 %v124
    %v6981 = vunpack.c.l.b16 %v125
    %v6982 = vpack.c.b16 %v6981, %v6980
    %v6985 = vsel %vm3666, %v6982, 0
    %6987 = vmatpush.bf16.msra.mxu0 0
    %6988 = vmatpush.bf16.msra.mxu0 0
    %6989 = vmatpush.bf16.msra.mxu0 0
    %6990 = vmatpush.bf16.msra.mxu0 0
    %6991 = vmatpush.bf16.msra.mxu0 0
    %6992 = vmatpush.bf16.msra.mxu0 0
    %6993 = vmatpush.bf16.msra.mxu0 0
    %6994 = vmatpush.bf16.msra.mxu0 %v3638
    %6995 = vmatmul.bf16.gmra.mxu0 %v6985
    %v6996 = vpop.f32.mrf.mxu0
    %v6997 = vadd.f32 0.0, %v6996
    %v6998 = vpop.f32.mrf.mxu0
    %v6999 = vadd.f32 0.0, %v6998
    %7000 = vdwg.mxu0
    %v7003 = vunpack.c.l.b16 %v126
    %v7004 = vunpack.c.l.b16 %v127
    %v7005 = vpack.c.b16 %v7004, %v7003
    %v7008 = vsel %vm3666, %v7005, 0
    %7010 = vmatpush.bf16.msra.mxu0 0
    %7011 = vmatpush.bf16.msra.mxu0 0
    %7012 = vmatpush.bf16.msra.mxu0 0
    %7013 = vmatpush.bf16.msra.mxu0 0
    %7014 = vmatpush.bf16.msra.mxu0 0
    %7015 = vmatpush.bf16.msra.mxu0 0
    %7016 = vmatpush.bf16.msra.mxu0 0
    %7017 = vmatpush.bf16.msra.mxu0 %v3639
    %7018 = vmatmul.bf16.gmra.mxu0 %v7008
    %v7019 = vpop.f32.mrf.mxu0
    %v7020 = vadd.f32 0.0, %v7019
    %v7021 = vpop.f32.mrf.mxu0
    %v7022 = vadd.f32 0.0, %v7021
    %7023 = vdwg.mxu0
    %v7026 = vunpack.c.l.b16 %v128
    %v7027 = vunpack.c.l.b16 %v129
    %v7028 = vpack.c.b16 %v7027, %v7026
    %v7031 = vsel %vm3666, %v7028, 0
    %7033 = vmatpush.bf16.msra.mxu0 0
    %7034 = vmatpush.bf16.msra.mxu0 0
    %7035 = vmatpush.bf16.msra.mxu0 0
    %7036 = vmatpush.bf16.msra.mxu0 0
    %7037 = vmatpush.bf16.msra.mxu0 0
    %7038 = vmatpush.bf16.msra.mxu0 0
    %7039 = vmatpush.bf16.msra.mxu0 0
    %7040 = vmatpush.bf16.msra.mxu0 %v3640
    %7041 = vmatmul.bf16.gmra.mxu0 %v7031
    %v7042 = vpop.f32.mrf.mxu0
    %v7043 = vadd.f32 0.0, %v7042
    %v7044 = vpop.f32.mrf.mxu0
    %v7045 = vadd.f32 0.0, %v7044
    %7046 = vdwg.mxu0
    %v7049 = vunpack.c.l.b16 %v130
    %v7050 = vunpack.c.l.b16 %v131
    %v7051 = vpack.c.b16 %v7050, %v7049
    %v7054 = vsel %vm3666, %v7051, 0
    %7056 = vmatpush.bf16.msra.mxu0 0
    %7057 = vmatpush.bf16.msra.mxu0 0
    %7058 = vmatpush.bf16.msra.mxu0 0
    %7059 = vmatpush.bf16.msra.mxu0 0
    %7060 = vmatpush.bf16.msra.mxu0 0
    %7061 = vmatpush.bf16.msra.mxu0 0
    %7062 = vmatpush.bf16.msra.mxu0 0
    %7063 = vmatpush.bf16.msra.mxu0 %v3641
    %7064 = vmatmul.bf16.gmra.mxu0 %v7054
    %v7065 = vpop.f32.mrf.mxu0
    %v7066 = vadd.f32 0.0, %v7065
    %v7067 = vpop.f32.mrf.mxu0
    %v7068 = vadd.f32 0.0, %v7067
    %7069 = vdwg.mxu0
    %v7072 = vunpack.c.l.b16 %v132
    %v7073 = vunpack.c.l.b16 %v133
    %v7074 = vpack.c.b16 %v7073, %v7072
    %v7077 = vsel %vm3666, %v7074, 0
    %7079 = vmatpush.bf16.msra.mxu0 0
    %7080 = vmatpush.bf16.msra.mxu0 0
    %7081 = vmatpush.bf16.msra.mxu0 0
    %7082 = vmatpush.bf16.msra.mxu0 0
    %7083 = vmatpush.bf16.msra.mxu0 0
    %7084 = vmatpush.bf16.msra.mxu0 0
    %7085 = vmatpush.bf16.msra.mxu0 0
    %7086 = vmatpush.bf16.msra.mxu0 %v3642
    %7087 = vmatmul.bf16.gmra.mxu0 %v7077
    %v7088 = vpop.f32.mrf.mxu0
    %v7089 = vadd.f32 0.0, %v7088
    %v7090 = vpop.f32.mrf.mxu0
    %v7091 = vadd.f32 0.0, %v7090
    %7092 = vdwg.mxu0
    %v7095 = vunpack.c.l.b16 %v134
    %v7096 = vunpack.c.l.b16 %v135
    %v7097 = vpack.c.b16 %v7096, %v7095
    %v7100 = vsel %vm3666, %v7097, 0
    %7102 = vmatpush.bf16.msra.mxu0 0
    %7103 = vmatpush.bf16.msra.mxu0 0
    %7104 = vmatpush.bf16.msra.mxu0 0
    %7105 = vmatpush.bf16.msra.mxu0 0
    %7106 = vmatpush.bf16.msra.mxu0 0
    %7107 = vmatpush.bf16.msra.mxu0 0
    %7108 = vmatpush.bf16.msra.mxu0 0
    %7109 = vmatpush.bf16.msra.mxu0 %v3643
    %7110 = vmatmul.bf16.gmra.mxu0 %v7100
    %v7111 = vpop.f32.mrf.mxu0
    %v7112 = vadd.f32 0.0, %v7111
    %v7113 = vpop.f32.mrf.mxu0
    %v7114 = vadd.f32 0.0, %v7113
    %7115 = vdwg.mxu0
    %v7118 = vunpack.c.l.b16 %v136
    %v7119 = vunpack.c.l.b16 %v137
    %v7120 = vpack.c.b16 %v7119, %v7118
    %v7123 = vsel %vm3666, %v7120, 0
    %7125 = vmatpush.bf16.msra.mxu0 0
    %7126 = vmatpush.bf16.msra.mxu0 0
    %7127 = vmatpush.bf16.msra.mxu0 0
    %7128 = vmatpush.bf16.msra.mxu0 0
    %7129 = vmatpush.bf16.msra.mxu0 0
    %7130 = vmatpush.bf16.msra.mxu0 0
    %7131 = vmatpush.bf16.msra.mxu0 0
    %7132 = vmatpush.bf16.msra.mxu0 %v3644
    %7133 = vmatmul.bf16.gmra.mxu0 %v7123
    %v7134 = vpop.f32.mrf.mxu0
    %v7135 = vadd.f32 0.0, %v7134
    %v7136 = vpop.f32.mrf.mxu0
    %v7137 = vadd.f32 0.0, %v7136
    %7138 = vdwg.mxu0
    %v7141 = vunpack.c.l.b16 %v138
    %v7142 = vunpack.c.l.b16 %v139
    %v7143 = vpack.c.b16 %v7142, %v7141
    %v7146 = vsel %vm3666, %v7143, 0
    %7148 = vmatpush.bf16.msra.mxu0 0
    %7149 = vmatpush.bf16.msra.mxu0 0
    %7150 = vmatpush.bf16.msra.mxu0 0
    %7151 = vmatpush.bf16.msra.mxu0 0
    %7152 = vmatpush.bf16.msra.mxu0 0
    %7153 = vmatpush.bf16.msra.mxu0 0
    %7154 = vmatpush.bf16.msra.mxu0 0
    %7155 = vmatpush.bf16.msra.mxu0 %v3645
    %7156 = vmatmul.bf16.gmra.mxu0 %v7146
    %v7157 = vpop.f32.mrf.mxu0
    %v7158 = vadd.f32 0.0, %v7157
    %v7159 = vpop.f32.mrf.mxu0
    %v7160 = vadd.f32 0.0, %v7159
    %7161 = vdwg.mxu0
    %v7164 = vunpack.c.l.b16 %v140
    %v7165 = vunpack.c.l.b16 %v141
    %v7166 = vpack.c.b16 %v7165, %v7164
    %v7169 = vsel %vm3666, %v7166, 0
    %7171 = vmatpush.bf16.msra.mxu0 0
    %7172 = vmatpush.bf16.msra.mxu0 0
    %7173 = vmatpush.bf16.msra.mxu0 0
    %7174 = vmatpush.bf16.msra.mxu0 0
    %7175 = vmatpush.bf16.msra.mxu0 0
    %7176 = vmatpush.bf16.msra.mxu0 0
    %7177 = vmatpush.bf16.msra.mxu0 0
    %7178 = vmatpush.bf16.msra.mxu0 %v3646
    %7179 = vmatmul.bf16.gmra.mxu0 %v7169
    %v7180 = vpop.f32.mrf.mxu0
    %v7181 = vadd.f32 0.0, %v7180
    %v7182 = vpop.f32.mrf.mxu0
    %v7183 = vadd.f32 0.0, %v7182
    %7184 = vdwg.mxu0
    %v7187 = vunpack.c.l.b16 %v142
    %v7188 = vunpack.c.l.b16 %v143
    %v7189 = vpack.c.b16 %v7188, %v7187
    %v7192 = vsel %vm3666, %v7189, 0
    %7194 = vmatpush.bf16.msra.mxu0 0
    %7195 = vmatpush.bf16.msra.mxu0 0
    %7196 = vmatpush.bf16.msra.mxu0 0
    %7197 = vmatpush.bf16.msra.mxu0 0
    %7198 = vmatpush.bf16.msra.mxu0 0
    %7199 = vmatpush.bf16.msra.mxu0 0
    %7200 = vmatpush.bf16.msra.mxu0 0
    %7201 = vmatpush.bf16.msra.mxu0 %v3647
    %7202 = vmatmul.bf16.gmra.mxu0 %v7192
    %v7203 = vpop.f32.mrf.mxu0
    %v7204 = vadd.f32 0.0, %v7203
    %v7205 = vpop.f32.mrf.mxu0
    %v7206 = vadd.f32 0.0, %v7205
    %7207 = vdwg.mxu0
    %v7210 = vunpack.c.l.b16 %v144
    %v7211 = vunpack.c.l.b16 %v145
    %v7212 = vpack.c.b16 %v7211, %v7210
    %v7215 = vsel %vm3666, %v7212, 0
    %7217 = vmatpush.bf16.msra.mxu0 0
    %7218 = vmatpush.bf16.msra.mxu0 0
    %7219 = vmatpush.bf16.msra.mxu0 0
    %7220 = vmatpush.bf16.msra.mxu0 0
    %7221 = vmatpush.bf16.msra.mxu0 0
    %7222 = vmatpush.bf16.msra.mxu0 0
    %7223 = vmatpush.bf16.msra.mxu0 0
    %7224 = vmatpush.bf16.msra.mxu0 %v3648
    %7225 = vmatmul.bf16.gmra.mxu0 %v7215
    %v7226 = vpop.f32.mrf.mxu0
    %v7227 = vadd.f32 0.0, %v7226
    %v7228 = vpop.f32.mrf.mxu0
    %v7229 = vadd.f32 0.0, %v7228
    %7230 = vdwg.mxu0
    %v7233 = vunpack.c.l.b16 %v146
    %v7234 = vunpack.c.l.b16 %v147
    %v7235 = vpack.c.b16 %v7234, %v7233
    %v7238 = vsel %vm3666, %v7235, 0
    %7240 = vmatpush.bf16.msra.mxu0 0
    %7241 = vmatpush.bf16.msra.mxu0 0
    %7242 = vmatpush.bf16.msra.mxu0 0
    %7243 = vmatpush.bf16.msra.mxu0 0
    %7244 = vmatpush.bf16.msra.mxu0 0
    %7245 = vmatpush.bf16.msra.mxu0 0
    %7246 = vmatpush.bf16.msra.mxu0 0
    %7247 = vmatpush.bf16.msra.mxu0 %v3649
    %7248 = vmatmul.bf16.gmra.mxu0 %v7238
    %v7249 = vpop.f32.mrf.mxu0
    %v7250 = vadd.f32 0.0, %v7249
    %v7251 = vpop.f32.mrf.mxu0
    %v7252 = vadd.f32 0.0, %v7251
    %7253 = vdwg.mxu0
    %v7256 = vunpack.c.l.b16 %v148
    %v7257 = vunpack.c.l.b16 %v149
    %v7258 = vpack.c.b16 %v7257, %v7256
    %v7261 = vsel %vm3666, %v7258, 0
    %7263 = vmatpush.bf16.msra.mxu0 0
    %7264 = vmatpush.bf16.msra.mxu0 0
    %7265 = vmatpush.bf16.msra.mxu0 0
    %7266 = vmatpush.bf16.msra.mxu0 0
    %7267 = vmatpush.bf16.msra.mxu0 0
    %7268 = vmatpush.bf16.msra.mxu0 0
    %7269 = vmatpush.bf16.msra.mxu0 0
    %7270 = vmatpush.bf16.msra.mxu0 %v3650
    %7271 = vmatmul.bf16.gmra.mxu0 %v7261
    %v7272 = vpop.f32.mrf.mxu0
    %v7273 = vadd.f32 0.0, %v7272
    %v7274 = vpop.f32.mrf.mxu0
    %v7275 = vadd.f32 0.0, %v7274
    %7276 = vdwg.mxu0
    %v7279 = vunpack.c.l.b16 %v150
    %v7280 = vunpack.c.l.b16 %v151
    %v7281 = vpack.c.b16 %v7280, %v7279
    %v7284 = vsel %vm3666, %v7281, 0
    %7286 = vmatpush.bf16.msra.mxu0 0
    %7287 = vmatpush.bf16.msra.mxu0 0
    %7288 = vmatpush.bf16.msra.mxu0 0
    %7289 = vmatpush.bf16.msra.mxu0 0
    %7290 = vmatpush.bf16.msra.mxu0 0
    %7291 = vmatpush.bf16.msra.mxu0 0
    %7292 = vmatpush.bf16.msra.mxu0 0
    %7293 = vmatpush.bf16.msra.mxu0 %v3651
    %7294 = vmatmul.bf16.gmra.mxu0 %v7284
    %v7295 = vpop.f32.mrf.mxu0
    %v7296 = vadd.f32 0.0, %v7295
    %v7297 = vpop.f32.mrf.mxu0
    %v7298 = vadd.f32 0.0, %v7297
    %7299 = vdwg.mxu0
    %v7302 = vunpack.c.l.b16 %v152
    %v7303 = vunpack.c.l.b16 %v153
    %v7304 = vpack.c.b16 %v7303, %v7302
    %v7307 = vsel %vm3666, %v7304, 0
    %7309 = vmatpush.bf16.msra.mxu0 0
    %7310 = vmatpush.bf16.msra.mxu0 0
    %7311 = vmatpush.bf16.msra.mxu0 0
    %7312 = vmatpush.bf16.msra.mxu0 0
    %7313 = vmatpush.bf16.msra.mxu0 0
    %7314 = vmatpush.bf16.msra.mxu0 0
    %7315 = vmatpush.bf16.msra.mxu0 0
    %7316 = vmatpush.bf16.msra.mxu0 %v3652
    %7317 = vmatmul.bf16.gmra.mxu0 %v7307
    %v7318 = vpop.f32.mrf.mxu0
    %v7319 = vadd.f32 0.0, %v7318
    %v7320 = vpop.f32.mrf.mxu0
    %v7321 = vadd.f32 0.0, %v7320
    %7322 = vdwg.mxu0
    %v7325 = vunpack.c.l.b16 %v154
    %v7326 = vunpack.c.l.b16 %v155
    %v7327 = vpack.c.b16 %v7326, %v7325
    %v7330 = vsel %vm3666, %v7327, 0
    %7332 = vmatpush.bf16.msra.mxu0 0
    %7333 = vmatpush.bf16.msra.mxu0 0
    %7334 = vmatpush.bf16.msra.mxu0 0
    %7335 = vmatpush.bf16.msra.mxu0 0
    %7336 = vmatpush.bf16.msra.mxu0 0
    %7337 = vmatpush.bf16.msra.mxu0 0
    %7338 = vmatpush.bf16.msra.mxu0 0
    %7339 = vmatpush.bf16.msra.mxu0 %v3653
    %7340 = vmatmul.bf16.gmra.mxu0 %v7330
    %v7341 = vpop.f32.mrf.mxu0
    %v7342 = vadd.f32 0.0, %v7341
    %v7343 = vpop.f32.mrf.mxu0
    %v7344 = vadd.f32 0.0, %v7343
    %7345 = vdwg.mxu0
    %v7348 = vunpack.c.l.b16 %v156
    %v7349 = vunpack.c.l.b16 %v157
    %v7350 = vpack.c.b16 %v7349, %v7348
    %v7353 = vsel %vm3666, %v7350, 0
    %7355 = vmatpush.bf16.msra.mxu0 0
    %7356 = vmatpush.bf16.msra.mxu0 0
    %7357 = vmatpush.bf16.msra.mxu0 0
    %7358 = vmatpush.bf16.msra.mxu0 0
    %7359 = vmatpush.bf16.msra.mxu0 0
    %7360 = vmatpush.bf16.msra.mxu0 0
    %7361 = vmatpush.bf16.msra.mxu0 0
    %7362 = vmatpush.bf16.msra.mxu0 %v3654
    %7363 = vmatmul.bf16.gmra.mxu0 %v7353
    %v7364 = vpop.f32.mrf.mxu0
    %v7365 = vadd.f32 0.0, %v7364
    %v7366 = vpop.f32.mrf.mxu0
    %v7367 = vadd.f32 0.0, %v7366
    %7368 = vdwg.mxu0
    %v7371 = vunpack.c.l.b16 %v158
    %v7372 = vunpack.c.l.b16 %v159
    %v7373 = vpack.c.b16 %v7372, %v7371
    %v7376 = vsel %vm3666, %v7373, 0
    %7378 = vmatpush.bf16.msra.mxu0 0
    %7379 = vmatpush.bf16.msra.mxu0 0
    %7380 = vmatpush.bf16.msra.mxu0 0
    %7381 = vmatpush.bf16.msra.mxu0 0
    %7382 = vmatpush.bf16.msra.mxu0 0
    %7383 = vmatpush.bf16.msra.mxu0 0
    %7384 = vmatpush.bf16.msra.mxu0 0
    %7385 = vmatpush.bf16.msra.mxu0 %v3655
    %7386 = vmatmul.bf16.gmra.mxu0 %v7376
    %v7387 = vpop.f32.mrf.mxu0
    %v7388 = vadd.f32 0.0, %v7387
    %v7389 = vpop.f32.mrf.mxu0
    %v7390 = vadd.f32 0.0, %v7389
    %7391 = vdwg.mxu0
    %v7394 = vunpack.c.l.b16 %v160
    %v7395 = vunpack.c.l.b16 %v161
    %v7396 = vpack.c.b16 %v7395, %v7394
    %v7399 = vsel %vm3666, %v7396, 0
    %7401 = vmatpush.bf16.msra.mxu0 0
    %7402 = vmatpush.bf16.msra.mxu0 0
    %7403 = vmatpush.bf16.msra.mxu0 0
    %7404 = vmatpush.bf16.msra.mxu0 0
    %7405 = vmatpush.bf16.msra.mxu0 0
    %7406 = vmatpush.bf16.msra.mxu0 0
    %7407 = vmatpush.bf16.msra.mxu0 0
    %7408 = vmatpush.bf16.msra.mxu0 %v3656
    %7409 = vmatmul.bf16.gmra.mxu0 %v7399
    %v7410 = vpop.f32.mrf.mxu0
    %v7411 = vadd.f32 0.0, %v7410
    %v7412 = vpop.f32.mrf.mxu0
    %v7413 = vadd.f32 0.0, %v7412
    %7414 = vdwg.mxu0
    %v7417 = vunpack.c.l.b16 %v162
    %v7418 = vunpack.c.l.b16 %v163
    %v7419 = vpack.c.b16 %v7418, %v7417
    %v7422 = vsel %vm3666, %v7419, 0
    %7424 = vmatpush.bf16.msra.mxu0 0
    %7425 = vmatpush.bf16.msra.mxu0 0
    %7426 = vmatpush.bf16.msra.mxu0 0
    %7427 = vmatpush.bf16.msra.mxu0 0
    %7428 = vmatpush.bf16.msra.mxu0 0
    %7429 = vmatpush.bf16.msra.mxu0 0
    %7430 = vmatpush.bf16.msra.mxu0 0
    %7431 = vmatpush.bf16.msra.mxu0 %v3657
    %7432 = vmatmul.bf16.gmra.mxu0 %v7422
    %v7433 = vpop.f32.mrf.mxu0
    %v7434 = vadd.f32 0.0, %v7433
    %v7435 = vpop.f32.mrf.mxu0
    %v7436 = vadd.f32 0.0, %v7435
    %7437 = vdwg.mxu0
    %v7440 = vunpack.c.l.b16 %v164
    %v7441 = vunpack.c.l.b16 %v165
    %v7442 = vpack.c.b16 %v7441, %v7440
    %v7445 = vsel %vm3666, %v7442, 0
    %7447 = vmatpush.bf16.msra.mxu0 0
    %7448 = vmatpush.bf16.msra.mxu0 0
    %7449 = vmatpush.bf16.msra.mxu0 0
    %7450 = vmatpush.bf16.msra.mxu0 0
    %7451 = vmatpush.bf16.msra.mxu0 0
    %7452 = vmatpush.bf16.msra.mxu0 0
    %7453 = vmatpush.bf16.msra.mxu0 0
    %7454 = vmatpush.bf16.msra.mxu0 %v3658
    %7455 = vmatmul.bf16.gmra.mxu0 %v7445
    %v7456 = vpop.f32.mrf.mxu0
    %v7457 = vadd.f32 0.0, %v7456
    %v7458 = vpop.f32.mrf.mxu0
    %v7459 = vadd.f32 0.0, %v7458
    %7460 = vdwg.mxu0
    %v7463 = vunpack.c.l.b16 %v166
    %v7464 = vunpack.c.l.b16 %v167
    %v7465 = vpack.c.b16 %v7464, %v7463
    %v7468 = vsel %vm3666, %v7465, 0
    %7470 = vmatpush.bf16.msra.mxu0 0
    %7471 = vmatpush.bf16.msra.mxu0 0
    %7472 = vmatpush.bf16.msra.mxu0 0
    %7473 = vmatpush.bf16.msra.mxu0 0
    %7474 = vmatpush.bf16.msra.mxu0 0
    %7475 = vmatpush.bf16.msra.mxu0 0
    %7476 = vmatpush.bf16.msra.mxu0 0
    %7477 = vmatpush.bf16.msra.mxu0 %v3659
    %7478 = vmatmul.bf16.gmra.mxu0 %v7468
    %v7479 = vpop.f32.mrf.mxu0
    %v7480 = vadd.f32 0.0, %v7479
    %v7481 = vpop.f32.mrf.mxu0
    %v7482 = vadd.f32 0.0, %v7481
    %7483 = vdwg.mxu0
    %v7484 = vadd.f32 %v3366, %v6767
    %v7485 = vadd.f32 %v3367, %v6769
    %v7486 = vadd.f32 %v3368, %v6790
    %v7487 = vadd.f32 %v3369, %v6792
    %v7488 = vadd.f32 %v3370, %v6813
    %v7489 = vadd.f32 %v3371, %v6815
    %v7490 = vadd.f32 %v3372, %v6836
    %v7491 = vadd.f32 %v3373, %v6838
    %v7492 = vadd.f32 %v3374, %v6859
    %v7493 = vadd.f32 %v3375, %v6861
    %v7494 = vadd.f32 %v3376, %v6882
    %v7495 = vadd.f32 %v3377, %v6884
    %v7496 = vadd.f32 %v3378, %v6905
    %v7497 = vadd.f32 %v3379, %v6907
    %v7498 = vadd.f32 %v3380, %v6928
    %v7499 = vadd.f32 %v3381, %v6930
    %v7500 = vadd.f32 %v3382, %v6951
    %v7501 = vadd.f32 %v3383, %v6953
    %v7502 = vadd.f32 %v3384, %v6974
    %v7503 = vadd.f32 %v3385, %v6976
    %v7504 = vadd.f32 %v3386, %v6997
    %v7505 = vadd.f32 %v3387, %v6999
    %v7506 = vadd.f32 %v3388, %v7020
    %v7507 = vadd.f32 %v3389, %v7022
    %v7508 = vadd.f32 %v3390, %v7043
    %v7509 = vadd.f32 %v3391, %v7045
    %v7510 = vadd.f32 %v3392, %v7066
    %v7511 = vadd.f32 %v3393, %v7068
    %v7512 = vadd.f32 %v3394, %v7089
    %v7513 = vadd.f32 %v3395, %v7091
    %v7514 = vadd.f32 %v3396, %v7112
    %v7515 = vadd.f32 %v3397, %v7114
    %v7516 = vadd.f32 %v3398, %v7135
    %v7517 = vadd.f32 %v3399, %v7137
    %v7518 = vadd.f32 %v3400, %v7158
    %v7519 = vadd.f32 %v3401, %v7160
    %v7520 = vadd.f32 %v3402, %v7181
    %v7521 = vadd.f32 %v3403, %v7183
    %v7522 = vadd.f32 %v3404, %v7204
    %v7523 = vadd.f32 %v3405, %v7206
    %v7524 = vadd.f32 %v3406, %v7227
    %v7525 = vadd.f32 %v3407, %v7229
    %v7526 = vadd.f32 %v3408, %v7250
    %v7527 = vadd.f32 %v3409, %v7252
    %v7528 = vadd.f32 %v3410, %v7273
    %v7529 = vadd.f32 %v3411, %v7275
    %v7530 = vadd.f32 %v3412, %v7296
    %v7531 = vadd.f32 %v3413, %v7298
    %v7532 = vadd.f32 %v3414, %v7319
    %v7533 = vadd.f32 %v3415, %v7321
    %v7534 = vadd.f32 %v3416, %v7342
    %v7535 = vadd.f32 %v3417, %v7344
    %v7536 = vadd.f32 %v3418, %v7365
    %v7537 = vadd.f32 %v3419, %v7367
    %v7538 = vadd.f32 %v3420, %v7388
    %v7539 = vadd.f32 %v3421, %v7390
    %v7540 = vadd.f32 %v3422, %v7411
    %v7541 = vadd.f32 %v3423, %v7413
    %v7542 = vadd.f32 %v3424, %v7434
    %v7543 = vadd.f32 %v3425, %v7436
    %v7544 = vadd.f32 %v3426, %v7457
    %v7545 = vadd.f32 %v3427, %v7459
    %v7546 = vadd.f32 %v3428, %v7480
    %v7547 = vadd.f32 %v3429, %v7482
    %v7548 = vpack.c.bf16 %v7485, %v7484
    %v7549 = vpack.c.bf16 %v7487, %v7486
    %v7550 = vpack.c.bf16 %v7489, %v7488
    %v7551 = vpack.c.bf16 %v7491, %v7490
    %v7552 = vpack.c.bf16 %v7493, %v7492
    %v7553 = vpack.c.bf16 %v7495, %v7494
    %v7554 = vpack.c.bf16 %v7497, %v7496
    %v7555 = vpack.c.bf16 %v7499, %v7498
    %v7556 = vpack.c.bf16 %v7501, %v7500
    %v7557 = vpack.c.bf16 %v7503, %v7502
    %v7558 = vpack.c.bf16 %v7505, %v7504
    %v7559 = vpack.c.bf16 %v7507, %v7506
    %v7560 = vpack.c.bf16 %v7509, %v7508
    %v7561 = vpack.c.bf16 %v7511, %v7510
    %v7562 = vpack.c.bf16 %v7513, %v7512
    %v7563 = vpack.c.bf16 %v7515, %v7514
    %v7564 = vpack.c.bf16 %v7517, %v7516
    %v7565 = vpack.c.bf16 %v7519, %v7518
    %v7566 = vpack.c.bf16 %v7521, %v7520
    %v7567 = vpack.c.bf16 %v7523, %v7522
    %v7568 = vpack.c.bf16 %v7525, %v7524
    %v7569 = vpack.c.bf16 %v7527, %v7526
    %v7570 = vpack.c.bf16 %v7529, %v7528
    %v7571 = vpack.c.bf16 %v7531, %v7530
    %v7572 = vpack.c.bf16 %v7533, %v7532
    %v7573 = vpack.c.bf16 %v7535, %v7534
    %v7574 = vpack.c.bf16 %v7537, %v7536
    %v7575 = vpack.c.bf16 %v7539, %v7538
    %v7576 = vpack.c.bf16 %v7541, %v7540
    %v7577 = vpack.c.bf16 %v7543, %v7542
    %v7578 = vpack.c.bf16 %v7545, %v7544
    %v7579 = vpack.c.bf16 %v7547, %v7546
    %v7580 = vld [vmem:[%s6] sm:$0xf]
    %v7581 = vld [vmem:[%s6 + $0x4] sm:$0xf]
    %v7582 = vld [vmem:[%s7] sm:$0x1]
    %v7584 = vperm.slane %v7582, 0
    %v7588 = vunpack.c.l.b16 %v7580
    %v7589 = vunpack.c.l.b16 %v7581
    %v7590 = vpack.c.b16 %v7589, %v7588
    %v7593 = vsel %vm3666, %v7548, 0
    %v7596 = vsel %vm3666, %v7549, 0
    %v7599 = vsel %vm3666, %v7550, 0
    %v7602 = vsel %vm3666, %v7551, 0
    %v7605 = vsel %vm3666, %v7552, 0
    %v7608 = vsel %vm3666, %v7553, 0
    %v7611 = vsel %vm3666, %v7554, 0
    %v7614 = vsel %vm3666, %v7555, 0
    %v7617 = vsel %vm3666, %v7556, 0
    %v7620 = vsel %vm3666, %v7557, 0
    %v7623 = vsel %vm3666, %v7558, 0
    %v7626 = vsel %vm3666, %v7559, 0
    %v7629 = vsel %vm3666, %v7560, 0
    %v7632 = vsel %vm3666, %v7561, 0
    %v7635 = vsel %vm3666, %v7562, 0
    %v7638 = vsel %vm3666, %v7563, 0
    %v7641 = vsel %vm3666, %v7564, 0
    %v7644 = vsel %vm3666, %v7565, 0
    %v7647 = vsel %vm3666, %v7566, 0
    %v7650 = vsel %vm3666, %v7567, 0
    %v7653 = vsel %vm3666, %v7568, 0
    %v7656 = vsel %vm3666, %v7569, 0
    %v7659 = vsel %vm3666, %v7570, 0
    %v7662 = vsel %vm3666, %v7571, 0
    %v7665 = vsel %vm3666, %v7572, 0
    %v7668 = vsel %vm3666, %v7573, 0
    %v7671 = vsel %vm3666, %v7574, 0
    %v7674 = vsel %vm3666, %v7575, 0
    %v7677 = vsel %vm3666, %v7576, 0
    %v7680 = vsel %vm3666, %v7577, 0
    %v7683 = vsel %vm3666, %v7578, 0
    %v7686 = vsel %vm3666, %v7579, 0
    %7688 = vmatpush.bf16.msra.mxu0 0
    %7689 = vmatpush.bf16.msra.mxu0 0
    %7690 = vmatpush.bf16.msra.mxu0 0
    %7691 = vmatpush.bf16.msra.mxu0 0
    %7692 = vmatpush.bf16.msra.mxu0 0
    %7693 = vmatpush.bf16.msra.mxu0 0
    %7694 = vmatpush.bf16.msra.mxu0 0
    %7695 = vmatpush.bf16.msra.mxu0 %v7590
    %7696 = vmatmul.bf16.gmra.mxu0 %v7593
    %v7697 = vpop.f32.mrf.mxu0
    %v7698 = vadd.f32 %v7584, %v7697
    %v7699 = vpop.f32.mrf.mxu0
    %v7700 = vadd.f32 %v7584, %v7699
    %7701 = vmatmul.bf16.gmra.mxu0 %v7596
    %v7702 = vpop.f32.mrf.mxu0
    %v7703 = vadd.f32 %v7584, %v7702
    %v7704 = vpop.f32.mrf.mxu0
    %v7705 = vadd.f32 %v7584, %v7704
    %7706 = vmatmul.bf16.gmra.mxu0 %v7599
    %v7707 = vpop.f32.mrf.mxu0
    %v7708 = vadd.f32 %v7584, %v7707
    %v7709 = vpop.f32.mrf.mxu0
    %v7710 = vadd.f32 %v7584, %v7709
    %7711 = vmatmul.bf16.gmra.mxu0 %v7602
    %v7712 = vpop.f32.mrf.mxu0
    %v7713 = vadd.f32 %v7584, %v7712
    %v7714 = vpop.f32.mrf.mxu0
    %v7715 = vadd.f32 %v7584, %v7714
    %7716 = vmatmul.bf16.gmra.mxu0 %v7605
    %v7717 = vpop.f32.mrf.mxu0
    %v7718 = vadd.f32 %v7584, %v7717
    %v7719 = vpop.f32.mrf.mxu0
    %v7720 = vadd.f32 %v7584, %v7719
    %7721 = vmatmul.bf16.gmra.mxu0 %v7608
    %v7722 = vpop.f32.mrf.mxu0
    %v7723 = vadd.f32 %v7584, %v7722
    %v7724 = vpop.f32.mrf.mxu0
    %v7725 = vadd.f32 %v7584, %v7724
    %7726 = vmatmul.bf16.gmra.mxu0 %v7611
    %v7727 = vpop.f32.mrf.mxu0
    %v7728 = vadd.f32 %v7584, %v7727
    %v7729 = vpop.f32.mrf.mxu0
    %v7730 = vadd.f32 %v7584, %v7729
    %7731 = vmatmul.bf16.gmra.mxu0 %v7614
    %v7732 = vpop.f32.mrf.mxu0
    %v7733 = vadd.f32 %v7584, %v7732
    %v7734 = vpop.f32.mrf.mxu0
    %v7735 = vadd.f32 %v7584, %v7734
    %7736 = vmatmul.bf16.gmra.mxu0 %v7617
    %v7737 = vpop.f32.mrf.mxu0
    %v7738 = vadd.f32 %v7584, %v7737
    %v7739 = vpop.f32.mrf.mxu0
    %v7740 = vadd.f32 %v7584, %v7739
    %7741 = vmatmul.bf16.gmra.mxu0 %v7620
    %v7742 = vpop.f32.mrf.mxu0
    %v7743 = vadd.f32 %v7584, %v7742
    %v7744 = vpop.f32.mrf.mxu0
    %v7745 = vadd.f32 %v7584, %v7744
    %7746 = vmatmul.bf16.gmra.mxu0 %v7623
    %v7747 = vpop.f32.mrf.mxu0
    %v7748 = vadd.f32 %v7584, %v7747
    %v7749 = vpop.f32.mrf.mxu0
    %v7750 = vadd.f32 %v7584, %v7749
    %7751 = vmatmul.bf16.gmra.mxu0 %v7626
    %v7752 = vpop.f32.mrf.mxu0
    %v7753 = vadd.f32 %v7584, %v7752
    %v7754 = vpop.f32.mrf.mxu0
    %v7755 = vadd.f32 %v7584, %v7754
    %7756 = vmatmul.bf16.gmra.mxu0 %v7629
    %v7757 = vpop.f32.mrf.mxu0
    %v7758 = vadd.f32 %v7584, %v7757
    %v7759 = vpop.f32.mrf.mxu0
    %v7760 = vadd.f32 %v7584, %v7759
    %7761 = vmatmul.bf16.gmra.mxu0 %v7632
    %v7762 = vpop.f32.mrf.mxu0
    %v7763 = vadd.f32 %v7584, %v7762
    %v7764 = vpop.f32.mrf.mxu0
    %v7765 = vadd.f32 %v7584, %v7764
    %7766 = vmatmul.bf16.gmra.mxu0 %v7635
    %v7767 = vpop.f32.mrf.mxu0
    %v7768 = vadd.f32 %v7584, %v7767
    %v7769 = vpop.f32.mrf.mxu0
    %v7770 = vadd.f32 %v7584, %v7769
    %7771 = vmatmul.bf16.gmra.mxu0 %v7638
    %v7772 = vpop.f32.mrf.mxu0
    %v7773 = vadd.f32 %v7584, %v7772
    %v7774 = vpop.f32.mrf.mxu0
    %v7775 = vadd.f32 %v7584, %v7774
    %7776 = vmatmul.bf16.gmra.mxu0 %v7641
    %v7777 = vpop.f32.mrf.mxu0
    %v7778 = vadd.f32 %v7584, %v7777
    %v7779 = vpop.f32.mrf.mxu0
    %v7780 = vadd.f32 %v7584, %v7779
    %7781 = vmatmul.bf16.gmra.mxu0 %v7644
    %v7782 = vpop.f32.mrf.mxu0
    %v7783 = vadd.f32 %v7584, %v7782
    %v7784 = vpop.f32.mrf.mxu0
    %v7785 = vadd.f32 %v7584, %v7784
    %7786 = vmatmul.bf16.gmra.mxu0 %v7647
    %v7787 = vpop.f32.mrf.mxu0
    %v7788 = vadd.f32 %v7584, %v7787
    %v7789 = vpop.f32.mrf.mxu0
    %v7790 = vadd.f32 %v7584, %v7789
    %7791 = vmatmul.bf16.gmra.mxu0 %v7650
    %v7792 = vpop.f32.mrf.mxu0
    %v7793 = vadd.f32 %v7584, %v7792
    %v7794 = vpop.f32.mrf.mxu0
    %v7795 = vadd.f32 %v7584, %v7794
    %7796 = vmatmul.bf16.gmra.mxu0 %v7653
    %v7797 = vpop.f32.mrf.mxu0
    %v7798 = vadd.f32 %v7584, %v7797
    %v7799 = vpop.f32.mrf.mxu0
    %v7800 = vadd.f32 %v7584, %v7799
    %7801 = vmatmul.bf16.gmra.mxu0 %v7656
    %v7802 = vpop.f32.mrf.mxu0
    %v7803 = vadd.f32 %v7584, %v7802
    %v7804 = vpop.f32.mrf.mxu0
    %v7805 = vadd.f32 %v7584, %v7804
    %7806 = vmatmul.bf16.gmra.mxu0 %v7659
    %v7807 = vpop.f32.mrf.mxu0
    %v7808 = vadd.f32 %v7584, %v7807
    %v7809 = vpop.f32.mrf.mxu0
    %v7810 = vadd.f32 %v7584, %v7809
    %7811 = vmatmul.bf16.gmra.mxu0 %v7662
    %v7812 = vpop.f32.mrf.mxu0
    %v7813 = vadd.f32 %v7584, %v7812
    %v7814 = vpop.f32.mrf.mxu0
    %v7815 = vadd.f32 %v7584, %v7814
    %7816 = vmatmul.bf16.gmra.mxu0 %v7665
    %v7817 = vpop.f32.mrf.mxu0
    %v7818 = vadd.f32 %v7584, %v7817
    %v7819 = vpop.f32.mrf.mxu0
    %v7820 = vadd.f32 %v7584, %v7819
    %7821 = vmatmul.bf16.gmra.mxu0 %v7668
    %v7822 = vpop.f32.mrf.mxu0
    %v7823 = vadd.f32 %v7584, %v7822
    %v7824 = vpop.f32.mrf.mxu0
    %v7825 = vadd.f32 %v7584, %v7824
    %7826 = vmatmul.bf16.gmra.mxu0 %v7671
    %v7827 = vpop.f32.mrf.mxu0
    %v7828 = vadd.f32 %v7584, %v7827
    %v7829 = vpop.f32.mrf.mxu0
    %v7830 = vadd.f32 %v7584, %v7829
    %7831 = vmatmul.bf16.gmra.mxu0 %v7674
    %v7832 = vpop.f32.mrf.mxu0
    %v7833 = vadd.f32 %v7584, %v7832
    %v7834 = vpop.f32.mrf.mxu0
    %v7835 = vadd.f32 %v7584, %v7834
    %7836 = vmatmul.bf16.gmra.mxu0 %v7677
    %v7837 = vpop.f32.mrf.mxu0
    %v7838 = vadd.f32 %v7584, %v7837
    %v7839 = vpop.f32.mrf.mxu0
    %v7840 = vadd.f32 %v7584, %v7839
    %7841 = vmatmul.bf16.gmra.mxu0 %v7680
    %v7842 = vpop.f32.mrf.mxu0
    %v7843 = vadd.f32 %v7584, %v7842
    %v7844 = vpop.f32.mrf.mxu0
    %v7845 = vadd.f32 %v7584, %v7844
    %7846 = vmatmul.bf16.gmra.mxu0 %v7683
    %v7847 = vpop.f32.mrf.mxu0
    %v7848 = vadd.f32 %v7584, %v7847
    %v7849 = vpop.f32.mrf.mxu0
    %v7850 = vadd.f32 %v7584, %v7849
    %7851 = vmatmul.bf16.gmra.mxu0 %v7686
    %v7852 = vpop.f32.mrf.mxu0
    %v7853 = vadd.f32 %v7584, %v7852
    %v7854 = vpop.f32.mrf.mxu0
    %v7855 = vadd.f32 %v7584, %v7854
    %7856 = vdwg.mxu0
    %v7857 = vpack.c.bf16 %v7698, %v7698
    %v7858 = vpack.c.bf16 %v7700, %v7700
    %v7859 = vpack.c.bf16 %v7703, %v7703
    %v7860 = vpack.c.bf16 %v7705, %v7705
    %v7861 = vpack.c.bf16 %v7708, %v7708
    %v7862 = vpack.c.bf16 %v7710, %v7710
    %v7863 = vpack.c.bf16 %v7713, %v7713
    %v7864 = vpack.c.bf16 %v7715, %v7715
    %v7865 = vpack.c.bf16 %v7718, %v7718
    %v7866 = vpack.c.bf16 %v7720, %v7720
    %v7867 = vpack.c.bf16 %v7723, %v7723
    %v7868 = vpack.c.bf16 %v7725, %v7725
    %v7869 = vpack.c.bf16 %v7728, %v7728
    %v7870 = vpack.c.bf16 %v7730, %v7730
    %v7871 = vpack.c.bf16 %v7733, %v7733
    %v7872 = vpack.c.bf16 %v7735, %v7735
    %v7873 = vpack.c.bf16 %v7738, %v7738
    %v7874 = vpack.c.bf16 %v7740, %v7740
    %v7875 = vpack.c.bf16 %v7743, %v7743
    %v7876 = vpack.c.bf16 %v7745, %v7745
    %v7877 = vpack.c.bf16 %v7748, %v7748
    %v7878 = vpack.c.bf16 %v7750, %v7750
    %v7879 = vpack.c.bf16 %v7753, %v7753
    %v7880 = vpack.c.bf16 %v7755, %v7755
    %v7881 = vpack.c.bf16 %v7758, %v7758
    %v7882 = vpack.c.bf16 %v7760, %v7760
    %v7883 = vpack.c.bf16 %v7763, %v7763
    %v7884 = vpack.c.bf16 %v7765, %v7765
    %v7885 = vpack.c.bf16 %v7768, %v7768
    %v7886 = vpack.c.bf16 %v7770, %v7770
    %v7887 = vpack.c.bf16 %v7773, %v7773
    %v7888 = vpack.c.bf16 %v7775, %v7775
    %v7889 = vpack.c.bf16 %v7778, %v7778
    %v7890 = vpack.c.bf16 %v7780, %v7780
    %v7891 = vpack.c.bf16 %v7783, %v7783
    %v7892 = vpack.c.bf16 %v7785, %v7785
    %v7893 = vpack.c.bf16 %v7788, %v7788
    %v7894 = vpack.c.bf16 %v7790, %v7790
    %v7895 = vpack.c.bf16 %v7793, %v7793
    %v7896 = vpack.c.bf16 %v7795, %v7795
    %v7897 = vpack.c.bf16 %v7798, %v7798
    %v7898 = vpack.c.bf16 %v7800, %v7800
    %v7899 = vpack.c.bf16 %v7803, %v7803
    %v7900 = vpack.c.bf16 %v7805, %v7805
    %v7901 = vpack.c.bf16 %v7808, %v7808
    %v7902 = vpack.c.bf16 %v7810, %v7810
    %v7903 = vpack.c.bf16 %v7813, %v7813
    %v7904 = vpack.c.bf16 %v7815, %v7815
    %v7905 = vpack.c.bf16 %v7818, %v7818
    %v7906 = vpack.c.bf16 %v7820, %v7820
    %v7907 = vpack.c.bf16 %v7823, %v7823
    %v7908 = vpack.c.bf16 %v7825, %v7825
    %v7909 = vpack.c.bf16 %v7828, %v7828
    %v7910 = vpack.c.bf16 %v7830, %v7830
    %v7911 = vpack.c.bf16 %v7833, %v7833
    %v7912 = vpack.c.bf16 %v7835, %v7835
    %v7913 = vpack.c.bf16 %v7838, %v7838
    %v7914 = vpack.c.bf16 %v7840, %v7840
    %v7915 = vpack.c.bf16 %v7843, %v7843
    %v7916 = vpack.c.bf16 %v7845, %v7845
    %v7917 = vpack.c.bf16 %v7848, %v7848
    %v7918 = vpack.c.bf16 %v7850, %v7850
    %v7919 = vpack.c.bf16 %v7853, %v7853
    %v7920 = vpack.c.bf16 %v7855, %v7855
    %v7923 = vunpack.c.l.b16 %v7857
    %v7924 = vunpack.c.l.b16 %v7858
    %v7925 = vpack.c.b16 %v7924, %v7923
    %7927 = vmatpush.bf16.msra.mxu0 0
    %7928 = vmatpush.bf16.msra.mxu0 0
    %7929 = vmatpush.bf16.msra.mxu0 0
    %7930 = vmatpush.bf16.msra.mxu0 0
    %7931 = vmatpush.bf16.msra.mxu0 0
    %7932 = vmatpush.bf16.msra.mxu0 0
    %7933 = vmatpush.bf16.msra.mxu0 0
    %7934 = vmatpush.bf16.msra.mxu0 %v7925
    %7935 = vmatmul.bf16.gmra.mxu0 %v6755
    %v7936 = vpop.f32.mrf.mxu0
    %v7937 = vadd.f32 0.0, %v7936
    %v7938 = vpop.f32.mrf.mxu0
    %v7939 = vadd.f32 0.0, %v7938
    %7940 = vdwg.mxu0
    %v7943 = vunpack.c.l.b16 %v7859
    %v7944 = vunpack.c.l.b16 %v7860
    %v7945 = vpack.c.b16 %v7944, %v7943
    %7947 = vmatpush.bf16.msra.mxu0 0
    %7948 = vmatpush.bf16.msra.mxu0 0
    %7949 = vmatpush.bf16.msra.mxu0 0
    %7950 = vmatpush.bf16.msra.mxu0 0
    %7951 = vmatpush.bf16.msra.mxu0 0
    %7952 = vmatpush.bf16.msra.mxu0 0
    %7953 = vmatpush.bf16.msra.mxu0 0
    %7954 = vmatpush.bf16.msra.mxu0 %v7945
    %7955 = vmatmul.bf16.gmra.mxu0 %v6778
    %v7956 = vpop.f32.mrf.mxu0
    %v7957 = vadd.f32 0.0, %v7956
    %v7958 = vpop.f32.mrf.mxu0
    %v7959 = vadd.f32 0.0, %v7958
    %7960 = vdwg.mxu0
    %v7963 = vunpack.c.l.b16 %v7861
    %v7964 = vunpack.c.l.b16 %v7862
    %v7965 = vpack.c.b16 %v7964, %v7963
    %7967 = vmatpush.bf16.msra.mxu0 0
    %7968 = vmatpush.bf16.msra.mxu0 0
    %7969 = vmatpush.bf16.msra.mxu0 0
    %7970 = vmatpush.bf16.msra.mxu0 0
    %7971 = vmatpush.bf16.msra.mxu0 0
    %7972 = vmatpush.bf16.msra.mxu0 0
    %7973 = vmatpush.bf16.msra.mxu0 0
    %7974 = vmatpush.bf16.msra.mxu0 %v7965
    %7975 = vmatmul.bf16.gmra.mxu0 %v6801
    %v7976 = vpop.f32.mrf.mxu0
    %v7977 = vadd.f32 0.0, %v7976
    %v7978 = vpop.f32.mrf.mxu0
    %v7979 = vadd.f32 0.0, %v7978
    %7980 = vdwg.mxu0
    %v7983 = vunpack.c.l.b16 %v7863
    %v7984 = vunpack.c.l.b16 %v7864
    %v7985 = vpack.c.b16 %v7984, %v7983
    %7987 = vmatpush.bf16.msra.mxu0 0
    %7988 = vmatpush.bf16.msra.mxu0 0
    %7989 = vmatpush.bf16.msra.mxu0 0
    %7990 = vmatpush.bf16.msra.mxu0 0
    %7991 = vmatpush.bf16.msra.mxu0 0
    %7992 = vmatpush.bf16.msra.mxu0 0
    %7993 = vmatpush.bf16.msra.mxu0 0
    %7994 = vmatpush.bf16.msra.mxu0 %v7985
    %7995 = vmatmul.bf16.gmra.mxu0 %v6824
    %v7996 = vpop.f32.mrf.mxu0
    %v7997 = vadd.f32 0.0, %v7996
    %v7998 = vpop.f32.mrf.mxu0
    %v7999 = vadd.f32 0.0, %v7998
    %8000 = vdwg.mxu0
    %v8003 = vunpack.c.l.b16 %v7865
    %v8004 = vunpack.c.l.b16 %v7866
    %v8005 = vpack.c.b16 %v8004, %v8003
    %8007 = vmatpush.bf16.msra.mxu0 0
    %8008 = vmatpush.bf16.msra.mxu0 0
    %8009 = vmatpush.bf16.msra.mxu0 0
    %8010 = vmatpush.bf16.msra.mxu0 0
    %8011 = vmatpush.bf16.msra.mxu0 0
    %8012 = vmatpush.bf16.msra.mxu0 0
    %8013 = vmatpush.bf16.msra.mxu0 0
    %8014 = vmatpush.bf16.msra.mxu0 %v8005
    %8015 = vmatmul.bf16.gmra.mxu0 %v6847
    %v8016 = vpop.f32.mrf.mxu0
    %v8017 = vadd.f32 0.0, %v8016
    %v8018 = vpop.f32.mrf.mxu0
    %v8019 = vadd.f32 0.0, %v8018
    %8020 = vdwg.mxu0
    %v8023 = vunpack.c.l.b16 %v7867
    %v8024 = vunpack.c.l.b16 %v7868
    %v8025 = vpack.c.b16 %v8024, %v8023
    %8027 = vmatpush.bf16.msra.mxu0 0
    %8028 = vmatpush.bf16.msra.mxu0 0
    %8029 = vmatpush.bf16.msra.mxu0 0
    %8030 = vmatpush.bf16.msra.mxu0 0
    %8031 = vmatpush.bf16.msra.mxu0 0
    %8032 = vmatpush.bf16.msra.mxu0 0
    %8033 = vmatpush.bf16.msra.mxu0 0
    %8034 = vmatpush.bf16.msra.mxu0 %v8025
    %8035 = vmatmul.bf16.gmra.mxu0 %v6870
    %v8036 = vpop.f32.mrf.mxu0
    %v8037 = vadd.f32 0.0, %v8036
    %v8038 = vpop.f32.mrf.mxu0
    %v8039 = vadd.f32 0.0, %v8038
    %8040 = vdwg.mxu0
    %v8043 = vunpack.c.l.b16 %v7869
    %v8044 = vunpack.c.l.b16 %v7870
    %v8045 = vpack.c.b16 %v8044, %v8043
    %8047 = vmatpush.bf16.msra.mxu0 0
    %8048 = vmatpush.bf16.msra.mxu0 0
    %8049 = vmatpush.bf16.msra.mxu0 0
    %8050 = vmatpush.bf16.msra.mxu0 0
    %8051 = vmatpush.bf16.msra.mxu0 0
    %8052 = vmatpush.bf16.msra.mxu0 0
    %8053 = vmatpush.bf16.msra.mxu0 0
    %8054 = vmatpush.bf16.msra.mxu0 %v8045
    %8055 = vmatmul.bf16.gmra.mxu0 %v6893
    %v8056 = vpop.f32.mrf.mxu0
    %v8057 = vadd.f32 0.0, %v8056
    %v8058 = vpop.f32.mrf.mxu0
    %v8059 = vadd.f32 0.0, %v8058
    %8060 = vdwg.mxu0
    %v8063 = vunpack.c.l.b16 %v7871
    %v8064 = vunpack.c.l.b16 %v7872
    %v8065 = vpack.c.b16 %v8064, %v8063
    %8067 = vmatpush.bf16.msra.mxu0 0
    %8068 = vmatpush.bf16.msra.mxu0 0
    %8069 = vmatpush.bf16.msra.mxu0 0
    %8070 = vmatpush.bf16.msra.mxu0 0
    %8071 = vmatpush.bf16.msra.mxu0 0
    %8072 = vmatpush.bf16.msra.mxu0 0
    %8073 = vmatpush.bf16.msra.mxu0 0
    %8074 = vmatpush.bf16.msra.mxu0 %v8065
    %8075 = vmatmul.bf16.gmra.mxu0 %v6916
    %v8076 = vpop.f32.mrf.mxu0
    %v8077 = vadd.f32 0.0, %v8076
    %v8078 = vpop.f32.mrf.mxu0
    %v8079 = vadd.f32 0.0, %v8078
    %8080 = vdwg.mxu0
    %v8083 = vunpack.c.l.b16 %v7873
    %v8084 = vunpack.c.l.b16 %v7874
    %v8085 = vpack.c.b16 %v8084, %v8083
    %8087 = vmatpush.bf16.msra.mxu0 0
    %8088 = vmatpush.bf16.msra.mxu0 0
    %8089 = vmatpush.bf16.msra.mxu0 0
    %8090 = vmatpush.bf16.msra.mxu0 0
    %8091 = vmatpush.bf16.msra.mxu0 0
    %8092 = vmatpush.bf16.msra.mxu0 0
    %8093 = vmatpush.bf16.msra.mxu0 0
    %8094 = vmatpush.bf16.msra.mxu0 %v8085
    %8095 = vmatmul.bf16.gmra.mxu0 %v6939
    %v8096 = vpop.f32.mrf.mxu0
    %v8097 = vadd.f32 0.0, %v8096
    %v8098 = vpop.f32.mrf.mxu0
    %v8099 = vadd.f32 0.0, %v8098
    %8100 = vdwg.mxu0
    %v8103 = vunpack.c.l.b16 %v7875
    %v8104 = vunpack.c.l.b16 %v7876
    %v8105 = vpack.c.b16 %v8104, %v8103
    %8107 = vmatpush.bf16.msra.mxu0 0
    %8108 = vmatpush.bf16.msra.mxu0 0
    %8109 = vmatpush.bf16.msra.mxu0 0
    %8110 = vmatpush.bf16.msra.mxu0 0
    %8111 = vmatpush.bf16.msra.mxu0 0
    %8112 = vmatpush.bf16.msra.mxu0 0
    %8113 = vmatpush.bf16.msra.mxu0 0
    %8114 = vmatpush.bf16.msra.mxu0 %v8105
    %8115 = vmatmul.bf16.gmra.mxu0 %v6962
    %v8116 = vpop.f32.mrf.mxu0
    %v8117 = vadd.f32 0.0, %v8116
    %v8118 = vpop.f32.mrf.mxu0
    %v8119 = vadd.f32 0.0, %v8118
    %8120 = vdwg.mxu0
    %v8123 = vunpack.c.l.b16 %v7877
    %v8124 = vunpack.c.l.b16 %v7878
    %v8125 = vpack.c.b16 %v8124, %v8123
    %8127 = vmatpush.bf16.msra.mxu0 0
    %8128 = vmatpush.bf16.msra.mxu0 0
    %8129 = vmatpush.bf16.msra.mxu0 0
    %8130 = vmatpush.bf16.msra.mxu0 0
    %8131 = vmatpush.bf16.msra.mxu0 0
    %8132 = vmatpush.bf16.msra.mxu0 0
    %8133 = vmatpush.bf16.msra.mxu0 0
    %8134 = vmatpush.bf16.msra.mxu0 %v8125
    %8135 = vmatmul.bf16.gmra.mxu0 %v6985
    %v8136 = vpop.f32.mrf.mxu0
    %v8137 = vadd.f32 0.0, %v8136
    %v8138 = vpop.f32.mrf.mxu0
    %v8139 = vadd.f32 0.0, %v8138
    %8140 = vdwg.mxu0
    %v8143 = vunpack.c.l.b16 %v7879
    %v8144 = vunpack.c.l.b16 %v7880
    %v8145 = vpack.c.b16 %v8144, %v8143
    %8147 = vmatpush.bf16.msra.mxu0 0
    %8148 = vmatpush.bf16.msra.mxu0 0
    %8149 = vmatpush.bf16.msra.mxu0 0
    %8150 = vmatpush.bf16.msra.mxu0 0
    %8151 = vmatpush.bf16.msra.mxu0 0
    %8152 = vmatpush.bf16.msra.mxu0 0
    %8153 = vmatpush.bf16.msra.mxu0 0
    %8154 = vmatpush.bf16.msra.mxu0 %v8145
    %8155 = vmatmul.bf16.gmra.mxu0 %v7008
    %v8156 = vpop.f32.mrf.mxu0
    %v8157 = vadd.f32 0.0, %v8156
    %v8158 = vpop.f32.mrf.mxu0
    %v8159 = vadd.f32 0.0, %v8158
    %8160 = vdwg.mxu0
    %v8163 = vunpack.c.l.b16 %v7881
    %v8164 = vunpack.c.l.b16 %v7882
    %v8165 = vpack.c.b16 %v8164, %v8163
    %8167 = vmatpush.bf16.msra.mxu0 0
    %8168 = vmatpush.bf16.msra.mxu0 0
    %8169 = vmatpush.bf16.msra.mxu0 0
    %8170 = vmatpush.bf16.msra.mxu0 0
    %8171 = vmatpush.bf16.msra.mxu0 0
    %8172 = vmatpush.bf16.msra.mxu0 0
    %8173 = vmatpush.bf16.msra.mxu0 0
    %8174 = vmatpush.bf16.msra.mxu0 %v8165
    %8175 = vmatmul.bf16.gmra.mxu0 %v7031
    %v8176 = vpop.f32.mrf.mxu0
    %v8177 = vadd.f32 0.0, %v8176
    %v8178 = vpop.f32.mrf.mxu0
    %v8179 = vadd.f32 0.0, %v8178
    %8180 = vdwg.mxu0
    %v8183 = vunpack.c.l.b16 %v7883
    %v8184 = vunpack.c.l.b16 %v7884
    %v8185 = vpack.c.b16 %v8184, %v8183
    %8187 = vmatpush.bf16.msra.mxu0 0
    %8188 = vmatpush.bf16.msra.mxu0 0
    %8189 = vmatpush.bf16.msra.mxu0 0
    %8190 = vmatpush.bf16.msra.mxu0 0
    %8191 = vmatpush.bf16.msra.mxu0 0
    %8192 = vmatpush.bf16.msra.mxu0 0
    %8193 = vmatpush.bf16.msra.mxu0 0
    %8194 = vmatpush.bf16.msra.mxu0 %v8185
    %8195 = vmatmul.bf16.gmra.mxu0 %v7054
    %v8196 = vpop.f32.mrf.mxu0
    %v8197 = vadd.f32 0.0, %v8196
    %v8198 = vpop.f32.mrf.mxu0
    %v8199 = vadd.f32 0.0, %v8198
    %8200 = vdwg.mxu0
    %v8203 = vunpack.c.l.b16 %v7885
    %v8204 = vunpack.c.l.b16 %v7886
    %v8205 = vpack.c.b16 %v8204, %v8203
    %8207 = vmatpush.bf16.msra.mxu0 0
    %8208 = vmatpush.bf16.msra.mxu0 0
    %8209 = vmatpush.bf16.msra.mxu0 0
    %8210 = vmatpush.bf16.msra.mxu0 0
    %8211 = vmatpush.bf16.msra.mxu0 0
    %8212 = vmatpush.bf16.msra.mxu0 0
    %8213 = vmatpush.bf16.msra.mxu0 0
    %8214 = vmatpush.bf16.msra.mxu0 %v8205
    %8215 = vmatmul.bf16.gmra.mxu0 %v7077
    %v8216 = vpop.f32.mrf.mxu0
    %v8217 = vadd.f32 0.0, %v8216
    %v8218 = vpop.f32.mrf.mxu0
    %v8219 = vadd.f32 0.0, %v8218
    %8220 = vdwg.mxu0
    %v8223 = vunpack.c.l.b16 %v7887
    %v8224 = vunpack.c.l.b16 %v7888
    %v8225 = vpack.c.b16 %v8224, %v8223
    %8227 = vmatpush.bf16.msra.mxu0 0
    %8228 = vmatpush.bf16.msra.mxu0 0
    %8229 = vmatpush.bf16.msra.mxu0 0
    %8230 = vmatpush.bf16.msra.mxu0 0
    %8231 = vmatpush.bf16.msra.mxu0 0
    %8232 = vmatpush.bf16.msra.mxu0 0
    %8233 = vmatpush.bf16.msra.mxu0 0
    %8234 = vmatpush.bf16.msra.mxu0 %v8225
    %8235 = vmatmul.bf16.gmra.mxu0 %v7100
    %v8236 = vpop.f32.mrf.mxu0
    %v8237 = vadd.f32 0.0, %v8236
    %v8238 = vpop.f32.mrf.mxu0
    %v8239 = vadd.f32 0.0, %v8238
    %8240 = vdwg.mxu0
    %v8243 = vunpack.c.l.b16 %v7889
    %v8244 = vunpack.c.l.b16 %v7890
    %v8245 = vpack.c.b16 %v8244, %v8243
    %8247 = vmatpush.bf16.msra.mxu0 0
    %8248 = vmatpush.bf16.msra.mxu0 0
    %8249 = vmatpush.bf16.msra.mxu0 0
    %8250 = vmatpush.bf16.msra.mxu0 0
    %8251 = vmatpush.bf16.msra.mxu0 0
    %8252 = vmatpush.bf16.msra.mxu0 0
    %8253 = vmatpush.bf16.msra.mxu0 0
    %8254 = vmatpush.bf16.msra.mxu0 %v8245
    %8255 = vmatmul.bf16.gmra.mxu0 %v7123
    %v8256 = vpop.f32.mrf.mxu0
    %v8257 = vadd.f32 0.0, %v8256
    %v8258 = vpop.f32.mrf.mxu0
    %v8259 = vadd.f32 0.0, %v8258
    %8260 = vdwg.mxu0
    %v8263 = vunpack.c.l.b16 %v7891
    %v8264 = vunpack.c.l.b16 %v7892
    %v8265 = vpack.c.b16 %v8264, %v8263
    %8267 = vmatpush.bf16.msra.mxu0 0
    %8268 = vmatpush.bf16.msra.mxu0 0
    %8269 = vmatpush.bf16.msra.mxu0 0
    %8270 = vmatpush.bf16.msra.mxu0 0
    %8271 = vmatpush.bf16.msra.mxu0 0
    %8272 = vmatpush.bf16.msra.mxu0 0
    %8273 = vmatpush.bf16.msra.mxu0 0
    %8274 = vmatpush.bf16.msra.mxu0 %v8265
    %8275 = vmatmul.bf16.gmra.mxu0 %v7146
    %v8276 = vpop.f32.mrf.mxu0
    %v8277 = vadd.f32 0.0, %v8276
    %v8278 = vpop.f32.mrf.mxu0
    %v8279 = vadd.f32 0.0, %v8278
    %8280 = vdwg.mxu0
    %v8283 = vunpack.c.l.b16 %v7893
    %v8284 = vunpack.c.l.b16 %v7894
    %v8285 = vpack.c.b16 %v8284, %v8283
    %8287 = vmatpush.bf16.msra.mxu0 0
    %8288 = vmatpush.bf16.msra.mxu0 0
    %8289 = vmatpush.bf16.msra.mxu0 0
    %8290 = vmatpush.bf16.msra.mxu0 0
    %8291 = vmatpush.bf16.msra.mxu0 0
    %8292 = vmatpush.bf16.msra.mxu0 0
    %8293 = vmatpush.bf16.msra.mxu0 0
    %8294 = vmatpush.bf16.msra.mxu0 %v8285
    %8295 = vmatmul.bf16.gmra.mxu0 %v7169
    %v8296 = vpop.f32.mrf.mxu0
    %v8297 = vadd.f32 0.0, %v8296
    %v8298 = vpop.f32.mrf.mxu0
    %v8299 = vadd.f32 0.0, %v8298
    %8300 = vdwg.mxu0
    %v8303 = vunpack.c.l.b16 %v7895
    %v8304 = vunpack.c.l.b16 %v7896
    %v8305 = vpack.c.b16 %v8304, %v8303
    %8307 = vmatpush.bf16.msra.mxu0 0
    %8308 = vmatpush.bf16.msra.mxu0 0
    %8309 = vmatpush.bf16.msra.mxu0 0
    %8310 = vmatpush.bf16.msra.mxu0 0
    %8311 = vmatpush.bf16.msra.mxu0 0
    %8312 = vmatpush.bf16.msra.mxu0 0
    %8313 = vmatpush.bf16.msra.mxu0 0
    %8314 = vmatpush.bf16.msra.mxu0 %v8305
    %8315 = vmatmul.bf16.gmra.mxu0 %v7192
    %v8316 = vpop.f32.mrf.mxu0
    %v8317 = vadd.f32 0.0, %v8316
    %v8318 = vpop.f32.mrf.mxu0
    %v8319 = vadd.f32 0.0, %v8318
    %8320 = vdwg.mxu0
    %v8323 = vunpack.c.l.b16 %v7897
    %v8324 = vunpack.c.l.b16 %v7898
    %v8325 = vpack.c.b16 %v8324, %v8323
    %8327 = vmatpush.bf16.msra.mxu0 0
    %8328 = vmatpush.bf16.msra.mxu0 0
    %8329 = vmatpush.bf16.msra.mxu0 0
    %8330 = vmatpush.bf16.msra.mxu0 0
    %8331 = vmatpush.bf16.msra.mxu0 0
    %8332 = vmatpush.bf16.msra.mxu0 0
    %8333 = vmatpush.bf16.msra.mxu0 0
    %8334 = vmatpush.bf16.msra.mxu0 %v8325
    %8335 = vmatmul.bf16.gmra.mxu0 %v7215
    %v8336 = vpop.f32.mrf.mxu0
    %v8337 = vadd.f32 0.0, %v8336
    %v8338 = vpop.f32.mrf.mxu0
    %v8339 = vadd.f32 0.0, %v8338
    %8340 = vdwg.mxu0
    %v8343 = vunpack.c.l.b16 %v7899
    %v8344 = vunpack.c.l.b16 %v7900
    %v8345 = vpack.c.b16 %v8344, %v8343
    %8347 = vmatpush.bf16.msra.mxu0 0
    %8348 = vmatpush.bf16.msra.mxu0 0
    %8349 = vmatpush.bf16.msra.mxu0 0
    %8350 = vmatpush.bf16.msra.mxu0 0
    %8351 = vmatpush.bf16.msra.mxu0 0
    %8352 = vmatpush.bf16.msra.mxu0 0
    %8353 = vmatpush.bf16.msra.mxu0 0
    %8354 = vmatpush.bf16.msra.mxu0 %v8345
    %8355 = vmatmul.bf16.gmra.mxu0 %v7238
    %v8356 = vpop.f32.mrf.mxu0
    %v8357 = vadd.f32 0.0, %v8356
    %v8358 = vpop.f32.mrf.mxu0
    %v8359 = vadd.f32 0.0, %v8358
    %8360 = vdwg.mxu0
    %v8363 = vunpack.c.l.b16 %v7901
    %v8364 = vunpack.c.l.b16 %v7902
    %v8365 = vpack.c.b16 %v8364, %v8363
    %8367 = vmatpush.bf16.msra.mxu0 0
    %8368 = vmatpush.bf16.msra.mxu0 0
    %8369 = vmatpush.bf16.msra.mxu0 0
    %8370 = vmatpush.bf16.msra.mxu0 0
    %8371 = vmatpush.bf16.msra.mxu0 0
    %8372 = vmatpush.bf16.msra.mxu0 0
    %8373 = vmatpush.bf16.msra.mxu0 0
    %8374 = vmatpush.bf16.msra.mxu0 %v8365
    %8375 = vmatmul.bf16.gmra.mxu0 %v7261
    %v8376 = vpop.f32.mrf.mxu0
    %v8377 = vadd.f32 0.0, %v8376
    %v8378 = vpop.f32.mrf.mxu0
    %v8379 = vadd.f32 0.0, %v8378
    %8380 = vdwg.mxu0
    %v8383 = vunpack.c.l.b16 %v7903
    %v8384 = vunpack.c.l.b16 %v7904
    %v8385 = vpack.c.b16 %v8384, %v8383
    %8387 = vmatpush.bf16.msra.mxu0 0
    %8388 = vmatpush.bf16.msra.mxu0 0
    %8389 = vmatpush.bf16.msra.mxu0 0
    %8390 = vmatpush.bf16.msra.mxu0 0
    %8391 = vmatpush.bf16.msra.mxu0 0
    %8392 = vmatpush.bf16.msra.mxu0 0
    %8393 = vmatpush.bf16.msra.mxu0 0
    %8394 = vmatpush.bf16.msra.mxu0 %v8385
    %8395 = vmatmul.bf16.gmra.mxu0 %v7284
    %v8396 = vpop.f32.mrf.mxu0
    %v8397 = vadd.f32 0.0, %v8396
    %v8398 = vpop.f32.mrf.mxu0
    %v8399 = vadd.f32 0.0, %v8398
    %8400 = vdwg.mxu0
    %v8403 = vunpack.c.l.b16 %v7905
    %v8404 = vunpack.c.l.b16 %v7906
    %v8405 = vpack.c.b16 %v8404, %v8403
    %8407 = vmatpush.bf16.msra.mxu0 0
    %8408 = vmatpush.bf16.msra.mxu0 0
    %8409 = vmatpush.bf16.msra.mxu0 0
    %8410 = vmatpush.bf16.msra.mxu0 0
    %8411 = vmatpush.bf16.msra.mxu0 0
    %8412 = vmatpush.bf16.msra.mxu0 0
    %8413 = vmatpush.bf16.msra.mxu0 0
    %8414 = vmatpush.bf16.msra.mxu0 %v8405
    %8415 = vmatmul.bf16.gmra.mxu0 %v7307
    %v8416 = vpop.f32.mrf.mxu0
    %v8417 = vadd.f32 0.0, %v8416
    %v8418 = vpop.f32.mrf.mxu0
    %v8419 = vadd.f32 0.0, %v8418
    %8420 = vdwg.mxu0
    %v8423 = vunpack.c.l.b16 %v7907
    %v8424 = vunpack.c.l.b16 %v7908
    %v8425 = vpack.c.b16 %v8424, %v8423
    %8427 = vmatpush.bf16.msra.mxu0 0
    %8428 = vmatpush.bf16.msra.mxu0 0
    %8429 = vmatpush.bf16.msra.mxu0 0
    %8430 = vmatpush.bf16.msra.mxu0 0
    %8431 = vmatpush.bf16.msra.mxu0 0
    %8432 = vmatpush.bf16.msra.mxu0 0
    %8433 = vmatpush.bf16.msra.mxu0 0
    %8434 = vmatpush.bf16.msra.mxu0 %v8425
    %8435 = vmatmul.bf16.gmra.mxu0 %v7330
    %v8436 = vpop.f32.mrf.mxu0
    %v8437 = vadd.f32 0.0, %v8436
    %v8438 = vpop.f32.mrf.mxu0
    %v8439 = vadd.f32 0.0, %v8438
    %8440 = vdwg.mxu0
    %v8443 = vunpack.c.l.b16 %v7909
    %v8444 = vunpack.c.l.b16 %v7910
    %v8445 = vpack.c.b16 %v8444, %v8443
    %8447 = vmatpush.bf16.msra.mxu0 0
    %8448 = vmatpush.bf16.msra.mxu0 0
    %8449 = vmatpush.bf16.msra.mxu0 0
    %8450 = vmatpush.bf16.msra.mxu0 0
    %8451 = vmatpush.bf16.msra.mxu0 0
    %8452 = vmatpush.bf16.msra.mxu0 0
    %8453 = vmatpush.bf16.msra.mxu0 0
    %8454 = vmatpush.bf16.msra.mxu0 %v8445
    %8455 = vmatmul.bf16.gmra.mxu0 %v7353
    %v8456 = vpop.f32.mrf.mxu0
    %v8457 = vadd.f32 0.0, %v8456
    %v8458 = vpop.f32.mrf.mxu0
    %v8459 = vadd.f32 0.0, %v8458
    %8460 = vdwg.mxu0
    %v8463 = vunpack.c.l.b16 %v7911
    %v8464 = vunpack.c.l.b16 %v7912
    %v8465 = vpack.c.b16 %v8464, %v8463
    %8467 = vmatpush.bf16.msra.mxu0 0
    %8468 = vmatpush.bf16.msra.mxu0 0
    %8469 = vmatpush.bf16.msra.mxu0 0
    %8470 = vmatpush.bf16.msra.mxu0 0
    %8471 = vmatpush.bf16.msra.mxu0 0
    %8472 = vmatpush.bf16.msra.mxu0 0
    %8473 = vmatpush.bf16.msra.mxu0 0
    %8474 = vmatpush.bf16.msra.mxu0 %v8465
    %8475 = vmatmul.bf16.gmra.mxu0 %v7376
    %v8476 = vpop.f32.mrf.mxu0
    %v8477 = vadd.f32 0.0, %v8476
    %v8478 = vpop.f32.mrf.mxu0
    %v8479 = vadd.f32 0.0, %v8478
    %8480 = vdwg.mxu0
    %v8483 = vunpack.c.l.b16 %v7913
    %v8484 = vunpack.c.l.b16 %v7914
    %v8485 = vpack.c.b16 %v8484, %v8483
    %8487 = vmatpush.bf16.msra.mxu0 0
    %8488 = vmatpush.bf16.msra.mxu0 0
    %8489 = vmatpush.bf16.msra.mxu0 0
    %8490 = vmatpush.bf16.msra.mxu0 0
    %8491 = vmatpush.bf16.msra.mxu0 0
    %8492 = vmatpush.bf16.msra.mxu0 0
    %8493 = vmatpush.bf16.msra.mxu0 0
    %8494 = vmatpush.bf16.msra.mxu0 %v8485
    %8495 = vmatmul.bf16.gmra.mxu0 %v7399
    %v8496 = vpop.f32.mrf.mxu0
    %v8497 = vadd.f32 0.0, %v8496
    %v8498 = vpop.f32.mrf.mxu0
    %v8499 = vadd.f32 0.0, %v8498
    %8500 = vdwg.mxu0
    %v8503 = vunpack.c.l.b16 %v7915
    %v8504 = vunpack.c.l.b16 %v7916
    %v8505 = vpack.c.b16 %v8504, %v8503
    %8507 = vmatpush.bf16.msra.mxu0 0
    %8508 = vmatpush.bf16.msra.mxu0 0
    %8509 = vmatpush.bf16.msra.mxu0 0
    %8510 = vmatpush.bf16.msra.mxu0 0
    %8511 = vmatpush.bf16.msra.mxu0 0
    %8512 = vmatpush.bf16.msra.mxu0 0
    %8513 = vmatpush.bf16.msra.mxu0 0
    %8514 = vmatpush.bf16.msra.mxu0 %v8505
    %8515 = vmatmul.bf16.gmra.mxu0 %v7422
    %v8516 = vpop.f32.mrf.mxu0
    %v8517 = vadd.f32 0.0, %v8516
    %v8518 = vpop.f32.mrf.mxu0
    %v8519 = vadd.f32 0.0, %v8518
    %8520 = vdwg.mxu0
    %v8523 = vunpack.c.l.b16 %v7917
    %v8524 = vunpack.c.l.b16 %v7918
    %v8525 = vpack.c.b16 %v8524, %v8523
    %8527 = vmatpush.bf16.msra.mxu0 0
    %8528 = vmatpush.bf16.msra.mxu0 0
    %8529 = vmatpush.bf16.msra.mxu0 0
    %8530 = vmatpush.bf16.msra.mxu0 0
    %8531 = vmatpush.bf16.msra.mxu0 0
    %8532 = vmatpush.bf16.msra.mxu0 0
    %8533 = vmatpush.bf16.msra.mxu0 0
    %8534 = vmatpush.bf16.msra.mxu0 %v8525
    %8535 = vmatmul.bf16.gmra.mxu0 %v7445
    %v8536 = vpop.f32.mrf.mxu0
    %v8537 = vadd.f32 0.0, %v8536
    %v8538 = vpop.f32.mrf.mxu0
    %v8539 = vadd.f32 0.0, %v8538
    %8540 = vdwg.mxu0
    %v8543 = vunpack.c.l.b16 %v7919
    %v8544 = vunpack.c.l.b16 %v7920
    %v8545 = vpack.c.b16 %v8544, %v8543
    %8547 = vmatpush.bf16.msra.mxu0 0
    %8548 = vmatpush.bf16.msra.mxu0 0
    %8549 = vmatpush.bf16.msra.mxu0 0
    %8550 = vmatpush.bf16.msra.mxu0 0
    %8551 = vmatpush.bf16.msra.mxu0 0
    %8552 = vmatpush.bf16.msra.mxu0 0
    %8553 = vmatpush.bf16.msra.mxu0 0
    %8554 = vmatpush.bf16.msra.mxu0 %v8545
    %8555 = vmatmul.bf16.gmra.mxu0 %v7468
    %v8556 = vpop.f32.mrf.mxu0
    %v8557 = vadd.f32 0.0, %v8556
    %v8558 = vpop.f32.mrf.mxu0
    %v8559 = vadd.f32 0.0, %v8558
    %8560 = vdwg.mxu0
    %v8561 = vadd.f32 %v7698, %v7937
    %v8562 = vadd.f32 %v7700, %v7939
    %v8563 = vadd.f32 %v7703, %v7957
    %v8564 = vadd.f32 %v7705, %v7959
    %v8565 = vadd.f32 %v7708, %v7977
    %v8566 = vadd.f32 %v7710, %v7979
    %v8567 = vadd.f32 %v7713, %v7997
    %v8568 = vadd.f32 %v7715, %v7999
    %v8569 = vadd.f32 %v7718, %v8017
    %v8570 = vadd.f32 %v7720, %v8019
    %v8571 = vadd.f32 %v7723, %v8037
    %v8572 = vadd.f32 %v7725, %v8039
    %v8573 = vadd.f32 %v7728, %v8057
    %v8574 = vadd.f32 %v7730, %v8059
    %v8575 = vadd.f32 %v7733, %v8077
    %v8576 = vadd.f32 %v7735, %v8079
    %v8577 = vadd.f32 %v7738, %v8097
    %v8578 = vadd.f32 %v7740, %v8099
    %v8579 = vadd.f32 %v7743, %v8117
    %v8580 = vadd.f32 %v7745, %v8119
    %v8581 = vadd.f32 %v7748, %v8137
    %v8582 = vadd.f32 %v7750, %v8139
    %v8583 = vadd.f32 %v7753, %v8157
    %v8584 = vadd.f32 %v7755, %v8159
    %v8585 = vadd.f32 %v7758, %v8177
    %v8586 = vadd.f32 %v7760, %v8179
    %v8587 = vadd.f32 %v7763, %v8197
    %v8588 = vadd.f32 %v7765, %v8199
    %v8589 = vadd.f32 %v7768, %v8217
    %v8590 = vadd.f32 %v7770, %v8219
    %v8591 = vadd.f32 %v7773, %v8237
    %v8592 = vadd.f32 %v7775, %v8239
    %v8593 = vadd.f32 %v7778, %v8257
    %v8594 = vadd.f32 %v7780, %v8259
    %v8595 = vadd.f32 %v7783, %v8277
    %v8596 = vadd.f32 %v7785, %v8279
    %v8597 = vadd.f32 %v7788, %v8297
    %v8598 = vadd.f32 %v7790, %v8299
    %v8599 = vadd.f32 %v7793, %v8317
    %v8600 = vadd.f32 %v7795, %v8319
    %v8601 = vadd.f32 %v7798, %v8337
    %v8602 = vadd.f32 %v7800, %v8339
    %v8603 = vadd.f32 %v7803, %v8357
    %v8604 = vadd.f32 %v7805, %v8359
    %v8605 = vadd.f32 %v7808, %v8377
    %v8606 = vadd.f32 %v7810, %v8379
    %v8607 = vadd.f32 %v7813, %v8397
    %v8608 = vadd.f32 %v7815, %v8399
    %v8609 = vadd.f32 %v7818, %v8417
    %v8610 = vadd.f32 %v7820, %v8419
    %v8611 = vadd.f32 %v7823, %v8437
    %v8612 = vadd.f32 %v7825, %v8439
    %v8613 = vadd.f32 %v7828, %v8457
    %v8614 = vadd.f32 %v7830, %v8459
    %v8615 = vadd.f32 %v7833, %v8477
    %v8616 = vadd.f32 %v7835, %v8479
    %v8617 = vadd.f32 %v7838, %v8497
    %v8618 = vadd.f32 %v7840, %v8499
    %v8619 = vadd.f32 %v7843, %v8517
    %v8620 = vadd.f32 %v7845, %v8519
    %v8621 = vadd.f32 %v7848, %v8537
    %v8622 = vadd.f32 %v7850, %v8539
    %v8623 = vadd.f32 %v7853, %v8557
    %v8624 = vadd.f32 %v7855, %v8559
    %v8625 = vpack.c.bf16 %v8562, %v8561
    %v8626 = vpack.c.bf16 %v8564, %v8563
    %v8627 = vpack.c.bf16 %v8566, %v8565
    %v8628 = vpack.c.bf16 %v8568, %v8567
    %v8629 = vpack.c.bf16 %v8570, %v8569
    %v8630 = vpack.c.bf16 %v8572, %v8571
    %v8631 = vpack.c.bf16 %v8574, %v8573
    %v8632 = vpack.c.bf16 %v8576, %v8575
    %v8633 = vpack.c.bf16 %v8578, %v8577
    %v8634 = vpack.c.bf16 %v8580, %v8579
    %v8635 = vpack.c.bf16 %v8582, %v8581
    %v8636 = vpack.c.bf16 %v8584, %v8583
    %v8637 = vpack.c.bf16 %v8586, %v8585
    %v8638 = vpack.c.bf16 %v8588, %v8587
    %v8639 = vpack.c.bf16 %v8590, %v8589
    %v8640 = vpack.c.bf16 %v8592, %v8591
    %v8641 = vpack.c.bf16 %v8594, %v8593
    %v8642 = vpack.c.bf16 %v8596, %v8595
    %v8643 = vpack.c.bf16 %v8598, %v8597
    %v8644 = vpack.c.bf16 %v8600, %v8599
    %v8645 = vpack.c.bf16 %v8602, %v8601
    %v8646 = vpack.c.bf16 %v8604, %v8603
    %v8647 = vpack.c.bf16 %v8606, %v8605
    %v8648 = vpack.c.bf16 %v8608, %v8607
    %v8649 = vpack.c.bf16 %v8610, %v8609
    %v8650 = vpack.c.bf16 %v8612, %v8611
    %v8651 = vpack.c.bf16 %v8614, %v8613
    %v8652 = vpack.c.bf16 %v8616, %v8615
    %v8653 = vpack.c.bf16 %v8618, %v8617
    %v8654 = vpack.c.bf16 %v8620, %v8619
    %v8655 = vpack.c.bf16 %v8622, %v8621
    %v8656 = vpack.c.bf16 %v8624, %v8623
    %v8657 = vld [vmem:[%s8] sm:$0xf]
    %v8658 = vld [vmem:[%s8 + $0x4] sm:$0xf]
    %v8659 = vld [vmem:[%s9] sm:$0x1]
    %v8661 = vperm.slane %v8659, 0
    %v8665 = vunpack.c.l.b16 %v8657
    %v8666 = vunpack.c.l.b16 %v8658
    %v8667 = vpack.c.b16 %v8666, %v8665
    %v8670 = vsel %vm3666, %v8625, 0
    %v8673 = vsel %vm3666, %v8626, 0
    %v8676 = vsel %vm3666, %v8627, 0
    %v8679 = vsel %vm3666, %v8628, 0
    %v8682 = vsel %vm3666, %v8629, 0
    %v8685 = vsel %vm3666, %v8630, 0
    %v8688 = vsel %vm3666, %v8631, 0
    %v8691 = vsel %vm3666, %v8632, 0
    %v8694 = vsel %vm3666, %v8633, 0
    %v8697 = vsel %vm3666, %v8634, 0
    %v8700 = vsel %vm3666, %v8635, 0
    %v8703 = vsel %vm3666, %v8636, 0
    %v8706 = vsel %vm3666, %v8637, 0
    %v8709 = vsel %vm3666, %v8638, 0
    %v8712 = vsel %vm3666, %v8639, 0
    %v8715 = vsel %vm3666, %v8640, 0
    %v8718 = vsel %vm3666, %v8641, 0
    %v8721 = vsel %vm3666, %v8642, 0
    %v8724 = vsel %vm3666, %v8643, 0
    %v8727 = vsel %vm3666, %v8644, 0
    %v8730 = vsel %vm3666, %v8645, 0
    %v8733 = vsel %vm3666, %v8646, 0
    %v8736 = vsel %vm3666, %v8647, 0
    %v8739 = vsel %vm3666, %v8648, 0
    %v8742 = vsel %vm3666, %v8649, 0
    %v8745 = vsel %vm3666, %v8650, 0
    %v8748 = vsel %vm3666, %v8651, 0
    %v8751 = vsel %vm3666, %v8652, 0
    %v8754 = vsel %vm3666, %v8653, 0
    %v8757 = vsel %vm3666, %v8654, 0
    %v8760 = vsel %vm3666, %v8655, 0
    %v8763 = vsel %vm3666, %v8656, 0
    %8765 = vmatpush.bf16.msra.mxu0 0
    %8766 = vmatpush.bf16.msra.mxu0 0
    %8767 = vmatpush.bf16.msra.mxu0 0
    %8768 = vmatpush.bf16.msra.mxu0 0
    %8769 = vmatpush.bf16.msra.mxu0 0
    %8770 = vmatpush.bf16.msra.mxu0 0
    %8771 = vmatpush.bf16.msra.mxu0 0
    %8772 = vmatpush.bf16.msra.mxu0 %v8667
    %8773 = vmatmul.bf16.gmra.mxu0 %v8670
    %v8774 = vpop.f32.mrf.mxu0
    %v8775 = vadd.f32 %v8661, %v8774
    %v8776 = vpop.f32.mrf.mxu0
    %v8777 = vadd.f32 %v8661, %v8776
    %8778 = vmatmul.bf16.gmra.mxu0 %v8673
    %v8779 = vpop.f32.mrf.mxu0
    %v8780 = vadd.f32 %v8661, %v8779
    %v8781 = vpop.f32.mrf.mxu0
    %v8782 = vadd.f32 %v8661, %v8781
    %8783 = vmatmul.bf16.gmra.mxu0 %v8676
    %v8784 = vpop.f32.mrf.mxu0
    %v8785 = vadd.f32 %v8661, %v8784
    %v8786 = vpop.f32.mrf.mxu0
    %v8787 = vadd.f32 %v8661, %v8786
    %8788 = vmatmul.bf16.gmra.mxu0 %v8679
    %v8789 = vpop.f32.mrf.mxu0
    %v8790 = vadd.f32 %v8661, %v8789
    %v8791 = vpop.f32.mrf.mxu0
    %v8792 = vadd.f32 %v8661, %v8791
    %8793 = vmatmul.bf16.gmra.mxu0 %v8682
    %v8794 = vpop.f32.mrf.mxu0
    %v8795 = vadd.f32 %v8661, %v8794
    %v8796 = vpop.f32.mrf.mxu0
    %v8797 = vadd.f32 %v8661, %v8796
    %8798 = vmatmul.bf16.gmra.mxu0 %v8685
    %v8799 = vpop.f32.mrf.mxu0
    %v8800 = vadd.f32 %v8661, %v8799
    %v8801 = vpop.f32.mrf.mxu0
    %v8802 = vadd.f32 %v8661, %v8801
    %8803 = vmatmul.bf16.gmra.mxu0 %v8688
    %v8804 = vpop.f32.mrf.mxu0
    %v8805 = vadd.f32 %v8661, %v8804
    %v8806 = vpop.f32.mrf.mxu0
    %v8807 = vadd.f32 %v8661, %v8806
    %8808 = vmatmul.bf16.gmra.mxu0 %v8691
    %v8809 = vpop.f32.mrf.mxu0
    %v8810 = vadd.f32 %v8661, %v8809
    %v8811 = vpop.f32.mrf.mxu0
    %v8812 = vadd.f32 %v8661, %v8811
    %8813 = vmatmul.bf16.gmra.mxu0 %v8694
    %v8814 = vpop.f32.mrf.mxu0
    %v8815 = vadd.f32 %v8661, %v8814
    %v8816 = vpop.f32.mrf.mxu0
    %v8817 = vadd.f32 %v8661, %v8816
    %8818 = vmatmul.bf16.gmra.mxu0 %v8697
    %v8819 = vpop.f32.mrf.mxu0
    %v8820 = vadd.f32 %v8661, %v8819
    %v8821 = vpop.f32.mrf.mxu0
    %v8822 = vadd.f32 %v8661, %v8821
    %8823 = vmatmul.bf16.gmra.mxu0 %v8700
    %v8824 = vpop.f32.mrf.mxu0
    %v8825 = vadd.f32 %v8661, %v8824
    %v8826 = vpop.f32.mrf.mxu0
    %v8827 = vadd.f32 %v8661, %v8826
    %8828 = vmatmul.bf16.gmra.mxu0 %v8703
    %v8829 = vpop.f32.mrf.mxu0
    %v8830 = vadd.f32 %v8661, %v8829
    %v8831 = vpop.f32.mrf.mxu0
    %v8832 = vadd.f32 %v8661, %v8831
    %8833 = vmatmul.bf16.gmra.mxu0 %v8706
    %v8834 = vpop.f32.mrf.mxu0
    %v8835 = vadd.f32 %v8661, %v8834
    %v8836 = vpop.f32.mrf.mxu0
    %v8837 = vadd.f32 %v8661, %v8836
    %8838 = vmatmul.bf16.gmra.mxu0 %v8709
    %v8839 = vpop.f32.mrf.mxu0
    %v8840 = vadd.f32 %v8661, %v8839
    %v8841 = vpop.f32.mrf.mxu0
    %v8842 = vadd.f32 %v8661, %v8841
    %8843 = vmatmul.bf16.gmra.mxu0 %v8712
    %v8844 = vpop.f32.mrf.mxu0
    %v8845 = vadd.f32 %v8661, %v8844
    %v8846 = vpop.f32.mrf.mxu0
    %v8847 = vadd.f32 %v8661, %v8846
    %8848 = vmatmul.bf16.gmra.mxu0 %v8715
    %v8849 = vpop.f32.mrf.mxu0
    %v8850 = vadd.f32 %v8661, %v8849
    %v8851 = vpop.f32.mrf.mxu0
    %v8852 = vadd.f32 %v8661, %v8851
    %8853 = vmatmul.bf16.gmra.mxu0 %v8718
    %v8854 = vpop.f32.mrf.mxu0
    %v8855 = vadd.f32 %v8661, %v8854
    %v8856 = vpop.f32.mrf.mxu0
    %v8857 = vadd.f32 %v8661, %v8856
    %8858 = vmatmul.bf16.gmra.mxu0 %v8721
    %v8859 = vpop.f32.mrf.mxu0
    %v8860 = vadd.f32 %v8661, %v8859
    %v8861 = vpop.f32.mrf.mxu0
    %v8862 = vadd.f32 %v8661, %v8861
    %8863 = vmatmul.bf16.gmra.mxu0 %v8724
    %v8864 = vpop.f32.mrf.mxu0
    %v8865 = vadd.f32 %v8661, %v8864
    %v8866 = vpop.f32.mrf.mxu0
    %v8867 = vadd.f32 %v8661, %v8866
    %8868 = vmatmul.bf16.gmra.mxu0 %v8727
    %v8869 = vpop.f32.mrf.mxu0
    %v8870 = vadd.f32 %v8661, %v8869
    %v8871 = vpop.f32.mrf.mxu0
    %v8872 = vadd.f32 %v8661, %v8871
    %8873 = vmatmul.bf16.gmra.mxu0 %v8730
    %v8874 = vpop.f32.mrf.mxu0
    %v8875 = vadd.f32 %v8661, %v8874
    %v8876 = vpop.f32.mrf.mxu0
    %v8877 = vadd.f32 %v8661, %v8876
    %8878 = vmatmul.bf16.gmra.mxu0 %v8733
    %v8879 = vpop.f32.mrf.mxu0
    %v8880 = vadd.f32 %v8661, %v8879
    %v8881 = vpop.f32.mrf.mxu0
    %v8882 = vadd.f32 %v8661, %v8881
    %8883 = vmatmul.bf16.gmra.mxu0 %v8736
    %v8884 = vpop.f32.mrf.mxu0
    %v8885 = vadd.f32 %v8661, %v8884
    %v8886 = vpop.f32.mrf.mxu0
    %v8887 = vadd.f32 %v8661, %v8886
    %8888 = vmatmul.bf16.gmra.mxu0 %v8739
    %v8889 = vpop.f32.mrf.mxu0
    %v8890 = vadd.f32 %v8661, %v8889
    %v8891 = vpop.f32.mrf.mxu0
    %v8892 = vadd.f32 %v8661, %v8891
    %8893 = vmatmul.bf16.gmra.mxu0 %v8742
    %v8894 = vpop.f32.mrf.mxu0
    %v8895 = vadd.f32 %v8661, %v8894
    %v8896 = vpop.f32.mrf.mxu0
    %v8897 = vadd.f32 %v8661, %v8896
    %8898 = vmatmul.bf16.gmra.mxu0 %v8745
    %v8899 = vpop.f32.mrf.mxu0
    %v8900 = vadd.f32 %v8661, %v8899
    %v8901 = vpop.f32.mrf.mxu0
    %v8902 = vadd.f32 %v8661, %v8901
    %8903 = vmatmul.bf16.gmra.mxu0 %v8748
    %v8904 = vpop.f32.mrf.mxu0
    %v8905 = vadd.f32 %v8661, %v8904
    %v8906 = vpop.f32.mrf.mxu0
    %v8907 = vadd.f32 %v8661, %v8906
    %8908 = vmatmul.bf16.gmra.mxu0 %v8751
    %v8909 = vpop.f32.mrf.mxu0
    %v8910 = vadd.f32 %v8661, %v8909
    %v8911 = vpop.f32.mrf.mxu0
    %v8912 = vadd.f32 %v8661, %v8911
    %8913 = vmatmul.bf16.gmra.mxu0 %v8754
    %v8914 = vpop.f32.mrf.mxu0
    %v8915 = vadd.f32 %v8661, %v8914
    %v8916 = vpop.f32.mrf.mxu0
    %v8917 = vadd.f32 %v8661, %v8916
    %8918 = vmatmul.bf16.gmra.mxu0 %v8757
    %v8919 = vpop.f32.mrf.mxu0
    %v8920 = vadd.f32 %v8661, %v8919
    %v8921 = vpop.f32.mrf.mxu0
    %v8922 = vadd.f32 %v8661, %v8921
    %8923 = vmatmul.bf16.gmra.mxu0 %v8760
    %v8924 = vpop.f32.mrf.mxu0
    %v8925 = vadd.f32 %v8661, %v8924
    %v8926 = vpop.f32.mrf.mxu0
    %v8927 = vadd.f32 %v8661, %v8926
    %8928 = vmatmul.bf16.gmra.mxu0 %v8763
    %v8929 = vpop.f32.mrf.mxu0
    %v8930 = vadd.f32 %v8661, %v8929
    %v8931 = vpop.f32.mrf.mxu0
    %v8932 = vadd.f32 %v8661, %v8931
    %8933 = vdwg.mxu0
    %8998 = vrot.lane.b32.xlu0 %v7698, 112
    %v8999 = vpop.permute.xlu0 %8998
    %9000 = vrot.lane.b32.xlu0 %v7700, 112
    %v9001 = vpop.permute.xlu0 %9000
    %9002 = vrot.lane.b32.xlu0 %v7703, 112
    %v9003 = vpop.permute.xlu0 %9002
    %9004 = vrot.lane.b32.xlu0 %v7705, 112
    %v9005 = vpop.permute.xlu0 %9004
    %9006 = vrot.lane.b32.xlu0 %v7708, 112
    %v9007 = vpop.permute.xlu0 %9006
    %9008 = vrot.lane.b32.xlu0 %v7710, 112
    %v9009 = vpop.permute.xlu0 %9008
    %9010 = vrot.lane.b32.xlu0 %v7713, 112
    %v9011 = vpop.permute.xlu0 %9010
    %9012 = vrot.lane.b32.xlu0 %v7715, 112
    %v9013 = vpop.permute.xlu0 %9012
    %9014 = vrot.lane.b32.xlu0 %v7718, 112
    %v9015 = vpop.permute.xlu0 %9014
    %9016 = vrot.lane.b32.xlu0 %v7720, 112
    %v9017 = vpop.permute.xlu0 %9016
    %9018 = vrot.lane.b32.xlu0 %v7723, 112
    %v9019 = vpop.permute.xlu0 %9018
    %9020 = vrot.lane.b32.xlu0 %v7725, 112
    %v9021 = vpop.permute.xlu0 %9020
    %9022 = vrot.lane.b32.xlu0 %v7728, 112
    %v9023 = vpop.permute.xlu0 %9022
    %9024 = vrot.lane.b32.xlu0 %v7730, 112
    %v9025 = vpop.permute.xlu0 %9024
    %9026 = vrot.lane.b32.xlu0 %v7733, 112
    %v9027 = vpop.permute.xlu0 %9026
    %9028 = vrot.lane.b32.xlu0 %v7735, 112
    %v9029 = vpop.permute.xlu0 %9028
    %9030 = vrot.lane.b32.xlu0 %v7738, 112
    %v9031 = vpop.permute.xlu0 %9030
    %9032 = vrot.lane.b32.xlu0 %v7740, 112
    %v9033 = vpop.permute.xlu0 %9032
    %9034 = vrot.lane.b32.xlu0 %v7743, 112
    %v9035 = vpop.permute.xlu0 %9034
    %9036 = vrot.lane.b32.xlu0 %v7745, 112
    %v9037 = vpop.permute.xlu0 %9036
    %9038 = vrot.lane.b32.xlu0 %v7748, 112
    %v9039 = vpop.permute.xlu0 %9038
    %9040 = vrot.lane.b32.xlu0 %v7750, 112
    %v9041 = vpop.permute.xlu0 %9040
    %9042 = vrot.lane.b32.xlu0 %v7753, 112
    %v9043 = vpop.permute.xlu0 %9042
    %9044 = vrot.lane.b32.xlu0 %v7755, 112
    %v9045 = vpop.permute.xlu0 %9044
    %9046 = vrot.lane.b32.xlu0 %v7758, 112
    %v9047 = vpop.permute.xlu0 %9046
    %9048 = vrot.lane.b32.xlu0 %v7760, 112
    %v9049 = vpop.permute.xlu0 %9048
    %9050 = vrot.lane.b32.xlu0 %v7763, 112
    %v9051 = vpop.permute.xlu0 %9050
    %9052 = vrot.lane.b32.xlu0 %v7765, 112
    %v9053 = vpop.permute.xlu0 %9052
    %9054 = vrot.lane.b32.xlu0 %v7768, 112
    %v9055 = vpop.permute.xlu0 %9054
    %9056 = vrot.lane.b32.xlu0 %v7770, 112
    %v9057 = vpop.permute.xlu0 %9056
    %9058 = vrot.lane.b32.xlu0 %v7773, 112
    %v9059 = vpop.permute.xlu0 %9058
    %9060 = vrot.lane.b32.xlu0 %v7775, 112
    %v9061 = vpop.permute.xlu0 %9060
    %9062 = vrot.lane.b32.xlu0 %v7778, 112
    %v9063 = vpop.permute.xlu0 %9062
    %9064 = vrot.lane.b32.xlu0 %v7780, 112
    %v9065 = vpop.permute.xlu0 %9064
    %9066 = vrot.lane.b32.xlu0 %v7783, 112
    %v9067 = vpop.permute.xlu0 %9066
    %9068 = vrot.lane.b32.xlu0 %v7785, 112
    %v9069 = vpop.permute.xlu0 %9068
    %9070 = vrot.lane.b32.xlu0 %v7788, 112
    %v9071 = vpop.permute.xlu0 %9070
    %9072 = vrot.lane.b32.xlu0 %v7790, 112
    %v9073 = vpop.permute.xlu0 %9072
    %9074 = vrot.lane.b32.xlu0 %v7793, 112
    %v9075 = vpop.permute.xlu0 %9074
    %9076 = vrot.lane.b32.xlu0 %v7795, 112
    %v9077 = vpop.permute.xlu0 %9076
    %9078 = vrot.lane.b32.xlu0 %v7798, 112
    %v9079 = vpop.permute.xlu0 %9078
    %9080 = vrot.lane.b32.xlu0 %v7800, 112
    %v9081 = vpop.permute.xlu0 %9080
    %9082 = vrot.lane.b32.xlu0 %v7803, 112
    %v9083 = vpop.permute.xlu0 %9082
    %9084 = vrot.lane.b32.xlu0 %v7805, 112
    %v9085 = vpop.permute.xlu0 %9084
    %9086 = vrot.lane.b32.xlu0 %v7808, 112
    %v9087 = vpop.permute.xlu0 %9086
    %9088 = vrot.lane.b32.xlu0 %v7810, 112
    %v9089 = vpop.permute.xlu0 %9088
    %9090 = vrot.lane.b32.xlu0 %v7813, 112
    %v9091 = vpop.permute.xlu0 %9090
    %9092 = vrot.lane.b32.xlu0 %v7815, 112
    %v9093 = vpop.permute.xlu0 %9092
    %9094 = vrot.lane.b32.xlu0 %v7818, 112
    %v9095 = vpop.permute.xlu0 %9094
    %9096 = vrot.lane.b32.xlu0 %v7820, 112
    %v9097 = vpop.permute.xlu0 %9096
    %9098 = vrot.lane.b32.xlu0 %v7823, 112
    %v9099 = vpop.permute.xlu0 %9098
    %9100 = vrot.lane.b32.xlu0 %v7825, 112
    %v9101 = vpop.permute.xlu0 %9100
    %9102 = vrot.lane.b32.xlu0 %v7828, 112
    %v9103 = vpop.permute.xlu0 %9102
    %9104 = vrot.lane.b32.xlu0 %v7830, 112
    %v9105 = vpop.permute.xlu0 %9104
    %9106 = vrot.lane.b32.xlu0 %v7833, 112
    %v9107 = vpop.permute.xlu0 %9106
    %9108 = vrot.lane.b32.xlu0 %v7835, 112
    %v9109 = vpop.permute.xlu0 %9108
    %9110 = vrot.lane.b32.xlu0 %v7838, 112
    %v9111 = vpop.permute.xlu0 %9110
    %9112 = vrot.lane.b32.xlu0 %v7840, 112
    %v9113 = vpop.permute.xlu0 %9112
    %9114 = vrot.lane.b32.xlu0 %v7843, 112
    %v9115 = vpop.permute.xlu0 %9114
    %9116 = vrot.lane.b32.xlu0 %v7845, 112
    %v9117 = vpop.permute.xlu0 %9116
    %9118 = vrot.lane.b32.xlu0 %v7848, 112
    %v9119 = vpop.permute.xlu0 %9118
    %9120 = vrot.lane.b32.xlu0 %v7850, 112
    %v9121 = vpop.permute.xlu0 %9120
    %9122 = vrot.lane.b32.xlu0 %v7853, 112
    %v9123 = vpop.permute.xlu0 %9122
    %9124 = vrot.lane.b32.xlu0 %v7855, 112
    %v9125 = vpop.permute.xlu0 %9124
    %v9190 = vadd.f32 %v6684, %v8999
    %v9191 = vadd.f32 %v6685, %v9001
    %v9192 = vadd.f32 %v6686, %v9003
    %v9193 = vadd.f32 %v6687, %v9005
    %v9194 = vadd.f32 %v6688, %v9007
    %v9195 = vadd.f32 %v6689, %v9009
    %v9196 = vadd.f32 %v6690, %v9011
    %v9197 = vadd.f32 %v6691, %v9013
    %v9198 = vadd.f32 %v6692, %v9015
    %v9199 = vadd.f32 %v6693, %v9017
    %v9200 = vadd.f32 %v6694, %v9019
    %v9201 = vadd.f32 %v6695, %v9021
    %v9202 = vadd.f32 %v6696, %v9023
    %v9203 = vadd.f32 %v6697, %v9025
    %v9204 = vadd.f32 %v6698, %v9027
    %v9205 = vadd.f32 %v6699, %v9029
    %v9206 = vadd.f32 %v6700, %v9031
    %v9207 = vadd.f32 %v6701, %v9033
    %v9208 = vadd.f32 %v6702, %v9035
    %v9209 = vadd.f32 %v6703, %v9037
    %v9210 = vadd.f32 %v6704, %v9039
    %v9211 = vadd.f32 %v6705, %v9041
    %v9212 = vadd.f32 %v6706, %v9043
    %v9213 = vadd.f32 %v6707, %v9045
    %v9214 = vadd.f32 %v6708, %v9047
    %v9215 = vadd.f32 %v6709, %v9049
    %v9216 = vadd.f32 %v6710, %v9051
    %v9217 = vadd.f32 %v6711, %v9053
    %v9218 = vadd.f32 %v6712, %v9055
    %v9219 = vadd.f32 %v6713, %v9057
    %v9220 = vadd.f32 %v6714, %v9059
    %v9221 = vadd.f32 %v6715, %v9061
    %v9222 = vadd.f32 %v6716, %v9063
    %v9223 = vadd.f32 %v6717, %v9065
    %v9224 = vadd.f32 %v6718, %v9067
    %v9225 = vadd.f32 %v6719, %v9069
    %v9226 = vadd.f32 %v6720, %v9071
    %v9227 = vadd.f32 %v6721, %v9073
    %v9228 = vadd.f32 %v6722, %v9075
    %v9229 = vadd.f32 %v6723, %v9077
    %v9230 = vadd.f32 %v6724, %v9079
    %v9231 = vadd.f32 %v6725, %v9081
    %v9232 = vadd.f32 %v6726, %v9083
    %v9233 = vadd.f32 %v6727, %v9085
    %v9234 = vadd.f32 %v6728, %v9087
    %v9235 = vadd.f32 %v6729, %v9089
    %v9236 = vadd.f32 %v6730, %v9091
    %v9237 = vadd.f32 %v6731, %v9093
    %v9238 = vadd.f32 %v6732, %v9095
    %v9239 = vadd.f32 %v6733, %v9097
    %v9240 = vadd.f32 %v6734, %v9099
    %v9241 = vadd.f32 %v6735, %v9101
    %v9242 = vadd.f32 %v6736, %v9103
    %v9243 = vadd.f32 %v6737, %v9105
    %v9244 = vadd.f32 %v6738, %v9107
    %v9245 = vadd.f32 %v6739, %v9109
    %v9246 = vadd.f32 %v6740, %v9111
    %v9247 = vadd.f32 %v6741, %v9113
    %v9248 = vadd.f32 %v6742, %v9115
    %v9249 = vadd.f32 %v6743, %v9117
    %v9250 = vadd.f32 %v6744, %v9119
    %v9251 = vadd.f32 %v6745, %v9121
    %v9252 = vadd.f32 %v6746, %v9123
    %v9253 = vadd.f32 %v6747, %v9125
    %9318 = vrot.lane.b32.xlu0 %v8775, 120
    %v9319 = vpop.permute.xlu0 %9318
    %9320 = vrot.lane.b32.xlu0 %v8777, 120
    %v9321 = vpop.permute.xlu0 %9320
    %9322 = vrot.lane.b32.xlu0 %v8780, 120
    %v9323 = vpop.permute.xlu0 %9322
    %9324 = vrot.lane.b32.xlu0 %v8782, 120
    %v9325 = vpop.permute.xlu0 %9324
    %9326 = vrot.lane.b32.xlu0 %v8785, 120
    %v9327 = vpop.permute.xlu0 %9326
    %9328 = vrot.lane.b32.xlu0 %v8787, 120
    %v9329 = vpop.permute.xlu0 %9328
    %9330 = vrot.lane.b32.xlu0 %v8790, 120
    %v9331 = vpop.permute.xlu0 %9330
    %9332 = vrot.lane.b32.xlu0 %v8792, 120
    %v9333 = vpop.permute.xlu0 %9332
    %9334 = vrot.lane.b32.xlu0 %v8795, 120
    %v9335 = vpop.permute.xlu0 %9334
    %9336 = vrot.lane.b32.xlu0 %v8797, 120
    %v9337 = vpop.permute.xlu0 %9336
    %9338 = vrot.lane.b32.xlu0 %v8800, 120
    %v9339 = vpop.permute.xlu0 %9338
    %9340 = vrot.lane.b32.xlu0 %v8802, 120
    %v9341 = vpop.permute.xlu0 %9340
    %9342 = vrot.lane.b32.xlu0 %v8805, 120
    %v9343 = vpop.permute.xlu0 %9342
    %9344 = vrot.lane.b32.xlu0 %v8807, 120
    %v9345 = vpop.permute.xlu0 %9344
    %9346 = vrot.lane.b32.xlu0 %v8810, 120
    %v9347 = vpop.permute.xlu0 %9346
    %9348 = vrot.lane.b32.xlu0 %v8812, 120
    %v9349 = vpop.permute.xlu0 %9348
    %9350 = vrot.lane.b32.xlu0 %v8815, 120
    %v9351 = vpop.permute.xlu0 %9350
    %9352 = vrot.lane.b32.xlu0 %v8817, 120
    %v9353 = vpop.permute.xlu0 %9352
    %9354 = vrot.lane.b32.xlu0 %v8820, 120
    %v9355 = vpop.permute.xlu0 %9354
    %9356 = vrot.lane.b32.xlu0 %v8822, 120
    %v9357 = vpop.permute.xlu0 %9356
    %9358 = vrot.lane.b32.xlu0 %v8825, 120
    %v9359 = vpop.permute.xlu0 %9358
    %9360 = vrot.lane.b32.xlu0 %v8827, 120
    %v9361 = vpop.permute.xlu0 %9360
    %9362 = vrot.lane.b32.xlu0 %v8830, 120
    %v9363 = vpop.permute.xlu0 %9362
    %9364 = vrot.lane.b32.xlu0 %v8832, 120
    %v9365 = vpop.permute.xlu0 %9364
    %9366 = vrot.lane.b32.xlu0 %v8835, 120
    %v9367 = vpop.permute.xlu0 %9366
    %9368 = vrot.lane.b32.xlu0 %v8837, 120
    %v9369 = vpop.permute.xlu0 %9368
    %9370 = vrot.lane.b32.xlu0 %v8840, 120
    %v9371 = vpop.permute.xlu0 %9370
    %9372 = vrot.lane.b32.xlu0 %v8842, 120
    %v9373 = vpop.permute.xlu0 %9372
    %9374 = vrot.lane.b32.xlu0 %v8845, 120
    %v9375 = vpop.permute.xlu0 %9374
    %9376 = vrot.lane.b32.xlu0 %v8847, 120
    %v9377 = vpop.permute.xlu0 %9376
    %9378 = vrot.lane.b32.xlu0 %v8850, 120
    %v9379 = vpop.permute.xlu0 %9378
    %9380 = vrot.lane.b32.xlu0 %v8852, 120
    %v9381 = vpop.permute.xlu0 %9380
    %9382 = vrot.lane.b32.xlu0 %v8855, 120
    %v9383 = vpop.permute.xlu0 %9382
    %9384 = vrot.lane.b32.xlu0 %v8857, 120
    %v9385 = vpop.permute.xlu0 %9384
    %9386 = vrot.lane.b32.xlu0 %v8860, 120
    %v9387 = vpop.permute.xlu0 %9386
    %9388 = vrot.lane.b32.xlu0 %v8862, 120
    %v9389 = vpop.permute.xlu0 %9388
    %9390 = vrot.lane.b32.xlu0 %v8865, 120
    %v9391 = vpop.permute.xlu0 %9390
    %9392 = vrot.lane.b32.xlu0 %v8867, 120
    %v9393 = vpop.permute.xlu0 %9392
    %9394 = vrot.lane.b32.xlu0 %v8870, 120
    %v9395 = vpop.permute.xlu0 %9394
    %9396 = vrot.lane.b32.xlu0 %v8872, 120
    %v9397 = vpop.permute.xlu0 %9396
    %9398 = vrot.lane.b32.xlu0 %v8875, 120
    %v9399 = vpop.permute.xlu0 %9398
    %9400 = vrot.lane.b32.xlu0 %v8877, 120
    %v9401 = vpop.permute.xlu0 %9400
    %9402 = vrot.lane.b32.xlu0 %v8880, 120
    %v9403 = vpop.permute.xlu0 %9402
    %9404 = vrot.lane.b32.xlu0 %v8882, 120
    %v9405 = vpop.permute.xlu0 %9404
    %9406 = vrot.lane.b32.xlu0 %v8885, 120
    %v9407 = vpop.permute.xlu0 %9406
    %9408 = vrot.lane.b32.xlu0 %v8887, 120
    %v9409 = vpop.permute.xlu0 %9408
    %9410 = vrot.lane.b32.xlu0 %v8890, 120
    %v9411 = vpop.permute.xlu0 %9410
    %9412 = vrot.lane.b32.xlu0 %v8892, 120
    %v9413 = vpop.permute.xlu0 %9412
    %9414 = vrot.lane.b32.xlu0 %v8895, 120
    %v9415 = vpop.permute.xlu0 %9414
    %9416 = vrot.lane.b32.xlu0 %v8897, 120
    %v9417 = vpop.permute.xlu0 %9416
    %9418 = vrot.lane.b32.xlu0 %v8900, 120
    %v9419 = vpop.permute.xlu0 %9418
    %9420 = vrot.lane.b32.xlu0 %v8902, 120
    %v9421 = vpop.permute.xlu0 %9420
    %9422 = vrot.lane.b32.xlu0 %v8905, 120
    %v9423 = vpop.permute.xlu0 %9422
    %9424 = vrot.lane.b32.xlu0 %v8907, 120
    %v9425 = vpop.permute.xlu0 %9424
    %9426 = vrot.lane.b32.xlu0 %v8910, 120
    %v9427 = vpop.permute.xlu0 %9426
    %9428 = vrot.lane.b32.xlu0 %v8912, 120
    %v9429 = vpop.permute.xlu0 %9428
    %9430 = vrot.lane.b32.xlu0 %v8915, 120
    %v9431 = vpop.permute.xlu0 %9430
    %9432 = vrot.lane.b32.xlu0 %v8917, 120
    %v9433 = vpop.permute.xlu0 %9432
    %9434 = vrot.lane.b32.xlu0 %v8920, 120
    %v9435 = vpop.permute.xlu0 %9434
    %9436 = vrot.lane.b32.xlu0 %v8922, 120
    %v9437 = vpop.permute.xlu0 %9436
    %9438 = vrot.lane.b32.xlu0 %v8925, 120
    %v9439 = vpop.permute.xlu0 %9438
    %9440 = vrot.lane.b32.xlu0 %v8927, 120
    %v9441 = vpop.permute.xlu0 %9440
    %9442 = vrot.lane.b32.xlu0 %v8930, 120
    %v9443 = vpop.permute.xlu0 %9442
    %9444 = vrot.lane.b32.xlu0 %v8932, 120
    %v9445 = vpop.permute.xlu0 %9444
    %v9510 = vadd.f32 %v9190, %v9319
    %v9511 = vadd.f32 %v9191, %v9321
    %v9512 = vadd.f32 %v9192, %v9323
    %v9513 = vadd.f32 %v9193, %v9325
    %v9514 = vadd.f32 %v9194, %v9327
    %v9515 = vadd.f32 %v9195, %v9329
    %v9516 = vadd.f32 %v9196, %v9331
    %v9517 = vadd.f32 %v9197, %v9333
    %v9518 = vadd.f32 %v9198, %v9335
    %v9519 = vadd.f32 %v9199, %v9337
    %v9520 = vadd.f32 %v9200, %v9339
    %v9521 = vadd.f32 %v9201, %v9341
    %v9522 = vadd.f32 %v9202, %v9343
    %v9523 = vadd.f32 %v9203, %v9345
    %v9524 = vadd.f32 %v9204, %v9347
    %v9525 = vadd.f32 %v9205, %v9349
    %v9526 = vadd.f32 %v9206, %v9351
    %v9527 = vadd.f32 %v9207, %v9353
    %v9528 = vadd.f32 %v9208, %v9355
    %v9529 = vadd.f32 %v9209, %v9357
    %v9530 = vadd.f32 %v9210, %v9359
    %v9531 = vadd.f32 %v9211, %v9361
    %v9532 = vadd.f32 %v9212, %v9363
    %v9533 = vadd.f32 %v9213, %v9365
    %v9534 = vadd.f32 %v9214, %v9367
    %v9535 = vadd.f32 %v9215, %v9369
    %v9536 = vadd.f32 %v9216, %v9371
    %v9537 = vadd.f32 %v9217, %v9373
    %v9538 = vadd.f32 %v9218, %v9375
    %v9539 = vadd.f32 %v9219, %v9377
    %v9540 = vadd.f32 %v9220, %v9379
    %v9541 = vadd.f32 %v9221, %v9381
    %v9542 = vadd.f32 %v9222, %v9383
    %v9543 = vadd.f32 %v9223, %v9385
    %v9544 = vadd.f32 %v9224, %v9387
    %v9545 = vadd.f32 %v9225, %v9389
    %v9546 = vadd.f32 %v9226, %v9391
    %v9547 = vadd.f32 %v9227, %v9393
    %v9548 = vadd.f32 %v9228, %v9395
    %v9549 = vadd.f32 %v9229, %v9397
    %v9550 = vadd.f32 %v9230, %v9399
    %v9551 = vadd.f32 %v9231, %v9401
    %v9552 = vadd.f32 %v9232, %v9403
    %v9553 = vadd.f32 %v9233, %v9405
    %v9554 = vadd.f32 %v9234, %v9407
    %v9555 = vadd.f32 %v9235, %v9409
    %v9556 = vadd.f32 %v9236, %v9411
    %v9557 = vadd.f32 %v9237, %v9413
    %v9558 = vadd.f32 %v9238, %v9415
    %v9559 = vadd.f32 %v9239, %v9417
    %v9560 = vadd.f32 %v9240, %v9419
    %v9561 = vadd.f32 %v9241, %v9421
    %v9562 = vadd.f32 %v9242, %v9423
    %v9563 = vadd.f32 %v9243, %v9425
    %v9564 = vadd.f32 %v9244, %v9427
    %v9565 = vadd.f32 %v9245, %v9429
    %v9566 = vadd.f32 %v9246, %v9431
    %v9567 = vadd.f32 %v9247, %v9433
    %v9568 = vadd.f32 %v9248, %v9435
    %v9569 = vadd.f32 %v9249, %v9437
    %v9570 = vadd.f32 %v9250, %v9439
    %v9571 = vadd.f32 %v9251, %v9441
    %v9572 = vadd.f32 %v9252, %v9443
    %v9573 = vadd.f32 %v9253, %v9445
    %9574 = vrot.lane.b32.xlu0 %v7698, 116
    %v9575 = vpop.permute.xlu0 %9574
    %9576 = vrot.lane.b32.xlu0 %v7700, 116
    %v9577 = vpop.permute.xlu0 %9576
    %9578 = vrot.lane.b32.xlu0 %v7703, 116
    %v9579 = vpop.permute.xlu0 %9578
    %9580 = vrot.lane.b32.xlu0 %v7705, 116
    %v9581 = vpop.permute.xlu0 %9580
    %9582 = vrot.lane.b32.xlu0 %v7708, 116
    %v9583 = vpop.permute.xlu0 %9582
    %9584 = vrot.lane.b32.xlu0 %v7710, 116
    %v9585 = vpop.permute.xlu0 %9584
    %9586 = vrot.lane.b32.xlu0 %v7713, 116
    %v9587 = vpop.permute.xlu0 %9586
    %9588 = vrot.lane.b32.xlu0 %v7715, 116
    %v9589 = vpop.permute.xlu0 %9588
    %9590 = vrot.lane.b32.xlu0 %v7718, 116
    %v9591 = vpop.permute.xlu0 %9590
    %9592 = vrot.lane.b32.xlu0 %v7720, 116
    %v9593 = vpop.permute.xlu0 %9592
    %9594 = vrot.lane.b32.xlu0 %v7723, 116
    %v9595 = vpop.permute.xlu0 %9594
    %9596 = vrot.lane.b32.xlu0 %v7725, 116
    %v9597 = vpop.permute.xlu0 %9596
    %9598 = vrot.lane.b32.xlu0 %v7728, 116
    %v9599 = vpop.permute.xlu0 %9598
    %9600 = vrot.lane.b32.xlu0 %v7730, 116
    %v9601 = vpop.permute.xlu0 %9600
    %9602 = vrot.lane.b32.xlu0 %v7733, 116
    %v9603 = vpop.permute.xlu0 %9602
    %9604 = vrot.lane.b32.xlu0 %v7735, 116
    %v9605 = vpop.permute.xlu0 %9604
    %9606 = vrot.lane.b32.xlu0 %v7738, 116
    %v9607 = vpop.permute.xlu0 %9606
    %9608 = vrot.lane.b32.xlu0 %v7740, 116
    %v9609 = vpop.permute.xlu0 %9608
    %9610 = vrot.lane.b32.xlu0 %v7743, 116
    %v9611 = vpop.permute.xlu0 %9610
    %9612 = vrot.lane.b32.xlu0 %v7745, 116
    %v9613 = vpop.permute.xlu0 %9612
    %9614 = vrot.lane.b32.xlu0 %v7748, 116
    %v9615 = vpop.permute.xlu0 %9614
    %9616 = vrot.lane.b32.xlu0 %v7750, 116
    %v9617 = vpop.permute.xlu0 %9616
    %9618 = vrot.lane.b32.xlu0 %v7753, 116
    %v9619 = vpop.permute.xlu0 %9618
    %9620 = vrot.lane.b32.xlu0 %v7755, 116
    %v9621 = vpop.permute.xlu0 %9620
    %9622 = vrot.lane.b32.xlu0 %v7758, 116
    %v9623 = vpop.permute.xlu0 %9622
    %9624 = vrot.lane.b32.xlu0 %v7760, 116
    %v9625 = vpop.permute.xlu0 %9624
    %9626 = vrot.lane.b32.xlu0 %v7763, 116
    %v9627 = vpop.permute.xlu0 %9626
    %9628 = vrot.lane.b32.xlu0 %v7765, 116
    %v9629 = vpop.permute.xlu0 %9628
    %9630 = vrot.lane.b32.xlu0 %v7768, 116
    %v9631 = vpop.permute.xlu0 %9630
    %9632 = vrot.lane.b32.xlu0 %v7770, 116
    %v9633 = vpop.permute.xlu0 %9632
    %9634 = vrot.lane.b32.xlu0 %v7773, 116
    %v9635 = vpop.permute.xlu0 %9634
    %9636 = vrot.lane.b32.xlu0 %v7775, 116
    %v9637 = vpop.permute.xlu0 %9636
    %9638 = vrot.lane.b32.xlu0 %v7778, 116
    %v9639 = vpop.permute.xlu0 %9638
    %9640 = vrot.lane.b32.xlu0 %v7780, 116
    %v9641 = vpop.permute.xlu0 %9640
    %9642 = vrot.lane.b32.xlu0 %v7783, 116
    %v9643 = vpop.permute.xlu0 %9642
    %9644 = vrot.lane.b32.xlu0 %v7785, 116
    %v9645 = vpop.permute.xlu0 %9644
    %9646 = vrot.lane.b32.xlu0 %v7788, 116
    %v9647 = vpop.permute.xlu0 %9646
    %9648 = vrot.lane.b32.xlu0 %v7790, 116
    %v9649 = vpop.permute.xlu0 %9648
    %9650 = vrot.lane.b32.xlu0 %v7793, 116
    %v9651 = vpop.permute.xlu0 %9650
    %9652 = vrot.lane.b32.xlu0 %v7795, 116
    %v9653 = vpop.permute.xlu0 %9652
    %9654 = vrot.lane.b32.xlu0 %v7798, 116
    %v9655 = vpop.permute.xlu0 %9654
    %9656 = vrot.lane.b32.xlu0 %v7800, 116
    %v9657 = vpop.permute.xlu0 %9656
    %9658 = vrot.lane.b32.xlu0 %v7803, 116
    %v9659 = vpop.permute.xlu0 %9658
    %9660 = vrot.lane.b32.xlu0 %v7805, 116
    %v9661 = vpop.permute.xlu0 %9660
    %9662 = vrot.lane.b32.xlu0 %v7808, 116
    %v9663 = vpop.permute.xlu0 %9662
    %9664 = vrot.lane.b32.xlu0 %v7810, 116
    %v9665 = vpop.permute.xlu0 %9664
    %9666 = vrot.lane.b32.xlu0 %v7813, 116
    %v9667 = vpop.permute.xlu0 %9666
    %9668 = vrot.lane.b32.xlu0 %v7815, 116
    %v9669 = vpop.permute.xlu0 %9668
    %9670 = vrot.lane.b32.xlu0 %v7818, 116
    %v9671 = vpop.permute.xlu0 %9670
    %9672 = vrot.lane.b32.xlu0 %v7820, 116
    %v9673 = vpop.permute.xlu0 %9672
    %9674 = vrot.lane.b32.xlu0 %v7823, 116
    %v9675 = vpop.permute.xlu0 %9674
    %9676 = vrot.lane.b32.xlu0 %v7825, 116
    %v9677 = vpop.permute.xlu0 %9676
    %9678 = vrot.lane.b32.xlu0 %v7828, 116
    %v9679 = vpop.permute.xlu0 %9678
    %9680 = vrot.lane.b32.xlu0 %v7830, 116
    %v9681 = vpop.permute.xlu0 %9680
    %9682 = vrot.lane.b32.xlu0 %v7833, 116
    %v9683 = vpop.permute.xlu0 %9682
    %9684 = vrot.lane.b32.xlu0 %v7835, 116
    %v9685 = vpop.permute.xlu0 %9684
    %9686 = vrot.lane.b32.xlu0 %v7838, 116
    %v9687 = vpop.permute.xlu0 %9686
    %9688 = vrot.lane.b32.xlu0 %v7840, 116
    %v9689 = vpop.permute.xlu0 %9688
    %9690 = vrot.lane.b32.xlu0 %v7843, 116
    %v9691 = vpop.permute.xlu0 %9690
    %9692 = vrot.lane.b32.xlu0 %v7845, 116
    %v9693 = vpop.permute.xlu0 %9692
    %9694 = vrot.lane.b32.xlu0 %v7848, 116
    %v9695 = vpop.permute.xlu0 %9694
    %9696 = vrot.lane.b32.xlu0 %v7850, 116
    %v9697 = vpop.permute.xlu0 %9696
    %9698 = vrot.lane.b32.xlu0 %v7853, 116
    %v9699 = vpop.permute.xlu0 %9698
    %9700 = vrot.lane.b32.xlu0 %v7855, 116
    %v9701 = vpop.permute.xlu0 %9700
    %vm9766 = vcmask 31744
    %v9767 = vsel %vm9766, %v6684, %v9575
    %v9768 = vsel %vm9766, %v6685, %v9577
    %v9769 = vsel %vm9766, %v6686, %v9579
    %v9770 = vsel %vm9766, %v6687, %v9581
    %v9771 = vsel %vm9766, %v6688, %v9583
    %v9772 = vsel %vm9766, %v6689, %v9585
    %v9773 = vsel %vm9766, %v6690, %v9587
    %v9774 = vsel %vm9766, %v6691, %v9589
    %v9775 = vsel %vm9766, %v6692, %v9591
    %v9776 = vsel %vm9766, %v6693, %v9593
    %v9777 = vsel %vm9766, %v6694, %v9595
    %v9778 = vsel %vm9766, %v6695, %v9597
    %v9779 = vsel %vm9766, %v6696, %v9599
    %v9780 = vsel %vm9766, %v6697, %v9601
    %v9781 = vsel %vm9766, %v6698, %v9603
    %v9782 = vsel %vm9766, %v6699, %v9605
    %v9783 = vsel %vm9766, %v6700, %v9607
    %v9784 = vsel %vm9766, %v6701, %v9609
    %v9785 = vsel %vm9766, %v6702, %v9611
    %v9786 = vsel %vm9766, %v6703, %v9613
    %v9787 = vsel %vm9766, %v6704, %v9615
    %v9788 = vsel %vm9766, %v6705, %v9617
    %v9789 = vsel %vm9766, %v6706, %v9619
    %v9790 = vsel %vm9766, %v6707, %v9621
    %v9791 = vsel %vm9766, %v6708, %v9623
    %v9792 = vsel %vm9766, %v6709, %v9625
    %v9793 = vsel %vm9766, %v6710, %v9627
    %v9794 = vsel %vm9766, %v6711, %v9629
    %v9795 = vsel %vm9766, %v6712, %v9631
    %v9796 = vsel %vm9766, %v6713, %v9633
    %v9797 = vsel %vm9766, %v6714, %v9635
    %v9798 = vsel %vm9766, %v6715, %v9637
    %v9799 = vsel %vm9766, %v6716, %v9639
    %v9800 = vsel %vm9766, %v6717, %v9641
    %v9801 = vsel %vm9766, %v6718, %v9643
    %v9802 = vsel %vm9766, %v6719, %v9645
    %v9803 = vsel %vm9766, %v6720, %v9647
    %v9804 = vsel %vm9766, %v6721, %v9649
    %v9805 = vsel %vm9766, %v6722, %v9651
    %v9806 = vsel %vm9766, %v6723, %v9653
    %v9807 = vsel %vm9766, %v6724, %v9655
    %v9808 = vsel %vm9766, %v6725, %v9657
    %v9809 = vsel %vm9766, %v6726, %v9659
    %v9810 = vsel %vm9766, %v6727, %v9661
    %v9811 = vsel %vm9766, %v6728, %v9663
    %v9812 = vsel %vm9766, %v6729, %v9665
    %v9813 = vsel %vm9766, %v6730, %v9667
    %v9814 = vsel %vm9766, %v6731, %v9669
    %v9815 = vsel %vm9766, %v6732, %v9671
    %v9816 = vsel %vm9766, %v6733, %v9673
    %v9817 = vsel %vm9766, %v6734, %v9675
    %v9818 = vsel %vm9766, %v6735, %v9677
    %v9819 = vsel %vm9766, %v6736, %v9679
    %v9820 = vsel %vm9766, %v6737, %v9681
    %v9821 = vsel %vm9766, %v6738, %v9683
    %v9822 = vsel %vm9766, %v6739, %v9685
    %v9823 = vsel %vm9766, %v6740, %v9687
    %v9824 = vsel %vm9766, %v6741, %v9689
    %v9825 = vsel %vm9766, %v6742, %v9691
    %v9826 = vsel %vm9766, %v6743, %v9693
    %v9827 = vsel %vm9766, %v6744, %v9695
    %v9828 = vsel %vm9766, %v6745, %v9697
    %v9829 = vsel %vm9766, %v6746, %v9699
    %v9830 = vsel %vm9766, %v6747, %v9701
    %vm9831 = vcmask 64512
    %v9832 = vsel %vm9831, %v9767, %v8775
    %v9833 = vsel %vm9831, %v9768, %v8777
    %v9834 = vsel %vm9831, %v9769, %v8780
    %v9835 = vsel %vm9831, %v9770, %v8782
    %v9836 = vsel %vm9831, %v9771, %v8785
    %v9837 = vsel %vm9831, %v9772, %v8787
    %v9838 = vsel %vm9831, %v9773, %v8790
    %v9839 = vsel %vm9831, %v9774, %v8792
    %v9840 = vsel %vm9831, %v9775, %v8795
    %v9841 = vsel %vm9831, %v9776, %v8797
    %v9842 = vsel %vm9831, %v9777, %v8800
    %v9843 = vsel %vm9831, %v9778, %v8802
    %v9844 = vsel %vm9831, %v9779, %v8805
    %v9845 = vsel %vm9831, %v9780, %v8807
    %v9846 = vsel %vm9831, %v9781, %v8810
    %v9847 = vsel %vm9831, %v9782, %v8812
    %v9848 = vsel %vm9831, %v9783, %v8815
    %v9849 = vsel %vm9831, %v9784, %v8817
    %v9850 = vsel %vm9831, %v9785, %v8820
    %v9851 = vsel %vm9831, %v9786, %v8822
    %v9852 = vsel %vm9831, %v9787, %v8825
    %v9853 = vsel %vm9831, %v9788, %v8827
    %v9854 = vsel %vm9831, %v9789, %v8830
    %v9855 = vsel %vm9831, %v9790, %v8832
    %v9856 = vsel %vm9831, %v9791, %v8835
    %v9857 = vsel %vm9831, %v9792, %v8837
    %v9858 = vsel %vm9831, %v9793, %v8840
    %v9859 = vsel %vm9831, %v9794, %v8842
    %v9860 = vsel %vm9831, %v9795, %v8845
    %v9861 = vsel %vm9831, %v9796, %v8847
    %v9862 = vsel %vm9831, %v9797, %v8850
    %v9863 = vsel %vm9831, %v9798, %v8852
    %v9864 = vsel %vm9831, %v9799, %v8855
    %v9865 = vsel %vm9831, %v9800, %v8857
    %v9866 = vsel %vm9831, %v9801, %v8860
    %v9867 = vsel %vm9831, %v9802, %v8862
    %v9868 = vsel %vm9831, %v9803, %v8865
    %v9869 = vsel %vm9831, %v9804, %v8867
    %v9870 = vsel %vm9831, %v9805, %v8870
    %v9871 = vsel %vm9831, %v9806, %v8872
    %v9872 = vsel %vm9831, %v9807, %v8875
    %v9873 = vsel %vm9831, %v9808, %v8877
    %v9874 = vsel %vm9831, %v9809, %v8880
    %v9875 = vsel %vm9831, %v9810, %v8882
    %v9876 = vsel %vm9831, %v9811, %v8885
    %v9877 = vsel %vm9831, %v9812, %v8887
    %v9878 = vsel %vm9831, %v9813, %v8890
    %v9879 = vsel %vm9831, %v9814, %v8892
    %v9880 = vsel %vm9831, %v9815, %v8895
    %v9881 = vsel %vm9831, %v9816, %v8897
    %v9882 = vsel %vm9831, %v9817, %v8900
    %v9883 = vsel %vm9831, %v9818, %v8902
    %v9884 = vsel %vm9831, %v9819, %v8905
    %v9885 = vsel %vm9831, %v9820, %v8907
    %v9886 = vsel %vm9831, %v9821, %v8910
    %v9887 = vsel %vm9831, %v9822, %v8912
    %v9888 = vsel %vm9831, %v9823, %v8915
    %v9889 = vsel %vm9831, %v9824, %v8917
    %v9890 = vsel %vm9831, %v9825, %v8920
    %v9891 = vsel %vm9831, %v9826, %v8922
    %v9892 = vsel %vm9831, %v9827, %v8925
    %v9893 = vsel %vm9831, %v9828, %v8927
    %v9894 = vsel %vm9831, %v9829, %v8930
    %v9895 = vsel %vm9831, %v9830, %v8932
    %vm9896 = vcmask 97280
    %v9897 = vsel %vm9896, %v9832, -inf
    %v9898 = vsel %vm9896, %v9833, -inf
    %v9899 = vmax.f32 %v9897, %v9898
    %v9900 = vrot.slane %v9899, 4
    %v9901 = vmax.f32 %v9899, %v9900
    %v9902 = vrot.slane %v9901, 2
    %v9903 = vmax.f32 %v9901, %v9902
    %v9904 = vrot.slane %v9903, 1
    %v9905 = vmax.f32 %v9903, %v9904
    %v9906 = vsel %vm9896, %v9834, -inf
    %v9907 = vsel %vm9896, %v9835, -inf
    %v9908 = vmax.f32 %v9906, %v9907
    %v9909 = vrot.slane %v9908, 4
    %v9910 = vmax.f32 %v9908, %v9909
    %v9911 = vrot.slane %v9910, 2
    %v9912 = vmax.f32 %v9910, %v9911
    %v9913 = vrot.slane %v9912, 1
    %v9914 = vmax.f32 %v9912, %v9913
    %v9915 = vsel %vm9896, %v9836, -inf
    %v9916 = vsel %vm9896, %v9837, -inf
    %v9917 = vmax.f32 %v9915, %v9916
    %v9918 = vrot.slane %v9917, 4
    %v9919 = vmax.f32 %v9917, %v9918
    %v9920 = vrot.slane %v9919, 2
    %v9921 = vmax.f32 %v9919, %v9920
    %v9922 = vrot.slane %v9921, 1
    %v9923 = vmax.f32 %v9921, %v9922
    %v9924 = vsel %vm9896, %v9838, -inf
    %v9925 = vsel %vm9896, %v9839, -inf
    %v9926 = vmax.f32 %v9924, %v9925
    %v9927 = vrot.slane %v9926, 4
    %v9928 = vmax.f32 %v9926, %v9927
    %v9929 = vrot.slane %v9928, 2
    %v9930 = vmax.f32 %v9928, %v9929
    %v9931 = vrot.slane %v9930, 1
    %v9932 = vmax.f32 %v9930, %v9931
    %v9933 = vsel %vm9896, %v9840, -inf
    %v9934 = vsel %vm9896, %v9841, -inf
    %v9935 = vmax.f32 %v9933, %v9934
    %v9936 = vrot.slane %v9935, 4
    %v9937 = vmax.f32 %v9935, %v9936
    %v9938 = vrot.slane %v9937, 2
    %v9939 = vmax.f32 %v9937, %v9938
    %v9940 = vrot.slane %v9939, 1
    %v9941 = vmax.f32 %v9939, %v9940
    %v9942 = vsel %vm9896, %v9842, -inf
    %v9943 = vsel %vm9896, %v9843, -inf
    %v9944 = vmax.f32 %v9942, %v9943
    %v9945 = vrot.slane %v9944, 4
    %v9946 = vmax.f32 %v9944, %v9945
    %v9947 = vrot.slane %v9946, 2
    %v9948 = vmax.f32 %v9946, %v9947
    %v9949 = vrot.slane %v9948, 1
    %v9950 = vmax.f32 %v9948, %v9949
    %v9951 = vsel %vm9896, %v9844, -inf
    %v9952 = vsel %vm9896, %v9845, -inf
    %v9953 = vmax.f32 %v9951, %v9952
    %v9954 = vrot.slane %v9953, 4
    %v9955 = vmax.f32 %v9953, %v9954
    %v9956 = vrot.slane %v9955, 2
    %v9957 = vmax.f32 %v9955, %v9956
    %v9958 = vrot.slane %v9957, 1
    %v9959 = vmax.f32 %v9957, %v9958
    %v9960 = vsel %vm9896, %v9846, -inf
    %v9961 = vsel %vm9896, %v9847, -inf
    %v9962 = vmax.f32 %v9960, %v9961
    %v9963 = vrot.slane %v9962, 4
    %v9964 = vmax.f32 %v9962, %v9963
    %v9965 = vrot.slane %v9964, 2
    %v9966 = vmax.f32 %v9964, %v9965
    %v9967 = vrot.slane %v9966, 1
    %v9968 = vmax.f32 %v9966, %v9967
    %v9969 = vsel %vm9896, %v9848, -inf
    %v9970 = vsel %vm9896, %v9849, -inf
    %v9971 = vmax.f32 %v9969, %v9970
    %v9972 = vrot.slane %v9971, 4
    %v9973 = vmax.f32 %v9971, %v9972
    %v9974 = vrot.slane %v9973, 2
    %v9975 = vmax.f32 %v9973, %v9974
    %v9976 = vrot.slane %v9975, 1
    %v9977 = vmax.f32 %v9975, %v9976
    %v9978 = vsel %vm9896, %v9850, -inf
    %v9979 = vsel %vm9896, %v9851, -inf
    %v9980 = vmax.f32 %v9978, %v9979
    %v9981 = vrot.slane %v9980, 4
    %v9982 = vmax.f32 %v9980, %v9981
    %v9983 = vrot.slane %v9982, 2
    %v9984 = vmax.f32 %v9982, %v9983
    %v9985 = vrot.slane %v9984, 1
    %v9986 = vmax.f32 %v9984, %v9985
    %v9987 = vsel %vm9896, %v9852, -inf
    %v9988 = vsel %vm9896, %v9853, -inf
    %v9989 = vmax.f32 %v9987, %v9988
    %v9990 = vrot.slane %v9989, 4
    %v9991 = vmax.f32 %v9989, %v9990
    %v9992 = vrot.slane %v9991, 2
    %v9993 = vmax.f32 %v9991, %v9992
    %v9994 = vrot.slane %v9993, 1
    %v9995 = vmax.f32 %v9993, %v9994
    %v9996 = vsel %vm9896, %v9854, -inf
    %v9997 = vsel %vm9896, %v9855, -inf
    %v9998 = vmax.f32 %v9996, %v9997
    %v9999 = vrot.slane %v9998, 4
    %v10000 = vmax.f32 %v9998, %v9999
    %v10001 = vrot.slane %v10000, 2
    %v10002 = vmax.f32 %v10000, %v10001
    %v10003 = vrot.slane %v10002, 1
    %v10004 = vmax.f32 %v10002, %v10003
    %v10005 = vsel %vm9896, %v9856, -inf
    %v10006 = vsel %vm9896, %v9857, -inf
    %v10007 = vmax.f32 %v10005, %v10006
    %v10008 = vrot.slane %v10007, 4
    %v10009 = vmax.f32 %v10007, %v10008
    %v10010 = vrot.slane %v10009, 2
    %v10011 = vmax.f32 %v10009, %v10010
    %v10012 = vrot.slane %v10011, 1
    %v10013 = vmax.f32 %v10011, %v10012
    %v10014 = vsel %vm9896, %v9858, -inf
    %v10015 = vsel %vm9896, %v9859, -inf
    %v10016 = vmax.f32 %v10014, %v10015
    %v10017 = vrot.slane %v10016, 4
    %v10018 = vmax.f32 %v10016, %v10017
    %v10019 = vrot.slane %v10018, 2
    %v10020 = vmax.f32 %v10018, %v10019
    %v10021 = vrot.slane %v10020, 1
    %v10022 = vmax.f32 %v10020, %v10021
    %v10023 = vsel %vm9896, %v9860, -inf
    %v10024 = vsel %vm9896, %v9861, -inf
    %v10025 = vmax.f32 %v10023, %v10024
    %v10026 = vrot.slane %v10025, 4
    %v10027 = vmax.f32 %v10025, %v10026
    %v10028 = vrot.slane %v10027, 2
    %v10029 = vmax.f32 %v10027, %v10028
    %v10030 = vrot.slane %v10029, 1
    %v10031 = vmax.f32 %v10029, %v10030
    %v10032 = vsel %vm9896, %v9862, -inf
    %v10033 = vsel %vm9896, %v9863, -inf
    %v10034 = vmax.f32 %v10032, %v10033
    %v10035 = vrot.slane %v10034, 4
    %v10036 = vmax.f32 %v10034, %v10035
    %v10037 = vrot.slane %v10036, 2
    %v10038 = vmax.f32 %v10036, %v10037
    %v10039 = vrot.slane %v10038, 1
    %v10040 = vmax.f32 %v10038, %v10039
    %v10041 = vsel %vm9896, %v9864, -inf
    %v10042 = vsel %vm9896, %v9865, -inf
    %v10043 = vmax.f32 %v10041, %v10042
    %v10044 = vrot.slane %v10043, 4
    %v10045 = vmax.f32 %v10043, %v10044
    %v10046 = vrot.slane %v10045, 2
    %v10047 = vmax.f32 %v10045, %v10046
    %v10048 = vrot.slane %v10047, 1
    %v10049 = vmax.f32 %v10047, %v10048
    %v10050 = vsel %vm9896, %v9866, -inf
    %v10051 = vsel %vm9896, %v9867, -inf
    %v10052 = vmax.f32 %v10050, %v10051
    %v10053 = vrot.slane %v10052, 4
    %v10054 = vmax.f32 %v10052, %v10053
    %v10055 = vrot.slane %v10054, 2
    %v10056 = vmax.f32 %v10054, %v10055
    %v10057 = vrot.slane %v10056, 1
    %v10058 = vmax.f32 %v10056, %v10057
    %v10059 = vsel %vm9896, %v9868, -inf
    %v10060 = vsel %vm9896, %v9869, -inf
    %v10061 = vmax.f32 %v10059, %v10060
    %v10062 = vrot.slane %v10061, 4
    %v10063 = vmax.f32 %v10061, %v10062
    %v10064 = vrot.slane %v10063, 2
    %v10065 = vmax.f32 %v10063, %v10064
    %v10066 = vrot.slane %v10065, 1
    %v10067 = vmax.f32 %v10065, %v10066
    %v10068 = vsel %vm9896, %v9870, -inf
    %v10069 = vsel %vm9896, %v9871, -inf
    %v10070 = vmax.f32 %v10068, %v10069
    %v10071 = vrot.slane %v10070, 4
    %v10072 = vmax.f32 %v10070, %v10071
    %v10073 = vrot.slane %v10072, 2
    %v10074 = vmax.f32 %v10072, %v10073
    %v10075 = vrot.slane %v10074, 1
    %v10076 = vmax.f32 %v10074, %v10075
    %v10077 = vsel %vm9896, %v9872, -inf
    %v10078 = vsel %vm9896, %v9873, -inf
    %v10079 = vmax.f32 %v10077, %v10078
    %v10080 = vrot.slane %v10079, 4
    %v10081 = vmax.f32 %v10079, %v10080
    %v10082 = vrot.slane %v10081, 2
    %v10083 = vmax.f32 %v10081, %v10082
    %v10084 = vrot.slane %v10083, 1
    %v10085 = vmax.f32 %v10083, %v10084
    %v10086 = vsel %vm9896, %v9874, -inf
    %v10087 = vsel %vm9896, %v9875, -inf
    %v10088 = vmax.f32 %v10086, %v10087
    %v10089 = vrot.slane %v10088, 4
    %v10090 = vmax.f32 %v10088, %v10089
    %v10091 = vrot.slane %v10090, 2
    %v10092 = vmax.f32 %v10090, %v10091
    %v10093 = vrot.slane %v10092, 1
    %v10094 = vmax.f32 %v10092, %v10093
    %v10095 = vsel %vm9896, %v9876, -inf
    %v10096 = vsel %vm9896, %v9877, -inf
    %v10097 = vmax.f32 %v10095, %v10096
    %v10098 = vrot.slane %v10097, 4
    %v10099 = vmax.f32 %v10097, %v10098
    %v10100 = vrot.slane %v10099, 2
    %v10101 = vmax.f32 %v10099, %v10100
    %v10102 = vrot.slane %v10101, 1
    %v10103 = vmax.f32 %v10101, %v10102
    %v10104 = vsel %vm9896, %v9878, -inf
    %v10105 = vsel %vm9896, %v9879, -inf
    %v10106 = vmax.f32 %v10104, %v10105
    %v10107 = vrot.slane %v10106, 4
    %v10108 = vmax.f32 %v10106, %v10107
    %v10109 = vrot.slane %v10108, 2
    %v10110 = vmax.f32 %v10108, %v10109
    %v10111 = vrot.slane %v10110, 1
    %v10112 = vmax.f32 %v10110, %v10111
    %v10113 = vsel %vm9896, %v9880, -inf
    %v10114 = vsel %vm9896, %v9881, -inf
    %v10115 = vmax.f32 %v10113, %v10114
    %v10116 = vrot.slane %v10115, 4
    %v10117 = vmax.f32 %v10115, %v10116
    %v10118 = vrot.slane %v10117, 2
    %v10119 = vmax.f32 %v10117, %v10118
    %v10120 = vrot.slane %v10119, 1
    %v10121 = vmax.f32 %v10119, %v10120
    %v10122 = vsel %vm9896, %v9882, -inf
    %v10123 = vsel %vm9896, %v9883, -inf
    %v10124 = vmax.f32 %v10122, %v10123
    %v10125 = vrot.slane %v10124, 4
    %v10126 = vmax.f32 %v10124, %v10125
    %v10127 = vrot.slane %v10126, 2
    %v10128 = vmax.f32 %v10126, %v10127
    %v10129 = vrot.slane %v10128, 1
    %v10130 = vmax.f32 %v10128, %v10129
    %v10131 = vsel %vm9896, %v9884, -inf
    %v10132 = vsel %vm9896, %v9885, -inf
    %v10133 = vmax.f32 %v10131, %v10132
    %v10134 = vrot.slane %v10133, 4
    %v10135 = vmax.f32 %v10133, %v10134
    %v10136 = vrot.slane %v10135, 2
    %v10137 = vmax.f32 %v10135, %v10136
    %v10138 = vrot.slane %v10137, 1
    %v10139 = vmax.f32 %v10137, %v10138
    %v10140 = vsel %vm9896, %v9886, -inf
    %v10141 = vsel %vm9896, %v9887, -inf
    %v10142 = vmax.f32 %v10140, %v10141
    %v10143 = vrot.slane %v10142, 4
    %v10144 = vmax.f32 %v10142, %v10143
    %v10145 = vrot.slane %v10144, 2
    %v10146 = vmax.f32 %v10144, %v10145
    %v10147 = vrot.slane %v10146, 1
    %v10148 = vmax.f32 %v10146, %v10147
    %v10149 = vsel %vm9896, %v9888, -inf
    %v10150 = vsel %vm9896, %v9889, -inf
    %v10151 = vmax.f32 %v10149, %v10150
    %v10152 = vrot.slane %v10151, 4
    %v10153 = vmax.f32 %v10151, %v10152
    %v10154 = vrot.slane %v10153, 2
    %v10155 = vmax.f32 %v10153, %v10154
    %v10156 = vrot.slane %v10155, 1
    %v10157 = vmax.f32 %v10155, %v10156
    %v10158 = vsel %vm9896, %v9890, -inf
    %v10159 = vsel %vm9896, %v9891, -inf
    %v10160 = vmax.f32 %v10158, %v10159
    %v10161 = vrot.slane %v10160, 4
    %v10162 = vmax.f32 %v10160, %v10161
    %v10163 = vrot.slane %v10162, 2
    %v10164 = vmax.f32 %v10162, %v10163
    %v10165 = vrot.slane %v10164, 1
    %v10166 = vmax.f32 %v10164, %v10165
    %v10167 = vsel %vm9896, %v9892, -inf
    %v10168 = vsel %vm9896, %v9893, -inf
    %v10169 = vmax.f32 %v10167, %v10168
    %v10170 = vrot.slane %v10169, 4
    %v10171 = vmax.f32 %v10169, %v10170
    %v10172 = vrot.slane %v10171, 2
    %v10173 = vmax.f32 %v10171, %v10172
    %v10174 = vrot.slane %v10173, 1
    %v10175 = vmax.f32 %v10173, %v10174
    %v10176 = vsel %vm9896, %v9894, -inf
    %v10177 = vsel %vm9896, %v9895, -inf
    %v10178 = vmax.f32 %v10176, %v10177
    %v10179 = vrot.slane %v10178, 4
    %v10180 = vmax.f32 %v10178, %v10179
    %v10181 = vrot.slane %v10180, 2
    %v10182 = vmax.f32 %v10180, %v10181
    %v10183 = vrot.slane %v10182, 1
    %v10184 = vmax.f32 %v10182, %v10183
    %10217 = vrot.lane.b32.xlu0 %v9905, 124
    %v10218 = vpop.permute.xlu0 %10217
    %10219 = vrot.lane.b32.xlu0 %v9914, 124
    %v10220 = vpop.permute.xlu0 %10219
    %10221 = vrot.lane.b32.xlu0 %v9923, 124
    %v10222 = vpop.permute.xlu0 %10221
    %10223 = vrot.lane.b32.xlu0 %v9932, 124
    %v10224 = vpop.permute.xlu0 %10223
    %10225 = vrot.lane.b32.xlu0 %v9941, 124
    %v10226 = vpop.permute.xlu0 %10225
    %10227 = vrot.lane.b32.xlu0 %v9950, 124
    %v10228 = vpop.permute.xlu0 %10227
    %10229 = vrot.lane.b32.xlu0 %v9959, 124
    %v10230 = vpop.permute.xlu0 %10229
    %10231 = vrot.lane.b32.xlu0 %v9968, 124
    %v10232 = vpop.permute.xlu0 %10231
    %10233 = vrot.lane.b32.xlu0 %v9977, 124
    %v10234 = vpop.permute.xlu0 %10233
    %10235 = vrot.lane.b32.xlu0 %v9986, 124
    %v10236 = vpop.permute.xlu0 %10235
    %10237 = vrot.lane.b32.xlu0 %v9995, 124
    %v10238 = vpop.permute.xlu0 %10237
    %10239 = vrot.lane.b32.xlu0 %v10004, 124
    %v10240 = vpop.permute.xlu0 %10239
    %10241 = vrot.lane.b32.xlu0 %v10013, 124
    %v10242 = vpop.permute.xlu0 %10241
    %10243 = vrot.lane.b32.xlu0 %v10022, 124
    %v10244 = vpop.permute.xlu0 %10243
    %10245 = vrot.lane.b32.xlu0 %v10031, 124
    %v10246 = vpop.permute.xlu0 %10245
    %10247 = vrot.lane.b32.xlu0 %v10040, 124
    %v10248 = vpop.permute.xlu0 %10247
    %10249 = vrot.lane.b32.xlu0 %v10049, 124
    %v10250 = vpop.permute.xlu0 %10249
    %10251 = vrot.lane.b32.xlu0 %v10058, 124
    %v10252 = vpop.permute.xlu0 %10251
    %10253 = vrot.lane.b32.xlu0 %v10067, 124
    %v10254 = vpop.permute.xlu0 %10253
    %10255 = vrot.lane.b32.xlu0 %v10076, 124
    %v10256 = vpop.permute.xlu0 %10255
    %10257 = vrot.lane.b32.xlu0 %v10085, 124
    %v10258 = vpop.permute.xlu0 %10257
    %10259 = vrot.lane.b32.xlu0 %v10094, 124
    %v10260 = vpop.permute.xlu0 %10259
    %10261 = vrot.lane.b32.xlu0 %v10103, 124
    %v10262 = vpop.permute.xlu0 %10261
    %10263 = vrot.lane.b32.xlu0 %v10112, 124
    %v10264 = vpop.permute.xlu0 %10263
    %10265 = vrot.lane.b32.xlu0 %v10121, 124
    %v10266 = vpop.permute.xlu0 %10265
    %10267 = vrot.lane.b32.xlu0 %v10130, 124
    %v10268 = vpop.permute.xlu0 %10267
    %10269 = vrot.lane.b32.xlu0 %v10139, 124
    %v10270 = vpop.permute.xlu0 %10269
    %10271 = vrot.lane.b32.xlu0 %v10148, 124
    %v10272 = vpop.permute.xlu0 %10271
    %10273 = vrot.lane.b32.xlu0 %v10157, 124
    %v10274 = vpop.permute.xlu0 %10273
    %10275 = vrot.lane.b32.xlu0 %v10166, 124
    %v10276 = vpop.permute.xlu0 %10275
    %10277 = vrot.lane.b32.xlu0 %v10175, 124
    %v10278 = vpop.permute.xlu0 %10277
    %10279 = vrot.lane.b32.xlu0 %v10184, 124
    %v10280 = vpop.permute.xlu0 %10279
    %v10313 = vadd.f32 %v9905, %v10218
    %v10314 = vadd.f32 %v9914, %v10220
    %v10315 = vadd.f32 %v9923, %v10222
    %v10316 = vadd.f32 %v9932, %v10224
    %v10317 = vadd.f32 %v9941, %v10226
    %v10318 = vadd.f32 %v9950, %v10228
    %v10319 = vadd.f32 %v9959, %v10230
    %v10320 = vadd.f32 %v9968, %v10232
    %v10321 = vadd.f32 %v9977, %v10234
    %v10322 = vadd.f32 %v9986, %v10236
    %v10323 = vadd.f32 %v9995, %v10238
    %v10324 = vadd.f32 %v10004, %v10240
    %v10325 = vadd.f32 %v10013, %v10242
    %v10326 = vadd.f32 %v10022, %v10244
    %v10327 = vadd.f32 %v10031, %v10246
    %v10328 = vadd.f32 %v10040, %v10248
    %v10329 = vadd.f32 %v10049, %v10250
    %v10330 = vadd.f32 %v10058, %v10252
    %v10331 = vadd.f32 %v10067, %v10254
    %v10332 = vadd.f32 %v10076, %v10256
    %v10333 = vadd.f32 %v10085, %v10258
    %v10334 = vadd.f32 %v10094, %v10260
    %v10335 = vadd.f32 %v10103, %v10262
    %v10336 = vadd.f32 %v10112, %v10264
    %v10337 = vadd.f32 %v10121, %v10266
    %v10338 = vadd.f32 %v10130, %v10268
    %v10339 = vadd.f32 %v10139, %v10270
    %v10340 = vadd.f32 %v10148, %v10272
    %v10341 = vadd.f32 %v10157, %v10274
    %v10342 = vadd.f32 %v10166, %v10276
    %v10343 = vadd.f32 %v10175, %v10278
    %v10344 = vadd.f32 %v10184, %v10280
    %10345 = vrot.lane.b32.xlu0 %v9905, 120
    %v10346 = vpop.permute.xlu0 %10345
    %10347 = vrot.lane.b32.xlu0 %v9914, 120
    %v10348 = vpop.permute.xlu0 %10347
    %10349 = vrot.lane.b32.xlu0 %v9923, 120
    %v10350 = vpop.permute.xlu0 %10349
    %10351 = vrot.lane.b32.xlu0 %v9932, 120
    %v10352 = vpop.permute.xlu0 %10351
    %10353 = vrot.lane.b32.xlu0 %v9941, 120
    %v10354 = vpop.permute.xlu0 %10353
    %10355 = vrot.lane.b32.xlu0 %v9950, 120
    %v10356 = vpop.permute.xlu0 %10355
    %10357 = vrot.lane.b32.xlu0 %v9959, 120
    %v10358 = vpop.permute.xlu0 %10357
    %10359 = vrot.lane.b32.xlu0 %v9968, 120
    %v10360 = vpop.permute.xlu0 %10359
    %10361 = vrot.lane.b32.xlu0 %v9977, 120
    %v10362 = vpop.permute.xlu0 %10361
    %10363 = vrot.lane.b32.xlu0 %v9986, 120
    %v10364 = vpop.permute.xlu0 %10363
    %10365 = vrot.lane.b32.xlu0 %v9995, 120
    %v10366 = vpop.permute.xlu0 %10365
    %10367 = vrot.lane.b32.xlu0 %v10004, 120
    %v10368 = vpop.permute.xlu0 %10367
    %10369 = vrot.lane.b32.xlu0 %v10013, 120
    %v10370 = vpop.permute.xlu0 %10369
    %10371 = vrot.lane.b32.xlu0 %v10022, 120
    %v10372 = vpop.permute.xlu0 %10371
    %10373 = vrot.lane.b32.xlu0 %v10031, 120
    %v10374 = vpop.permute.xlu0 %10373
    %10375 = vrot.lane.b32.xlu0 %v10040, 120
    %v10376 = vpop.permute.xlu0 %10375
    %10377 = vrot.lane.b32.xlu0 %v10049, 120
    %v10378 = vpop.permute.xlu0 %10377
    %10379 = vrot.lane.b32.xlu0 %v10058, 120
    %v10380 = vpop.permute.xlu0 %10379
    %10381 = vrot.lane.b32.xlu0 %v10067, 120
    %v10382 = vpop.permute.xlu0 %10381
    %10383 = vrot.lane.b32.xlu0 %v10076, 120
    %v10384 = vpop.permute.xlu0 %10383
    %10385 = vrot.lane.b32.xlu0 %v10085, 120
    %v10386 = vpop.permute.xlu0 %10385
    %10387 = vrot.lane.b32.xlu0 %v10094, 120
    %v10388 = vpop.permute.xlu0 %10387
    %10389 = vrot.lane.b32.xlu0 %v10103, 120
    %v10390 = vpop.permute.xlu0 %10389
    %10391 = vrot.lane.b32.xlu0 %v10112, 120
    %v10392 = vpop.permute.xlu0 %10391
    %10393 = vrot.lane.b32.xlu0 %v10121, 120
    %v10394 = vpop.permute.xlu0 %10393
    %10395 = vrot.lane.b32.xlu0 %v10130, 120
    %v10396 = vpop.permute.xlu0 %10395
    %10397 = vrot.lane.b32.xlu0 %v10139, 120
    %v10398 = vpop.permute.xlu0 %10397
    %10399 = vrot.lane.b32.xlu0 %v10148, 120
    %v10400 = vpop.permute.xlu0 %10399
    %10401 = vrot.lane.b32.xlu0 %v10157, 120
    %v10402 = vpop.permute.xlu0 %10401
    %10403 = vrot.lane.b32.xlu0 %v10166, 120
    %v10404 = vpop.permute.xlu0 %10403
    %10405 = vrot.lane.b32.xlu0 %v10175, 120
    %v10406 = vpop.permute.xlu0 %10405
    %10407 = vrot.lane.b32.xlu0 %v10184, 120
    %v10408 = vpop.permute.xlu0 %10407
    %v10441 = vadd.f32 %v10313, %v10346
    %v10442 = vadd.f32 %v10314, %v10348
    %v10443 = vadd.f32 %v10315, %v10350
    %v10444 = vadd.f32 %v10316, %v10352
    %v10445 = vadd.f32 %v10317, %v10354
    %v10446 = vadd.f32 %v10318, %v10356
    %v10447 = vadd.f32 %v10319, %v10358
    %v10448 = vadd.f32 %v10320, %v10360
    %v10449 = vadd.f32 %v10321, %v10362
    %v10450 = vadd.f32 %v10322, %v10364
    %v10451 = vadd.f32 %v10323, %v10366
    %v10452 = vadd.f32 %v10324, %v10368
    %v10453 = vadd.f32 %v10325, %v10370
    %v10454 = vadd.f32 %v10326, %v10372
    %v10455 = vadd.f32 %v10327, %v10374
    %v10456 = vadd.f32 %v10328, %v10376
    %v10457 = vadd.f32 %v10329, %v10378
    %v10458 = vadd.f32 %v10330, %v10380
    %v10459 = vadd.f32 %v10331, %v10382
    %v10460 = vadd.f32 %v10332, %v10384
    %v10461 = vadd.f32 %v10333, %v10386
    %v10462 = vadd.f32 %v10334, %v10388
    %v10463 = vadd.f32 %v10335, %v10390
    %v10464 = vadd.f32 %v10336, %v10392
    %v10465 = vadd.f32 %v10337, %v10394
    %v10466 = vadd.f32 %v10338, %v10396
    %v10467 = vadd.f32 %v10339, %v10398
    %v10468 = vadd.f32 %v10340, %v10400
    %v10469 = vadd.f32 %v10341, %v10402
    %v10470 = vadd.f32 %v10342, %v10404
    %v10471 = vadd.f32 %v10343, %v10406
    %v10472 = vadd.f32 %v10344, %v10408
    %v10473 = vpack.c.bf16 %v9510, %v9510
    %v10474 = vpack.c.bf16 %v9511, %v9511
    %v10475 = vpack.c.bf16 %v9512, %v9512
    %v10476 = vpack.c.bf16 %v9513, %v9513
    %v10477 = vpack.c.bf16 %v9514, %v9514
    %v10478 = vpack.c.bf16 %v9515, %v9515
    %v10479 = vpack.c.bf16 %v9516, %v9516
    %v10480 = vpack.c.bf16 %v9517, %v9517
    %v10481 = vpack.c.bf16 %v9518, %v9518
    %v10482 = vpack.c.bf16 %v9519, %v9519
    %v10483 = vpack.c.bf16 %v9520, %v9520
    %v10484 = vpack.c.bf16 %v9521, %v9521
    %v10485 = vpack.c.bf16 %v9522, %v9522
    %v10486 = vpack.c.bf16 %v9523, %v9523
    %v10487 = vpack.c.bf16 %v9524, %v9524
    %v10488 = vpack.c.bf16 %v9525, %v9525
    %v10489 = vpack.c.bf16 %v9526, %v9526
    %v10490 = vpack.c.bf16 %v9527, %v9527
    %v10491 = vpack.c.bf16 %v9528, %v9528
    %v10492 = vpack.c.bf16 %v9529, %v9529
    %v10493 = vpack.c.bf16 %v9530, %v9530
    %v10494 = vpack.c.bf16 %v9531, %v9531
    %v10495 = vpack.c.bf16 %v9532, %v9532
    %v10496 = vpack.c.bf16 %v9533, %v9533
    %v10497 = vpack.c.bf16 %v9534, %v9534
    %v10498 = vpack.c.bf16 %v9535, %v9535
    %v10499 = vpack.c.bf16 %v9536, %v9536
    %v10500 = vpack.c.bf16 %v9537, %v9537
    %v10501 = vpack.c.bf16 %v9538, %v9538
    %v10502 = vpack.c.bf16 %v9539, %v9539
    %v10503 = vpack.c.bf16 %v9540, %v9540
    %v10504 = vpack.c.bf16 %v9541, %v9541
    %v10505 = vpack.c.bf16 %v9542, %v9542
    %v10506 = vpack.c.bf16 %v9543, %v9543
    %v10507 = vpack.c.bf16 %v9544, %v9544
    %v10508 = vpack.c.bf16 %v9545, %v9545
    %v10509 = vpack.c.bf16 %v9546, %v9546
    %v10510 = vpack.c.bf16 %v9547, %v9547
    %v10511 = vpack.c.bf16 %v9548, %v9548
    %v10512 = vpack.c.bf16 %v9549, %v9549
    %v10513 = vpack.c.bf16 %v9550, %v9550
    %v10514 = vpack.c.bf16 %v9551, %v9551
    %v10515 = vpack.c.bf16 %v9552, %v9552
    %v10516 = vpack.c.bf16 %v9553, %v9553
    %v10517 = vpack.c.bf16 %v9554, %v9554
    %v10518 = vpack.c.bf16 %v9555, %v9555
    %v10519 = vpack.c.bf16 %v9556, %v9556
    %v10520 = vpack.c.bf16 %v9557, %v9557
    %v10521 = vpack.c.bf16 %v9558, %v9558
    %v10522 = vpack.c.bf16 %v9559, %v9559
    %v10523 = vpack.c.bf16 %v9560, %v9560
    %v10524 = vpack.c.bf16 %v9561, %v9561
    %v10525 = vpack.c.bf16 %v9562, %v9562
    %v10526 = vpack.c.bf16 %v9563, %v9563
    %v10527 = vpack.c.bf16 %v9564, %v9564
    %v10528 = vpack.c.bf16 %v9565, %v9565
    %v10529 = vpack.c.bf16 %v9566, %v9566
    %v10530 = vpack.c.bf16 %v9567, %v9567
    %v10531 = vpack.c.bf16 %v9568, %v9568
    %v10532 = vpack.c.bf16 %v9569, %v9569
    %v10533 = vpack.c.bf16 %v9570, %v9570
    %v10534 = vpack.c.bf16 %v9571, %v9571
    %v10535 = vpack.c.bf16 %v9572, %v9572
    %v10536 = vpack.c.bf16 %v9573, %v9573
    %vm10537 = vcmask 27648
    %10538 = vst.msk [vmem:[#allocation2] sm:$0xf] %vm10537, %v10473
    %10539 = vst.msk [vmem:[#allocation2 + $0x4] sm:$0xf] %vm10537, %v10474
    %10540 = vst.msk [vmem:[#allocation2 + $0x8] sm:$0xf] %vm10537, %v10475
    %10541 = vst.msk [vmem:[#allocation2 + $0xc] sm:$0xf] %vm10537, %v10476
    %10542 = vst.msk [vmem:[#allocation2 + $0x10] sm:$0xf] %vm10537, %v10477
    %10543 = vst.msk [vmem:[#allocation2 + $0x14] sm:$0xf] %vm10537, %v10478
    %10544 = vst.msk [vmem:[#allocation2 + $0x18] sm:$0xf] %vm10537, %v10479
    %10545 = vst.msk [vmem:[#allocation2 + $0x1c] sm:$0xf] %vm10537, %v10480
    %10546 = vst.msk [vmem:[#allocation2 + $0x20] sm:$0xf] %vm10537, %v10481
    %10547 = vst.msk [vmem:[#allocation2 + $0x24] sm:$0xf] %vm10537, %v10482
    %10548 = vst.msk [vmem:[#allocation2 + $0x28] sm:$0xf] %vm10537, %v10483
    %10549 = vst.msk [vmem:[#allocation2 + $0x2c] sm:$0xf] %vm10537, %v10484
    %10550 = vst.msk [vmem:[#allocation2 + $0x30] sm:$0xf] %vm10537, %v10485
    %10551 = vst.msk [vmem:[#allocation2 + $0x34] sm:$0xf] %vm10537, %v10486
    %10552 = vst.msk [vmem:[#allocation2 + $0x38] sm:$0xf] %vm10537, %v10487
    %10553 = vst.msk [vmem:[#allocation2 + $0x3c] sm:$0xf] %vm10537, %v10488
    %10554 = vst.msk [vmem:[#allocation2 + $0x40] sm:$0xf] %vm10537, %v10489
    %10555 = vst.msk [vmem:[#allocation2 + $0x44] sm:$0xf] %vm10537, %v10490
    %10556 = vst.msk [vmem:[#allocation2 + $0x48] sm:$0xf] %vm10537, %v10491
    %10557 = vst.msk [vmem:[#allocation2 + $0x4c] sm:$0xf] %vm10537, %v10492
    %10558 = vst.msk [vmem:[#allocation2 + $0x50] sm:$0xf] %vm10537, %v10493
    %10559 = vst.msk [vmem:[#allocation2 + $0x54] sm:$0xf] %vm10537, %v10494
    %10560 = vst.msk [vmem:[#allocation2 + $0x58] sm:$0xf] %vm10537, %v10495
    %10561 = vst.msk [vmem:[#allocation2 + $0x5c] sm:$0xf] %vm10537, %v10496
    %10562 = vst.msk [vmem:[#allocation2 + $0x60] sm:$0xf] %vm10537, %v10497
    %10563 = vst.msk [vmem:[#allocation2 + $0x64] sm:$0xf] %vm10537, %v10498
    %10564 = vst.msk [vmem:[#allocation2 + $0x68] sm:$0xf] %vm10537, %v10499
    %10565 = vst.msk [vmem:[#allocation2 + $0x6c] sm:$0xf] %vm10537, %v10500
    %10566 = vst.msk [vmem:[#allocation2 + $0x70] sm:$0xf] %vm10537, %v10501
    %10567 = vst.msk [vmem:[#allocation2 + $0x74] sm:$0xf] %vm10537, %v10502
    %10568 = vst.msk [vmem:[#allocation2 + $0x78] sm:$0xf] %vm10537, %v10503
    %10569 = vst.msk [vmem:[#allocation2 + $0x7c] sm:$0xf] %vm10537, %v10504
    %10570 = vst.msk [vmem:[#allocation2 + $0x80] sm:$0xf] %vm10537, %v10505
    %10571 = vst.msk [vmem:[#allocation2 + $0x84] sm:$0xf] %vm10537, %v10506
    %10572 = vst.msk [vmem:[#allocation2 + $0x88] sm:$0xf] %vm10537, %v10507
    %10573 = vst.msk [vmem:[#allocation2 + $0x8c] sm:$0xf] %vm10537, %v10508
    %10574 = vst.msk [vmem:[#allocation2 + $0x90] sm:$0xf] %vm10537, %v10509
    %10575 = vst.msk [vmem:[#allocation2 + $0x94] sm:$0xf] %vm10537, %v10510
    %10576 = vst.msk [vmem:[#allocation2 + $0x98] sm:$0xf] %vm10537, %v10511
    %10577 = vst.msk [vmem:[#allocation2 + $0x9c] sm:$0xf] %vm10537, %v10512
    %10578 = vst.msk [vmem:[#allocation2 + $0xa0] sm:$0xf] %vm10537, %v10513
    %10579 = vst.msk [vmem:[#allocation2 + $0xa4] sm:$0xf] %vm10537, %v10514
    %10580 = vst.msk [vmem:[#allocation2 + $0xa8] sm:$0xf] %vm10537, %v10515
    %10581 = vst.msk [vmem:[#allocation2 + $0xac] sm:$0xf] %vm10537, %v10516
    %10582 = vst.msk [vmem:[#allocation2 + $0xb0] sm:$0xf] %vm10537, %v10517
    %10583 = vst.msk [vmem:[#allocation2 + $0xb4] sm:$0xf] %vm10537, %v10518
    %10584 = vst.msk [vmem:[#allocation2 + $0xb8] sm:$0xf] %vm10537, %v10519
    %10585 = vst.msk [vmem:[#allocation2 + $0xbc] sm:$0xf] %vm10537, %v10520
    %10586 = vst.msk [vmem:[#allocation2 + $0xc0] sm:$0xf] %vm10537, %v10521
    %10587 = vst.msk [vmem:[#allocation2 + $0xc4] sm:$0xf] %vm10537, %v10522
    %10588 = vst.msk [vmem:[#allocation2 + $0xc8] sm:$0xf] %vm10537, %v10523
    %10589 = vst.msk [vmem:[#allocation2 + $0xcc] sm:$0xf] %vm10537, %v10524
    %10590 = vst.msk [vmem:[#allocation2 + $0xd0] sm:$0xf] %vm10537, %v10525
    %10591 = vst.msk [vmem:[#allocation2 + $0xd4] sm:$0xf] %vm10537, %v10526
    %10592 = vst.msk [vmem:[#allocation2 + $0xd8] sm:$0xf] %vm10537, %v10527
    %10593 = vst.msk [vmem:[#allocation2 + $0xdc] sm:$0xf] %vm10537, %v10528
    %10594 = vst.msk [vmem:[#allocation2 + $0xe0] sm:$0xf] %vm10537, %v10529
    %10595 = vst.msk [vmem:[#allocation2 + $0xe4] sm:$0xf] %vm10537, %v10530
    %10596 = vst.msk [vmem:[#allocation2 + $0xe8] sm:$0xf] %vm10537, %v10531
    %10597 = vst.msk [vmem:[#allocation2 + $0xec] sm:$0xf] %vm10537, %v10532
    %10598 = vst.msk [vmem:[#allocation2 + $0xf0] sm:$0xf] %vm10537, %v10533
    %10599 = vst.msk [vmem:[#allocation2 + $0xf4] sm:$0xf] %vm10537, %v10534
    %10600 = vst.msk [vmem:[#allocation2 + $0xf8] sm:$0xf] %vm10537, %v10535
    %10601 = vst.msk [vmem:[#allocation2 + $0xfc] sm:$0xf] %vm10537, %v10536
    %v10602 = vpack.c.bf16 %v8775, %v8775
    %v10603 = vpack.c.bf16 %v8777, %v8777
    %v10604 = vpack.c.bf16 %v8780, %v8780
    %v10605 = vpack.c.bf16 %v8782, %v8782
    %v10606 = vpack.c.bf16 %v8785, %v8785
    %v10607 = vpack.c.bf16 %v8787, %v8787
    %v10608 = vpack.c.bf16 %v8790, %v8790
    %v10609 = vpack.c.bf16 %v8792, %v8792
    %v10610 = vpack.c.bf16 %v8795, %v8795
    %v10611 = vpack.c.bf16 %v8797, %v8797
    %v10612 = vpack.c.bf16 %v8800, %v8800
    %v10613 = vpack.c.bf16 %v8802, %v8802
    %v10614 = vpack.c.bf16 %v8805, %v8805
    %v10615 = vpack.c.bf16 %v8807, %v8807
    %v10616 = vpack.c.bf16 %v8810, %v8810
    %v10617 = vpack.c.bf16 %v8812, %v8812
    %v10618 = vpack.c.bf16 %v8815, %v8815
    %v10619 = vpack.c.bf16 %v8817, %v8817
    %v10620 = vpack.c.bf16 %v8820, %v8820
    %v10621 = vpack.c.bf16 %v8822, %v8822
    %v10622 = vpack.c.bf16 %v8825, %v8825
    %v10623 = vpack.c.bf16 %v8827, %v8827
    %v10624 = vpack.c.bf16 %v8830, %v8830
    %v10625 = vpack.c.bf16 %v8832, %v8832
    %v10626 = vpack.c.bf16 %v8835, %v8835
    %v10627 = vpack.c.bf16 %v8837, %v8837
    %v10628 = vpack.c.bf16 %v8840, %v8840
    %v10629 = vpack.c.bf16 %v8842, %v8842
    %v10630 = vpack.c.bf16 %v8845, %v8845
    %v10631 = vpack.c.bf16 %v8847, %v8847
    %v10632 = vpack.c.bf16 %v8850, %v8850
    %v10633 = vpack.c.bf16 %v8852, %v8852
    %v10634 = vpack.c.bf16 %v8855, %v8855
    %v10635 = vpack.c.bf16 %v8857, %v8857
    %v10636 = vpack.c.bf16 %v8860, %v8860
    %v10637 = vpack.c.bf16 %v8862, %v8862
    %v10638 = vpack.c.bf16 %v8865, %v8865
    %v10639 = vpack.c.bf16 %v8867, %v8867
    %v10640 = vpack.c.bf16 %v8870, %v8870
    %v10641 = vpack.c.bf16 %v8872, %v8872
    %v10642 = vpack.c.bf16 %v8875, %v8875
    %v10643 = vpack.c.bf16 %v8877, %v8877
    %v10644 = vpack.c.bf16 %v8880, %v8880
    %v10645 = vpack.c.bf16 %v8882, %v8882
    %v10646 = vpack.c.bf16 %v8885, %v8885
    %v10647 = vpack.c.bf16 %v8887, %v8887
    %v10648 = vpack.c.bf16 %v8890, %v8890
    %v10649 = vpack.c.bf16 %v8892, %v8892
    %v10650 = vpack.c.bf16 %v8895, %v8895
    %v10651 = vpack.c.bf16 %v8897, %v8897
    %v10652 = vpack.c.bf16 %v8900, %v8900
    %v10653 = vpack.c.bf16 %v8902, %v8902
    %v10654 = vpack.c.bf16 %v8905, %v8905
    %v10655 = vpack.c.bf16 %v8907, %v8907
    %v10656 = vpack.c.bf16 %v8910, %v8910
    %v10657 = vpack.c.bf16 %v8912, %v8912
    %v10658 = vpack.c.bf16 %v8915, %v8915
    %v10659 = vpack.c.bf16 %v8917, %v8917
    %v10660 = vpack.c.bf16 %v8920, %v8920
    %v10661 = vpack.c.bf16 %v8922, %v8922
    %v10662 = vpack.c.bf16 %v8925, %v8925
    %v10663 = vpack.c.bf16 %v8927, %v8927
    %v10664 = vpack.c.bf16 %v8930, %v8930
    %v10665 = vpack.c.bf16 %v8932, %v8932
    %10730 = vrot.lane.b32.xlu0 %v10602, 4
    %v10731 = vpop.permute.xlu0 %10730
    %10732 = vrot.lane.b32.xlu0 %v10603, 4
    %v10733 = vpop.permute.xlu0 %10732
    %10734 = vrot.lane.b32.xlu0 %v10604, 4
    %v10735 = vpop.permute.xlu0 %10734
    %10736 = vrot.lane.b32.xlu0 %v10605, 4
    %v10737 = vpop.permute.xlu0 %10736
    %10738 = vrot.lane.b32.xlu0 %v10606, 4
    %v10739 = vpop.permute.xlu0 %10738
    %10740 = vrot.lane.b32.xlu0 %v10607, 4
    %v10741 = vpop.permute.xlu0 %10740
    %10742 = vrot.lane.b32.xlu0 %v10608, 4
    %v10743 = vpop.permute.xlu0 %10742
    %10744 = vrot.lane.b32.xlu0 %v10609, 4
    %v10745 = vpop.permute.xlu0 %10744
    %10746 = vrot.lane.b32.xlu0 %v10610, 4
    %v10747 = vpop.permute.xlu0 %10746
    %10748 = vrot.lane.b32.xlu0 %v10611, 4
    %v10749 = vpop.permute.xlu0 %10748
    %10750 = vrot.lane.b32.xlu0 %v10612, 4
    %v10751 = vpop.permute.xlu0 %10750
    %10752 = vrot.lane.b32.xlu0 %v10613, 4
    %v10753 = vpop.permute.xlu0 %10752
    %10754 = vrot.lane.b32.xlu0 %v10614, 4
    %v10755 = vpop.permute.xlu0 %10754
    %10756 = vrot.lane.b32.xlu0 %v10615, 4
    %v10757 = vpop.permute.xlu0 %10756
    %10758 = vrot.lane.b32.xlu0 %v10616, 4
    %v10759 = vpop.permute.xlu0 %10758
    %10760 = vrot.lane.b32.xlu0 %v10617, 4
    %v10761 = vpop.permute.xlu0 %10760
    %10762 = vrot.lane.b32.xlu0 %v10618, 4
    %v10763 = vpop.permute.xlu0 %10762
    %10764 = vrot.lane.b32.xlu0 %v10619, 4
    %v10765 = vpop.permute.xlu0 %10764
    %10766 = vrot.lane.b32.xlu0 %v10620, 4
    %v10767 = vpop.permute.xlu0 %10766
    %10768 = vrot.lane.b32.xlu0 %v10621, 4
    %v10769 = vpop.permute.xlu0 %10768
    %10770 = vrot.lane.b32.xlu0 %v10622, 4
    %v10771 = vpop.permute.xlu0 %10770
    %10772 = vrot.lane.b32.xlu0 %v10623, 4
    %v10773 = vpop.permute.xlu0 %10772
    %10774 = vrot.lane.b32.xlu0 %v10624, 4
    %v10775 = vpop.permute.xlu0 %10774
    %10776 = vrot.lane.b32.xlu0 %v10625, 4
    %v10777 = vpop.permute.xlu0 %10776
    %10778 = vrot.lane.b32.xlu0 %v10626, 4
    %v10779 = vpop.permute.xlu0 %10778
    %10780 = vrot.lane.b32.xlu0 %v10627, 4
    %v10781 = vpop.permute.xlu0 %10780
    %10782 = vrot.lane.b32.xlu0 %v10628, 4
    %v10783 = vpop.permute.xlu0 %10782
    %10784 = vrot.lane.b32.xlu0 %v10629, 4
    %v10785 = vpop.permute.xlu0 %10784
    %10786 = vrot.lane.b32.xlu0 %v10630, 4
    %v10787 = vpop.permute.xlu0 %10786
    %10788 = vrot.lane.b32.xlu0 %v10631, 4
    %v10789 = vpop.permute.xlu0 %10788
    %10790 = vrot.lane.b32.xlu0 %v10632, 4
    %v10791 = vpop.permute.xlu0 %10790
    %10792 = vrot.lane.b32.xlu0 %v10633, 4
    %v10793 = vpop.permute.xlu0 %10792
    %10794 = vrot.lane.b32.xlu0 %v10634, 4
    %v10795 = vpop.permute.xlu0 %10794
    %10796 = vrot.lane.b32.xlu0 %v10635, 4
    %v10797 = vpop.permute.xlu0 %10796
    %10798 = vrot.lane.b32.xlu0 %v10636, 4
    %v10799 = vpop.permute.xlu0 %10798
    %10800 = vrot.lane.b32.xlu0 %v10637, 4
    %v10801 = vpop.permute.xlu0 %10800
    %10802 = vrot.lane.b32.xlu0 %v10638, 4
    %v10803 = vpop.permute.xlu0 %10802
    %10804 = vrot.lane.b32.xlu0 %v10639, 4
    %v10805 = vpop.permute.xlu0 %10804
    %10806 = vrot.lane.b32.xlu0 %v10640, 4
    %v10807 = vpop.permute.xlu0 %10806
    %10808 = vrot.lane.b32.xlu0 %v10641, 4
    %v10809 = vpop.permute.xlu0 %10808
    %10810 = vrot.lane.b32.xlu0 %v10642, 4
    %v10811 = vpop.permute.xlu0 %10810
    %10812 = vrot.lane.b32.xlu0 %v10643, 4
    %v10813 = vpop.permute.xlu0 %10812
    %10814 = vrot.lane.b32.xlu0 %v10644, 4
    %v10815 = vpop.permute.xlu0 %10814
    %10816 = vrot.lane.b32.xlu0 %v10645, 4
    %v10817 = vpop.permute.xlu0 %10816
    %10818 = vrot.lane.b32.xlu0 %v10646, 4
    %v10819 = vpop.permute.xlu0 %10818
    %10820 = vrot.lane.b32.xlu0 %v10647, 4
    %v10821 = vpop.permute.xlu0 %10820
    %10822 = vrot.lane.b32.xlu0 %v10648, 4
    %v10823 = vpop.permute.xlu0 %10822
    %10824 = vrot.lane.b32.xlu0 %v10649, 4
    %v10825 = vpop.permute.xlu0 %10824
    %10826 = vrot.lane.b32.xlu0 %v10650, 4
    %v10827 = vpop.permute.xlu0 %10826
    %10828 = vrot.lane.b32.xlu0 %v10651, 4
    %v10829 = vpop.permute.xlu0 %10828
    %10830 = vrot.lane.b32.xlu0 %v10652, 4
    %v10831 = vpop.permute.xlu0 %10830
    %10832 = vrot.lane.b32.xlu0 %v10653, 4
    %v10833 = vpop.permute.xlu0 %10832
    %10834 = vrot.lane.b32.xlu0 %v10654, 4
    %v10835 = vpop.permute.xlu0 %10834
    %10836 = vrot.lane.b32.xlu0 %v10655, 4
    %v10837 = vpop.permute.xlu0 %10836
    %10838 = vrot.lane.b32.xlu0 %v10656, 4
    %v10839 = vpop.permute.xlu0 %10838
    %10840 = vrot.lane.b32.xlu0 %v10657, 4
    %v10841 = vpop.permute.xlu0 %10840
    %10842 = vrot.lane.b32.xlu0 %v10658, 4
    %v10843 = vpop.permute.xlu0 %10842
    %10844 = vrot.lane.b32.xlu0 %v10659, 4
    %v10845 = vpop.permute.xlu0 %10844
    %10846 = vrot.lane.b32.xlu0 %v10660, 4
    %v10847 = vpop.permute.xlu0 %10846
    %10848 = vrot.lane.b32.xlu0 %v10661, 4
    %v10849 = vpop.permute.xlu0 %10848
    %10850 = vrot.lane.b32.xlu0 %v10662, 4
    %v10851 = vpop.permute.xlu0 %10850
    %10852 = vrot.lane.b32.xlu0 %v10663, 4
    %v10853 = vpop.permute.xlu0 %10852
    %10854 = vrot.lane.b32.xlu0 %v10664, 4
    %v10855 = vpop.permute.xlu0 %10854
    %10856 = vrot.lane.b32.xlu0 %v10665, 4
    %v10857 = vpop.permute.xlu0 %10856
    %vm10922 = vcmask 93216
    %10923 = vst.msk [vmem:[#allocation2] sm:$0xf] %vm10922, %v10731
    %10924 = vst.msk [vmem:[#allocation2 + $0x4] sm:$0xf] %vm10922, %v10733
    %10925 = vst.msk [vmem:[#allocation2 + $0x8] sm:$0xf] %vm10922, %v10735
    %10926 = vst.msk [vmem:[#allocation2 + $0xc] sm:$0xf] %vm10922, %v10737
    %10927 = vst.msk [vmem:[#allocation2 + $0x10] sm:$0xf] %vm10922, %v10739
    %10928 = vst.msk [vmem:[#allocation2 + $0x14] sm:$0xf] %vm10922, %v10741
    %10929 = vst.msk [vmem:[#allocation2 + $0x18] sm:$0xf] %vm10922, %v10743
    %10930 = vst.msk [vmem:[#allocation2 + $0x1c] sm:$0xf] %vm10922, %v10745
    %10931 = vst.msk [vmem:[#allocation2 + $0x20] sm:$0xf] %vm10922, %v10747
    %10932 = vst.msk [vmem:[#allocation2 + $0x24] sm:$0xf] %vm10922, %v10749
    %10933 = vst.msk [vmem:[#allocation2 + $0x28] sm:$0xf] %vm10922, %v10751
    %10934 = vst.msk [vmem:[#allocation2 + $0x2c] sm:$0xf] %vm10922, %v10753
    %10935 = vst.msk [vmem:[#allocation2 + $0x30] sm:$0xf] %vm10922, %v10755
    %10936 = vst.msk [vmem:[#allocation2 + $0x34] sm:$0xf] %vm10922, %v10757
    %10937 = vst.msk [vmem:[#allocation2 + $0x38] sm:$0xf] %vm10922, %v10759
    %10938 = vst.msk [vmem:[#allocation2 + $0x3c] sm:$0xf] %vm10922, %v10761
    %10939 = vst.msk [vmem:[#allocation2 + $0x40] sm:$0xf] %vm10922, %v10763
    %10940 = vst.msk [vmem:[#allocation2 + $0x44] sm:$0xf] %vm10922, %v10765
    %10941 = vst.msk [vmem:[#allocation2 + $0x48] sm:$0xf] %vm10922, %v10767
    %10942 = vst.msk [vmem:[#allocation2 + $0x4c] sm:$0xf] %vm10922, %v10769
    %10943 = vst.msk [vmem:[#allocation2 + $0x50] sm:$0xf] %vm10922, %v10771
    %10944 = vst.msk [vmem:[#allocation2 + $0x54] sm:$0xf] %vm10922, %v10773
    %10945 = vst.msk [vmem:[#allocation2 + $0x58] sm:$0xf] %vm10922, %v10775
    %10946 = vst.msk [vmem:[#allocation2 + $0x5c] sm:$0xf] %vm10922, %v10777
    %10947 = vst.msk [vmem:[#allocation2 + $0x60] sm:$0xf] %vm10922, %v10779
    %10948 = vst.msk [vmem:[#allocation2 + $0x64] sm:$0xf] %vm10922, %v10781
    %10949 = vst.msk [vmem:[#allocation2 + $0x68] sm:$0xf] %vm10922, %v10783
    %10950 = vst.msk [vmem:[#allocation2 + $0x6c] sm:$0xf] %vm10922, %v10785
    %10951 = vst.msk [vmem:[#allocation2 + $0x70] sm:$0xf] %vm10922, %v10787
    %10952 = vst.msk [vmem:[#allocation2 + $0x74] sm:$0xf] %vm10922, %v10789
    %10953 = vst.msk [vmem:[#allocation2 + $0x78] sm:$0xf] %vm10922, %v10791
    %10954 = vst.msk [vmem:[#allocation2 + $0x7c] sm:$0xf] %vm10922, %v10793
    %10955 = vst.msk [vmem:[#allocation2 + $0x80] sm:$0xf] %vm10922, %v10795
    %10956 = vst.msk [vmem:[#allocation2 + $0x84] sm:$0xf] %vm10922, %v10797
    %10957 = vst.msk [vmem:[#allocation2 + $0x88] sm:$0xf] %vm10922, %v10799
    %10958 = vst.msk [vmem:[#allocation2 + $0x8c] sm:$0xf] %vm10922, %v10801
    %10959 = vst.msk [vmem:[#allocation2 + $0x90] sm:$0xf] %vm10922, %v10803
    %10960 = vst.msk [vmem:[#allocation2 + $0x94] sm:$0xf] %vm10922, %v10805
    %10961 = vst.msk [vmem:[#allocation2 + $0x98] sm:$0xf] %vm10922, %v10807
    %10962 = vst.msk [vmem:[#allocation2 + $0x9c] sm:$0xf] %vm10922, %v10809
    %10963 = vst.msk [vmem:[#allocation2 + $0xa0] sm:$0xf] %vm10922, %v10811
    %10964 = vst.msk [vmem:[#allocation2 + $0xa4] sm:$0xf] %vm10922, %v10813
    %10965 = vst.msk [vmem:[#allocation2 + $0xa8] sm:$0xf] %vm10922, %v10815
    %10966 = vst.msk [vmem:[#allocation2 + $0xac] sm:$0xf] %vm10922, %v10817
    %10967 = vst.msk [vmem:[#allocation2 + $0xb0] sm:$0xf] %vm10922, %v10819
    %10968 = vst.msk [vmem:[#allocation2 + $0xb4] sm:$0xf] %vm10922, %v10821
    %10969 = vst.msk [vmem:[#allocation2 + $0xb8] sm:$0xf] %vm10922, %v10823
    %10970 = vst.msk [vmem:[#allocation2 + $0xbc] sm:$0xf] %vm10922, %v10825
    %10971 = vst.msk [vmem:[#allocation2 + $0xc0] sm:$0xf] %vm10922, %v10827
    %10972 = vst.msk [vmem:[#allocation2 + $0xc4] sm:$0xf] %vm10922, %v10829
    %10973 = vst.msk [vmem:[#allocation2 + $0xc8] sm:$0xf] %vm10922, %v10831
    %10974 = vst.msk [vmem:[#allocation2 + $0xcc] sm:$0xf] %vm10922, %v10833
    %10975 = vst.msk [vmem:[#allocation2 + $0xd0] sm:$0xf] %vm10922, %v10835
    %10976 = vst.msk [vmem:[#allocation2 + $0xd4] sm:$0xf] %vm10922, %v10837
    %10977 = vst.msk [vmem:[#allocation2 + $0xd8] sm:$0xf] %vm10922, %v10839
    %10978 = vst.msk [vmem:[#allocation2 + $0xdc] sm:$0xf] %vm10922, %v10841
    %10979 = vst.msk [vmem:[#allocation2 + $0xe0] sm:$0xf] %vm10922, %v10843
    %10980 = vst.msk [vmem:[#allocation2 + $0xe4] sm:$0xf] %vm10922, %v10845
    %10981 = vst.msk [vmem:[#allocation2 + $0xe8] sm:$0xf] %vm10922, %v10847
    %10982 = vst.msk [vmem:[#allocation2 + $0xec] sm:$0xf] %vm10922, %v10849
    %10983 = vst.msk [vmem:[#allocation2 + $0xf0] sm:$0xf] %vm10922, %v10851
    %10984 = vst.msk [vmem:[#allocation2 + $0xf4] sm:$0xf] %vm10922, %v10853
    %10985 = vst.msk [vmem:[#allocation2 + $0xf8] sm:$0xf] %vm10922, %v10855
    %10986 = vst.msk [vmem:[#allocation2 + $0xfc] sm:$0xf] %vm10922, %v10857
    %v10987 = vpack.c.bf16 %v10441, %v10441
    %v10988 = vpack.c.bf16 %v10442, %v10442
    %v10989 = vpack.c.bf16 %v10443, %v10443
    %v10990 = vpack.c.bf16 %v10444, %v10444
    %v10991 = vpack.c.bf16 %v10445, %v10445
    %v10992 = vpack.c.bf16 %v10446, %v10446
    %v10993 = vpack.c.bf16 %v10447, %v10447
    %v10994 = vpack.c.bf16 %v10448, %v10448
    %v10995 = vpack.c.bf16 %v10449, %v10449
    %v10996 = vpack.c.bf16 %v10450, %v10450
    %v10997 = vpack.c.bf16 %v10451, %v10451
    %v10998 = vpack.c.bf16 %v10452, %v10452
    %v10999 = vpack.c.bf16 %v10453, %v10453
    %v11000 = vpack.c.bf16 %v10454, %v10454
    %v11001 = vpack.c.bf16 %v10455, %v10455
    %v11002 = vpack.c.bf16 %v10456, %v10456
    %v11003 = vpack.c.bf16 %v10457, %v10457
    %v11004 = vpack.c.bf16 %v10458, %v10458
    %v11005 = vpack.c.bf16 %v10459, %v10459
    %v11006 = vpack.c.bf16 %v10460, %v10460
    %v11007 = vpack.c.bf16 %v10461, %v10461
    %v11008 = vpack.c.bf16 %v10462, %v10462
    %v11009 = vpack.c.bf16 %v10463, %v10463
    %v11010 = vpack.c.bf16 %v10464, %v10464
    %v11011 = vpack.c.bf16 %v10465, %v10465
    %v11012 = vpack.c.bf16 %v10466, %v10466
    %v11013 = vpack.c.bf16 %v10467, %v10467
    %v11014 = vpack.c.bf16 %v10468, %v10468
    %v11015 = vpack.c.bf16 %v10469, %v10469
    %v11016 = vpack.c.bf16 %v10470, %v10470
    %v11017 = vpack.c.bf16 %v10471, %v10471
    %v11018 = vpack.c.bf16 %v10472, %v10472
    %v11051 = vunpack.c.l.b16 %v10987
    %v11052 = vunpack.c.l.b16 %v10988
    %v11053 = vunpack.c.l.b16 %v10989
    %v11054 = vunpack.c.l.b16 %v10990
    %v11055 = vunpack.c.l.b16 %v10991
    %v11056 = vunpack.c.l.b16 %v10992
    %v11057 = vunpack.c.l.b16 %v10993
    %v11058 = vunpack.c.l.b16 %v10994
    %v11059 = vunpack.c.l.b16 %v10995
    %v11060 = vunpack.c.l.b16 %v10996
    %v11061 = vunpack.c.l.b16 %v10997
    %v11062 = vunpack.c.l.b16 %v10998
    %v11063 = vunpack.c.l.b16 %v10999
    %v11064 = vunpack.c.l.b16 %v11000
    %v11065 = vunpack.c.l.b16 %v11001
    %v11066 = vunpack.c.l.b16 %v11002
    %v11067 = vunpack.c.l.b16 %v11003
    %v11068 = vunpack.c.l.b16 %v11004
    %v11069 = vunpack.c.l.b16 %v11005
    %v11070 = vunpack.c.l.b16 %v11006
    %v11071 = vunpack.c.l.b16 %v11007
    %v11072 = vunpack.c.l.b16 %v11008
    %v11073 = vunpack.c.l.b16 %v11009
    %v11074 = vunpack.c.l.b16 %v11010
    %v11075 = vunpack.c.l.b16 %v11011
    %v11076 = vunpack.c.l.b16 %v11012
    %v11077 = vunpack.c.l.b16 %v11013
    %v11078 = vunpack.c.l.b16 %v11014
    %v11079 = vunpack.c.l.b16 %v11015
    %v11080 = vunpack.c.l.b16 %v11016
    %v11081 = vunpack.c.l.b16 %v11017
    %v11082 = vunpack.c.l.b16 %v11018
    %v11083 = vrot.slane %v11052, 7
    %vm11084 = vcmask 1041409
    %v11085 = vsel %vm11084, %v11083, %v11051
    %v11086 = vrot.slane %v11053, 6
    %vm11087 = vcmask 1042434
    %v11088 = vsel %vm11087, %v11086, %v11085
    %v11089 = vrot.slane %v11054, 5
    %vm11090 = vcmask 1043459
    %v11091 = vsel %vm11090, %v11089, %v11088
    %v11092 = vrot.slane %v11055, 4
    %vm11093 = vcmask 1044484
    %v11094 = vsel %vm11093, %v11092, %v11091
    %v11095 = vrot.slane %v11056, 3
    %vm11096 = vcmask 1045509
    %v11097 = vsel %vm11096, %v11095, %v11094
    %v11098 = vrot.slane %v11057, 2
    %vm11099 = vcmask 1046534
    %v11100 = vsel %vm11099, %v11098, %v11097
    %v11101 = vrot.slane %v11058, 1
    %vm11102 = vcmask 1047559
    %v11103 = vsel %vm11102, %v11101, %v11100
    %v11104 = vrot.slane %v11060, 7
    %v11105 = vsel %vm11084, %v11104, %v11059
    %v11106 = vrot.slane %v11061, 6
    %v11107 = vsel %vm11087, %v11106, %v11105
    %v11108 = vrot.slane %v11062, 5
    %v11109 = vsel %vm11090, %v11108, %v11107
    %v11110 = vrot.slane %v11063, 4
    %v11111 = vsel %vm11093, %v11110, %v11109
    %v11112 = vrot.slane %v11064, 3
    %v11113 = vsel %vm11096, %v11112, %v11111
    %v11114 = vrot.slane %v11065, 2
    %v11115 = vsel %vm11099, %v11114, %v11113
    %v11116 = vrot.slane %v11066, 1
    %v11117 = vsel %vm11102, %v11116, %v11115
    %v11118 = vrot.slane %v11068, 7
    %v11119 = vsel %vm11084, %v11118, %v11067
    %v11120 = vrot.slane %v11069, 6
    %v11121 = vsel %vm11087, %v11120, %v11119
    %v11122 = vrot.slane %v11070, 5
    %v11123 = vsel %vm11090, %v11122, %v11121
    %v11124 = vrot.slane %v11071, 4
    %v11125 = vsel %vm11093, %v11124, %v11123
    %v11126 = vrot.slane %v11072, 3
    %v11127 = vsel %vm11096, %v11126, %v11125
    %v11128 = vrot.slane %v11073, 2
    %v11129 = vsel %vm11099, %v11128, %v11127
    %v11130 = vrot.slane %v11074, 1
    %v11131 = vsel %vm11102, %v11130, %v11129
    %v11132 = vrot.slane %v11076, 7
    %v11133 = vsel %vm11084, %v11132, %v11075
    %v11134 = vrot.slane %v11077, 6
    %v11135 = vsel %vm11087, %v11134, %v11133
    %v11136 = vrot.slane %v11078, 5
    %v11137 = vsel %vm11090, %v11136, %v11135
    %v11138 = vrot.slane %v11079, 4
    %v11139 = vsel %vm11093, %v11138, %v11137
    %v11140 = vrot.slane %v11080, 3
    %v11141 = vsel %vm11096, %v11140, %v11139
    %v11142 = vrot.slane %v11081, 2
    %v11143 = vsel %vm11099, %v11142, %v11141
    %v11144 = vrot.slane %v11082, 1
    %v11145 = vsel %vm11102, %v11144, %v11143
    %v11146 = vpack.c.b16 %v11103, %v11103
    %v11147 = vpack.c.b16 %v11117, %v11117
    %v11148 = vpack.c.b16 %v11131, %v11131
    %v11149 = vpack.c.b16 %v11145, %v11145
    %11154 = vst.msk [vmem:[#allocation4] sm:$0xf] %vm10537, %v11146
    %11155 = vst.msk [vmem:[#allocation4 + $0x4] sm:$0xf] %vm10537, %v11147
    %11156 = vst.msk [vmem:[#allocation4 + $0x8] sm:$0xf] %vm10537, %v11148
    %11157 = vst.msk [vmem:[#allocation4 + $0xc] sm:$0xf] %vm10537, %v11149
    // Predicated region
    $region42: #{tpu_custom_call.1} parent=1 // pred_check
      _
    $region43: #{tpu_custom_call.1} parent=1 // pred_check_branch
      %11159 = sbr.rel (0) target = $region45
    $region44: #{tpu_custom_call.1} parent=1 // pred_region
      %11161 = vsyncadd [#allocation3], 0
      %s11162 = sshll.u32 [#allocation2], 4
      %s11163 = int_to_ptr.vmem [resolvable:$true] %s11162
      %s11164 = sshll.u32 %s10, 4
      %s11165 = int_to_ptr.hbm [resolvable:$true] %s11164
      %11170 = dma.vmem_to_hbm [thread:$0]  %s11163, 4096, %s11165, [#allocation3], 64, 64, 4
    $region45: #{tpu_custom_call.1} parent=1 // pred_fallthru
      _
    // Predicated region
    $region46: #{tpu_custom_call.1} parent=1 // pred_check
      _
    $region47: #{tpu_custom_call.1} parent=1 // pred_check_branch
      %11172 = sbr.rel (0) target = $region49
    $region48: #{tpu_custom_call.1} parent=1 // pred_region
      %11174 = vsyncadd [#allocation5], 0
      %s11175 = sshll.u32 [#allocation4], 4
      %s11176 = int_to_ptr.vmem [resolvable:$true] %s11175
      %s11177 = sshll.u32 %s11, 4
      %s11178 = int_to_ptr.hbm [resolvable:$true] %s11177
      %11183 = dma.vmem_to_hbm [thread:$0]  %s11176, 256, %s11178, [#allocation5], 64, 64, 4
    $region49: #{tpu_custom_call.1} parent=1 // pred_fallthru
      _
    // Predicated region
    $region50: #{tpu_custom_call.1} parent=1 // pred_check
      _
    $region51: #{tpu_custom_call.1} parent=1 // pred_check_branch
      %11185 = sbr.rel (0) target = $region53
    $region52: #{tpu_custom_call.1} parent=1 // pred_region
      %11187 = dma.done [#allocation3], 4096
    $region53: #{tpu_custom_call.1} parent=1 // pred_fallthru
      _
    // Predicated region
    $region54: #{tpu_custom_call.1} parent=1 // pred_check
      _
    $region55: #{tpu_custom_call.1} parent=1 // pred_check_branch
      %11189 = sbr.rel (0) target = $region57
    $region56: #{tpu_custom_call.1} parent=1 // pred_region
      %11191 = dma.done [#allocation5], 256
    $region57: #{tpu_custom_call.1} parent=1 // pred_fallthru
      _
    %11192 = vsyncpa [#allocation3], 1
    %11193 = vsyncpa [#allocation5], 1

</llo_original>
